<compile_context>
chip_gen: v7x
topology: tpu7x:2x2x1
jax: 0.10.0
libtpu: 0.0.40
codegen_flags: <defaults>
</compile_context>

<pallas_src>
import jax
import jax.numpy as jnp
from jax.experimental import pallas as pl
from jax.experimental.pallas import tpu as pltpu


# ----------------------------- tiling helpers ------------------------------

def _pick_tile(n, max_tile=2048):
    """Largest pixel tile: full axis if small, else a multiple-of-128 divisor."""
    if n <= max_tile:
        return n
    t = max_tile - (max_tile % 128)
    while t >= 128:
        if n % t == 0:
            return t
        t -= 128
    return n


def _pick_windows_per_step(bw, length, chan, budget=2 << 20):
    """Windows per attention grid step: cap VMEM, keep >=2 grid steps."""
    per_win = max(length * chan, length * length) * 4
    cap = max(1, budget // per_win)
    if bw >= 2:
        cap = min(cap, bw // 2)          # feed both TensorCores on v7x
    nw = max(1, min(cap, bw))
    while bw % nw:
        nw -= 1
    return nw


# ----------------------------- Pallas kernels ------------------------------

def _pw_conv_kernel(x_ref, w_ref, b_ref, o_ref):
    # x: (1, C_in, tm) bf16, w: (C_out, C_in) bf16, b: (C_out, 1) f32
    y = jnp.dot(w_ref[...], x_ref[0], preferred_element_type=jnp.float32)
    o_ref[0] = (y + b_ref[...]).astype(o_ref.dtype)


def pointwise_conv_nchw(x, w, b, scale=None, shift=None,
                        out_dtype=jnp.float32):
    """1x1 conv on an NCHW tensor, optional per-channel affine folded in."""
    B, C_in, H, W = x.shape
    C_out = w.shape[0]
    HW = H * W

    w = w.astype(jnp.float32)
    b = b.astype(jnp.float32)
    if scale is not None:                      # fold BatchNorm affine
        w = w * scale[:, None]
        b = b * scale + (shift if shift is not None else 0.0)
    elif shift is not None:
        b = b + shift

    tm = _pick_tile(HW)
    x3 = x.reshape(B, C_in, HW).astype(jnp.bfloat16)
    w_bf = w.astype(jnp.bfloat16)

    y = pl.pallas_call(
        _pw_conv_kernel,
        out_shape=jax.ShapeDtypeStruct((B, C_out, HW), out_dtype),
        grid=(B, HW // tm),
        in_specs=[
            pl.BlockSpec((1, C_in, tm), lambda bi, mi: (bi, 0, mi)),
            pl.BlockSpec((C_out, C_in), lambda bi, mi: (0, 0)),
            pl.BlockSpec((C_out, 1), lambda bi, mi: (0, 0)),
        ],
        out_specs=pl.BlockSpec((1, C_out, tm), lambda bi, mi: (bi, 0, mi)),
        compiler_params=pltpu.CompilerParams(
            dimension_semantics=("parallel", "parallel")),
    )(x3, w_bf, b.reshape(C_out, 1))
    return y.reshape(B, C_out, H, W)


def _attn_kernel(qkv_ref, o_ref):
    # qkv: (3, nw, L, C) bf16 -- nw windows handled per grid step.
    q = qkv_ref[0]
    k = qkv_ref[1]
    v = qkv_ref[2]
    s = jnp.einsum('nqc,nkc->nqk', q, k,
                   preferred_element_type=jnp.float32)        # (nw, L, L) f32
    s = s - jnp.max(s, axis=-1, keepdims=True)
    p = jnp.exp(s)
    p = p / jnp.sum(p, axis=-1, keepdims=True)                # softmax in f32
    o = jnp.einsum('nqk,nkc->nqc', p.astype(jnp.bfloat16), v,
                   preferred_element_type=jnp.float32)
    o_ref[...] = o.astype(o_ref.dtype)


def window_attention(q, k, v):
    """Batched window cross-attention; q/k/v: (Bw, L, C)."""
    Bw, L, C = q.shape
    nw = _pick_windows_per_step(Bw, L, C)
    qkv = jnp.stack([q, k, v], axis=0).astype(jnp.bfloat16)   # single input
    return pl.pallas_call(
        _attn_kernel,
        out_shape=jax.ShapeDtypeStruct((Bw, L, C), jnp.bfloat16),
        grid=(Bw // nw,),
        in_specs=[pl.BlockSpec((3, nw, L, C), lambda i: (0, i, 0, 0))],
        out_specs=pl.BlockSpec((nw, L, C), lambda i: (i, 0, 0)),
        compiler_params=pltpu.CompilerParams(
            dimension_semantics=("parallel",)),
    )(qkv)


# ----------------- ELRCAB branch (dead code in the reference) --------------
# Body.forward computes elrcab(x) and discards the result; these functions
# are kept for completeness but deliberately NOT invoked (saves ~half of the
# launched kernels with zero change to the output).

def _calayer_kernel(y_ref, w1_ref, b1_ref, w2_ref, b2_ref, o_ref):
    y = y_ref[0]                                          # (C, HW)
    pooled = jnp.mean(y, axis=-1, keepdims=True)          # global avg pool
    h = jnp.sum(w1_ref[...] * pooled.T, axis=-1, keepdims=True) + b1_ref[...]
    h = jnp.maximum(h, 0.0)
    a = jnp.sum(w2_ref[...] * h.T, axis=-1, keepdims=True) + b2_ref[...]
    a = jax.nn.sigmoid(a)
    o_ref[0] = a * y


def calayer_nchw(x, w1, b1, w2, b2):
    B, C, H, W = x.shape
    Cr = w1.shape[0]
    y = x.reshape(B, C, H * W)
    out = pl.pallas_call(
        _calayer_kernel,
        out_shape=jax.ShapeDtypeStruct((B, C, H * W), jnp.float32),
        grid=(B,),
        in_specs=[
            pl.BlockSpec((1, C, H * W), lambda i: (i, 0, 0)),
            pl.BlockSpec((Cr, C), lambda i: (0, 0)),
            pl.BlockSpec((Cr, 1), lambda i: (0, 0)),
            pl.BlockSpec((C, Cr), lambda i: (0, 0)),
            pl.BlockSpec((C, 1), lambda i: (0, 0)),
        ],
        out_specs=pl.BlockSpec((1, C, H * W), lambda i: (i, 0, 0)),
        compiler_params=pltpu.CompilerParams(
            dimension_semantics=("parallel",)),
    )(y, w1, b1.reshape(Cr, 1), w2, b2.reshape(C, 1))
    return out.reshape(B, C, H, W)


def _spatial_shift(x, dy, dx):
    B, C, H, W = x.shape
    p = jnp.pad(x, ((0, 0), (0, 0), (1, 1), (1, 1)))
    return p[:, :, 1 + dy:1 + dy + H, 1 + dx:1 + dx + W]


def shift_conv2d(x, conv_w, conv_b, n_div=5):
    B, C, H, W = x.shape
    g = C // n_div
    parts = [
        _spatial_shift(x[:, 0 * g:1 * g], 0, +1),
        _spatial_shift(x[:, 1 * g:2 * g], 0, -1),
        _spatial_shift(x[:, 2 * g:3 * g], +1, 0),
        _spatial_shift(x[:, 3 * g:4 * g], -1, 0),
        x[:, 4 * g:],
    ]
    y = jnp.concatenate(parts, axis=1)
    return pointwise_conv_nchw(y, conv_w, conv_b)


def elrcab_forward(x, p):
    y = shift_conv2d(x, p['sf_w'], p['sf_b'])
    return calayer_nchw(y, p['ca_w1'], p['ca_b1'], p['ca_w2'], p['ca_b2'])


# ------------------------------- GMSA / Body --------------------------------

def _regroup(t, a):
    """Reproduce the reference k/v rearranges so the batch dim becomes `a`."""
    bt, L, ch = t.shape
    if a > bt:
        r = a // bt                 # 'b (c wsize) h -> (b wsize) c h'
        t = t.reshape(bt, L // r, r, ch)
        t = jnp.transpose(t, (0, 2, 1, 3)).reshape(bt * r, L // r, ch)
    else:
        r = bt // a                 # '(b wsize) c h -> b (c wsize) h'
        t = t.reshape(a, r, L, ch)
        t = jnp.transpose(t, (0, 2, 1, 3)).reshape(a, L * r, ch)
    return t


def gmsa_forward(x, p, shifts=4, window_sizes=(4, 8, 16)):
    B, C, H, W = x.shape
    # project_inp: 1x1 conv with eval-mode BatchNorm folded into the weights.
    bn_scale = p['bn_gamma'] / jnp.sqrt(p['bn_var'] + 1e-5)
    bn_shift = p['bn_beta'] - p['bn_mean'] * bn_scale
    xp = pointwise_conv_nchw(x, p['pi_w'], p['pi_b'], bn_scale, bn_shift,
                             out_dtype=jnp.bfloat16)

    split = 2 * C // 3
    xs = [xp[:, 0:split], xp[:, split:2 * split], xp[:, 2 * split:3 * split]]
    c3 = split // 2

    qss, vss = [], []
    for wid, el in enumerate(xs):
        ws = window_sizes[wid]
        if shifts > 0:
            el = jnp.roll(el, shift=(-ws // 2, -ws // 2), axis=(2, 3))
        # 'b (qv c) (h dh) (w dw) -> qv (b h w) (dh dw) c'
        el = el.reshape(B, 2, c3, H // ws, ws, W // ws, ws)
        el = jnp.transpose(el, (1, 0, 3, 5, 4, 6, 2))
        el = el.reshape(2, B * (H // ws) * (W // ws), ws * ws, c3)
        qss.append(el[0])
        vss.append(el[1])

    idx = [0, 1, 2, 1, 2, 0, 2, 0, 1]
    atnss = []
    for i in range(0, 9, 3):
        q = qss[idx[i]]
        k = _regroup(qss[idx[i + 1]], q.shape[0])
        v = _regroup(vss[idx[i + 2]], q.shape[0])
        atnss.append(window_attention(q, k, v))

    ys = []
    for wid, el in enumerate(atnss):
        ws = window_sizes[wid]
        # '(b h w) (dh dw) c -> b c (h dh) (w dw)'
        y = el.reshape(B, H // ws, W // ws, ws, ws, c3)
        y = jnp.transpose(y, (0, 5, 1, 3, 2, 4)).reshape(B, c3, H, W)
        if shifts > 0:
            y = jnp.roll(y, shift=(ws // 2, ws // 2), axis=(2, 3))
        ys.append(y)
    y = jnp.concatenate(ys, axis=1)                  # (B, C, H, W) bf16
    return pointwise_conv_nchw(y, p['po_w'], p['po_b'])


@jax.jit
def body_forward(x, p):
    # Reference Body: y = elrcab(x) is computed but its result is discarded;
    # the output is gmsa(x) only, so the dead ELRCAB branch is not executed.
    return gmsa_forward(x, p)


# ------------------------------- parameters --------------------------------

def init_params(key, channel=48, reduction=16):
    ks = jax.random.split(key, 10)
    cr = channel // reduction

    def w(k, shape, fan_in):
        return jax.random.normal(k, shape, jnp.float32) / jnp.sqrt(fan_in)

    return {
        # ShiftConv2d 1x1 conv (ELRCAB, unused in the forward output)
        'sf_w': w(ks[0], (channel, channel), channel),
        'sf_b': w(ks[1], (channel,), channel),
        # CALayer convs (ELRCAB, unused in the forward output)
        'ca_w1': w(ks[2], (cr, channel), channel),
        'ca_b1': w(ks[3], (cr,), channel),
        'ca_w2': w(ks[4], (channel, cr), cr),
        'ca_b2': w(ks[5], (channel,), cr),
        # GMSA project_inp conv + BatchNorm (eval-mode defaults)
        'pi_w': w(ks[6], (2 * channel, channel), channel),
        'pi_b': w(ks[7], (2 * channel,), channel),
        'bn_gamma': jnp.ones((2 * channel,), jnp.float32),
        'bn_beta': jnp.zeros((2 * channel,), jnp.float32),
        'bn_mean': jnp.zeros((2 * channel,), jnp.float32),
        'bn_var': jnp.ones((2 * channel,), jnp.float32),
        # GMSA project_out conv
        'po_w': w(ks[8], (channel, channel), channel),
        'po_b': w(ks[9], (channel,), channel),
    }


if __name__ == "__main__":
    key = jax.random.PRNGKey(0)
    kx, kp = jax.random.split(key)
    B, channel, H, W = 2, 48, 16, 16      # channel % 3 == 0 required by GMSA
    x = jax.random.normal(kx, (B, channel, H, W), jnp.float32)
    params = init_params(kp, channel=channel, reduction=16)

    out = body_forward(x, params)
    jax.block_until_ready(out)
    assert out.shape == (B, channel, H, W) and out.dtype == jnp.float32
    print("KERNEL_OK")
</pallas_src>

<mosaic_0001>
module attributes {stable_mosaic.version = 11 : i64} {
  func.func @_pw_conv_kernel(%arg0: i32, %arg1: i32, %arg2: memref<1x48x256xbf16, #tpu.memory_space<vmem>>, %arg3: memref<96x48xbf16, #tpu.memory_space<vmem>>, %arg4: memref<96x1xf32, #tpu.memory_space<vmem>>, %arg5: memref<1x96x256xbf16, #tpu.memory_space<vmem>>) attributes {dimension_semantics = [#tpu.dimension_semantics<parallel>, #tpu.dimension_semantics<parallel>], iteration_bounds = array<i64: 2, 1>, scalar_prefetch = 0 : i64, scratch_operands = 0 : i64, tpu.core_type = #tpu.core_type<tc>, window_params = [{transform_indices = @transform_0, window_bounds = array<i64: 1, 48, 256>}, {pipeline_mode = #tpu.pipeline_mode<synchronous>, transform_indices = @transform_1, window_bounds = array<i64: 96, 48>}, {pipeline_mode = #tpu.pipeline_mode<synchronous>, transform_indices = @transform_2, window_bounds = array<i64: 96, 1>}, {transform_indices = @transform_3, window_bounds = array<i64: 1, 96, 256>}]} {
    %c0 = arith.constant 0 : index
    %c0_0 = arith.constant 0 : index
    %0 = vector.load %arg3[%c0, %c0_0] : memref<96x48xbf16, #tpu.memory_space<vmem>>, vector<96x48xbf16>
    %c0_1 = arith.constant 0 : index
    %c0_2 = arith.constant 0 : index
    %c0_3 = arith.constant 0 : index
    %1 = vector.load %arg2[%c0_1, %c0_2, %c0_3] : memref<1x48x256xbf16, #tpu.memory_space<vmem>>, vector<1x48x256xbf16>
    %2 = vector.shape_cast %1 : vector<1x48x256xbf16> to vector<48x256xbf16>
    %cst = arith.constant dense<0.000000e+00> : vector<96x256xf32>
    %3 = tpu.matmul %0, %2, %cst {dimension_numbers = #tpu.dot_dimension_numbers<[1], [0], [0], [1], [0, 0, 1, 1], [], []>} : vector<96x48xbf16>, vector<48x256xbf16>, vector<96x256xf32> -> vector<96x256xf32>
    %c0_4 = arith.constant 0 : index
    %c0_5 = arith.constant 0 : index
    %4 = vector.load %arg4[%c0_4, %c0_5] : memref<96x1xf32, #tpu.memory_space<vmem>>, vector<96x1xf32>
    %5 = vector.broadcast %4 : vector<96x1xf32> to vector<96x256xf32>
    %6 = arith.addf %3, %5 : vector<96x256xf32>
    %7 = arith.truncf %6 : vector<96x256xf32> to vector<96x256xbf16>
    %c0_6 = arith.constant 0 : index
    %c0_7 = arith.constant 0 : index
    %c0_8 = arith.constant 0 : index
    %8 = vector.load %arg5[%c0_6, %c0_7, %c0_8] : memref<1x96x256xbf16, #tpu.memory_space<vmem>>, vector<1x96x256xbf16>
    %9 = vector.shape_cast %8 : vector<1x96x256xbf16> to vector<96x256xbf16>
    %10 = vector.shape_cast %7 : vector<96x256xbf16> to vector<1x96x256xbf16>
    tpu.vector_store %arg5[%c0_6, %c0_7, %c0_8], %10 {strides = array<i32>} : memref<1x96x256xbf16, #tpu.memory_space<vmem>>, vector<1x96x256xbf16>,
    return
  }
  func.func @transform_0(%arg0: i32, %arg1: i32) -> (i32, i32, i32) {
    %c0_i32 = arith.constant 0 : i32
    %c0_i32_0 = arith.constant 0 : i32
    return %arg0, %c0_i32, %arg1 : i32, i32, i32
  }
  func.func @transform_1(%arg0: i32, %arg1: i32) -> (i32, i32) {
    %c0_i32 = arith.constant 0 : i32
    %c0_i32_0 = arith.constant 0 : i32
    %c0_i32_1 = arith.constant 0 : i32
    return %c0_i32, %c0_i32_0 : i32, i32
  }
  func.func @transform_2(%arg0: i32, %arg1: i32) -> (i32, i32) {
    %c0_i32 = arith.constant 0 : i32
    %c0_i32_0 = arith.constant 0 : i32
    %c0_i32_1 = arith.constant 0 : i32
    return %c0_i32, %c0_i32_0 : i32, i32
  }
  func.func @transform_3(%arg0: i32, %arg1: i32) -> (i32, i32, i32) {
    %c0_i32 = arith.constant 0 : i32
    %c0_i32_0 = arith.constant 0 : i32
    return %arg0, %c0_i32, %arg1 : i32, i32, i32
  }
}

module attributes {stable_mosaic.version = 11 : i64} {
  func.func @_attn_kernel(%arg0: i32, %arg1: memref<3x1x256x16xbf16, #tpu.memory_space<vmem>>, %arg2: memref<1x256x16xbf16, #tpu.memory_space<vmem>>) attributes {dimension_semantics = [#tpu.dimension_semantics<parallel>], iteration_bounds = array<i64: 2>, scalar_prefetch = 0 : i64, scratch_operands = 0 : i64, tpu.core_type = #tpu.core_type<tc>, window_params = [{transform_indices = @transform_0, window_bounds = array<i64: 3, 1, 256, 16>}, {transform_indices = @transform_1, window_bounds = array<i64: 1, 256, 16>}]} {
    %c0 = arith.constant 0 : index
    %c0_0 = arith.constant 0 : index
    %c0_1 = arith.constant 0 : index
    %c0_2 = arith.constant 0 : index
    %0 = vector.load %arg1[%c0, %c0_0, %c0_1, %c0_2] : memref<3x1x256x16xbf16, #tpu.memory_space<vmem>>, vector<1x1x256x16xbf16>
    %1 = vector.shape_cast %0 : vector<1x1x256x16xbf16> to vector<1x256x16xbf16>
    %c1 = arith.constant 1 : index
    %c0_3 = arith.constant 0 : index
    %c0_4 = arith.constant 0 : index
    %c0_5 = arith.constant 0 : index
    %2 = vector.load %arg1[%c1, %c0_3, %c0_4, %c0_5] : memref<3x1x256x16xbf16, #tpu.memory_space<vmem>>, vector<1x1x256x16xbf16>
    %3 = vector.shape_cast %2 : vector<1x1x256x16xbf16> to vector<1x256x16xbf16>
    %c2 = arith.constant 2 : index
    %c0_6 = arith.constant 0 : index
    %c0_7 = arith.constant 0 : index
    %c0_8 = arith.constant 0 : index
    %4 = vector.load %arg1[%c2, %c0_6, %c0_7, %c0_8] : memref<3x1x256x16xbf16, #tpu.memory_space<vmem>>, vector<1x1x256x16xbf16>
    %5 = vector.shape_cast %4 : vector<1x1x256x16xbf16> to vector<1x256x16xbf16>
    "tpu.trace_start"() <{level = 10 : i32, message = "nqc,nkc->nqk"}> : () -> ()
    %cst = arith.constant dense<0.000000e+00> : vector<1x256x256xf32>
    %6 = tpu.matmul %1, %3, %cst {dimension_numbers = #tpu.dot_dimension_numbers<[2], [2], [1], [1], [0, 0, 0, 1, 1, 1], [0], [0]>} : vector<1x256x16xbf16>, vector<1x256x16xbf16>, vector<1x256x256xf32> -> vector<1x256x256xf32>
    "tpu.trace_stop"() : () -> ()
    %cst_9 = arith.constant dense<0xFF800000> : vector<1x256xf32>
    %7 = vector.multi_reduction <maximumf>, %6, %cst_9 [2] : vector<1x256x256xf32> to vector<1x256xf32>
    %8 = vector.shape_cast %7 : vector<1x256xf32> to vector<1x256x1xf32>
    %9 = vector.broadcast %8 : vector<1x256x1xf32> to vector<1x256x256xf32>
    %10 = arith.subf %6, %9 : vector<1x256x256xf32>
    %11 = math.exp %10 : vector<1x256x256xf32>
    %cst_10 = arith.constant dense<0.000000e+00> : vector<1x256xf32>
    %12 = vector.multi_reduction <add>, %11, %cst_10 [2] : vector<1x256x256xf32> to vector<1x256xf32>
    %13 = vector.shape_cast %12 : vector<1x256xf32> to vector<1x256x1xf32>
    %14 = vector.broadcast %13 : vector<1x256x1xf32> to vector<1x256x256xf32>
    %15 = arith.divf %11, %14 : vector<1x256x256xf32>
    %16 = arith.truncf %15 : vector<1x256x256xf32> to vector<1x256x256xbf16>
    "tpu.trace_start"() <{level = 10 : i32, message = "nqk,nkc->nqc"}> : () -> ()
    %cst_11 = arith.constant dense<0.000000e+00> : vector<1x256x16xf32>
    %17 = tpu.matmul %16, %5, %cst_11 {dimension_numbers = #tpu.dot_dimension_numbers<[2], [1], [1], [2], [0, 0, 0, 1, 1, 2], [0], [0]>} : vector<1x256x256xbf16>, vector<1x256x16xbf16>, vector<1x256x16xf32> -> vector<1x256x16xf32>
    "tpu.trace_stop"() : () -> ()
    %18 = arith.truncf %17 : vector<1x256x16xf32> to vector<1x256x16xbf16>
    %c0_12 = arith.constant 0 : index
    %c0_13 = arith.constant 0 : index
    %c0_14 = arith.constant 0 : index
    %19 = vector.load %arg2[%c0_12, %c0_13, %c0_14] : memref<1x256x16xbf16, #tpu.memory_space<vmem>>, vector<1x256x16xbf16>
    tpu.vector_store %arg2[%c0_12, %c0_13, %c0_14], %18 {strides = array<i32>} : memref<1x256x16xbf16, #tpu.memory_space<vmem>>, vector<1x256x16xbf16>,
    return
  }
  func.func @transform_0(%arg0: i32) -> (i32, i32, i32, i32) {
    %c0_i32 = arith.constant 0 : i32
    %c0_i32_0 = arith.constant 0 : i32
    %c0_i32_1 = arith.constant 0 : i32
    %c0_i32_2 = arith.constant 0 : i32
    return %c0_i32, %arg0, %c0_i32_0, %c0_i32_1 : i32, i32, i32, i32
  }
  func.func @transform_1(%arg0: i32) -> (i32, i32, i32) {
    %c0_i32 = arith.constant 0 : i32
    %c0_i32_0 = arith.constant 0 : i32
    %c0_i32_1 = arith.constant 0 : i32
    return %arg0, %c0_i32, %c0_i32_0 : i32, i32, i32
  }
}

module attributes {stable_mosaic.version = 11 : i64} {
  func.func @_attn_kernel(%arg0: i32, %arg1: memref<3x16x16x16xbf16, #tpu.memory_space<vmem>>, %arg2: memref<16x16x16xbf16, #tpu.memory_space<vmem>>) attributes {dimension_semantics = [#tpu.dimension_semantics<parallel>], iteration_bounds = array<i64: 2>, scalar_prefetch = 0 : i64, scratch_operands = 0 : i64, tpu.core_type = #tpu.core_type<tc>, window_params = [{transform_indices = @transform_0, window_bounds = array<i64: 3, 16, 16, 16>}, {transform_indices = @transform_1, window_bounds = array<i64: 16, 16, 16>}]} {
    %c0 = arith.constant 0 : index
    %c0_0 = arith.constant 0 : index
    %c0_1 = arith.constant 0 : index
    %c0_2 = arith.constant 0 : index
    %0 = vector.load %arg1[%c0, %c0_0, %c0_1, %c0_2] : memref<3x16x16x16xbf16, #tpu.memory_space<vmem>>, vector<1x16x16x16xbf16>
    %1 = vector.shape_cast %0 : vector<1x16x16x16xbf16> to vector<16x16x16xbf16>
    %c1 = arith.constant 1 : index
    %c0_3 = arith.constant 0 : index
    %c0_4 = arith.constant 0 : index
    %c0_5 = arith.constant 0 : index
    %2 = vector.load %arg1[%c1, %c0_3, %c0_4, %c0_5] : memref<3x16x16x16xbf16, #tpu.memory_space<vmem>>, vector<1x16x16x16xbf16>
    %3 = vector.shape_cast %2 : vector<1x16x16x16xbf16> to vector<16x16x16xbf16>
    %c2 = arith.constant 2 : index
    %c0_6 = arith.constant 0 : index
    %c0_7 = arith.constant 0 : index
    %c0_8 = arith.constant 0 : index
    %4 = vector.load %arg1[%c2, %c0_6, %c0_7, %c0_8] : memref<3x16x16x16xbf16, #tpu.memory_space<vmem>>, vector<1x16x16x16xbf16>
    %5 = vector.shape_cast %4 : vector<1x16x16x16xbf16> to vector<16x16x16xbf16>
    "tpu.trace_start"() <{level = 10 : i32, message = "nqc,nkc->nqk"}> : () -> ()
    %cst = arith.constant dense<0.000000e+00> : vector<16x16x16xf32>
    %6 = tpu.matmul %1, %3, %cst {dimension_numbers = #tpu.dot_dimension_numbers<[2], [2], [1], [1], [0, 0, 0, 1, 1, 1], [0], [0]>} : vector<16x16x16xbf16>, vector<16x16x16xbf16>, vector<16x16x16xf32> -> vector<16x16x16xf32>
    "tpu.trace_stop"() : () -> ()
    %cst_9 = arith.constant dense<0xFF800000> : vector<16x16xf32>
    %7 = vector.multi_reduction <maximumf>, %6, %cst_9 [2] : vector<16x16x16xf32> to vector<16x16xf32>
    %8 = vector.shape_cast %7 : vector<16x16xf32> to vector<16x16x1xf32>
    %9 = vector.broadcast %8 : vector<16x16x1xf32> to vector<16x16x16xf32>
    %10 = arith.subf %6, %9 : vector<16x16x16xf32>
    %11 = math.exp %10 : vector<16x16x16xf32>
    %cst_10 = arith.constant dense<0.000000e+00> : vector<16x16xf32>
    %12 = vector.multi_reduction <add>, %11, %cst_10 [2] : vector<16x16x16xf32> to vector<16x16xf32>
    %13 = vector.shape_cast %12 : vector<16x16xf32> to vector<16x16x1xf32>
    %14 = vector.broadcast %13 : vector<16x16x1xf32> to vector<16x16x16xf32>
    %15 = arith.divf %11, %14 : vector<16x16x16xf32>
    %16 = arith.truncf %15 : vector<16x16x16xf32> to vector<16x16x16xbf16>
    "tpu.trace_start"() <{level = 10 : i32, message = "nqk,nkc->nqc"}> : () -> ()
    %cst_11 = arith.constant dense<0.000000e+00> : vector<16x16x16xf32>
    %17 = tpu.matmul %16, %5, %cst_11 {dimension_numbers = #tpu.dot_dimension_numbers<[2], [1], [1], [2], [0, 0, 0, 1, 1, 2], [0], [0]>} : vector<16x16x16xbf16>, vector<16x16x16xbf16>, vector<16x16x16xf32> -> vector<16x16x16xf32>
    "tpu.trace_stop"() : () -> ()
    %18 = arith.truncf %17 : vector<16x16x16xf32> to vector<16x16x16xbf16>
    %c0_12 = arith.constant 0 : index
    %c0_13 = arith.constant 0 : index
    %c0_14 = arith.constant 0 : index
    %19 = vector.load %arg2[%c0_12, %c0_13, %c0_14] : memref<16x16x16xbf16, #tpu.memory_space<vmem>>, vector<16x16x16xbf16>
    tpu.vector_store %arg2[%c0_12, %c0_13, %c0_14], %18 {strides = array<i32>} : memref<16x16x16xbf16, #tpu.memory_space<vmem>>, vector<16x16x16xbf16>,
    return
  }
  func.func @transform_0(%arg0: i32) -> (i32, i32, i32, i32) {
    %c0_i32 = arith.constant 0 : i32
    %c0_i32_0 = arith.constant 0 : i32
    %c0_i32_1 = arith.constant 0 : i32
    %c0_i32_2 = arith.constant 0 : i32
    return %c0_i32, %arg0, %c0_i32_0, %c0_i32_1 : i32, i32, i32, i32
  }
  func.func @transform_1(%arg0: i32) -> (i32, i32, i32) {
    %c0_i32 = arith.constant 0 : i32
    %c0_i32_0 = arith.constant 0 : i32
    %c0_i32_1 = arith.constant 0 : i32
    return %arg0, %c0_i32, %c0_i32_0 : i32, i32, i32
  }
}

module attributes {stable_mosaic.version = 11 : i64} {
  func.func @_attn_kernel(%arg0: i32, %arg1: memref<3x4x64x16xbf16, #tpu.memory_space<vmem>>, %arg2: memref<4x64x16xbf16, #tpu.memory_space<vmem>>) attributes {dimension_semantics = [#tpu.dimension_semantics<parallel>], iteration_bounds = array<i64: 2>, scalar_prefetch = 0 : i64, scratch_operands = 0 : i64, tpu.core_type = #tpu.core_type<tc>, window_params = [{transform_indices = @transform_0, window_bounds = array<i64: 3, 4, 64, 16>}, {transform_indices = @transform_1, window_bounds = array<i64: 4, 64, 16>}]} {
    %c0 = arith.constant 0 : index
    %c0_0 = arith.constant 0 : index
    %c0_1 = arith.constant 0 : index
    %c0_2 = arith.constant 0 : index
    %0 = vector.load %arg1[%c0, %c0_0, %c0_1, %c0_2] : memref<3x4x64x16xbf16, #tpu.memory_space<vmem>>, vector<1x4x64x16xbf16>
    %1 = vector.shape_cast %0 : vector<1x4x64x16xbf16> to vector<4x64x16xbf16>
    %c1 = arith.constant 1 : index
    %c0_3 = arith.constant 0 : index
    %c0_4 = arith.constant 0 : index
    %c0_5 = arith.constant 0 : index
    %2 = vector.load %arg1[%c1, %c0_3, %c0_4, %c0_5] : memref<3x4x64x16xbf16, #tpu.memory_space<vmem>>, vector<1x4x64x16xbf16>
    %3 = vector.shape_cast %2 : vector<1x4x64x16xbf16> to vector<4x64x16xbf16>
    %c2 = arith.constant 2 : index
    %c0_6 = arith.constant 0 : index
    %c0_7 = arith.constant 0 : index
    %c0_8 = arith.constant 0 : index
    %4 = vector.load %arg1[%c2, %c0_6, %c0_7, %c0_8] : memref<3x4x64x16xbf16, #tpu.memory_space<vmem>>, vector<1x4x64x16xbf16>
    %5 = vector.shape_cast %4 : vector<1x4x64x16xbf16> to vector<4x64x16xbf16>
    "tpu.trace_start"() <{level = 10 : i32, message = "nqc,nkc->nqk"}> : () -> ()
    %cst = arith.constant dense<0.000000e+00> : vector<4x64x64xf32>
    %6 = tpu.matmul %1, %3, %cst {dimension_numbers = #tpu.dot_dimension_numbers<[2], [2], [1], [1], [0, 0, 0, 1, 1, 1], [0], [0]>} : vector<4x64x16xbf16>, vector<4x64x16xbf16>, vector<4x64x64xf32> -> vector<4x64x64xf32>
    "tpu.trace_stop"() : () -> ()
    %cst_9 = arith.constant dense<0xFF800000> : vector<4x64xf32>
    %7 = vector.multi_reduction <maximumf>, %6, %cst_9 [2] : vector<4x64x64xf32> to vector<4x64xf32>
    %8 = vector.shape_cast %7 : vector<4x64xf32> to vector<4x64x1xf32>
    %9 = vector.broadcast %8 : vector<4x64x1xf32> to vector<4x64x64xf32>
    %10 = arith.subf %6, %9 : vector<4x64x64xf32>
    %11 = math.exp %10 : vector<4x64x64xf32>
    %cst_10 = arith.constant dense<0.000000e+00> : vector<4x64xf32>
    %12 = vector.multi_reduction <add>, %11, %cst_10 [2] : vector<4x64x64xf32> to vector<4x64xf32>
    %13 = vector.shape_cast %12 : vector<4x64xf32> to vector<4x64x1xf32>
    %14 = vector.broadcast %13 : vector<4x64x1xf32> to vector<4x64x64xf32>
    %15 = arith.divf %11, %14 : vector<4x64x64xf32>
    %16 = arith.truncf %15 : vector<4x64x64xf32> to vector<4x64x64xbf16>
    "tpu.trace_start"() <{level = 10 : i32, message = "nqk,nkc->nqc"}> : () -> ()
    %cst_11 = arith.constant dense<0.000000e+00> : vector<4x64x16xf32>
    %17 = tpu.matmul %16, %5, %cst_11 {dimension_numbers = #tpu.dot_dimension_numbers<[2], [1], [1], [2], [0, 0, 0, 1, 1, 2], [0], [0]>} : vector<4x64x64xbf16>, vector<4x64x16xbf16>, vector<4x64x16xf32> -> vector<4x64x16xf32>
    "tpu.trace_stop"() : () -> ()
    %18 = arith.truncf %17 : vector<4x64x16xf32> to vector<4x64x16xbf16>
    %c0_12 = arith.constant 0 : index
    %c0_13 = arith.constant 0 : index
    %c0_14 = arith.constant 0 : index
    %19 = vector.load %arg2[%c0_12, %c0_13, %c0_14] : memref<4x64x16xbf16, #tpu.memory_space<vmem>>, vector<4x64x16xbf16>
    tpu.vector_store %arg2[%c0_12, %c0_13, %c0_14], %18 {strides = array<i32>} : memref<4x64x16xbf16, #tpu.memory_space<vmem>>, vector<4x64x16xbf16>,
    return
  }
  func.func @transform_0(%arg0: i32) -> (i32, i32, i32, i32) {
    %c0_i32 = arith.constant 0 : i32
    %c0_i32_0 = arith.constant 0 : i32
    %c0_i32_1 = arith.constant 0 : i32
    %c0_i32_2 = arith.constant 0 : i32
    return %c0_i32, %arg0, %c0_i32_0, %c0_i32_1 : i32, i32, i32, i32
  }
  func.func @transform_1(%arg0: i32) -> (i32, i32, i32) {
    %c0_i32 = arith.constant 0 : i32
    %c0_i32_0 = arith.constant 0 : i32
    %c0_i32_1 = arith.constant 0 : i32
    return %arg0, %c0_i32, %c0_i32_0 : i32, i32, i32
  }
}

module attributes {stable_mosaic.version = 11 : i64} {
  func.func @_pw_conv_kernel(%arg0: i32, %arg1: i32, %arg2: memref<1x48x256xbf16, #tpu.memory_space<vmem>>, %arg3: memref<48x48xbf16, #tpu.memory_space<vmem>>, %arg4: memref<48x1xf32, #tpu.memory_space<vmem>>, %arg5: memref<1x48x256xf32, #tpu.memory_space<vmem>>) attributes {dimension_semantics = [#tpu.dimension_semantics<parallel>, #tpu.dimension_semantics<parallel>], iteration_bounds = array<i64: 2, 1>, scalar_prefetch = 0 : i64, scratch_operands = 0 : i64, tpu.core_type = #tpu.core_type<tc>, window_params = [{transform_indices = @transform_0, window_bounds = array<i64: 1, 48, 256>}, {pipeline_mode = #tpu.pipeline_mode<synchronous>, transform_indices = @transform_1, window_bounds = array<i64: 48, 48>}, {pipeline_mode = #tpu.pipeline_mode<synchronous>, transform_indices = @transform_2, window_bounds = array<i64: 48, 1>}, {transform_indices = @transform_3, window_bounds = array<i64: 1, 48, 256>}]} {
    %c0 = arith.constant 0 : index
    %c0_0 = arith.constant 0 : index
    %0 = vector.load %arg3[%c0, %c0_0] : memref<48x48xbf16, #tpu.memory_space<vmem>>, vector<48x48xbf16>
    %c0_1 = arith.constant 0 : index
    %c0_2 = arith.constant 0 : index
    %c0_3 = arith.constant 0 : index
    %1 = vector.load %arg2[%c0_1, %c0_2, %c0_3] : memref<1x48x256xbf16, #tpu.memory_space<vmem>>, vector<1x48x256xbf16>
    %2 = vector.shape_cast %1 : vector<1x48x256xbf16> to vector<48x256xbf16>
    %cst = arith.constant dense<0.000000e+00> : vector<48x256xf32>
    %3 = tpu.matmul %0, %2, %cst {dimension_numbers = #tpu.dot_dimension_numbers<[1], [0], [0], [1], [0, 0, 1, 1], [], []>} : vector<48x48xbf16>, vector<48x256xbf16>, vector<48x256xf32> -> vector<48x256xf32>
    %c0_4 = arith.constant 0 : index
    %c0_5 = arith.constant 0 : index
    %4 = vector.load %arg4[%c0_4, %c0_5] : memref<48x1xf32, #tpu.memory_space<vmem>>, vector<48x1xf32>
    %5 = vector.broadcast %4 : vector<48x1xf32> to vector<48x256xf32>
    %6 = arith.addf %3, %5 : vector<48x256xf32>
    %c0_6 = arith.constant 0 : index
    %c0_7 = arith.constant 0 : index
    %c0_8 = arith.constant 0 : index
    %7 = vector.load %arg5[%c0_6, %c0_7, %c0_8] : memref<1x48x256xf32, #tpu.memory_space<vmem>>, vector<1x48x256xf32>
    %8 = vector.shape_cast %7 : vector<1x48x256xf32> to vector<48x256xf32>
    %9 = vector.shape_cast %6 : vector<48x256xf32> to vector<1x48x256xf32>
    tpu.vector_store %arg5[%c0_6, %c0_7, %c0_8], %9 {strides = array<i32>} : memref<1x48x256xf32, #tpu.memory_space<vmem>>, vector<1x48x256xf32>,
    return
  }
  func.func @transform_0(%arg0: i32, %arg1: i32) -> (i32, i32, i32) {
    %c0_i32 = arith.constant 0 : i32
    %c0_i32_0 = arith.constant 0 : i32
    return %arg0, %c0_i32, %arg1 : i32, i32, i32
  }
  func.func @transform_1(%arg0: i32, %arg1: i32) -> (i32, i32) {
    %c0_i32 = arith.constant 0 : i32
    %c0_i32_0 = arith.constant 0 : i32
    %c0_i32_1 = arith.constant 0 : i32
    return %c0_i32, %c0_i32_0 : i32, i32
  }
  func.func @transform_2(%arg0: i32, %arg1: i32) -> (i32, i32) {
    %c0_i32 = arith.constant 0 : i32
    %c0_i32_0 = arith.constant 0 : i32
    %c0_i32_1 = arith.constant 0 : i32
    return %c0_i32, %c0_i32_0 : i32, i32
  }
  func.func @transform_3(%arg0: i32, %arg1: i32) -> (i32, i32, i32) {
    %c0_i32 = arith.constant 0 : i32
    %c0_i32_0 = arith.constant 0 : i32
    return %arg0, %c0_i32, %arg1 : i32, i32, i32
  }
}

</mosaic_0001>

<llo_original>
// kernel: body_forward.5
$region0: #{body_forward.5}
  #allocation0 [shape = 'u32[]', space=smem, size = 0x4, offset = 0x4, fixed_abs, tag = 'smem constant byte address 0x4 - core index']
  #allocation1 [shape = 'u32[144,128]{1,0:T(1,128)}', space=vmem, size = 0x12000, scoped, tag = 'internal scratch']
  %s0 = inlined_call_operand.vmem [shape: bf16[2,48,256], index: 0, kind: input, shape index: {}]
  %s1 = inlined_call_operand.vmem [shape: bf16[96,48], index: 1, kind: input, shape index: {}]
  %s2 = inlined_call_operand.vmem [shape: f32[96,1], index: 2, kind: input, shape index: {}]
  %s3 = inlined_call_operand.vmem [shape: bf16[2,96,256], index: 3, kind: output, shape index: {}]
  %s4 = sld [smem:[#allocation0]]
  $region45: #{body_forward.5} parent=0
    _
  %s6 = ssub.s32 1, %s4
  %s7 = scalar_select 0, %s6, %s4
  loop: start=0, step=1, limit=4
  $region2: #{body_forward.5} parent=0 // loop_pre_header
    _
  $region3: #{body_forward.5} parent=0 // loop_header
    %s9 = sphi 0, %s13
    %p10 = scmp.ge.s32.totalorder %s9, 4
    %s16 = sphi 0, %s28
    %s17 = sphi 0, %s24
    %s18 = sphi 0, %s16
    %s19 = sphi 0, %s17
    %s20 = sphi 0, %s18
    %s21 = sphi 0, %s19
    %s33 = sphi 0, %s35
    %s36 = sphi 0, %s33
    %s37 = sphi 0, %s36
    %s53 = sphi 0, %s37
    %s57 = sphi 0, %s57
    %s59 = sphi 0, %s57
    %s60 = sphi 0, %s59
    %s74 = sphi 0, %s60
    %s78 = sphi 0, %s78
    %s80 = sphi 0, %s78
    %s81 = sphi 0, %s80
    %s95 = sphi 0, %s81
    %s103 = sphi 0, %s105
    %s106 = sphi 0, %s103
    %s107 = sphi 0, %s106
    %s123 = sphi 0, %s107
  $region4: #{body_forward.5} parent=0 // loop_header_branch
    %12 = sbr.rel (%p10) target = $region8
  $region5: #{body_forward.5} parent=0 // loop_body
    %s14 = ssub.s32 %s9, 1
    %s15 = ssub.s32 %s9, 2
    %s22 = sadd.s32 1, %s17
    %p23 = scmp.ge.s32.totalorder %s22, 1
    %s24 = scalar_select %p23, 0, %s22
    %s25 = sadd.s32 1, %s16
    %s26 = scalar_select %p23, %s25, %s16
    %p27 = scmp.ge.s32.totalorder %s26, 2
    %s28 = scalar_select %p27, 0, %s26
    %s29 = ssub.s32 %s16, %s28
    %s30 = ssub.s32 %s17, %s24
    %s31 = sor.u32 %s29, %s30
    %p32 = scmp.eq.s32.totalorder %s31, 0
    %s34 = sadd.s32 %s33, 1
    %s35 = scalar_select %p32, %s33, %s34
    %p38 = pneg %p32
    %p39 = scmp.eq.s32.totalorder %s9, 1
    %p40 = por %p38, %p39
    %p41 = scmp.ne.s32.totalorder %s33, %s36
    %p42 = scmp.eq.s32.totalorder %s9, 0
    %p43 = por %p41, %p42
    %p44 = scmp.ne.s32.totalorder %s33, %s36
    %p45 = scmp.eq.s32.totalorder %s14, 1
    %p46 = por %p44, %p45
    %p47 = scmp.ne.s32.totalorder %s36, %s37
    %p48 = scmp.eq.s32.totalorder %s14, 0
    %p49 = por %p47, %p48
    %p50 = scmp.ne.s32.totalorder %s36, %s37
    %p51 = scmp.eq.s32.totalorder %s15, 1
    %p52 = por %p50, %p51
    %p54 = scmp.ne.s32.totalorder %s37, %s53
    %p55 = scmp.eq.s32.totalorder %s15, 0
    %p56 = por %p54, %p55
    %s58 = sadd.s32 %s57, 1
    %p61 = scmp.eq.s32.totalorder %s9, 1
    %p62 = scmp.ne.s32.totalorder %s57, %s59
    %p63 = scmp.eq.s32.totalorder %s9, 0
    %p64 = por %p62, %p63
    %p65 = scmp.ne.s32.totalorder %s57, %s59
    %p66 = scmp.eq.s32.totalorder %s14, 1
    %p67 = por %p65, %p66
    %p68 = scmp.ne.s32.totalorder %s59, %s60
    %p69 = scmp.eq.s32.totalorder %s14, 0
    %p70 = por %p68, %p69
    %p71 = scmp.ne.s32.totalorder %s59, %s60
    %p72 = scmp.eq.s32.totalorder %s15, 1
    %p73 = por %p71, %p72
    %p75 = scmp.ne.s32.totalorder %s60, %s74
    %p76 = scmp.eq.s32.totalorder %s15, 0
    %p77 = por %p75, %p76
    %s79 = sadd.s32 %s78, 1
    %p82 = scmp.eq.s32.totalorder %s9, 1
    %p83 = scmp.ne.s32.totalorder %s78, %s80
    %p84 = scmp.eq.s32.totalorder %s9, 0
    %p85 = por %p83, %p84
    %p86 = scmp.ne.s32.totalorder %s78, %s80
    %p87 = scmp.eq.s32.totalorder %s14, 1
    %p88 = por %p86, %p87
    %p89 = scmp.ne.s32.totalorder %s80, %s81
    %p90 = scmp.eq.s32.totalorder %s14, 0
    %p91 = por %p89, %p90
    %p92 = scmp.ne.s32.totalorder %s80, %s81
    %p93 = scmp.eq.s32.totalorder %s15, 1
    %p94 = por %p92, %p93
    %p96 = scmp.ne.s32.totalorder %s81, %s95
    %p97 = scmp.eq.s32.totalorder %s15, 0
    %p98 = por %p96, %p97
    %s99 = ssub.s32 %s16, %s28
    %s100 = ssub.s32 %s17, %s24
    %s101 = sor.u32 %s99, %s100
    %p102 = scmp.eq.s32.totalorder %s101, 0
    %s104 = sadd.s32 %s103, 1
    %s105 = scalar_select %p102, %s103, %s104
    %p108 = pneg %p102
    %p109 = scmp.eq.s32.totalorder %s9, 1
    %p110 = por %p108, %p109
    %p111 = scmp.ne.s32.totalorder %s103, %s106
    %p112 = scmp.eq.s32.totalorder %s9, 0
    %p113 = por %p111, %p112
    %p114 = scmp.ne.s32.totalorder %s103, %s106
    %p115 = scmp.eq.s32.totalorder %s14, 1
    %p116 = por %p114, %p115
    %p117 = scmp.ne.s32.totalorder %s106, %s107
    %p118 = scmp.eq.s32.totalorder %s14, 0
    %p119 = por %p117, %p118
    %p120 = scmp.ne.s32.totalorder %s106, %s107
    %p121 = scmp.eq.s32.totalorder %s15, 1
    %p122 = por %p120, %p121
    %p124 = scmp.ne.s32.totalorder %s107, %s123
    %p125 = scmp.eq.s32.totalorder %s15, 0
    %p126 = por %p124, %p125
    %p127 = scmp.le.s32.totalorder 1, %s9
    %p128 = scmp.lt.s32.totalorder %s9, 3
    %p129 = pnand %p127, %p128
    %p130 = pneg %p129
    // Predicated region
    $region9: #{body_forward.5} parent=5 // pred_check
      _
    $region10: #{body_forward.5} parent=5 // pred_check_branch
      %132 = sbr.rel (%p129) target = $region12
    $region11: #{body_forward.5} parent=5 // pred_region
      %s133 = ssub.s32 %s9, 1
      // Predicated region
      $region13: #{body_forward.5} parent=11 // pred_check
        %p134 = pneg %p70
      $region14: #{body_forward.5} parent=11 // pred_check_branch
        %136 = sbr.rel (%p134) target = $region16
      $region15: #{body_forward.5} parent=11 // pred_region
        _
      $region16: #{body_forward.5} parent=11 // pred_fallthru
        _
      // Predicated region
      $region17: #{body_forward.5} parent=11 // pred_check
        %p137 = pneg %p91
      $region18: #{body_forward.5} parent=11 // pred_check_branch
        %139 = sbr.rel (%p137) target = $region20
      $region19: #{body_forward.5} parent=11 // pred_region
        _
      $region20: #{body_forward.5} parent=11 // pred_fallthru
        _
    $region12: #{body_forward.5} parent=5 // pred_fallthru
      _
    %p140 = scmp.lt.s32.totalorder %s9, 2
    // Predicated region
    $region21: #{body_forward.5} parent=5 // pred_check
      %p141 = pneg %p140
    $region22: #{body_forward.5} parent=5 // pred_check_branch
      %143 = sbr.rel (%p141) target = $region24
    $region23: #{body_forward.5} parent=5 // pred_region
      // Predicated region
      $region25: #{body_forward.5} parent=23 // pred_check
        %p144 = pneg %p43
      $region26: #{body_forward.5} parent=23 // pred_check_branch
        %146 = sbr.rel (%p144) target = $region28
      $region27: #{body_forward.5} parent=23 // pred_region
        %s147 = smul.u32 2, %s17
        %p148 = scmp.lt.s32.totalorder %s16, 1
        %s149 = scalar_select %p148, %s16, 1
        %p150 = scmp.lt.s32.totalorder %s147, 1
        %s151 = scalar_select %p150, %s147, 1
        %s152 = smul.addr %s149, 12
        %s153 = sadd.s32 %s151, %s152
        %s154 = smul.addr %s153, 4
        %s155 = scalar_lea.vmem %s0, %s154
        %s156 = smul.u32 2, %s17
      $region28: #{body_forward.5} parent=23 // pred_fallthru
        _
    $region24: #{body_forward.5} parent=5 // pred_fallthru
      _
    %p157 = scmp.le.s32.totalorder 1, %s9
    %p158 = scmp.lt.s32.totalorder %s9, 3
    %p159 = pnand %p157, %p158
    %p160 = pneg %p159
    // Predicated region
    $region29: #{body_forward.5} parent=5 // pred_check
      _
    $region30: #{body_forward.5} parent=5 // pred_check_branch
      %162 = sbr.rel (%p159) target = $region32
    $region31: #{body_forward.5} parent=5 // pred_region
      %s163 = ssub.s32 %s9, 1
      %s164 = smul.u32 2, %s19
      %p165 = scmp.lt.s32.totalorder %s18, 1
      %s166 = scalar_select %p165, %s18, 1
      %p167 = scmp.lt.s32.totalorder %s164, 1
      %s168 = scalar_select %p167, %s164, 1
      %s169 = smul.addr %s166, 12
      %s170 = sadd.s32 %s168, %s169
      %s171 = smul.addr %s170, 4
      %s172 = scalar_lea.vmem %s0, %s171
      %p173 = pneg %p49
      %p174 = pneg %p46
      %p175 = pneg %p70
      %p176 = pneg %p67
      %p177 = pneg %p91
      %p178 = pneg %p88
      %p179 = pneg %p119
      %p180 = pneg %p116
      %s181 = smul.u32 2, %s19
      %p182 = scmp.lt.s32.totalorder %s18, 1
      %s183 = scalar_select %p182, %s18, 1
      %p184 = scmp.lt.s32.totalorder %s181, 1
      %s185 = scalar_select %p184, %s181, 1
      %s186 = smul.addr %s183, 24
      %s187 = sadd.s32 %s185, %s186
      %s188 = smul.addr %s187, 4
      %s189 = scalar_lea.vmem %s3, %s188
      %s190 = smul.u32 2, %s19
      %p191 = scmp.lt.s32.totalorder %s18, 1
      %s192 = scalar_select %p191, %s18, 1
      %p193 = scmp.lt.s32.totalorder %s190, 1
      %s194 = scalar_select %p193, %s190, 1
      %s195 = smul.addr %s192, 12
      %s196 = sadd.s32 %s194, %s195
      %s197 = smul.addr %s196, 4
      %s198 = scalar_lea.vmem %s0, %s197
      %s199 = smul.u32 2, %s19
      %s200 = smul.u32 2, %s19
      %p201 = scmp.lt.s32.totalorder %s18, 1
      %s202 = scalar_select %p201, %s18, 1
      %p203 = scmp.lt.s32.totalorder %s200, 1
      %s204 = scalar_select %p203, %s200, 1
      %s205 = smul.addr %s202, 24
      %s206 = sadd.s32 %s204, %s205
      %s207 = smul.addr %s206, 4
      %s208 = scalar_lea.vmem %s3, %s207
      %s209 = smul.u32 2, %s19
      %v211 = vld [vmem:[%s1] sm:$0xf]
      %v212 = vld [vmem:[%s1 + $0x4] sm:$0xf]
      %v213 = vld [vmem:[%s1 + $0x8] sm:$0xf]
      %v214 = vld [vmem:[%s1 + $0xc] sm:$0xf]
      %v215 = vld [vmem:[%s1 + $0x10] sm:$0xf]
      %v216 = vld [vmem:[%s1 + $0x14] sm:$0xf]
      %v217 = vld [vmem:[%s1 + $0x18] sm:$0xf]
      %v218 = vld [vmem:[%s1 + $0x1c] sm:$0xf]
      %v219 = vld [vmem:[%s1 + $0x20] sm:$0xf]
      %v220 = vld [vmem:[%s1 + $0x24] sm:$0xf]
      %v221 = vld [vmem:[%s1 + $0x28] sm:$0xf]
      %v222 = vld [vmem:[%s1 + $0x2c] sm:$0xf]
      %v223 = vld [vmem:[%s198] sm:$0xff]
      %v224 = vld [vmem:[%s198 + $0x8] sm:$0xff]
      %v225 = vld [vmem:[%s198 + $0x10] sm:$0xff]
      %v226 = vld [vmem:[%s198 + $0x18] sm:$0xff]
      %v227 = vld [vmem:[%s198 + $0x20] sm:$0xff]
      %v228 = vld [vmem:[%s198 + $0x28] sm:$0xff]
      %v229 = vld [vmem:[%s2] sm:$0xff]
      %v230 = vld [vmem:[%s2 + $0x8] sm:$0xff]
      %v231 = vld [vmem:[%s2 + $0x10] sm:$0xff]
      %v232 = vld [vmem:[%s2 + $0x18] sm:$0xff]
      %v233 = vld [vmem:[%s2 + $0x20] sm:$0xff]
      %v234 = vld [vmem:[%s2 + $0x28] sm:$0xff]
      %v235 = vld [vmem:[%s2 + $0x30] sm:$0xff]
      %v236 = vld [vmem:[%s2 + $0x38] sm:$0xff]
      %v237 = vld [vmem:[%s2 + $0x40] sm:$0xff]
      %v238 = vld [vmem:[%s2 + $0x48] sm:$0xff]
      %v239 = vld [vmem:[%s2 + $0x50] sm:$0xff]
      %v240 = vld [vmem:[%s2 + $0x58] sm:$0xff]
      %242 = vset.pattern.permute.xlu0 0
      %243 = vperm.xlu0 %242, %v229
      %v244 = vpop.permute.xlu0 %243
      %247 = vset.pattern.permute.xlu0 0
      %248 = vperm.xlu0 %247, %v230
      %v249 = vpop.permute.xlu0 %248
      %252 = vset.pattern.permute.xlu0 0
      %253 = vperm.xlu0 %252, %v231
      %v254 = vpop.permute.xlu0 %253
      %257 = vset.pattern.permute.xlu0 0
      %258 = vperm.xlu0 %257, %v232
      %v259 = vpop.permute.xlu0 %258
      %262 = vset.pattern.permute.xlu0 0
      %263 = vperm.xlu0 %262, %v233
      %v264 = vpop.permute.xlu0 %263
      %267 = vset.pattern.permute.xlu0 0
      %268 = vperm.xlu0 %267, %v234
      %v269 = vpop.permute.xlu0 %268
      %272 = vset.pattern.permute.xlu0 0
      %273 = vperm.xlu0 %272, %v235
      %v274 = vpop.permute.xlu0 %273
      %277 = vset.pattern.permute.xlu0 0
      %278 = vperm.xlu0 %277, %v236
      %v279 = vpop.permute.xlu0 %278
      %282 = vset.pattern.permute.xlu0 0
      %283 = vperm.xlu0 %282, %v237
      %v284 = vpop.permute.xlu0 %283
      %287 = vset.pattern.permute.xlu0 0
      %288 = vperm.xlu0 %287, %v238
      %v289 = vpop.permute.xlu0 %288
      %292 = vset.pattern.permute.xlu0 0
      %293 = vperm.xlu0 %292, %v239
      %v294 = vpop.permute.xlu0 %293
      %297 = vset.pattern.permute.xlu0 0
      %298 = vperm.xlu0 %297, %v240
      %v299 = vpop.permute.xlu0 %298
      %v313 = vunpack.c.l.b16 %v211
      %v314 = vunpack.c.l.b16 %v212
      %v315 = vunpack.c.l.b16 %v213
      %v316 = vunpack.c.l.b16 %v214
      %v317 = vunpack.c.l.b16 %v215
      %v318 = vunpack.c.l.b16 %v216
      %v319 = vunpack.c.l.b16 %v217
      %v320 = vunpack.c.l.b16 %v218
      %v321 = vunpack.c.l.b16 %v219
      %v322 = vunpack.c.l.b16 %v220
      %v323 = vunpack.c.l.b16 %v221
      %v324 = vunpack.c.l.b16 %v222
      %v325 = vpack.c.b16 %v314, %v313
      %v326 = vpack.c.b16 %v316, %v315
      %v327 = vpack.c.b16 %v318, %v317
      %v328 = vpack.c.b16 %v320, %v319
      %v329 = vpack.c.b16 %v322, %v321
      %v330 = vpack.c.b16 %v324, %v323
      %v337 = vunpack.c.l.b16 %v223
      %v338 = vunpack.c.h.b16 %v223
      %v339 = vunpack.c.l.b16 %v224
      %v340 = vunpack.c.h.b16 %v224
      %v341 = vunpack.c.l.b16 %v225
      %v342 = vunpack.c.h.b16 %v225
      %v343 = vunpack.c.l.b16 %v226
      %v344 = vunpack.c.h.b16 %v226
      %v345 = vunpack.c.l.b16 %v227
      %v346 = vunpack.c.h.b16 %v227
      %v347 = vunpack.c.l.b16 %v228
      %v348 = vunpack.c.h.b16 %v228
      %v349 = vpack.c.b16 %v339, %v337
      %v350 = vpack.c.b16 %v340, %v338
      %v351 = vpack.c.b16 %v343, %v341
      %v352 = vpack.c.b16 %v344, %v342
      %v353 = vpack.c.b16 %v347, %v345
      %v354 = vpack.c.b16 %v348, %v346
      %vm361 = vcmask 392192
      %v363 = vsel %vm361, %v325, 0
      %v366 = vsel %vm361, %v326, 0
      %v369 = vsel %vm361, %v327, 0
      %v372 = vsel %vm361, %v328, 0
      %v375 = vsel %vm361, %v329, 0
      %v378 = vsel %vm361, %v330, 0
      %380 = vmatprep.subr.bf16.mxu0 %v350
      %381 = vmatpush1.bf16.msra.mxu0 %v349
      %382 = vmatprep.subr.bf16.mxu0 %v352
      %383 = vmatpush1.bf16.msra.mxu0 %v351
      %384 = vmatprep.subr.bf16.mxu0 %v354
      %385 = vmatpush1.bf16.msra.mxu0 %v353
      %386 = vmatprep.subr.bf16.mxu0 0
      %387 = vmatpush1.bf16.msra.mxu0 0
      %388 = vmatprep.subr.bf16.mxu0 0
      %389 = vmatpush1.bf16.msra.mxu0 0
      %390 = vmatprep.subr.bf16.mxu0 0
      %391 = vmatpush1.bf16.msra.mxu0 0
      %392 = vmatprep.subr.bf16.mxu0 0
      %393 = vmatpush1.bf16.msra.mxu0 0
      %394 = vmatprep.subr.bf16.mxu0 0
      %395 = vmatpush1.bf16.msra.mxu0 0
      %396 = vmatprep.subr.bf16.mxu0 0
      %397 = vmatpush1.bf16.msra.mxu0 0
      %398 = vmatprep.subr.bf16.mxu0 0
      %399 = vmatpush1.bf16.msra.mxu0 0
      %400 = vmatprep.subr.bf16.mxu0 0
      %401 = vmatpush1.bf16.msra.mxu0 0
      %402 = vmatprep.subr.bf16.mxu0 0
      %403 = vmatpush1.bf16.msra.mxu0 0
      %404 = vmatprep.subr.bf16.mxu0 0
      %405 = vmatpush1.bf16.msra.mxu0 0
      %406 = vmatprep.subr.bf16.mxu0 0
      %407 = vmatpush1.bf16.msra.mxu0 0
      %408 = vmatprep.subr.bf16.mxu0 0
      %409 = vmatpush1.bf16.msra.mxu0 0
      %410 = vmatprep.subr.bf16.mxu0 0
      %411 = vmatpush1.bf16.msra.mxu0 0
      %412 = vmatprep.mubr.bf16.mxu0 0
      %413 = vmatmul.mubr.bf16.gmra.mrb[0].mxu0 %v363
      %v414 = vpop.f32.mrb[0].mxu0
      %v415 = vadd.f32 %v244, %v414
      %v416 = vpop.f32.mrb[0].mxu0
      %v417 = vadd.f32 %v244, %v416
      %v418 = vpop.f32.mrb[0].mxu0
      %v419 = vadd.f32 %v249, %v418
      %v420 = vpop.f32.mrb[0].mxu0
      %v421 = vadd.f32 %v249, %v420
      %422 = vmatprep.mubr.bf16.mxu0 0
      %423 = vmatmul.mubr.bf16.gmra.mrb[0].mxu0 %v366
      %v424 = vpop.f32.mrb[0].mxu0
      %v425 = vadd.f32 %v254, %v424
      %v426 = vpop.f32.mrb[0].mxu0
      %v427 = vadd.f32 %v254, %v426
      %v428 = vpop.f32.mrb[0].mxu0
      %v429 = vadd.f32 %v259, %v428
      %v430 = vpop.f32.mrb[0].mxu0
      %v431 = vadd.f32 %v259, %v430
      %432 = vmatprep.mubr.bf16.mxu0 0
      %433 = vmatmul.mubr.bf16.gmra.mrb[0].mxu0 %v369
      %v434 = vpop.f32.mrb[0].mxu0
      %v435 = vadd.f32 %v264, %v434
      %v436 = vpop.f32.mrb[0].mxu0
      %v437 = vadd.f32 %v264, %v436
      %v438 = vpop.f32.mrb[0].mxu0
      %v439 = vadd.f32 %v269, %v438
      %v440 = vpop.f32.mrb[0].mxu0
      %v441 = vadd.f32 %v269, %v440
      %442 = vmatprep.mubr.bf16.mxu0 0
      %443 = vmatmul.mubr.bf16.gmra.mrb[0].mxu0 %v372
      %v444 = vpop.f32.mrb[0].mxu0
      %v445 = vadd.f32 %v274, %v444
      %v446 = vpop.f32.mrb[0].mxu0
      %v447 = vadd.f32 %v274, %v446
      %v448 = vpop.f32.mrb[0].mxu0
      %v449 = vadd.f32 %v279, %v448
      %v450 = vpop.f32.mrb[0].mxu0
      %v451 = vadd.f32 %v279, %v450
      %452 = vmatprep.mubr.bf16.mxu0 0
      %453 = vmatmul.mubr.bf16.gmra.mrb[0].mxu0 %v375
      %v454 = vpop.f32.mrb[0].mxu0
      %v455 = vadd.f32 %v284, %v454
      %v456 = vpop.f32.mrb[0].mxu0
      %v457 = vadd.f32 %v284, %v456
      %v458 = vpop.f32.mrb[0].mxu0
      %v459 = vadd.f32 %v289, %v458
      %v460 = vpop.f32.mrb[0].mxu0
      %v461 = vadd.f32 %v289, %v460
      %462 = vmatprep.mubr.bf16.mxu0 0
      %463 = vmatmul.mubr.bf16.gmra.mrb[0].mxu0 %v378
      %v464 = vpop.f32.mrb[0].mxu0
      %v465 = vadd.f32 %v294, %v464
      %v466 = vpop.f32.mrb[0].mxu0
      %v467 = vadd.f32 %v294, %v466
      %v468 = vpop.f32.mrb[0].mxu0
      %v469 = vadd.f32 %v299, %v468
      %v470 = vpop.f32.mrb[0].mxu0
      %v471 = vadd.f32 %v299, %v470
      %472 = vdwg.mxu0
      %v473 = vpack.c.bf16 %v419, %v415
      %v474 = vpack.c.bf16 %v421, %v417
      %v475 = vpack.c.bf16 %v429, %v425
      %v476 = vpack.c.bf16 %v431, %v427
      %v477 = vpack.c.bf16 %v439, %v435
      %v478 = vpack.c.bf16 %v441, %v437
      %v479 = vpack.c.bf16 %v449, %v445
      %v480 = vpack.c.bf16 %v451, %v447
      %v481 = vpack.c.bf16 %v459, %v455
      %v482 = vpack.c.bf16 %v461, %v457
      %v483 = vpack.c.bf16 %v469, %v465
      %v484 = vpack.c.bf16 %v471, %v467
      %v497 = vunpack.c.l.b16 %v473
      %v498 = vunpack.c.l.b16 %v474
      %v499 = vunpack.c.h.b16 %v473
      %v500 = vunpack.c.h.b16 %v474
      %v501 = vunpack.c.l.b16 %v475
      %v502 = vunpack.c.l.b16 %v476
      %v503 = vunpack.c.h.b16 %v475
      %v504 = vunpack.c.h.b16 %v476
      %v505 = vunpack.c.l.b16 %v477
      %v506 = vunpack.c.l.b16 %v478
      %v507 = vunpack.c.h.b16 %v477
      %v508 = vunpack.c.h.b16 %v478
      %v509 = vunpack.c.l.b16 %v479
      %v510 = vunpack.c.l.b16 %v480
      %v511 = vunpack.c.h.b16 %v479
      %v512 = vunpack.c.h.b16 %v480
      %v513 = vunpack.c.l.b16 %v481
      %v514 = vunpack.c.l.b16 %v482
      %v515 = vunpack.c.h.b16 %v481
      %v516 = vunpack.c.h.b16 %v482
      %v517 = vunpack.c.l.b16 %v483
      %v518 = vunpack.c.l.b16 %v484
      %v519 = vunpack.c.h.b16 %v483
      %v520 = vunpack.c.h.b16 %v484
      %v521 = vpack.c.b16 %v498, %v497
      %v522 = vpack.c.b16 %v500, %v499
      %v523 = vpack.c.b16 %v502, %v501
      %v524 = vpack.c.b16 %v504, %v503
      %v525 = vpack.c.b16 %v506, %v505
      %v526 = vpack.c.b16 %v508, %v507
      %v527 = vpack.c.b16 %v510, %v509
      %v528 = vpack.c.b16 %v512, %v511
      %v529 = vpack.c.b16 %v514, %v513
      %v530 = vpack.c.b16 %v516, %v515
      %v531 = vpack.c.b16 %v518, %v517
      %v532 = vpack.c.b16 %v520, %v519
      %545 = vst [vmem:[%s208] sm:$0xff] %v521
      %546 = vst [vmem:[%s208 + $0x8] sm:$0xff] %v522
      %547 = vst [vmem:[%s208 + $0x10] sm:$0xff] %v523
      %548 = vst [vmem:[%s208 + $0x18] sm:$0xff] %v524
      %549 = vst [vmem:[%s208 + $0x20] sm:$0xff] %v525
      %550 = vst [vmem:[%s208 + $0x28] sm:$0xff] %v526
      %551 = vst [vmem:[%s208 + $0x30] sm:$0xff] %v527
      %552 = vst [vmem:[%s208 + $0x38] sm:$0xff] %v528
      %553 = vst [vmem:[%s208 + $0x40] sm:$0xff] %v529
      %554 = vst [vmem:[%s208 + $0x48] sm:$0xff] %v530
      %555 = vst [vmem:[%s208 + $0x50] sm:$0xff] %v531
      %556 = vst [vmem:[%s208 + $0x58] sm:$0xff] %v532
      %s557 = smul.u32 2, %s19
      %p558 = scmp.lt.s32.totalorder %s18, 1
      %s559 = scalar_select %p558, %s18, 1
      %p560 = scmp.lt.s32.totalorder %s557, 1
      %s561 = scalar_select %p560, %s557, 1
      %s562 = smul.addr %s559, 24
      %s563 = sadd.s32 %s561, %s562
      %s564 = smul.addr %s563, 4
      %s565 = scalar_lea.vmem %s3, %s564
      // Predicated region
      $region33: #{body_forward.5} parent=31 // pred_check
        %p566 = pneg %p116
      $region34: #{body_forward.5} parent=31 // pred_check_branch
        %568 = sbr.rel (%p566) target = $region36
      $region35: #{body_forward.5} parent=31 // pred_region
        %s569 = smul.u32 2, %s19
      $region36: #{body_forward.5} parent=31 // pred_fallthru
        _
    $region32: #{body_forward.5} parent=5 // pred_fallthru
      _
    %p570 = scmp.le.s32.totalorder 2, %s9
    // Predicated region
    $region37: #{body_forward.5} parent=5 // pred_check
      %p571 = pneg %p570
    $region38: #{body_forward.5} parent=5 // pred_check_branch
      %573 = sbr.rel (%p571) target = $region40
    $region39: #{body_forward.5} parent=5 // pred_region
      %s574 = ssub.s32 %s9, 2
      // Predicated region
      $region41: #{body_forward.5} parent=39 // pred_check
        %p575 = pneg %p122
      $region42: #{body_forward.5} parent=39 // pred_check_branch
        %577 = sbr.rel (%p575) target = $region44
      $region43: #{body_forward.5} parent=39 // pred_region
        %s578 = smul.u32 2, %s21
        %p579 = scmp.lt.s32.totalorder %s20, 1
        %s580 = scalar_select %p579, %s20, 1
        %p581 = scmp.lt.s32.totalorder %s578, 1
        %s582 = scalar_select %p581, %s578, 1
        %s583 = smul.addr %s580, 24
        %s584 = sadd.s32 %s582, %s583
        %s585 = smul.addr %s584, 4
        %s586 = scalar_lea.vmem %s3, %s585
      $region44: #{body_forward.5} parent=39 // pred_fallthru
        _
    $region40: #{body_forward.5} parent=5 // pred_fallthru
      _
  $region6: #{body_forward.5} parent=0 // loop_footer
    %s13 = sadd.s32 1, %s9
  $region7: #{body_forward.5} parent=0 // loop_footer_branch
    %8 = sbr.rel target = $region3
  $region8: #{body_forward.5} parent=0 // loop_exit
    _

// kernel: squeeze.7
$region0: #{squeeze.7}
  %s0 = inlined_call_operand.vmem [shape: bf16[1,2,256,16], index: 0, kind: input, shape index: {}]
  %s1 = inlined_call_operand.vmem [shape: bf16[2,16,16,16], index: 1, kind: output, shape index: {}]
  $region1: #{squeeze.7} parent=0
    #allocation0 [shape = 'u8[262144]{0}', space=vmem, size = 0x40000, scoped, tag = 'scoped mem for output reshape']
    #allocation1 [shape = 'u8[32768]{0}', space=vmem, size = 0x8000, scoped, tag = 'scoped mem for input reshape']
    %s3 = smul.u32 4, 2
    %s4 = sshllo.u32 0, %s3
    %s5 = smul.addr 4, 7
    %s6 = scalar_lea.vmem %s0, %s5
    %s7 = sshrl.u32 %s4, 1
    %s8 = sor.u32 %s4, %s7
    %s9 = sand.u32 %s8, 85
    %s10 = sshrl.u32 %s9, 1
    %s11 = sor.u32 %s9, %s10
    %s12 = sand.u32 51, %s11
    %s13 = sshrl.u32 %s12, 2
    %s14 = sor.u32 %s12, %s13
    %s15 = sand.u32 15, %s14
    %v16 = vld [vmem:[%s6] sm:%s15]
    %v17 = vunpack.c.l.bf16 %v16
    %v18 = vunpack.c.h.bf16 %v16
    %s19 = scalar_lea.vmem [#allocation1], 56
    %20 = vst [vmem:[%s19] sm:%s4] %v17
    %s21 = smul.addr 4, 6
    %s22 = scalar_lea.vmem %s0, %s21
    %s23 = sshrl.u32 %s4, 1
    %s24 = sor.u32 %s4, %s23
    %s25 = sand.u32 %s24, 85
    %s26 = sshrl.u32 %s25, 1
    %s27 = sor.u32 %s25, %s26
    %s28 = sand.u32 51, %s27
    %s29 = sshrl.u32 %s28, 2
    %s30 = sor.u32 %s28, %s29
    %s31 = sand.u32 15, %s30
    %v32 = vld [vmem:[%s22] sm:%s31]
    %v33 = vunpack.c.l.bf16 %v32
    %v34 = vunpack.c.h.bf16 %v32
    %s35 = scalar_lea.vmem [#allocation1], 48
    %36 = vst [vmem:[%s35] sm:%s4] %v33
    %s37 = smul.addr 4, 5
    %s38 = scalar_lea.vmem %s0, %s37
    %s39 = sshrl.u32 %s4, 1
    %s40 = sor.u32 %s4, %s39
    %s41 = sand.u32 %s40, 85
    %s42 = sshrl.u32 %s41, 1
    %s43 = sor.u32 %s41, %s42
    %s44 = sand.u32 51, %s43
    %s45 = sshrl.u32 %s44, 2
    %s46 = sor.u32 %s44, %s45
    %s47 = sand.u32 15, %s46
    %v48 = vld [vmem:[%s38] sm:%s47]
    %v49 = vunpack.c.l.bf16 %v48
    %v50 = vunpack.c.h.bf16 %v48
    %s51 = scalar_lea.vmem [#allocation1], 40
    %52 = vst [vmem:[%s51] sm:%s4] %v49
    %s53 = smul.addr 4, 4
    %s54 = scalar_lea.vmem %s0, %s53
    %s55 = sshrl.u32 %s4, 1
    %s56 = sor.u32 %s4, %s55
    %s57 = sand.u32 %s56, 85
    %s58 = sshrl.u32 %s57, 1
    %s59 = sor.u32 %s57, %s58
    %s60 = sand.u32 51, %s59
    %s61 = sshrl.u32 %s60, 2
    %s62 = sor.u32 %s60, %s61
    %s63 = sand.u32 15, %s62
    %v64 = vld [vmem:[%s54] sm:%s63]
    %v65 = vunpack.c.l.bf16 %v64
    %v66 = vunpack.c.h.bf16 %v64
    %s67 = scalar_lea.vmem [#allocation1], 32
    %68 = vst [vmem:[%s67] sm:%s4] %v65
    %s69 = smul.addr 4, 3
    %s70 = scalar_lea.vmem %s0, %s69
    %s71 = sshrl.u32 %s4, 1
    %s72 = sor.u32 %s4, %s71
    %s73 = sand.u32 %s72, 85
    %s74 = sshrl.u32 %s73, 1
    %s75 = sor.u32 %s73, %s74
    %s76 = sand.u32 51, %s75
    %s77 = sshrl.u32 %s76, 2
    %s78 = sor.u32 %s76, %s77
    %s79 = sand.u32 15, %s78
    %v80 = vld [vmem:[%s70] sm:%s79]
    %v81 = vunpack.c.l.bf16 %v80
    %v82 = vunpack.c.h.bf16 %v80
    %s83 = scalar_lea.vmem [#allocation1], 24
    %84 = vst [vmem:[%s83] sm:%s4] %v81
    %s85 = smul.addr 4, 2
    %s86 = scalar_lea.vmem %s0, %s85
    %s87 = sshrl.u32 %s4, 1
    %s88 = sor.u32 %s4, %s87
    %s89 = sand.u32 %s88, 85
    %s90 = sshrl.u32 %s89, 1
    %s91 = sor.u32 %s89, %s90
    %s92 = sand.u32 51, %s91
    %s93 = sshrl.u32 %s92, 2
    %s94 = sor.u32 %s92, %s93
    %s95 = sand.u32 15, %s94
    %v96 = vld [vmem:[%s86] sm:%s95]
    %v97 = vunpack.c.l.bf16 %v96
    %v98 = vunpack.c.h.bf16 %v96
    %s99 = scalar_lea.vmem [#allocation1], 16
    %100 = vst [vmem:[%s99] sm:%s4] %v97
    %s101 = scalar_lea.vmem %s0, 4
    %s102 = sshrl.u32 %s4, 1
    %s103 = sor.u32 %s4, %s102
    %s104 = sand.u32 %s103, 85
    %s105 = sshrl.u32 %s104, 1
    %s106 = sor.u32 %s104, %s105
    %s107 = sand.u32 51, %s106
    %s108 = sshrl.u32 %s107, 2
    %s109 = sor.u32 %s107, %s108
    %s110 = sand.u32 15, %s109
    %v111 = vld [vmem:[%s101] sm:%s110]
    %v112 = vunpack.c.l.bf16 %v111
    %v113 = vunpack.c.h.bf16 %v111
    %s114 = scalar_lea.vmem [#allocation1], 8
    %115 = vst [vmem:[%s114] sm:%s4] %v112
    %s116 = sshrl.u32 %s4, 1
    %s117 = sor.u32 %s4, %s116
    %s118 = sand.u32 %s117, 85
    %s119 = sshrl.u32 %s118, 1
    %s120 = sor.u32 %s118, %s119
    %s121 = sand.u32 51, %s120
    %s122 = sshrl.u32 %s121, 2
    %s123 = sor.u32 %s121, %s122
    %s124 = sand.u32 15, %s123
    %v125 = vld [vmem:[%s0] sm:%s124]
    %v126 = vunpack.c.l.bf16 %v125
    %v127 = vunpack.c.h.bf16 %v125
    %128 = vst [vmem:[#allocation1] sm:%s4] %v126
    %v129 = vld [vmem:[#allocation1] sm:$0xff]
    %vm130 = vcmask 130048
    %131 = vst.msk [vmem:[#allocation0] ss:$16 sm:$0x3] %vm130, %v129
    %132 = vst.msk [vmem:[#allocation0] ss:$16 sm:$0xc] %vm130, %v129
    %133 = vst.msk [vmem:[#allocation0] ss:$16 sm:$0x30] %vm130, %v129
    %134 = vst.msk [vmem:[#allocation0] ss:$16 sm:$0xc0] %vm130, %v129
    %s135 = scalar_lea.vmem [#allocation1], 8
    %v136 = vld [vmem:[%s135] sm:$0xff]
    %vm137 = vcmask 130048
    %s138 = scalar_lea.vmem [#allocation0], 8
    %139 = vst.msk [vmem:[%s138] ss:$16 sm:$0x3] %vm137, %v136
    %s140 = scalar_lea.vmem [#allocation0], 8
    %141 = vst.msk [vmem:[%s140] ss:$16 sm:$0xc] %vm137, %v136
    %s142 = scalar_lea.vmem [#allocation0], 8
    %143 = vst.msk [vmem:[%s142] ss:$16 sm:$0x30] %vm137, %v136
    %s144 = scalar_lea.vmem [#allocation0], 8
    %145 = vst.msk [vmem:[%s144] ss:$16 sm:$0xc0] %vm137, %v136
    %s146 = scalar_lea.vmem [#allocation1], 16
    %v147 = vld [vmem:[%s146] sm:$0xff]
    %vm148 = vcmask 130048
    %s149 = scalar_lea.vmem [#allocation0], 128
    %150 = vst.msk [vmem:[%s149] ss:$16 sm:$0x3] %vm148, %v147
    %s151 = scalar_lea.vmem [#allocation0], 128
    %152 = vst.msk [vmem:[%s151] ss:$16 sm:$0xc] %vm148, %v147
    %s153 = scalar_lea.vmem [#allocation0], 128
    %154 = vst.msk [vmem:[%s153] ss:$16 sm:$0x30] %vm148, %v147
    %s155 = scalar_lea.vmem [#allocation0], 128
    %156 = vst.msk [vmem:[%s155] ss:$16 sm:$0xc0] %vm148, %v147
    %s157 = scalar_lea.vmem [#allocation1], 24
    %v158 = vld [vmem:[%s157] sm:$0xff]
    %vm159 = vcmask 130048
    %s160 = scalar_lea.vmem [#allocation0], 136
    %161 = vst.msk [vmem:[%s160] ss:$16 sm:$0x3] %vm159, %v158
    %s162 = scalar_lea.vmem [#allocation0], 136
    %163 = vst.msk [vmem:[%s162] ss:$16 sm:$0xc] %vm159, %v158
    %s164 = scalar_lea.vmem [#allocation0], 136
    %165 = vst.msk [vmem:[%s164] ss:$16 sm:$0x30] %vm159, %v158
    %s166 = scalar_lea.vmem [#allocation0], 136
    %167 = vst.msk [vmem:[%s166] ss:$16 sm:$0xc0] %vm159, %v158
    %s168 = scalar_lea.vmem [#allocation1], 32
    %v169 = vld [vmem:[%s168] sm:$0xff]
    %vm170 = vcmask 130048
    %s171 = scalar_lea.vmem [#allocation0], 256
    %172 = vst.msk [vmem:[%s171] ss:$16 sm:$0x3] %vm170, %v169
    %s173 = scalar_lea.vmem [#allocation0], 256
    %174 = vst.msk [vmem:[%s173] ss:$16 sm:$0xc] %vm170, %v169
    %s175 = scalar_lea.vmem [#allocation0], 256
    %176 = vst.msk [vmem:[%s175] ss:$16 sm:$0x30] %vm170, %v169
    %s177 = scalar_lea.vmem [#allocation0], 256
    %178 = vst.msk [vmem:[%s177] ss:$16 sm:$0xc0] %vm170, %v169
    %s179 = scalar_lea.vmem [#allocation1], 40
    %v180 = vld [vmem:[%s179] sm:$0xff]
    %vm181 = vcmask 130048
    %s182 = scalar_lea.vmem [#allocation0], 264
    %183 = vst.msk [vmem:[%s182] ss:$16 sm:$0x3] %vm181, %v180
    %s184 = scalar_lea.vmem [#allocation0], 264
    %185 = vst.msk [vmem:[%s184] ss:$16 sm:$0xc] %vm181, %v180
    %s186 = scalar_lea.vmem [#allocation0], 264
    %187 = vst.msk [vmem:[%s186] ss:$16 sm:$0x30] %vm181, %v180
    %s188 = scalar_lea.vmem [#allocation0], 264
    %189 = vst.msk [vmem:[%s188] ss:$16 sm:$0xc0] %vm181, %v180
    %s190 = scalar_lea.vmem [#allocation1], 48
    %v191 = vld [vmem:[%s190] sm:$0xff]
    %vm192 = vcmask 130048
    %s193 = scalar_lea.vmem [#allocation0], 384
    %194 = vst.msk [vmem:[%s193] ss:$16 sm:$0x3] %vm192, %v191
    %s195 = scalar_lea.vmem [#allocation0], 384
    %196 = vst.msk [vmem:[%s195] ss:$16 sm:$0xc] %vm192, %v191
    %s197 = scalar_lea.vmem [#allocation0], 384
    %198 = vst.msk [vmem:[%s197] ss:$16 sm:$0x30] %vm192, %v191
    %s199 = scalar_lea.vmem [#allocation0], 384
    %200 = vst.msk [vmem:[%s199] ss:$16 sm:$0xc0] %vm192, %v191
    %s201 = scalar_lea.vmem [#allocation1], 56
    %v202 = vld [vmem:[%s201] sm:$0xff]
    %vm203 = vcmask 130048
    %s204 = scalar_lea.vmem [#allocation0], 392
    %205 = vst.msk [vmem:[%s204] ss:$16 sm:$0x3] %vm203, %v202
    %s206 = scalar_lea.vmem [#allocation0], 392
    %207 = vst.msk [vmem:[%s206] ss:$16 sm:$0xc] %vm203, %v202
    %s208 = scalar_lea.vmem [#allocation0], 392
    %209 = vst.msk [vmem:[%s208] ss:$16 sm:$0x30] %vm203, %v202
    %s210 = scalar_lea.vmem [#allocation0], 392
    %211 = vst.msk [vmem:[%s210] ss:$16 sm:$0xc0] %vm203, %v202
    %v212 = vld.sshfl [vmem:[#allocation1] sm:$0xff pattern:$0xb3a29180]
    %213 = vrot.lane.b32.xlu0 %v212, 112
    %v214 = vpop.permute.xlu0 %213
    %vm215 = vcmask 130048
    %s216 = scalar_lea.vmem [#allocation0], 1
    %217 = vst.msk [vmem:[%s216] ss:$8 sm:$0xf] %vm215, %v214
    %s218 = scalar_lea.vmem [#allocation0], 1
    %219 = vst.msk [vmem:[%s218] ss:$8 sm:$0xf0] %vm215, %v214
    %s220 = scalar_lea.vmem [#allocation1], 4
    %v221 = vld.sshfl [vmem:[%s220] sm:$0xff pattern:$0xb3a29180]
    %222 = vrot.lane.b32.xlu0 %v221, 112
    %v223 = vpop.permute.xlu0 %222
    %vm224 = vcmask 130048
    %s225 = scalar_lea.vmem [#allocation0], 65
    %226 = vst.msk [vmem:[%s225] ss:$8 sm:$0xf] %vm224, %v223
    %s227 = scalar_lea.vmem [#allocation0], 65
    %228 = vst.msk [vmem:[%s227] ss:$8 sm:$0xf0] %vm224, %v223
    %s229 = scalar_lea.vmem [#allocation1], 16
    %v230 = vld.sshfl [vmem:[%s229] sm:$0xff pattern:$0xb3a29180]
    %231 = vrot.lane.b32.xlu0 %v230, 112
    %v232 = vpop.permute.xlu0 %231
    %vm233 = vcmask 130048
    %s234 = scalar_lea.vmem [#allocation0], 129
    %235 = vst.msk [vmem:[%s234] ss:$8 sm:$0xf] %vm233, %v232
    %s236 = scalar_lea.vmem [#allocation0], 129
    %237 = vst.msk [vmem:[%s236] ss:$8 sm:$0xf0] %vm233, %v232
    %s238 = scalar_lea.vmem [#allocation1], 20
    %v239 = vld.sshfl [vmem:[%s238] sm:$0xff pattern:$0xb3a29180]
    %240 = vrot.lane.b32.xlu0 %v239, 112
    %v241 = vpop.permute.xlu0 %240
    %vm242 = vcmask 130048
    %s243 = scalar_lea.vmem [#allocation0], 193
    %244 = vst.msk [vmem:[%s243] ss:$8 sm:$0xf] %vm242, %v241
    %s245 = scalar_lea.vmem [#allocation0], 193
    %246 = vst.msk [vmem:[%s245] ss:$8 sm:$0xf0] %vm242, %v241
    %s247 = scalar_lea.vmem [#allocation1], 32
    %v248 = vld.sshfl [vmem:[%s247] sm:$0xff pattern:$0xb3a29180]
    %249 = vrot.lane.b32.xlu0 %v248, 112
    %v250 = vpop.permute.xlu0 %249
    %vm251 = vcmask 130048
    %s252 = scalar_lea.vmem [#allocation0], 257
    %253 = vst.msk [vmem:[%s252] ss:$8 sm:$0xf] %vm251, %v250
    %s254 = scalar_lea.vmem [#allocation0], 257
    %255 = vst.msk [vmem:[%s254] ss:$8 sm:$0xf0] %vm251, %v250
    %s256 = scalar_lea.vmem [#allocation1], 36
    %v257 = vld.sshfl [vmem:[%s256] sm:$0xff pattern:$0xb3a29180]
    %258 = vrot.lane.b32.xlu0 %v257, 112
    %v259 = vpop.permute.xlu0 %258
    %vm260 = vcmask 130048
    %s261 = scalar_lea.vmem [#allocation0], 321
    %262 = vst.msk [vmem:[%s261] ss:$8 sm:$0xf] %vm260, %v259
    %s263 = scalar_lea.vmem [#allocation0], 321
    %264 = vst.msk [vmem:[%s263] ss:$8 sm:$0xf0] %vm260, %v259
    %s265 = scalar_lea.vmem [#allocation1], 48
    %v266 = vld.sshfl [vmem:[%s265] sm:$0xff pattern:$0xb3a29180]
    %267 = vrot.lane.b32.xlu0 %v266, 112
    %v268 = vpop.permute.xlu0 %267
    %vm269 = vcmask 130048
    %s270 = scalar_lea.vmem [#allocation0], 385
    %271 = vst.msk [vmem:[%s270] ss:$8 sm:$0xf] %vm269, %v268
    %s272 = scalar_lea.vmem [#allocation0], 385
    %273 = vst.msk [vmem:[%s272] ss:$8 sm:$0xf0] %vm269, %v268
    %s274 = scalar_lea.vmem [#allocation1], 52
    %v275 = vld.sshfl [vmem:[%s274] sm:$0xff pattern:$0xb3a29180]
    %276 = vrot.lane.b32.xlu0 %v275, 112
    %v277 = vpop.permute.xlu0 %276
    %vm278 = vcmask 130048
    %s279 = scalar_lea.vmem [#allocation0], 449
    %280 = vst.msk [vmem:[%s279] ss:$8 sm:$0xf] %vm278, %v277
    %s281 = scalar_lea.vmem [#allocation0], 449
    %282 = vst.msk [vmem:[%s281] ss:$8 sm:$0xf0] %vm278, %v277
    %v283 = vld.sshfl [vmem:[#allocation1] sm:$0xff pattern:$0xb3a29180]
    %284 = vrot.lane.b32.xlu0 %v283, 96
    %v285 = vpop.permute.xlu0 %284
    %vm286 = vcmask 130048
    %s287 = scalar_lea.vmem [#allocation0], 2
    %288 = vst.msk [vmem:[%s287] ss:$8 sm:$0xf] %vm286, %v285
    %s289 = scalar_lea.vmem [#allocation0], 2
    %290 = vst.msk [vmem:[%s289] ss:$8 sm:$0xf0] %vm286, %v285
    %s291 = scalar_lea.vmem [#allocation1], 4
    %v292 = vld.sshfl [vmem:[%s291] sm:$0xff pattern:$0xb3a29180]
    %293 = vrot.lane.b32.xlu0 %v292, 96
    %v294 = vpop.permute.xlu0 %293
    %vm295 = vcmask 130048
    %s296 = scalar_lea.vmem [#allocation0], 66
    %297 = vst.msk [vmem:[%s296] ss:$8 sm:$0xf] %vm295, %v294
    %s298 = scalar_lea.vmem [#allocation0], 66
    %299 = vst.msk [vmem:[%s298] ss:$8 sm:$0xf0] %vm295, %v294
    %s300 = scalar_lea.vmem [#allocation1], 16
    %v301 = vld.sshfl [vmem:[%s300] sm:$0xff pattern:$0xb3a29180]
    %302 = vrot.lane.b32.xlu0 %v301, 96
    %v303 = vpop.permute.xlu0 %302
    %vm304 = vcmask 130048
    %s305 = scalar_lea.vmem [#allocation0], 130
    %306 = vst.msk [vmem:[%s305] ss:$8 sm:$0xf] %vm304, %v303
    %s307 = scalar_lea.vmem [#allocation0], 130
    %308 = vst.msk [vmem:[%s307] ss:$8 sm:$0xf0] %vm304, %v303
    %s309 = scalar_lea.vmem [#allocation1], 20
    %v310 = vld.sshfl [vmem:[%s309] sm:$0xff pattern:$0xb3a29180]
    %311 = vrot.lane.b32.xlu0 %v310, 96
    %v312 = vpop.permute.xlu0 %311
    %vm313 = vcmask 130048
    %s314 = scalar_lea.vmem [#allocation0], 194
    %315 = vst.msk [vmem:[%s314] ss:$8 sm:$0xf] %vm313, %v312
    %s316 = scalar_lea.vmem [#allocation0], 194
    %317 = vst.msk [vmem:[%s316] ss:$8 sm:$0xf0] %vm313, %v312
    %s318 = scalar_lea.vmem [#allocation1], 32
    %v319 = vld.sshfl [vmem:[%s318] sm:$0xff pattern:$0xb3a29180]
    %320 = vrot.lane.b32.xlu0 %v319, 96
    %v321 = vpop.permute.xlu0 %320
    %vm322 = vcmask 130048
    %s323 = scalar_lea.vmem [#allocation0], 258
    %324 = vst.msk [vmem:[%s323] ss:$8 sm:$0xf] %vm322, %v321
    %s325 = scalar_lea.vmem [#allocation0], 258
    %326 = vst.msk [vmem:[%s325] ss:$8 sm:$0xf0] %vm322, %v321
    %s327 = scalar_lea.vmem [#allocation1], 36
    %v328 = vld.sshfl [vmem:[%s327] sm:$0xff pattern:$0xb3a29180]
    %329 = vrot.lane.b32.xlu0 %v328, 96
    %v330 = vpop.permute.xlu0 %329
    %vm331 = vcmask 130048
    %s332 = scalar_lea.vmem [#allocation0], 322
    %333 = vst.msk [vmem:[%s332] ss:$8 sm:$0xf] %vm331, %v330
    %s334 = scalar_lea.vmem [#allocation0], 322
    %335 = vst.msk [vmem:[%s334] ss:$8 sm:$0xf0] %vm331, %v330
    %s336 = scalar_lea.vmem [#allocation1], 48
    %v337 = vld.sshfl [vmem:[%s336] sm:$0xff pattern:$0xb3a29180]
    %338 = vrot.lane.b32.xlu0 %v337, 96
    %v339 = vpop.permute.xlu0 %338
    %vm340 = vcmask 130048
    %s341 = scalar_lea.vmem [#allocation0], 386
    %342 = vst.msk [vmem:[%s341] ss:$8 sm:$0xf] %vm340, %v339
    %s343 = scalar_lea.vmem [#allocation0], 386
    %344 = vst.msk [vmem:[%s343] ss:$8 sm:$0xf0] %vm340, %v339
    %s345 = scalar_lea.vmem [#allocation1], 52
    %v346 = vld.sshfl [vmem:[%s345] sm:$0xff pattern:$0xb3a29180]
    %347 = vrot.lane.b32.xlu0 %v346, 96
    %v348 = vpop.permute.xlu0 %347
    %vm349 = vcmask 130048
    %s350 = scalar_lea.vmem [#allocation0], 450
    %351 = vst.msk [vmem:[%s350] ss:$8 sm:$0xf] %vm349, %v348
    %s352 = scalar_lea.vmem [#allocation0], 450
    %353 = vst.msk [vmem:[%s352] ss:$8 sm:$0xf0] %vm349, %v348
    %v354 = vld.sshfl [vmem:[#allocation1] sm:$0xff pattern:$0xb3a29180]
    %355 = vrot.lane.b32.xlu0 %v354, 80
    %v356 = vpop.permute.xlu0 %355
    %vm357 = vcmask 130048
    %s358 = scalar_lea.vmem [#allocation0], 3
    %359 = vst.msk [vmem:[%s358] ss:$8 sm:$0xf] %vm357, %v356
    %s360 = scalar_lea.vmem [#allocation0], 3
    %361 = vst.msk [vmem:[%s360] ss:$8 sm:$0xf0] %vm357, %v356
    %s362 = scalar_lea.vmem [#allocation1], 4
    %v363 = vld.sshfl [vmem:[%s362] sm:$0xff pattern:$0xb3a29180]
    %364 = vrot.lane.b32.xlu0 %v363, 80
    %v365 = vpop.permute.xlu0 %364
    %vm366 = vcmask 130048
    %s367 = scalar_lea.vmem [#allocation0], 67
    %368 = vst.msk [vmem:[%s367] ss:$8 sm:$0xf] %vm366, %v365
    %s369 = scalar_lea.vmem [#allocation0], 67
    %370 = vst.msk [vmem:[%s369] ss:$8 sm:$0xf0] %vm366, %v365
    %s371 = scalar_lea.vmem [#allocation1], 16
    %v372 = vld.sshfl [vmem:[%s371] sm:$0xff pattern:$0xb3a29180]
    %373 = vrot.lane.b32.xlu0 %v372, 80
    %v374 = vpop.permute.xlu0 %373
    %vm375 = vcmask 130048
    %s376 = scalar_lea.vmem [#allocation0], 131
    %377 = vst.msk [vmem:[%s376] ss:$8 sm:$0xf] %vm375, %v374
    %s378 = scalar_lea.vmem [#allocation0], 131
    %379 = vst.msk [vmem:[%s378] ss:$8 sm:$0xf0] %vm375, %v374
    %s380 = scalar_lea.vmem [#allocation1], 20
    %v381 = vld.sshfl [vmem:[%s380] sm:$0xff pattern:$0xb3a29180]
    %382 = vrot.lane.b32.xlu0 %v381, 80
    %v383 = vpop.permute.xlu0 %382
    %vm384 = vcmask 130048
    %s385 = scalar_lea.vmem [#allocation0], 195
    %386 = vst.msk [vmem:[%s385] ss:$8 sm:$0xf] %vm384, %v383
    %s387 = scalar_lea.vmem [#allocation0], 195
    %388 = vst.msk [vmem:[%s387] ss:$8 sm:$0xf0] %vm384, %v383
    %s389 = scalar_lea.vmem [#allocation1], 32
    %v390 = vld.sshfl [vmem:[%s389] sm:$0xff pattern:$0xb3a29180]
    %391 = vrot.lane.b32.xlu0 %v390, 80
    %v392 = vpop.permute.xlu0 %391
    %vm393 = vcmask 130048
    %s394 = scalar_lea.vmem [#allocation0], 259
    %395 = vst.msk [vmem:[%s394] ss:$8 sm:$0xf] %vm393, %v392
    %s396 = scalar_lea.vmem [#allocation0], 259
    %397 = vst.msk [vmem:[%s396] ss:$8 sm:$0xf0] %vm393, %v392
    %s398 = scalar_lea.vmem [#allocation1], 36
    %v399 = vld.sshfl [vmem:[%s398] sm:$0xff pattern:$0xb3a29180]
    %400 = vrot.lane.b32.xlu0 %v399, 80
    %v401 = vpop.permute.xlu0 %400
    %vm402 = vcmask 130048
    %s403 = scalar_lea.vmem [#allocation0], 323
    %404 = vst.msk [vmem:[%s403] ss:$8 sm:$0xf] %vm402, %v401
    %s405 = scalar_lea.vmem [#allocation0], 323
    %406 = vst.msk [vmem:[%s405] ss:$8 sm:$0xf0] %vm402, %v401
    %s407 = scalar_lea.vmem [#allocation1], 48
    %v408 = vld.sshfl [vmem:[%s407] sm:$0xff pattern:$0xb3a29180]
    %409 = vrot.lane.b32.xlu0 %v408, 80
    %v410 = vpop.permute.xlu0 %409
    %vm411 = vcmask 130048
    %s412 = scalar_lea.vmem [#allocation0], 387
    %413 = vst.msk [vmem:[%s412] ss:$8 sm:$0xf] %vm411, %v410
    %s414 = scalar_lea.vmem [#allocation0], 387
    %415 = vst.msk [vmem:[%s414] ss:$8 sm:$0xf0] %vm411, %v410
    %s416 = scalar_lea.vmem [#allocation1], 52
    %v417 = vld.sshfl [vmem:[%s416] sm:$0xff pattern:$0xb3a29180]
    %418 = vrot.lane.b32.xlu0 %v417, 80
    %v419 = vpop.permute.xlu0 %418
    %vm420 = vcmask 130048
    %s421 = scalar_lea.vmem [#allocation0], 451
    %422 = vst.msk [vmem:[%s421] ss:$8 sm:$0xf] %vm420, %v419
    %s423 = scalar_lea.vmem [#allocation0], 451
    %424 = vst.msk [vmem:[%s423] ss:$8 sm:$0xf0] %vm420, %v419
    %v425 = vld.sshfl [vmem:[#allocation1] sm:$0xff pattern:$0xb3a29180]
    %426 = vrot.lane.b32.xlu0 %v425, 64
    %v427 = vpop.permute.xlu0 %426
    %vm428 = vcmask 130048
    %s429 = scalar_lea.vmem [#allocation0], 4
    %430 = vst.msk [vmem:[%s429] ss:$8 sm:$0xf] %vm428, %v427
    %s431 = scalar_lea.vmem [#allocation0], 4
    %432 = vst.msk [vmem:[%s431] ss:$8 sm:$0xf0] %vm428, %v427
    %s433 = scalar_lea.vmem [#allocation1], 4
    %v434 = vld.sshfl [vmem:[%s433] sm:$0xff pattern:$0xb3a29180]
    %435 = vrot.lane.b32.xlu0 %v434, 64
    %v436 = vpop.permute.xlu0 %435
    %vm437 = vcmask 130048
    %s438 = scalar_lea.vmem [#allocation0], 68
    %439 = vst.msk [vmem:[%s438] ss:$8 sm:$0xf] %vm437, %v436
    %s440 = scalar_lea.vmem [#allocation0], 68
    %441 = vst.msk [vmem:[%s440] ss:$8 sm:$0xf0] %vm437, %v436
    %s442 = scalar_lea.vmem [#allocation1], 16
    %v443 = vld.sshfl [vmem:[%s442] sm:$0xff pattern:$0xb3a29180]
    %444 = vrot.lane.b32.xlu0 %v443, 64
    %v445 = vpop.permute.xlu0 %444
    %vm446 = vcmask 130048
    %s447 = scalar_lea.vmem [#allocation0], 132
    %448 = vst.msk [vmem:[%s447] ss:$8 sm:$0xf] %vm446, %v445
    %s449 = scalar_lea.vmem [#allocation0], 132
    %450 = vst.msk [vmem:[%s449] ss:$8 sm:$0xf0] %vm446, %v445
    %s451 = scalar_lea.vmem [#allocation1], 20
    %v452 = vld.sshfl [vmem:[%s451] sm:$0xff pattern:$0xb3a29180]
    %453 = vrot.lane.b32.xlu0 %v452, 64
    %v454 = vpop.permute.xlu0 %453
    %vm455 = vcmask 130048
    %s456 = scalar_lea.vmem [#allocation0], 196
    %457 = vst.msk [vmem:[%s456] ss:$8 sm:$0xf] %vm455, %v454
    %s458 = scalar_lea.vmem [#allocation0], 196
    %459 = vst.msk [vmem:[%s458] ss:$8 sm:$0xf0] %vm455, %v454
    %s460 = scalar_lea.vmem [#allocation1], 32
    %v461 = vld.sshfl [vmem:[%s460] sm:$0xff pattern:$0xb3a29180]
    %462 = vrot.lane.b32.xlu0 %v461, 64
    %v463 = vpop.permute.xlu0 %462
    %vm464 = vcmask 130048
    %s465 = scalar_lea.vmem [#allocation0], 260
    %466 = vst.msk [vmem:[%s465] ss:$8 sm:$0xf] %vm464, %v463
    %s467 = scalar_lea.vmem [#allocation0], 260
    %468 = vst.msk [vmem:[%s467] ss:$8 sm:$0xf0] %vm464, %v463
    %s469 = scalar_lea.vmem [#allocation1], 36
    %v470 = vld.sshfl [vmem:[%s469] sm:$0xff pattern:$0xb3a29180]
    %471 = vrot.lane.b32.xlu0 %v470, 64
    %v472 = vpop.permute.xlu0 %471
    %vm473 = vcmask 130048
    %s474 = scalar_lea.vmem [#allocation0], 324
    %475 = vst.msk [vmem:[%s474] ss:$8 sm:$0xf] %vm473, %v472
    %s476 = scalar_lea.vmem [#allocation0], 324
    %477 = vst.msk [vmem:[%s476] ss:$8 sm:$0xf0] %vm473, %v472
    %s478 = scalar_lea.vmem [#allocation1], 48
    %v479 = vld.sshfl [vmem:[%s478] sm:$0xff pattern:$0xb3a29180]
    %480 = vrot.lane.b32.xlu0 %v479, 64
    %v481 = vpop.permute.xlu0 %480
    %vm482 = vcmask 130048
    %s483 = scalar_lea.vmem [#allocation0], 388
    %484 = vst.msk [vmem:[%s483] ss:$8 sm:$0xf] %vm482, %v481
    %s485 = scalar_lea.vmem [#allocation0], 388
    %486 = vst.msk [vmem:[%s485] ss:$8 sm:$0xf0] %vm482, %v481
    %s487 = scalar_lea.vmem [#allocation1], 52
    %v488 = vld.sshfl [vmem:[%s487] sm:$0xff pattern:$0xb3a29180]
    %489 = vrot.lane.b32.xlu0 %v488, 64
    %v490 = vpop.permute.xlu0 %489
    %vm491 = vcmask 130048
    %s492 = scalar_lea.vmem [#allocation0], 452
    %493 = vst.msk [vmem:[%s492] ss:$8 sm:$0xf] %vm491, %v490
    %s494 = scalar_lea.vmem [#allocation0], 452
    %495 = vst.msk [vmem:[%s494] ss:$8 sm:$0xf0] %vm491, %v490
    %v496 = vld.sshfl [vmem:[#allocation1] sm:$0xff pattern:$0xb3a29180]
    %497 = vrot.lane.b32.xlu0 %v496, 48
    %v498 = vpop.permute.xlu0 %497
    %vm499 = vcmask 130048
    %s500 = scalar_lea.vmem [#allocation0], 5
    %501 = vst.msk [vmem:[%s500] ss:$8 sm:$0xf] %vm499, %v498
    %s502 = scalar_lea.vmem [#allocation0], 5
    %503 = vst.msk [vmem:[%s502] ss:$8 sm:$0xf0] %vm499, %v498
    %s504 = scalar_lea.vmem [#allocation1], 4
    %v505 = vld.sshfl [vmem:[%s504] sm:$0xff pattern:$0xb3a29180]
    %506 = vrot.lane.b32.xlu0 %v505, 48
    %v507 = vpop.permute.xlu0 %506
    %vm508 = vcmask 130048
    %s509 = scalar_lea.vmem [#allocation0], 69
    %510 = vst.msk [vmem:[%s509] ss:$8 sm:$0xf] %vm508, %v507
    %s511 = scalar_lea.vmem [#allocation0], 69
    %512 = vst.msk [vmem:[%s511] ss:$8 sm:$0xf0] %vm508, %v507
    %s513 = scalar_lea.vmem [#allocation1], 16
    %v514 = vld.sshfl [vmem:[%s513] sm:$0xff pattern:$0xb3a29180]
    %515 = vrot.lane.b32.xlu0 %v514, 48
    %v516 = vpop.permute.xlu0 %515
    %vm517 = vcmask 130048
    %s518 = scalar_lea.vmem [#allocation0], 133
    %519 = vst.msk [vmem:[%s518] ss:$8 sm:$0xf] %vm517, %v516
    %s520 = scalar_lea.vmem [#allocation0], 133
    %521 = vst.msk [vmem:[%s520] ss:$8 sm:$0xf0] %vm517, %v516
    %s522 = scalar_lea.vmem [#allocation1], 20
    %v523 = vld.sshfl [vmem:[%s522] sm:$0xff pattern:$0xb3a29180]
    %524 = vrot.lane.b32.xlu0 %v523, 48
    %v525 = vpop.permute.xlu0 %524
    %vm526 = vcmask 130048
    %s527 = scalar_lea.vmem [#allocation0], 197
    %528 = vst.msk [vmem:[%s527] ss:$8 sm:$0xf] %vm526, %v525
    %s529 = scalar_lea.vmem [#allocation0], 197
    %530 = vst.msk [vmem:[%s529] ss:$8 sm:$0xf0] %vm526, %v525
    %s531 = scalar_lea.vmem [#allocation1], 32
    %v532 = vld.sshfl [vmem:[%s531] sm:$0xff pattern:$0xb3a29180]
    %533 = vrot.lane.b32.xlu0 %v532, 48
    %v534 = vpop.permute.xlu0 %533
    %vm535 = vcmask 130048
    %s536 = scalar_lea.vmem [#allocation0], 261
    %537 = vst.msk [vmem:[%s536] ss:$8 sm:$0xf] %vm535, %v534
    %s538 = scalar_lea.vmem [#allocation0], 261
    %539 = vst.msk [vmem:[%s538] ss:$8 sm:$0xf0] %vm535, %v534
    %s540 = scalar_lea.vmem [#allocation1], 36
    %v541 = vld.sshfl [vmem:[%s540] sm:$0xff pattern:$0xb3a29180]
    %542 = vrot.lane.b32.xlu0 %v541, 48
    %v543 = vpop.permute.xlu0 %542
    %vm544 = vcmask 130048
    %s545 = scalar_lea.vmem [#allocation0], 325
    %546 = vst.msk [vmem:[%s545] ss:$8 sm:$0xf] %vm544, %v543
    %s547 = scalar_lea.vmem [#allocation0], 325
    %548 = vst.msk [vmem:[%s547] ss:$8 sm:$0xf0] %vm544, %v543
    %s549 = scalar_lea.vmem [#allocation1], 48
    %v550 = vld.sshfl [vmem:[%s549] sm:$0xff pattern:$0xb3a29180]
    %551 = vrot.lane.b32.xlu0 %v550, 48
    %v552 = vpop.permute.xlu0 %551
    %vm553 = vcmask 130048
    %s554 = scalar_lea.vmem [#allocation0], 389
    %555 = vst.msk [vmem:[%s554] ss:$8 sm:$0xf] %vm553, %v552
    %s556 = scalar_lea.vmem [#allocation0], 389
    %557 = vst.msk [vmem:[%s556] ss:$8 sm:$0xf0] %vm553, %v552
    %s558 = scalar_lea.vmem [#allocation1], 52
    %v559 = vld.sshfl [vmem:[%s558] sm:$0xff pattern:$0xb3a29180]
    %560 = vrot.lane.b32.xlu0 %v559, 48
    %v561 = vpop.permute.xlu0 %560
    %vm562 = vcmask 130048
    %s563 = scalar_lea.vmem [#allocation0], 453
    %564 = vst.msk [vmem:[%s563] ss:$8 sm:$0xf] %vm562, %v561
    %s565 = scalar_lea.vmem [#allocation0], 453
    %566 = vst.msk [vmem:[%s565] ss:$8 sm:$0xf0] %vm562, %v561
    %v567 = vld.sshfl [vmem:[#allocation1] sm:$0xff pattern:$0xb3a29180]
    %568 = vrot.lane.b32.xlu0 %v567, 32
    %v569 = vpop.permute.xlu0 %568
    %vm570 = vcmask 130048
    %s571 = scalar_lea.vmem [#allocation0], 6
    %572 = vst.msk [vmem:[%s571] ss:$8 sm:$0xf] %vm570, %v569
    %s573 = scalar_lea.vmem [#allocation0], 6
    %574 = vst.msk [vmem:[%s573] ss:$8 sm:$0xf0] %vm570, %v569
    %s575 = scalar_lea.vmem [#allocation1], 4
    %v576 = vld.sshfl [vmem:[%s575] sm:$0xff pattern:$0xb3a29180]
    %577 = vrot.lane.b32.xlu0 %v576, 32
    %v578 = vpop.permute.xlu0 %577
    %vm579 = vcmask 130048
    %s580 = scalar_lea.vmem [#allocation0], 70
    %581 = vst.msk [vmem:[%s580] ss:$8 sm:$0xf] %vm579, %v578
    %s582 = scalar_lea.vmem [#allocation0], 70
    %583 = vst.msk [vmem:[%s582] ss:$8 sm:$0xf0] %vm579, %v578
    %s584 = scalar_lea.vmem [#allocation1], 16
    %v585 = vld.sshfl [vmem:[%s584] sm:$0xff pattern:$0xb3a29180]
    %586 = vrot.lane.b32.xlu0 %v585, 32
    %v587 = vpop.permute.xlu0 %586
    %vm588 = vcmask 130048
    %s589 = scalar_lea.vmem [#allocation0], 134
    %590 = vst.msk [vmem:[%s589] ss:$8 sm:$0xf] %vm588, %v587
    %s591 = scalar_lea.vmem [#allocation0], 134
    %592 = vst.msk [vmem:[%s591] ss:$8 sm:$0xf0] %vm588, %v587
    %s593 = scalar_lea.vmem [#allocation1], 20
    %v594 = vld.sshfl [vmem:[%s593] sm:$0xff pattern:$0xb3a29180]
    %595 = vrot.lane.b32.xlu0 %v594, 32
    %v596 = vpop.permute.xlu0 %595
    %vm597 = vcmask 130048
    %s598 = scalar_lea.vmem [#allocation0], 198
    %599 = vst.msk [vmem:[%s598] ss:$8 sm:$0xf] %vm597, %v596
    %s600 = scalar_lea.vmem [#allocation0], 198
    %601 = vst.msk [vmem:[%s600] ss:$8 sm:$0xf0] %vm597, %v596
    %s602 = scalar_lea.vmem [#allocation1], 32
    %v603 = vld.sshfl [vmem:[%s602] sm:$0xff pattern:$0xb3a29180]
    %604 = vrot.lane.b32.xlu0 %v603, 32
    %v605 = vpop.permute.xlu0 %604
    %vm606 = vcmask 130048
    %s607 = scalar_lea.vmem [#allocation0], 262
    %608 = vst.msk [vmem:[%s607] ss:$8 sm:$0xf] %vm606, %v605
    %s609 = scalar_lea.vmem [#allocation0], 262
    %610 = vst.msk [vmem:[%s609] ss:$8 sm:$0xf0] %vm606, %v605
    %s611 = scalar_lea.vmem [#allocation1], 36
    %v612 = vld.sshfl [vmem:[%s611] sm:$0xff pattern:$0xb3a29180]
    %613 = vrot.lane.b32.xlu0 %v612, 32
    %v614 = vpop.permute.xlu0 %613
    %vm615 = vcmask 130048
    %s616 = scalar_lea.vmem [#allocation0], 326
    %617 = vst.msk [vmem:[%s616] ss:$8 sm:$0xf] %vm615, %v614
    %s618 = scalar_lea.vmem [#allocation0], 326
    %619 = vst.msk [vmem:[%s618] ss:$8 sm:$0xf0] %vm615, %v614
    %s620 = scalar_lea.vmem [#allocation1], 48
    %v621 = vld.sshfl [vmem:[%s620] sm:$0xff pattern:$0xb3a29180]
    %622 = vrot.lane.b32.xlu0 %v621, 32
    %v623 = vpop.permute.xlu0 %622
    %vm624 = vcmask 130048
    %s625 = scalar_lea.vmem [#allocation0], 390
    %626 = vst.msk [vmem:[%s625] ss:$8 sm:$0xf] %vm624, %v623
    %s627 = scalar_lea.vmem [#allocation0], 390
    %628 = vst.msk [vmem:[%s627] ss:$8 sm:$0xf0] %vm624, %v623
    %s629 = scalar_lea.vmem [#allocation1], 52
    %v630 = vld.sshfl [vmem:[%s629] sm:$0xff pattern:$0xb3a29180]
    %631 = vrot.lane.b32.xlu0 %v630, 32
    %v632 = vpop.permute.xlu0 %631
    %vm633 = vcmask 130048
    %s634 = scalar_lea.vmem [#allocation0], 454
    %635 = vst.msk [vmem:[%s634] ss:$8 sm:$0xf] %vm633, %v632
    %s636 = scalar_lea.vmem [#allocation0], 454
    %637 = vst.msk [vmem:[%s636] ss:$8 sm:$0xf0] %vm633, %v632
    %v638 = vld.sshfl [vmem:[#allocation1] sm:$0xff pattern:$0xb3a29180]
    %639 = vrot.lane.b32.xlu0 %v638, 16
    %v640 = vpop.permute.xlu0 %639
    %vm641 = vcmask 130048
    %s642 = scalar_lea.vmem [#allocation0], 7
    %643 = vst.msk [vmem:[%s642] ss:$8 sm:$0xf] %vm641, %v640
    %s644 = scalar_lea.vmem [#allocation0], 7
    %645 = vst.msk [vmem:[%s644] ss:$8 sm:$0xf0] %vm641, %v640
    %s646 = scalar_lea.vmem [#allocation1], 4
    %v647 = vld.sshfl [vmem:[%s646] sm:$0xff pattern:$0xb3a29180]
    %648 = vrot.lane.b32.xlu0 %v647, 16
    %v649 = vpop.permute.xlu0 %648
    %vm650 = vcmask 130048
    %s651 = scalar_lea.vmem [#allocation0], 71
    %652 = vst.msk [vmem:[%s651] ss:$8 sm:$0xf] %vm650, %v649
    %s653 = scalar_lea.vmem [#allocation0], 71
    %654 = vst.msk [vmem:[%s653] ss:$8 sm:$0xf0] %vm650, %v649
    %s655 = scalar_lea.vmem [#allocation1], 16
    %v656 = vld.sshfl [vmem:[%s655] sm:$0xff pattern:$0xb3a29180]
    %657 = vrot.lane.b32.xlu0 %v656, 16
    %v658 = vpop.permute.xlu0 %657
    %vm659 = vcmask 130048
    %s660 = scalar_lea.vmem [#allocation0], 135
    %661 = vst.msk [vmem:[%s660] ss:$8 sm:$0xf] %vm659, %v658
    %s662 = scalar_lea.vmem [#allocation0], 135
    %663 = vst.msk [vmem:[%s662] ss:$8 sm:$0xf0] %vm659, %v658
    %s664 = scalar_lea.vmem [#allocation1], 20
    %v665 = vld.sshfl [vmem:[%s664] sm:$0xff pattern:$0xb3a29180]
    %666 = vrot.lane.b32.xlu0 %v665, 16
    %v667 = vpop.permute.xlu0 %666
    %vm668 = vcmask 130048
    %s669 = scalar_lea.vmem [#allocation0], 199
    %670 = vst.msk [vmem:[%s669] ss:$8 sm:$0xf] %vm668, %v667
    %s671 = scalar_lea.vmem [#allocation0], 199
    %672 = vst.msk [vmem:[%s671] ss:$8 sm:$0xf0] %vm668, %v667
    %s673 = scalar_lea.vmem [#allocation1], 32
    %v674 = vld.sshfl [vmem:[%s673] sm:$0xff pattern:$0xb3a29180]
    %675 = vrot.lane.b32.xlu0 %v674, 16
    %v676 = vpop.permute.xlu0 %675
    %vm677 = vcmask 130048
    %s678 = scalar_lea.vmem [#allocation0], 263
    %679 = vst.msk [vmem:[%s678] ss:$8 sm:$0xf] %vm677, %v676
    %s680 = scalar_lea.vmem [#allocation0], 263
    %681 = vst.msk [vmem:[%s680] ss:$8 sm:$0xf0] %vm677, %v676
    %s682 = scalar_lea.vmem [#allocation1], 36
    %v683 = vld.sshfl [vmem:[%s682] sm:$0xff pattern:$0xb3a29180]
    %684 = vrot.lane.b32.xlu0 %v683, 16
    %v685 = vpop.permute.xlu0 %684
    %vm686 = vcmask 130048
    %s687 = scalar_lea.vmem [#allocation0], 327
    %688 = vst.msk [vmem:[%s687] ss:$8 sm:$0xf] %vm686, %v685
    %s689 = scalar_lea.vmem [#allocation0], 327
    %690 = vst.msk [vmem:[%s689] ss:$8 sm:$0xf0] %vm686, %v685
    %s691 = scalar_lea.vmem [#allocation1], 48
    %v692 = vld.sshfl [vmem:[%s691] sm:$0xff pattern:$0xb3a29180]
    %693 = vrot.lane.b32.xlu0 %v692, 16
    %v694 = vpop.permute.xlu0 %693
    %vm695 = vcmask 130048
    %s696 = scalar_lea.vmem [#allocation0], 391
    %697 = vst.msk [vmem:[%s696] ss:$8 sm:$0xf] %vm695, %v694
    %s698 = scalar_lea.vmem [#allocation0], 391
    %699 = vst.msk [vmem:[%s698] ss:$8 sm:$0xf0] %vm695, %v694
    %s700 = scalar_lea.vmem [#allocation1], 52
    %v701 = vld.sshfl [vmem:[%s700] sm:$0xff pattern:$0xb3a29180]
    %702 = vrot.lane.b32.xlu0 %v701, 16
    %v703 = vpop.permute.xlu0 %702
    %vm704 = vcmask 130048
    %s705 = scalar_lea.vmem [#allocation0], 455
    %706 = vst.msk [vmem:[%s705] ss:$8 sm:$0xf] %vm704, %v703
    %s707 = scalar_lea.vmem [#allocation0], 455
    %708 = vst.msk [vmem:[%s707] ss:$8 sm:$0xf0] %vm704, %v703
    %s710 = smul.u32 4, 2
    %s711 = sshllo.u32 0, %s710
    %s712 = sshrl.u32 %s710, 1
    %v713 = vld [vmem:[#allocation0] sm:%s711]
    %v714 = vpack.c.bf16 0.0, %v713
    %s715 = sshllo.u32 0, %s712
    %716 = vst [vmem:[%s1] sm:%s715] %v714
    %s717 = scalar_lea.vmem [#allocation0], 8
    %v718 = vld [vmem:[%s717] sm:%s711]
    %v719 = vpack.c.bf16 0.0, %v718
    %s720 = sshllo.u32 0, %s712
    %s721 = scalar_lea.vmem %s1, 4
    %722 = vst [vmem:[%s721] sm:%s720] %v719
    %s723 = scalar_lea.vmem [#allocation0], 16
    %v724 = vld [vmem:[%s723] sm:%s711]
    %v725 = vpack.c.bf16 0.0, %v724
    %s726 = sshllo.u32 0, %s712
    %s727 = smul.addr 4, 2
    %s728 = scalar_lea.vmem %s1, %s727
    %729 = vst [vmem:[%s728] sm:%s726] %v725
    %s730 = scalar_lea.vmem [#allocation0], 24
    %v731 = vld [vmem:[%s730] sm:%s711]
    %v732 = vpack.c.bf16 0.0, %v731
    %s733 = sshllo.u32 0, %s712
    %s734 = smul.addr 4, 3
    %s735 = scalar_lea.vmem %s1, %s734
    %736 = vst [vmem:[%s735] sm:%s733] %v732
    %s737 = scalar_lea.vmem [#allocation0], 32
    %v738 = vld [vmem:[%s737] sm:%s711]
    %v739 = vpack.c.bf16 0.0, %v738
    %s740 = sshllo.u32 0, %s712
    %s741 = smul.addr 4, 4
    %s742 = scalar_lea.vmem %s1, %s741
    %743 = vst [vmem:[%s742] sm:%s740] %v739
    %s744 = scalar_lea.vmem [#allocation0], 40
    %v745 = vld [vmem:[%s744] sm:%s711]
    %v746 = vpack.c.bf16 0.0, %v745
    %s747 = sshllo.u32 0, %s712
    %s748 = smul.addr 4, 5
    %s749 = scalar_lea.vmem %s1, %s748
    %750 = vst [vmem:[%s749] sm:%s747] %v746
    %s751 = scalar_lea.vmem [#allocation0], 48
    %v752 = vld [vmem:[%s751] sm:%s711]
    %v753 = vpack.c.bf16 0.0, %v752
    %s754 = sshllo.u32 0, %s712
    %s755 = smul.addr 4, 6
    %s756 = scalar_lea.vmem %s1, %s755
    %757 = vst [vmem:[%s756] sm:%s754] %v753
    %s758 = scalar_lea.vmem [#allocation0], 56
    %v759 = vld [vmem:[%s758] sm:%s711]
    %v760 = vpack.c.bf16 0.0, %v759
    %s761 = sshllo.u32 0, %s712
    %s762 = smul.addr 4, 7
    %s763 = scalar_lea.vmem %s1, %s762
    %764 = vst [vmem:[%s763] sm:%s761] %v760
    %s765 = scalar_lea.vmem [#allocation0], 64
    %v766 = vld [vmem:[%s765] sm:%s711]
    %v767 = vpack.c.bf16 0.0, %v766
    %s768 = sshllo.u32 0, %s712
    %s769 = smul.addr 4, 8
    %s770 = scalar_lea.vmem %s1, %s769
    %771 = vst [vmem:[%s770] sm:%s768] %v767
    %s772 = scalar_lea.vmem [#allocation0], 72
    %v773 = vld [vmem:[%s772] sm:%s711]
    %v774 = vpack.c.bf16 0.0, %v773
    %s775 = sshllo.u32 0, %s712
    %s776 = smul.addr 4, 9
    %s777 = scalar_lea.vmem %s1, %s776
    %778 = vst [vmem:[%s777] sm:%s775] %v774
    %s779 = scalar_lea.vmem [#allocation0], 80
    %v780 = vld [vmem:[%s779] sm:%s711]
    %v781 = vpack.c.bf16 0.0, %v780
    %s782 = sshllo.u32 0, %s712
    %s783 = smul.addr 4, 10
    %s784 = scalar_lea.vmem %s1, %s783
    %785 = vst [vmem:[%s784] sm:%s782] %v781
    %s786 = scalar_lea.vmem [#allocation0], 88
    %v787 = vld [vmem:[%s786] sm:%s711]
    %v788 = vpack.c.bf16 0.0, %v787
    %s789 = sshllo.u32 0, %s712
    %s790 = smul.addr 4, 11
    %s791 = scalar_lea.vmem %s1, %s790
    %792 = vst [vmem:[%s791] sm:%s789] %v788
    %s793 = scalar_lea.vmem [#allocation0], 96
    %v794 = vld [vmem:[%s793] sm:%s711]
    %v795 = vpack.c.bf16 0.0, %v794
    %s796 = sshllo.u32 0, %s712
    %s797 = smul.addr 4, 12
    %s798 = scalar_lea.vmem %s1, %s797
    %799 = vst [vmem:[%s798] sm:%s796] %v795
    %s800 = scalar_lea.vmem [#allocation0], 104
    %v801 = vld [vmem:[%s800] sm:%s711]
    %v802 = vpack.c.bf16 0.0, %v801
    %s803 = sshllo.u32 0, %s712
    %s804 = smul.addr 4, 13
    %s805 = scalar_lea.vmem %s1, %s804
    %806 = vst [vmem:[%s805] sm:%s803] %v802
    %s807 = scalar_lea.vmem [#allocation0], 112
    %v808 = vld [vmem:[%s807] sm:%s711]
    %v809 = vpack.c.bf16 0.0, %v808
    %s810 = sshllo.u32 0, %s712
    %s811 = smul.addr 4, 14
    %s812 = scalar_lea.vmem %s1, %s811
    %813 = vst [vmem:[%s812] sm:%s810] %v809
    %s814 = scalar_lea.vmem [#allocation0], 120
    %v815 = vld [vmem:[%s814] sm:%s711]
    %v816 = vpack.c.bf16 0.0, %v815
    %s817 = sshllo.u32 0, %s712
    %s818 = smul.addr 4, 15
    %s819 = scalar_lea.vmem %s1, %s818
    %820 = vst [vmem:[%s819] sm:%s817] %v816
    %s821 = scalar_lea.vmem [#allocation0], 128
    %v822 = vld [vmem:[%s821] sm:%s711]
    %v823 = vpack.c.bf16 0.0, %v822
    %s824 = sshllo.u32 0, %s712
    %s825 = smul.addr 4, 16
    %s826 = scalar_lea.vmem %s1, %s825
    %827 = vst [vmem:[%s826] sm:%s824] %v823
    %s828 = scalar_lea.vmem [#allocation0], 136
    %v829 = vld [vmem:[%s828] sm:%s711]
    %v830 = vpack.c.bf16 0.0, %v829
    %s831 = sshllo.u32 0, %s712
    %s832 = smul.addr 4, 17
    %s833 = scalar_lea.vmem %s1, %s832
    %834 = vst [vmem:[%s833] sm:%s831] %v830
    %s835 = scalar_lea.vmem [#allocation0], 144
    %v836 = vld [vmem:[%s835] sm:%s711]
    %v837 = vpack.c.bf16 0.0, %v836
    %s838 = sshllo.u32 0, %s712
    %s839 = smul.addr 4, 18
    %s840 = scalar_lea.vmem %s1, %s839
    %841 = vst [vmem:[%s840] sm:%s838] %v837
    %s842 = scalar_lea.vmem [#allocation0], 152
    %v843 = vld [vmem:[%s842] sm:%s711]
    %v844 = vpack.c.bf16 0.0, %v843
    %s845 = sshllo.u32 0, %s712
    %s846 = smul.addr 4, 19
    %s847 = scalar_lea.vmem %s1, %s846
    %848 = vst [vmem:[%s847] sm:%s845] %v844
    %s849 = scalar_lea.vmem [#allocation0], 160
    %v850 = vld [vmem:[%s849] sm:%s711]
    %v851 = vpack.c.bf16 0.0, %v850
    %s852 = sshllo.u32 0, %s712
    %s853 = smul.addr 4, 20
    %s854 = scalar_lea.vmem %s1, %s853
    %855 = vst [vmem:[%s854] sm:%s852] %v851
    %s856 = scalar_lea.vmem [#allocation0], 168
    %v857 = vld [vmem:[%s856] sm:%s711]
    %v858 = vpack.c.bf16 0.0, %v857
    %s859 = sshllo.u32 0, %s712
    %s860 = smul.addr 4, 21
    %s861 = scalar_lea.vmem %s1, %s860
    %862 = vst [vmem:[%s861] sm:%s859] %v858
    %s863 = scalar_lea.vmem [#allocation0], 176
    %v864 = vld [vmem:[%s863] sm:%s711]
    %v865 = vpack.c.bf16 0.0, %v864
    %s866 = sshllo.u32 0, %s712
    %s867 = smul.addr 4, 22
    %s868 = scalar_lea.vmem %s1, %s867
    %869 = vst [vmem:[%s868] sm:%s866] %v865
    %s870 = scalar_lea.vmem [#allocation0], 184
    %v871 = vld [vmem:[%s870] sm:%s711]
    %v872 = vpack.c.bf16 0.0, %v871
    %s873 = sshllo.u32 0, %s712
    %s874 = smul.addr 4, 23
    %s875 = scalar_lea.vmem %s1, %s874
    %876 = vst [vmem:[%s875] sm:%s873] %v872
    %s877 = scalar_lea.vmem [#allocation0], 192
    %v878 = vld [vmem:[%s877] sm:%s711]
    %v879 = vpack.c.bf16 0.0, %v878
    %s880 = sshllo.u32 0, %s712
    %s881 = smul.addr 4, 24
    %s882 = scalar_lea.vmem %s1, %s881
    %883 = vst [vmem:[%s882] sm:%s880] %v879
    %s884 = scalar_lea.vmem [#allocation0], 200
    %v885 = vld [vmem:[%s884] sm:%s711]
    %v886 = vpack.c.bf16 0.0, %v885
    %s887 = sshllo.u32 0, %s712
    %s888 = smul.addr 4, 25
    %s889 = scalar_lea.vmem %s1, %s888
    %890 = vst [vmem:[%s889] sm:%s887] %v886
    %s891 = scalar_lea.vmem [#allocation0], 208
    %v892 = vld [vmem:[%s891] sm:%s711]
    %v893 = vpack.c.bf16 0.0, %v892
    %s894 = sshllo.u32 0, %s712
    %s895 = smul.addr 4, 26
    %s896 = scalar_lea.vmem %s1, %s895
    %897 = vst [vmem:[%s896] sm:%s894] %v893
    %s898 = scalar_lea.vmem [#allocation0], 216
    %v899 = vld [vmem:[%s898] sm:%s711]
    %v900 = vpack.c.bf16 0.0, %v899
    %s901 = sshllo.u32 0, %s712
    %s902 = smul.addr 4, 27
    %s903 = scalar_lea.vmem %s1, %s902
    %904 = vst [vmem:[%s903] sm:%s901] %v900
    %s905 = scalar_lea.vmem [#allocation0], 224
    %v906 = vld [vmem:[%s905] sm:%s711]
    %v907 = vpack.c.bf16 0.0, %v906
    %s908 = sshllo.u32 0, %s712
    %s909 = smul.addr 4, 28
    %s910 = scalar_lea.vmem %s1, %s909
    %911 = vst [vmem:[%s910] sm:%s908] %v907
    %s912 = scalar_lea.vmem [#allocation0], 232
    %v913 = vld [vmem:[%s912] sm:%s711]
    %v914 = vpack.c.bf16 0.0, %v913
    %s915 = sshllo.u32 0, %s712
    %s916 = smul.addr 4, 29
    %s917 = scalar_lea.vmem %s1, %s916
    %918 = vst [vmem:[%s917] sm:%s915] %v914
    %s919 = scalar_lea.vmem [#allocation0], 240
    %v920 = vld [vmem:[%s919] sm:%s711]
    %v921 = vpack.c.bf16 0.0, %v920
    %s922 = sshllo.u32 0, %s712
    %s923 = smul.addr 4, 30
    %s924 = scalar_lea.vmem %s1, %s923
    %925 = vst [vmem:[%s924] sm:%s922] %v921
    %s926 = scalar_lea.vmem [#allocation0], 248
    %v927 = vld [vmem:[%s926] sm:%s711]
    %v928 = vpack.c.bf16 0.0, %v927
    %s929 = sshllo.u32 0, %s712
    %s930 = smul.addr 4, 31
    %s931 = scalar_lea.vmem %s1, %s930
    %932 = vst [vmem:[%s931] sm:%s929] %v928
    %s933 = scalar_lea.vmem [#allocation0], 256
    %v934 = vld [vmem:[%s933] sm:%s711]
    %v935 = vpack.c.bf16 0.0, %v934
    %s936 = sshllo.u32 0, %s712
    %s937 = smul.addr 4, 32
    %s938 = scalar_lea.vmem %s1, %s937
    %939 = vst [vmem:[%s938] sm:%s936] %v935
    %s940 = scalar_lea.vmem [#allocation0], 264
    %v941 = vld [vmem:[%s940] sm:%s711]
    %v942 = vpack.c.bf16 0.0, %v941
    %s943 = sshllo.u32 0, %s712
    %s944 = smul.addr 4, 33
    %s945 = scalar_lea.vmem %s1, %s944
    %946 = vst [vmem:[%s945] sm:%s943] %v942
    %s947 = scalar_lea.vmem [#allocation0], 272
    %v948 = vld [vmem:[%s947] sm:%s711]
    %v949 = vpack.c.bf16 0.0, %v948
    %s950 = sshllo.u32 0, %s712
    %s951 = smul.addr 4, 34
    %s952 = scalar_lea.vmem %s1, %s951
    %953 = vst [vmem:[%s952] sm:%s950] %v949
    %s954 = scalar_lea.vmem [#allocation0], 280
    %v955 = vld [vmem:[%s954] sm:%s711]
    %v956 = vpack.c.bf16 0.0, %v955
    %s957 = sshllo.u32 0, %s712
    %s958 = smul.addr 4, 35
    %s959 = scalar_lea.vmem %s1, %s958
    %960 = vst [vmem:[%s959] sm:%s957] %v956
    %s961 = scalar_lea.vmem [#allocation0], 288
    %v962 = vld [vmem:[%s961] sm:%s711]
    %v963 = vpack.c.bf16 0.0, %v962
    %s964 = sshllo.u32 0, %s712
    %s965 = smul.addr 4, 36
    %s966 = scalar_lea.vmem %s1, %s965
    %967 = vst [vmem:[%s966] sm:%s964] %v963
    %s968 = scalar_lea.vmem [#allocation0], 296
    %v969 = vld [vmem:[%s968] sm:%s711]
    %v970 = vpack.c.bf16 0.0, %v969
    %s971 = sshllo.u32 0, %s712
    %s972 = smul.addr 4, 37
    %s973 = scalar_lea.vmem %s1, %s972
    %974 = vst [vmem:[%s973] sm:%s971] %v970
    %s975 = scalar_lea.vmem [#allocation0], 304
    %v976 = vld [vmem:[%s975] sm:%s711]
    %v977 = vpack.c.bf16 0.0, %v976
    %s978 = sshllo.u32 0, %s712
    %s979 = smul.addr 4, 38
    %s980 = scalar_lea.vmem %s1, %s979
    %981 = vst [vmem:[%s980] sm:%s978] %v977
    %s982 = scalar_lea.vmem [#allocation0], 312
    %v983 = vld [vmem:[%s982] sm:%s711]
    %v984 = vpack.c.bf16 0.0, %v983
    %s985 = sshllo.u32 0, %s712
    %s986 = smul.addr 4, 39
    %s987 = scalar_lea.vmem %s1, %s986
    %988 = vst [vmem:[%s987] sm:%s985] %v984
    %s989 = scalar_lea.vmem [#allocation0], 320
    %v990 = vld [vmem:[%s989] sm:%s711]
    %v991 = vpack.c.bf16 0.0, %v990
    %s992 = sshllo.u32 0, %s712
    %s993 = smul.addr 4, 40
    %s994 = scalar_lea.vmem %s1, %s993
    %995 = vst [vmem:[%s994] sm:%s992] %v991
    %s996 = scalar_lea.vmem [#allocation0], 328
    %v997 = vld [vmem:[%s996] sm:%s711]
    %v998 = vpack.c.bf16 0.0, %v997
    %s999 = sshllo.u32 0, %s712
    %s1000 = smul.addr 4, 41
    %s1001 = scalar_lea.vmem %s1, %s1000
    %1002 = vst [vmem:[%s1001] sm:%s999] %v998
    %s1003 = scalar_lea.vmem [#allocation0], 336
    %v1004 = vld [vmem:[%s1003] sm:%s711]
    %v1005 = vpack.c.bf16 0.0, %v1004
    %s1006 = sshllo.u32 0, %s712
    %s1007 = smul.addr 4, 42
    %s1008 = scalar_lea.vmem %s1, %s1007
    %1009 = vst [vmem:[%s1008] sm:%s1006] %v1005
    %s1010 = scalar_lea.vmem [#allocation0], 344
    %v1011 = vld [vmem:[%s1010] sm:%s711]
    %v1012 = vpack.c.bf16 0.0, %v1011
    %s1013 = sshllo.u32 0, %s712
    %s1014 = smul.addr 4, 43
    %s1015 = scalar_lea.vmem %s1, %s1014
    %1016 = vst [vmem:[%s1015] sm:%s1013] %v1012
    %s1017 = scalar_lea.vmem [#allocation0], 352
    %v1018 = vld [vmem:[%s1017] sm:%s711]
    %v1019 = vpack.c.bf16 0.0, %v1018
    %s1020 = sshllo.u32 0, %s712
    %s1021 = smul.addr 4, 44
    %s1022 = scalar_lea.vmem %s1, %s1021
    %1023 = vst [vmem:[%s1022] sm:%s1020] %v1019
    %s1024 = scalar_lea.vmem [#allocation0], 360
    %v1025 = vld [vmem:[%s1024] sm:%s711]
    %v1026 = vpack.c.bf16 0.0, %v1025
    %s1027 = sshllo.u32 0, %s712
    %s1028 = smul.addr 4, 45
    %s1029 = scalar_lea.vmem %s1, %s1028
    %1030 = vst [vmem:[%s1029] sm:%s1027] %v1026
    %s1031 = scalar_lea.vmem [#allocation0], 368
    %v1032 = vld [vmem:[%s1031] sm:%s711]
    %v1033 = vpack.c.bf16 0.0, %v1032
    %s1034 = sshllo.u32 0, %s712
    %s1035 = smul.addr 4, 46
    %s1036 = scalar_lea.vmem %s1, %s1035
    %1037 = vst [vmem:[%s1036] sm:%s1034] %v1033
    %s1038 = scalar_lea.vmem [#allocation0], 376
    %v1039 = vld [vmem:[%s1038] sm:%s711]
    %v1040 = vpack.c.bf16 0.0, %v1039
    %s1041 = sshllo.u32 0, %s712
    %s1042 = smul.addr 4, 47
    %s1043 = scalar_lea.vmem %s1, %s1042
    %1044 = vst [vmem:[%s1043] sm:%s1041] %v1040
    %s1045 = scalar_lea.vmem [#allocation0], 384
    %v1046 = vld [vmem:[%s1045] sm:%s711]
    %v1047 = vpack.c.bf16 0.0, %v1046
    %s1048 = sshllo.u32 0, %s712
    %s1049 = smul.addr 4, 48
    %s1050 = scalar_lea.vmem %s1, %s1049
    %1051 = vst [vmem:[%s1050] sm:%s1048] %v1047
    %s1052 = scalar_lea.vmem [#allocation0], 392
    %v1053 = vld [vmem:[%s1052] sm:%s711]
    %v1054 = vpack.c.bf16 0.0, %v1053
    %s1055 = sshllo.u32 0, %s712
    %s1056 = smul.addr 4, 49
    %s1057 = scalar_lea.vmem %s1, %s1056
    %1058 = vst [vmem:[%s1057] sm:%s1055] %v1054
    %s1059 = scalar_lea.vmem [#allocation0], 400
    %v1060 = vld [vmem:[%s1059] sm:%s711]
    %v1061 = vpack.c.bf16 0.0, %v1060
    %s1062 = sshllo.u32 0, %s712
    %s1063 = smul.addr 4, 50
    %s1064 = scalar_lea.vmem %s1, %s1063
    %1065 = vst [vmem:[%s1064] sm:%s1062] %v1061
    %s1066 = scalar_lea.vmem [#allocation0], 408
    %v1067 = vld [vmem:[%s1066] sm:%s711]
    %v1068 = vpack.c.bf16 0.0, %v1067
    %s1069 = sshllo.u32 0, %s712
    %s1070 = smul.addr 4, 51
    %s1071 = scalar_lea.vmem %s1, %s1070
    %1072 = vst [vmem:[%s1071] sm:%s1069] %v1068
    %s1073 = scalar_lea.vmem [#allocation0], 416
    %v1074 = vld [vmem:[%s1073] sm:%s711]
    %v1075 = vpack.c.bf16 0.0, %v1074
    %s1076 = sshllo.u32 0, %s712
    %s1077 = smul.addr 4, 52
    %s1078 = scalar_lea.vmem %s1, %s1077
    %1079 = vst [vmem:[%s1078] sm:%s1076] %v1075
    %s1080 = scalar_lea.vmem [#allocation0], 424
    %v1081 = vld [vmem:[%s1080] sm:%s711]
    %v1082 = vpack.c.bf16 0.0, %v1081
    %s1083 = sshllo.u32 0, %s712
    %s1084 = smul.addr 4, 53
    %s1085 = scalar_lea.vmem %s1, %s1084
    %1086 = vst [vmem:[%s1085] sm:%s1083] %v1082
    %s1087 = scalar_lea.vmem [#allocation0], 432
    %v1088 = vld [vmem:[%s1087] sm:%s711]
    %v1089 = vpack.c.bf16 0.0, %v1088
    %s1090 = sshllo.u32 0, %s712
    %s1091 = smul.addr 4, 54
    %s1092 = scalar_lea.vmem %s1, %s1091
    %1093 = vst [vmem:[%s1092] sm:%s1090] %v1089
    %s1094 = scalar_lea.vmem [#allocation0], 440
    %v1095 = vld [vmem:[%s1094] sm:%s711]
    %v1096 = vpack.c.bf16 0.0, %v1095
    %s1097 = sshllo.u32 0, %s712
    %s1098 = smul.addr 4, 55
    %s1099 = scalar_lea.vmem %s1, %s1098
    %1100 = vst [vmem:[%s1099] sm:%s1097] %v1096
    %s1101 = scalar_lea.vmem [#allocation0], 448
    %v1102 = vld [vmem:[%s1101] sm:%s711]
    %v1103 = vpack.c.bf16 0.0, %v1102
    %s1104 = sshllo.u32 0, %s712
    %s1105 = smul.addr 4, 56
    %s1106 = scalar_lea.vmem %s1, %s1105
    %1107 = vst [vmem:[%s1106] sm:%s1104] %v1103
    %s1108 = scalar_lea.vmem [#allocation0], 456
    %v1109 = vld [vmem:[%s1108] sm:%s711]
    %v1110 = vpack.c.bf16 0.0, %v1109
    %s1111 = sshllo.u32 0, %s712
    %s1112 = smul.addr 4, 57
    %s1113 = scalar_lea.vmem %s1, %s1112
    %1114 = vst [vmem:[%s1113] sm:%s1111] %v1110
    %s1115 = scalar_lea.vmem [#allocation0], 464
    %v1116 = vld [vmem:[%s1115] sm:%s711]
    %v1117 = vpack.c.bf16 0.0, %v1116
    %s1118 = sshllo.u32 0, %s712
    %s1119 = smul.addr 4, 58
    %s1120 = scalar_lea.vmem %s1, %s1119
    %1121 = vst [vmem:[%s1120] sm:%s1118] %v1117
    %s1122 = scalar_lea.vmem [#allocation0], 472
    %v1123 = vld [vmem:[%s1122] sm:%s711]
    %v1124 = vpack.c.bf16 0.0, %v1123
    %s1125 = sshllo.u32 0, %s712
    %s1126 = smul.addr 4, 59
    %s1127 = scalar_lea.vmem %s1, %s1126
    %1128 = vst [vmem:[%s1127] sm:%s1125] %v1124
    %s1129 = scalar_lea.vmem [#allocation0], 480
    %v1130 = vld [vmem:[%s1129] sm:%s711]
    %v1131 = vpack.c.bf16 0.0, %v1130
    %s1132 = sshllo.u32 0, %s712
    %s1133 = smul.addr 4, 60
    %s1134 = scalar_lea.vmem %s1, %s1133
    %1135 = vst [vmem:[%s1134] sm:%s1132] %v1131
    %s1136 = scalar_lea.vmem [#allocation0], 488
    %v1137 = vld [vmem:[%s1136] sm:%s711]
    %v1138 = vpack.c.bf16 0.0, %v1137
    %s1139 = sshllo.u32 0, %s712
    %s1140 = smul.addr 4, 61
    %s1141 = scalar_lea.vmem %s1, %s1140
    %1142 = vst [vmem:[%s1141] sm:%s1139] %v1138
    %s1143 = scalar_lea.vmem [#allocation0], 496
    %v1144 = vld [vmem:[%s1143] sm:%s711]
    %v1145 = vpack.c.bf16 0.0, %v1144
    %s1146 = sshllo.u32 0, %s712
    %s1147 = smul.addr 4, 62
    %s1148 = scalar_lea.vmem %s1, %s1147
    %1149 = vst [vmem:[%s1148] sm:%s1146] %v1145
    %s1150 = scalar_lea.vmem [#allocation0], 504
    %v1151 = vld [vmem:[%s1150] sm:%s711]
    %v1152 = vpack.c.bf16 0.0, %v1151
    %s1153 = sshllo.u32 0, %s712
    %s1154 = smul.addr 4, 63
    %s1155 = scalar_lea.vmem %s1, %s1154
    %1156 = vst [vmem:[%s1155] sm:%s1153] %v1152

// kernel: body_forward.8
$region0: #{body_forward.8}
  #allocation0 [shape = 'u32[]', space=smem, size = 0x4, offset = 0x4, fixed_abs, tag = 'smem constant byte address 0x4 - core index']
  #allocation1 [shape = 'u32[144,128]{1,0:T(1,128)}', space=vmem, size = 0x12000, scoped, tag = 'internal scratch']
  %s0 = inlined_call_operand.vmem [shape: bf16[3,2,256,16], index: 0, kind: input, shape index: {}]
  %s1 = inlined_call_operand.vmem [shape: bf16[2,256,16], index: 1, kind: output, shape index: {}]
  %s2 = sld [smem:[#allocation0]]
  $region78: #{body_forward.8} parent=0
    _
  %s4 = ssub.s32 1, %s2
  %s5 = scalar_select 0, %s4, %s2
  $region1: #{body_forward.8} parent=0
    #allocation2 [shape = 'u8[393216]{0}', space=vmem, size = 0x60000, scoped, tag = 'input window, operand 0']
    loop: start=0, step=1, limit=4
    $region2: #{body_forward.8} parent=1 // loop_pre_header
      _
    $region3: #{body_forward.8} parent=1 // loop_header
      %s7 = sphi 0, %s11
      %p8 = scmp.ge.s32.totalorder %s7, 4
      %s17 = sphi 0, %s19
      %s20 = sphi 0, %s17
      %s21 = sphi 0, %s20
      %s37 = sphi 0, %s21
      %s43 = sphi 0, %s45
      %s46 = sphi 0, %s43
      %s47 = sphi 0, %s46
      %s63 = sphi 0, %s47
    $region4: #{body_forward.8} parent=1 // loop_header_branch
      %10 = sbr.rel (%p8) target = $region8
    $region5: #{body_forward.8} parent=1 // loop_body
      %s12 = ssub.s32 %s7, 1
      %s13 = ssub.s32 %s7, 2
      %s14 = sadd.s32 %s7, 1
      %s15 = ssub.s32 %s7, %s14
      %p16 = scmp.eq.s32.totalorder %s15, 0
      %s18 = sadd.s32 %s17, 1
      %s19 = scalar_select %p16, %s17, %s18
      %p22 = pneg %p16
      %p23 = scmp.eq.s32.totalorder %s7, 1
      %p24 = por %p22, %p23
      %p25 = scmp.ne.s32.totalorder %s17, %s20
      %p26 = scmp.eq.s32.totalorder %s7, 0
      %p27 = por %p25, %p26
      %p28 = scmp.ne.s32.totalorder %s17, %s20
      %p29 = scmp.eq.s32.totalorder %s12, 1
      %p30 = por %p28, %p29
      %p31 = scmp.ne.s32.totalorder %s20, %s21
      %p32 = scmp.eq.s32.totalorder %s12, 0
      %p33 = por %p31, %p32
      %p34 = scmp.ne.s32.totalorder %s20, %s21
      %p35 = scmp.eq.s32.totalorder %s13, 1
      %p36 = por %p34, %p35
      %p38 = scmp.ne.s32.totalorder %s21, %s37
      %p39 = scmp.eq.s32.totalorder %s13, 0
      %p40 = por %p38, %p39
      %s41 = ssub.s32 %s7, %s14
      %p42 = scmp.eq.s32.totalorder %s41, 0
      %s44 = sadd.s32 %s43, 1
      %s45 = scalar_select %p42, %s43, %s44
      %p48 = pneg %p42
      %p49 = scmp.eq.s32.totalorder %s7, 1
      %p50 = por %p48, %p49
      %p51 = scmp.ne.s32.totalorder %s43, %s46
      %p52 = scmp.eq.s32.totalorder %s7, 0
      %p53 = por %p51, %p52
      %p54 = scmp.ne.s32.totalorder %s43, %s46
      %p55 = scmp.eq.s32.totalorder %s12, 1
      %p56 = por %p54, %p55
      %p57 = scmp.ne.s32.totalorder %s46, %s47
      %p58 = scmp.eq.s32.totalorder %s12, 0
      %p59 = por %p57, %p58
      %p60 = scmp.ne.s32.totalorder %s46, %s47
      %p61 = scmp.eq.s32.totalorder %s13, 1
      %p62 = por %p60, %p61
      %p64 = scmp.ne.s32.totalorder %s47, %s63
      %p65 = scmp.eq.s32.totalorder %s13, 0
      %p66 = por %p64, %p65
      %p67 = scmp.le.s32.totalorder 1, %s7
      %p68 = scmp.lt.s32.totalorder %s7, 3
      %p69 = pnand %p67, %p68
      %p70 = pneg %p69
      // Predicated region
      $region9: #{body_forward.8} parent=5 // pred_check
        _
      $region10: #{body_forward.8} parent=5 // pred_check_branch
        %72 = sbr.rel (%p69) target = $region12
      $region11: #{body_forward.8} parent=5 // pred_region
        %s73 = ssub.s32 %s7, 1
      $region12: #{body_forward.8} parent=5 // pred_fallthru
        _
      %p74 = scmp.lt.s32.totalorder %s7, 2
      // Predicated region
      $region13: #{body_forward.8} parent=5 // pred_check
        %p75 = pneg %p74
      $region14: #{body_forward.8} parent=5 // pred_check_branch
        %77 = sbr.rel (%p75) target = $region16
      $region15: #{body_forward.8} parent=5 // pred_region
        // Predicated region
        $region17: #{body_forward.8} parent=15 // pred_check
          %p78 = pneg %p27
        $region18: #{body_forward.8} parent=15 // pred_check_branch
          %80 = sbr.rel (%p78) target = $region20
        $region19: #{body_forward.8} parent=15 // pred_region
          %s81 = sand.u32 %s17, 1
          %s82 = sand.u32 %s17, 1
          %s83 = smul.addr %s82, 384
          %s84 = scalar_lea.vmem [#allocation2], %s83
          %s85 = smul.addr %s7, 32
          %s86 = smul.addr %s85, 4
          %s87 = scalar_lea.vmem %s0, %s86
          // Predicated region
          $region21: #{body_forward.8} parent=19 // pred_check
            _
          $region22: #{body_forward.8} parent=19 // pred_check_branch
            %89 = sbr.rel (0) target = $region24
          $region23: #{body_forward.8} parent=19 // pred_region
            // Predicated region
            $region25: #{body_forward.8} parent=23 // pred_check
              _
            $region26: #{body_forward.8} parent=23 // pred_check_branch
              %91 = sbr.rel target = $region28
            $region27: #{body_forward.8} parent=23 // pred_region
              // Predicated region
              $region40: #{body_forward.8} parent=27 // pred_check
                _
              $region41: #{body_forward.8} parent=27 // pred_check_branch
                %296 = sbr.rel (0) target = $region43
              $region42: #{body_forward.8} parent=27 // pred_region
                loop: start=0, step=1, limit=1
                $region44: #{body_forward.8} parent=42 // loop_pre_header
                  _
                $region45: #{body_forward.8} parent=42 // loop_header
                  %s298 = sphi 0, %s302
                  %p299 = scmp.ge.s32.totalorder %s298, 1
                  %s303 = sphi %s87, %s87
                  %s304 = sphi %s84, %s84
                $region46: #{body_forward.8} parent=42 // loop_header_branch
                  %301 = sbr.rel (%p299) target = $region50
                $region47: #{body_forward.8} parent=42 // loop_body
                  _
                $region48: #{body_forward.8} parent=42 // loop_footer
                  %s302 = sadd.s32 1, %s298
                $region49: #{body_forward.8} parent=42 // loop_footer_branch
                  %297 = sbr.rel target = $region45
                $region50: #{body_forward.8} parent=42 // loop_exit
                  _
                loop: start=0, step=1, limit=1
                $region51: #{body_forward.8} parent=42 // loop_pre_header
                  _
                $region52: #{body_forward.8} parent=42 // loop_header
                  %s307 = sphi 0, %s311
                  %p308 = scmp.ge.s32.totalorder %s307, 1
                  %s312 = sphi %s87, %s87
                  %s313 = sphi %s84, %s84
                $region53: #{body_forward.8} parent=42 // loop_header_branch
                  %310 = sbr.rel (%p308) target = $region57
                $region54: #{body_forward.8} parent=42 // loop_body
                  %v314 = vld [vmem:[%s312] sm:$0xf]
                  %315 = vst [vmem:[%s313] sm:$0xf] %v314
                  %v316 = vld [vmem:[%s312 + $0x4] sm:$0xf]
                  %317 = vst [vmem:[%s313 + $0x4] sm:$0xf] %v316
                  %v318 = vld [vmem:[%s312 + $0x8] sm:$0xf]
                  %319 = vst [vmem:[%s313 + $0x8] sm:$0xf] %v318
                  %v320 = vld [vmem:[%s312 + $0xc] sm:$0xf]
                  %321 = vst [vmem:[%s313 + $0xc] sm:$0xf] %v320
                  %v322 = vld [vmem:[%s312 + $0x10] sm:$0xf]
                  %323 = vst [vmem:[%s313 + $0x10] sm:$0xf] %v322
                  %v324 = vld [vmem:[%s312 + $0x14] sm:$0xf]
                  %325 = vst [vmem:[%s313 + $0x14] sm:$0xf] %v324
                  %v326 = vld [vmem:[%s312 + $0x18] sm:$0xf]
                  %327 = vst [vmem:[%s313 + $0x18] sm:$0xf] %v326
                  %v328 = vld [vmem:[%s312 + $0x1c] sm:$0xf]
                  %329 = vst [vmem:[%s313 + $0x1c] sm:$0xf] %v328
                  %v330 = vld [vmem:[%s312 + $0x20] sm:$0xf]
                  %331 = vst [vmem:[%s313 + $0x20] sm:$0xf] %v330
                  %v332 = vld [vmem:[%s312 + $0x24] sm:$0xf]
                  %333 = vst [vmem:[%s313 + $0x24] sm:$0xf] %v332
                  %v334 = vld [vmem:[%s312 + $0x28] sm:$0xf]
                  %335 = vst [vmem:[%s313 + $0x28] sm:$0xf] %v334
                  %v336 = vld [vmem:[%s312 + $0x2c] sm:$0xf]
                  %337 = vst [vmem:[%s313 + $0x2c] sm:$0xf] %v336
                  %v338 = vld [vmem:[%s312 + $0x30] sm:$0xf]
                  %339 = vst [vmem:[%s313 + $0x30] sm:$0xf] %v338
                  %v340 = vld [vmem:[%s312 + $0x34] sm:$0xf]
                  %341 = vst [vmem:[%s313 + $0x34] sm:$0xf] %v340
                  %v342 = vld [vmem:[%s312 + $0x38] sm:$0xf]
                  %343 = vst [vmem:[%s313 + $0x38] sm:$0xf] %v342
                  %v344 = vld [vmem:[%s312 + $0x3c] sm:$0xf]
                  %345 = vst [vmem:[%s313 + $0x3c] sm:$0xf] %v344
                  %v346 = vld [vmem:[%s312 + $0x40] sm:$0xf]
                  %347 = vst [vmem:[%s313 + $0x40] sm:$0xf] %v346
                  %v348 = vld [vmem:[%s312 + $0x44] sm:$0xf]
                  %349 = vst [vmem:[%s313 + $0x44] sm:$0xf] %v348
                  %v350 = vld [vmem:[%s312 + $0x48] sm:$0xf]
                  %351 = vst [vmem:[%s313 + $0x48] sm:$0xf] %v350
                  %v352 = vld [vmem:[%s312 + $0x4c] sm:$0xf]
                  %353 = vst [vmem:[%s313 + $0x4c] sm:$0xf] %v352
                  %v354 = vld [vmem:[%s312 + $0x50] sm:$0xf]
                  %355 = vst [vmem:[%s313 + $0x50] sm:$0xf] %v354
                  %v356 = vld [vmem:[%s312 + $0x54] sm:$0xf]
                  %357 = vst [vmem:[%s313 + $0x54] sm:$0xf] %v356
                  %v358 = vld [vmem:[%s312 + $0x58] sm:$0xf]
                  %359 = vst [vmem:[%s313 + $0x58] sm:$0xf] %v358
                  %v360 = vld [vmem:[%s312 + $0x5c] sm:$0xf]
                  %361 = vst [vmem:[%s313 + $0x5c] sm:$0xf] %v360
                  %v362 = vld [vmem:[%s312 + $0x60] sm:$0xf]
                  %363 = vst [vmem:[%s313 + $0x60] sm:$0xf] %v362
                  %v364 = vld [vmem:[%s312 + $0x64] sm:$0xf]
                  %365 = vst [vmem:[%s313 + $0x64] sm:$0xf] %v364
                  %v366 = vld [vmem:[%s312 + $0x68] sm:$0xf]
                  %367 = vst [vmem:[%s313 + $0x68] sm:$0xf] %v366
                  %v368 = vld [vmem:[%s312 + $0x6c] sm:$0xf]
                  %369 = vst [vmem:[%s313 + $0x6c] sm:$0xf] %v368
                  %v370 = vld [vmem:[%s312 + $0x70] sm:$0xf]
                  %371 = vst [vmem:[%s313 + $0x70] sm:$0xf] %v370
                  %v372 = vld [vmem:[%s312 + $0x74] sm:$0xf]
                  %373 = vst [vmem:[%s313 + $0x74] sm:$0xf] %v372
                  %v374 = vld [vmem:[%s312 + $0x78] sm:$0xf]
                  %375 = vst [vmem:[%s313 + $0x78] sm:$0xf] %v374
                  %v376 = vld [vmem:[%s312 + $0x7c] sm:$0xf]
                  %377 = vst [vmem:[%s313 + $0x7c] sm:$0xf] %v376
                  %v378 = vld [vmem:[%s312 + $0x100] sm:$0xf]
                  %379 = vst [vmem:[%s313 + $0x80] sm:$0xf] %v378
                  %v380 = vld [vmem:[%s312 + $0x104] sm:$0xf]
                  %381 = vst [vmem:[%s313 + $0x84] sm:$0xf] %v380
                  %v382 = vld [vmem:[%s312 + $0x108] sm:$0xf]
                  %383 = vst [vmem:[%s313 + $0x88] sm:$0xf] %v382
                  %v384 = vld [vmem:[%s312 + $0x10c] sm:$0xf]
                  %385 = vst [vmem:[%s313 + $0x8c] sm:$0xf] %v384
                  %v386 = vld [vmem:[%s312 + $0x110] sm:$0xf]
                  %387 = vst [vmem:[%s313 + $0x90] sm:$0xf] %v386
                  %v388 = vld [vmem:[%s312 + $0x114] sm:$0xf]
                  %389 = vst [vmem:[%s313 + $0x94] sm:$0xf] %v388
                  %v390 = vld [vmem:[%s312 + $0x118] sm:$0xf]
                  %391 = vst [vmem:[%s313 + $0x98] sm:$0xf] %v390
                  %v392 = vld [vmem:[%s312 + $0x11c] sm:$0xf]
                  %393 = vst [vmem:[%s313 + $0x9c] sm:$0xf] %v392
                  %v394 = vld [vmem:[%s312 + $0x120] sm:$0xf]
                  %395 = vst [vmem:[%s313 + $0xa0] sm:$0xf] %v394
                  %v396 = vld [vmem:[%s312 + $0x124] sm:$0xf]
                  %397 = vst [vmem:[%s313 + $0xa4] sm:$0xf] %v396
                  %v398 = vld [vmem:[%s312 + $0x128] sm:$0xf]
                  %399 = vst [vmem:[%s313 + $0xa8] sm:$0xf] %v398
                  %v400 = vld [vmem:[%s312 + $0x12c] sm:$0xf]
                  %401 = vst [vmem:[%s313 + $0xac] sm:$0xf] %v400
                  %v402 = vld [vmem:[%s312 + $0x130] sm:$0xf]
                  %403 = vst [vmem:[%s313 + $0xb0] sm:$0xf] %v402
                  %v404 = vld [vmem:[%s312 + $0x134] sm:$0xf]
                  %405 = vst [vmem:[%s313 + $0xb4] sm:$0xf] %v404
                  %v406 = vld [vmem:[%s312 + $0x138] sm:$0xf]
                  %407 = vst [vmem:[%s313 + $0xb8] sm:$0xf] %v406
                  %v408 = vld [vmem:[%s312 + $0x13c] sm:$0xf]
                  %409 = vst [vmem:[%s313 + $0xbc] sm:$0xf] %v408
                  %v410 = vld [vmem:[%s312 + $0x140] sm:$0xf]
                  %411 = vst [vmem:[%s313 + $0xc0] sm:$0xf] %v410
                  %v412 = vld [vmem:[%s312 + $0x144] sm:$0xf]
                  %413 = vst [vmem:[%s313 + $0xc4] sm:$0xf] %v412
                  %v414 = vld [vmem:[%s312 + $0x148] sm:$0xf]
                  %415 = vst [vmem:[%s313 + $0xc8] sm:$0xf] %v414
                  %v416 = vld [vmem:[%s312 + $0x14c] sm:$0xf]
                  %417 = vst [vmem:[%s313 + $0xcc] sm:$0xf] %v416
                  %v418 = vld [vmem:[%s312 + $0x150] sm:$0xf]
                  %419 = vst [vmem:[%s313 + $0xd0] sm:$0xf] %v418
                  %v420 = vld [vmem:[%s312 + $0x154] sm:$0xf]
                  %421 = vst [vmem:[%s313 + $0xd4] sm:$0xf] %v420
                  %v422 = vld [vmem:[%s312 + $0x158] sm:$0xf]
                  %423 = vst [vmem:[%s313 + $0xd8] sm:$0xf] %v422
                  %v424 = vld [vmem:[%s312 + $0x15c] sm:$0xf]
                  %425 = vst [vmem:[%s313 + $0xdc] sm:$0xf] %v424
                  %v426 = vld [vmem:[%s312 + $0x160] sm:$0xf]
                  %427 = vst [vmem:[%s313 + $0xe0] sm:$0xf] %v426
                  %v428 = vld [vmem:[%s312 + $0x164] sm:$0xf]
                  %429 = vst [vmem:[%s313 + $0xe4] sm:$0xf] %v428
                  %v430 = vld [vmem:[%s312 + $0x168] sm:$0xf]
                  %431 = vst [vmem:[%s313 + $0xe8] sm:$0xf] %v430
                  %v432 = vld [vmem:[%s312 + $0x16c] sm:$0xf]
                  %433 = vst [vmem:[%s313 + $0xec] sm:$0xf] %v432
                  %v434 = vld [vmem:[%s312 + $0x170] sm:$0xf]
                  %435 = vst [vmem:[%s313 + $0xf0] sm:$0xf] %v434
                  %v436 = vld [vmem:[%s312 + $0x174] sm:$0xf]
                  %437 = vst [vmem:[%s313 + $0xf4] sm:$0xf] %v436
                  %v438 = vld [vmem:[%s312 + $0x178] sm:$0xf]
                  %439 = vst [vmem:[%s313 + $0xf8] sm:$0xf] %v438
                  %v440 = vld [vmem:[%s312 + $0x17c] sm:$0xf]
                  %441 = vst [vmem:[%s313 + $0xfc] sm:$0xf] %v440
                  %v442 = vld [vmem:[%s312 + $0x200] sm:$0xf]
                  %443 = vst [vmem:[%s313 + $0x100] sm:$0xf] %v442
                  %v444 = vld [vmem:[%s312 + $0x204] sm:$0xf]
                  %445 = vst [vmem:[%s313 + $0x104] sm:$0xf] %v444
                  %v446 = vld [vmem:[%s312 + $0x208] sm:$0xf]
                  %447 = vst [vmem:[%s313 + $0x108] sm:$0xf] %v446
                  %v448 = vld [vmem:[%s312 + $0x20c] sm:$0xf]
                  %449 = vst [vmem:[%s313 + $0x10c] sm:$0xf] %v448
                  %v450 = vld [vmem:[%s312 + $0x210] sm:$0xf]
                  %451 = vst [vmem:[%s313 + $0x110] sm:$0xf] %v450
                  %v452 = vld [vmem:[%s312 + $0x214] sm:$0xf]
                  %453 = vst [vmem:[%s313 + $0x114] sm:$0xf] %v452
                  %v454 = vld [vmem:[%s312 + $0x218] sm:$0xf]
                  %455 = vst [vmem:[%s313 + $0x118] sm:$0xf] %v454
                  %v456 = vld [vmem:[%s312 + $0x21c] sm:$0xf]
                  %457 = vst [vmem:[%s313 + $0x11c] sm:$0xf] %v456
                  %v458 = vld [vmem:[%s312 + $0x220] sm:$0xf]
                  %459 = vst [vmem:[%s313 + $0x120] sm:$0xf] %v458
                  %v460 = vld [vmem:[%s312 + $0x224] sm:$0xf]
                  %461 = vst [vmem:[%s313 + $0x124] sm:$0xf] %v460
                  %v462 = vld [vmem:[%s312 + $0x228] sm:$0xf]
                  %463 = vst [vmem:[%s313 + $0x128] sm:$0xf] %v462
                  %v464 = vld [vmem:[%s312 + $0x22c] sm:$0xf]
                  %465 = vst [vmem:[%s313 + $0x12c] sm:$0xf] %v464
                  %v466 = vld [vmem:[%s312 + $0x230] sm:$0xf]
                  %467 = vst [vmem:[%s313 + $0x130] sm:$0xf] %v466
                  %v468 = vld [vmem:[%s312 + $0x234] sm:$0xf]
                  %469 = vst [vmem:[%s313 + $0x134] sm:$0xf] %v468
                  %v470 = vld [vmem:[%s312 + $0x238] sm:$0xf]
                  %471 = vst [vmem:[%s313 + $0x138] sm:$0xf] %v470
                  %v472 = vld [vmem:[%s312 + $0x23c] sm:$0xf]
                  %473 = vst [vmem:[%s313 + $0x13c] sm:$0xf] %v472
                  %v474 = vld [vmem:[%s312 + $0x240] sm:$0xf]
                  %475 = vst [vmem:[%s313 + $0x140] sm:$0xf] %v474
                  %v476 = vld [vmem:[%s312 + $0x244] sm:$0xf]
                  %477 = vst [vmem:[%s313 + $0x144] sm:$0xf] %v476
                  %v478 = vld [vmem:[%s312 + $0x248] sm:$0xf]
                  %479 = vst [vmem:[%s313 + $0x148] sm:$0xf] %v478
                  %v480 = vld [vmem:[%s312 + $0x24c] sm:$0xf]
                  %481 = vst [vmem:[%s313 + $0x14c] sm:$0xf] %v480
                  %v482 = vld [vmem:[%s312 + $0x250] sm:$0xf]
                  %483 = vst [vmem:[%s313 + $0x150] sm:$0xf] %v482
                  %v484 = vld [vmem:[%s312 + $0x254] sm:$0xf]
                  %485 = vst [vmem:[%s313 + $0x154] sm:$0xf] %v484
                  %v486 = vld [vmem:[%s312 + $0x258] sm:$0xf]
                  %487 = vst [vmem:[%s313 + $0x158] sm:$0xf] %v486
                  %v488 = vld [vmem:[%s312 + $0x25c] sm:$0xf]
                  %489 = vst [vmem:[%s313 + $0x15c] sm:$0xf] %v488
                  %v490 = vld [vmem:[%s312 + $0x260] sm:$0xf]
                  %491 = vst [vmem:[%s313 + $0x160] sm:$0xf] %v490
                  %v492 = vld [vmem:[%s312 + $0x264] sm:$0xf]
                  %493 = vst [vmem:[%s313 + $0x164] sm:$0xf] %v492
                  %v494 = vld [vmem:[%s312 + $0x268] sm:$0xf]
                  %495 = vst [vmem:[%s313 + $0x168] sm:$0xf] %v494
                  %v496 = vld [vmem:[%s312 + $0x26c] sm:$0xf]
                  %497 = vst [vmem:[%s313 + $0x16c] sm:$0xf] %v496
                  %v498 = vld [vmem:[%s312 + $0x270] sm:$0xf]
                  %499 = vst [vmem:[%s313 + $0x170] sm:$0xf] %v498
                  %v500 = vld [vmem:[%s312 + $0x274] sm:$0xf]
                  %501 = vst [vmem:[%s313 + $0x174] sm:$0xf] %v500
                  %v502 = vld [vmem:[%s312 + $0x278] sm:$0xf]
                  %503 = vst [vmem:[%s313 + $0x178] sm:$0xf] %v502
                  %v504 = vld [vmem:[%s312 + $0x27c] sm:$0xf]
                  %505 = vst [vmem:[%s313 + $0x17c] sm:$0xf] %v504
                $region55: #{body_forward.8} parent=42 // loop_footer
                  %s311 = sadd.s32 1, %s307
                $region56: #{body_forward.8} parent=42 // loop_footer_branch
                  %306 = sbr.rel target = $region52
                $region57: #{body_forward.8} parent=42 // loop_exit
                  _
              $region43: #{body_forward.8} parent=27 // pred_fallthru
                _
            $region28: #{body_forward.8} parent=23 // pred_fallthru
              _
            // Predicated region
            $region29: #{body_forward.8} parent=23 // pred_check
              _
            $region30: #{body_forward.8} parent=23 // pred_check_branch
              %93 = sbr.rel (0) target = $region32
            $region31: #{body_forward.8} parent=23 // pred_region
              loop: start=0, step=1, limit=1
              $region33: #{body_forward.8} parent=31 // loop_pre_header
                _
              $region34: #{body_forward.8} parent=31 // loop_header
                %s96 = sphi 0, %s100
                %p97 = scmp.ge.s32.totalorder %s96, 1
                %s101 = sphi %s87, %s87
                %s102 = sphi %s84, %s84
              $region35: #{body_forward.8} parent=31 // loop_header_branch
                %99 = sbr.rel (%p97) target = $region39
              $region36: #{body_forward.8} parent=31 // loop_body
                %v103 = vld [vmem:[%s101] sm:$0xf]
                %104 = vst [vmem:[%s102] sm:$0xf] %v103
                %v105 = vld [vmem:[%s101 + $0x4] sm:$0xf]
                %106 = vst [vmem:[%s102 + $0x4] sm:$0xf] %v105
                %v107 = vld [vmem:[%s101 + $0x8] sm:$0xf]
                %108 = vst [vmem:[%s102 + $0x8] sm:$0xf] %v107
                %v109 = vld [vmem:[%s101 + $0xc] sm:$0xf]
                %110 = vst [vmem:[%s102 + $0xc] sm:$0xf] %v109
                %v111 = vld [vmem:[%s101 + $0x10] sm:$0xf]
                %112 = vst [vmem:[%s102 + $0x10] sm:$0xf] %v111
                %v113 = vld [vmem:[%s101 + $0x14] sm:$0xf]
                %114 = vst [vmem:[%s102 + $0x14] sm:$0xf] %v113
                %v115 = vld [vmem:[%s101 + $0x18] sm:$0xf]
                %116 = vst [vmem:[%s102 + $0x18] sm:$0xf] %v115
                %v117 = vld [vmem:[%s101 + $0x1c] sm:$0xf]
                %118 = vst [vmem:[%s102 + $0x1c] sm:$0xf] %v117
                %v119 = vld [vmem:[%s101 + $0x20] sm:$0xf]
                %120 = vst [vmem:[%s102 + $0x20] sm:$0xf] %v119
                %v121 = vld [vmem:[%s101 + $0x24] sm:$0xf]
                %122 = vst [vmem:[%s102 + $0x24] sm:$0xf] %v121
                %v123 = vld [vmem:[%s101 + $0x28] sm:$0xf]
                %124 = vst [vmem:[%s102 + $0x28] sm:$0xf] %v123
                %v125 = vld [vmem:[%s101 + $0x2c] sm:$0xf]
                %126 = vst [vmem:[%s102 + $0x2c] sm:$0xf] %v125
                %v127 = vld [vmem:[%s101 + $0x30] sm:$0xf]
                %128 = vst [vmem:[%s102 + $0x30] sm:$0xf] %v127
                %v129 = vld [vmem:[%s101 + $0x34] sm:$0xf]
                %130 = vst [vmem:[%s102 + $0x34] sm:$0xf] %v129
                %v131 = vld [vmem:[%s101 + $0x38] sm:$0xf]
                %132 = vst [vmem:[%s102 + $0x38] sm:$0xf] %v131
                %v133 = vld [vmem:[%s101 + $0x3c] sm:$0xf]
                %134 = vst [vmem:[%s102 + $0x3c] sm:$0xf] %v133
                %v135 = vld [vmem:[%s101 + $0x40] sm:$0xf]
                %136 = vst [vmem:[%s102 + $0x40] sm:$0xf] %v135
                %v137 = vld [vmem:[%s101 + $0x44] sm:$0xf]
                %138 = vst [vmem:[%s102 + $0x44] sm:$0xf] %v137
                %v139 = vld [vmem:[%s101 + $0x48] sm:$0xf]
                %140 = vst [vmem:[%s102 + $0x48] sm:$0xf] %v139
                %v141 = vld [vmem:[%s101 + $0x4c] sm:$0xf]
                %142 = vst [vmem:[%s102 + $0x4c] sm:$0xf] %v141
                %v143 = vld [vmem:[%s101 + $0x50] sm:$0xf]
                %144 = vst [vmem:[%s102 + $0x50] sm:$0xf] %v143
                %v145 = vld [vmem:[%s101 + $0x54] sm:$0xf]
                %146 = vst [vmem:[%s102 + $0x54] sm:$0xf] %v145
                %v147 = vld [vmem:[%s101 + $0x58] sm:$0xf]
                %148 = vst [vmem:[%s102 + $0x58] sm:$0xf] %v147
                %v149 = vld [vmem:[%s101 + $0x5c] sm:$0xf]
                %150 = vst [vmem:[%s102 + $0x5c] sm:$0xf] %v149
                %v151 = vld [vmem:[%s101 + $0x60] sm:$0xf]
                %152 = vst [vmem:[%s102 + $0x60] sm:$0xf] %v151
                %v153 = vld [vmem:[%s101 + $0x64] sm:$0xf]
                %154 = vst [vmem:[%s102 + $0x64] sm:$0xf] %v153
                %v155 = vld [vmem:[%s101 + $0x68] sm:$0xf]
                %156 = vst [vmem:[%s102 + $0x68] sm:$0xf] %v155
                %v157 = vld [vmem:[%s101 + $0x6c] sm:$0xf]
                %158 = vst [vmem:[%s102 + $0x6c] sm:$0xf] %v157
                %v159 = vld [vmem:[%s101 + $0x70] sm:$0xf]
                %160 = vst [vmem:[%s102 + $0x70] sm:$0xf] %v159
                %v161 = vld [vmem:[%s101 + $0x74] sm:$0xf]
                %162 = vst [vmem:[%s102 + $0x74] sm:$0xf] %v161
                %v163 = vld [vmem:[%s101 + $0x78] sm:$0xf]
                %164 = vst [vmem:[%s102 + $0x78] sm:$0xf] %v163
                %v165 = vld [vmem:[%s101 + $0x7c] sm:$0xf]
                %166 = vst [vmem:[%s102 + $0x7c] sm:$0xf] %v165
                %v167 = vld [vmem:[%s101 + $0x100] sm:$0xf]
                %168 = vst [vmem:[%s102 + $0x80] sm:$0xf] %v167
                %v169 = vld [vmem:[%s101 + $0x104] sm:$0xf]
                %170 = vst [vmem:[%s102 + $0x84] sm:$0xf] %v169
                %v171 = vld [vmem:[%s101 + $0x108] sm:$0xf]
                %172 = vst [vmem:[%s102 + $0x88] sm:$0xf] %v171
                %v173 = vld [vmem:[%s101 + $0x10c] sm:$0xf]
                %174 = vst [vmem:[%s102 + $0x8c] sm:$0xf] %v173
                %v175 = vld [vmem:[%s101 + $0x110] sm:$0xf]
                %176 = vst [vmem:[%s102 + $0x90] sm:$0xf] %v175
                %v177 = vld [vmem:[%s101 + $0x114] sm:$0xf]
                %178 = vst [vmem:[%s102 + $0x94] sm:$0xf] %v177
                %v179 = vld [vmem:[%s101 + $0x118] sm:$0xf]
                %180 = vst [vmem:[%s102 + $0x98] sm:$0xf] %v179
                %v181 = vld [vmem:[%s101 + $0x11c] sm:$0xf]
                %182 = vst [vmem:[%s102 + $0x9c] sm:$0xf] %v181
                %v183 = vld [vmem:[%s101 + $0x120] sm:$0xf]
                %184 = vst [vmem:[%s102 + $0xa0] sm:$0xf] %v183
                %v185 = vld [vmem:[%s101 + $0x124] sm:$0xf]
                %186 = vst [vmem:[%s102 + $0xa4] sm:$0xf] %v185
                %v187 = vld [vmem:[%s101 + $0x128] sm:$0xf]
                %188 = vst [vmem:[%s102 + $0xa8] sm:$0xf] %v187
                %v189 = vld [vmem:[%s101 + $0x12c] sm:$0xf]
                %190 = vst [vmem:[%s102 + $0xac] sm:$0xf] %v189
                %v191 = vld [vmem:[%s101 + $0x130] sm:$0xf]
                %192 = vst [vmem:[%s102 + $0xb0] sm:$0xf] %v191
                %v193 = vld [vmem:[%s101 + $0x134] sm:$0xf]
                %194 = vst [vmem:[%s102 + $0xb4] sm:$0xf] %v193
                %v195 = vld [vmem:[%s101 + $0x138] sm:$0xf]
                %196 = vst [vmem:[%s102 + $0xb8] sm:$0xf] %v195
                %v197 = vld [vmem:[%s101 + $0x13c] sm:$0xf]
                %198 = vst [vmem:[%s102 + $0xbc] sm:$0xf] %v197
                %v199 = vld [vmem:[%s101 + $0x140] sm:$0xf]
                %200 = vst [vmem:[%s102 + $0xc0] sm:$0xf] %v199
                %v201 = vld [vmem:[%s101 + $0x144] sm:$0xf]
                %202 = vst [vmem:[%s102 + $0xc4] sm:$0xf] %v201
                %v203 = vld [vmem:[%s101 + $0x148] sm:$0xf]
                %204 = vst [vmem:[%s102 + $0xc8] sm:$0xf] %v203
                %v205 = vld [vmem:[%s101 + $0x14c] sm:$0xf]
                %206 = vst [vmem:[%s102 + $0xcc] sm:$0xf] %v205
                %v207 = vld [vmem:[%s101 + $0x150] sm:$0xf]
                %208 = vst [vmem:[%s102 + $0xd0] sm:$0xf] %v207
                %v209 = vld [vmem:[%s101 + $0x154] sm:$0xf]
                %210 = vst [vmem:[%s102 + $0xd4] sm:$0xf] %v209
                %v211 = vld [vmem:[%s101 + $0x158] sm:$0xf]
                %212 = vst [vmem:[%s102 + $0xd8] sm:$0xf] %v211
                %v213 = vld [vmem:[%s101 + $0x15c] sm:$0xf]
                %214 = vst [vmem:[%s102 + $0xdc] sm:$0xf] %v213
                %v215 = vld [vmem:[%s101 + $0x160] sm:$0xf]
                %216 = vst [vmem:[%s102 + $0xe0] sm:$0xf] %v215
                %v217 = vld [vmem:[%s101 + $0x164] sm:$0xf]
                %218 = vst [vmem:[%s102 + $0xe4] sm:$0xf] %v217
                %v219 = vld [vmem:[%s101 + $0x168] sm:$0xf]
                %220 = vst [vmem:[%s102 + $0xe8] sm:$0xf] %v219
                %v221 = vld [vmem:[%s101 + $0x16c] sm:$0xf]
                %222 = vst [vmem:[%s102 + $0xec] sm:$0xf] %v221
                %v223 = vld [vmem:[%s101 + $0x170] sm:$0xf]
                %224 = vst [vmem:[%s102 + $0xf0] sm:$0xf] %v223
                %v225 = vld [vmem:[%s101 + $0x174] sm:$0xf]
                %226 = vst [vmem:[%s102 + $0xf4] sm:$0xf] %v225
                %v227 = vld [vmem:[%s101 + $0x178] sm:$0xf]
                %228 = vst [vmem:[%s102 + $0xf8] sm:$0xf] %v227
                %v229 = vld [vmem:[%s101 + $0x17c] sm:$0xf]
                %230 = vst [vmem:[%s102 + $0xfc] sm:$0xf] %v229
                %v231 = vld [vmem:[%s101 + $0x200] sm:$0xf]
                %232 = vst [vmem:[%s102 + $0x100] sm:$0xf] %v231
                %v233 = vld [vmem:[%s101 + $0x204] sm:$0xf]
                %234 = vst [vmem:[%s102 + $0x104] sm:$0xf] %v233
                %v235 = vld [vmem:[%s101 + $0x208] sm:$0xf]
                %236 = vst [vmem:[%s102 + $0x108] sm:$0xf] %v235
                %v237 = vld [vmem:[%s101 + $0x20c] sm:$0xf]
                %238 = vst [vmem:[%s102 + $0x10c] sm:$0xf] %v237
                %v239 = vld [vmem:[%s101 + $0x210] sm:$0xf]
                %240 = vst [vmem:[%s102 + $0x110] sm:$0xf] %v239
                %v241 = vld [vmem:[%s101 + $0x214] sm:$0xf]
                %242 = vst [vmem:[%s102 + $0x114] sm:$0xf] %v241
                %v243 = vld [vmem:[%s101 + $0x218] sm:$0xf]
                %244 = vst [vmem:[%s102 + $0x118] sm:$0xf] %v243
                %v245 = vld [vmem:[%s101 + $0x21c] sm:$0xf]
                %246 = vst [vmem:[%s102 + $0x11c] sm:$0xf] %v245
                %v247 = vld [vmem:[%s101 + $0x220] sm:$0xf]
                %248 = vst [vmem:[%s102 + $0x120] sm:$0xf] %v247
                %v249 = vld [vmem:[%s101 + $0x224] sm:$0xf]
                %250 = vst [vmem:[%s102 + $0x124] sm:$0xf] %v249
                %v251 = vld [vmem:[%s101 + $0x228] sm:$0xf]
                %252 = vst [vmem:[%s102 + $0x128] sm:$0xf] %v251
                %v253 = vld [vmem:[%s101 + $0x22c] sm:$0xf]
                %254 = vst [vmem:[%s102 + $0x12c] sm:$0xf] %v253
                %v255 = vld [vmem:[%s101 + $0x230] sm:$0xf]
                %256 = vst [vmem:[%s102 + $0x130] sm:$0xf] %v255
                %v257 = vld [vmem:[%s101 + $0x234] sm:$0xf]
                %258 = vst [vmem:[%s102 + $0x134] sm:$0xf] %v257
                %v259 = vld [vmem:[%s101 + $0x238] sm:$0xf]
                %260 = vst [vmem:[%s102 + $0x138] sm:$0xf] %v259
                %v261 = vld [vmem:[%s101 + $0x23c] sm:$0xf]
                %262 = vst [vmem:[%s102 + $0x13c] sm:$0xf] %v261
                %v263 = vld [vmem:[%s101 + $0x240] sm:$0xf]
                %264 = vst [vmem:[%s102 + $0x140] sm:$0xf] %v263
                %v265 = vld [vmem:[%s101 + $0x244] sm:$0xf]
                %266 = vst [vmem:[%s102 + $0x144] sm:$0xf] %v265
                %v267 = vld [vmem:[%s101 + $0x248] sm:$0xf]
                %268 = vst [vmem:[%s102 + $0x148] sm:$0xf] %v267
                %v269 = vld [vmem:[%s101 + $0x24c] sm:$0xf]
                %270 = vst [vmem:[%s102 + $0x14c] sm:$0xf] %v269
                %v271 = vld [vmem:[%s101 + $0x250] sm:$0xf]
                %272 = vst [vmem:[%s102 + $0x150] sm:$0xf] %v271
                %v273 = vld [vmem:[%s101 + $0x254] sm:$0xf]
                %274 = vst [vmem:[%s102 + $0x154] sm:$0xf] %v273
                %v275 = vld [vmem:[%s101 + $0x258] sm:$0xf]
                %276 = vst [vmem:[%s102 + $0x158] sm:$0xf] %v275
                %v277 = vld [vmem:[%s101 + $0x25c] sm:$0xf]
                %278 = vst [vmem:[%s102 + $0x15c] sm:$0xf] %v277
                %v279 = vld [vmem:[%s101 + $0x260] sm:$0xf]
                %280 = vst [vmem:[%s102 + $0x160] sm:$0xf] %v279
                %v281 = vld [vmem:[%s101 + $0x264] sm:$0xf]
                %282 = vst [vmem:[%s102 + $0x164] sm:$0xf] %v281
                %v283 = vld [vmem:[%s101 + $0x268] sm:$0xf]
                %284 = vst [vmem:[%s102 + $0x168] sm:$0xf] %v283
                %v285 = vld [vmem:[%s101 + $0x26c] sm:$0xf]
                %286 = vst [vmem:[%s102 + $0x16c] sm:$0xf] %v285
                %v287 = vld [vmem:[%s101 + $0x270] sm:$0xf]
                %288 = vst [vmem:[%s102 + $0x170] sm:$0xf] %v287
                %v289 = vld [vmem:[%s101 + $0x274] sm:$0xf]
                %290 = vst [vmem:[%s102 + $0x174] sm:$0xf] %v289
                %v291 = vld [vmem:[%s101 + $0x278] sm:$0xf]
                %292 = vst [vmem:[%s102 + $0x178] sm:$0xf] %v291
                %v293 = vld [vmem:[%s101 + $0x27c] sm:$0xf]
                %294 = vst [vmem:[%s102 + $0x17c] sm:$0xf] %v293
              $region37: #{body_forward.8} parent=31 // loop_footer
                %s100 = sadd.s32 1, %s96
              $region38: #{body_forward.8} parent=31 // loop_footer_branch
                %95 = sbr.rel target = $region34
              $region39: #{body_forward.8} parent=31 // loop_exit
                _
            $region32: #{body_forward.8} parent=23 // pred_fallthru
              _
          $region24: #{body_forward.8} parent=19 // pred_fallthru
            _
          %506 = vnop
        $region20: #{body_forward.8} parent=15 // pred_fallthru
          _
      $region16: #{body_forward.8} parent=5 // pred_fallthru
        _
      %p507 = scmp.le.s32.totalorder 1, %s7
      %p508 = scmp.lt.s32.totalorder %s7, 3
      %p509 = pnand %p507, %p508
      %p510 = pneg %p509
      // Predicated region
      $region58: #{body_forward.8} parent=5 // pred_check
        _
      $region59: #{body_forward.8} parent=5 // pred_check_branch
        %512 = sbr.rel (%p509) target = $region61
      $region60: #{body_forward.8} parent=5 // pred_region
        %s513 = ssub.s32 %s7, 1
        %s514 = sand.u32 %s20, 1
        %s515 = sand.u32 %s20, 1
        %s516 = smul.addr %s515, 384
        %s517 = scalar_lea.vmem [#allocation2], %s516
        // Predicated region
        $region62: #{body_forward.8} parent=60 // pred_check
          %p518 = pneg %p33
        $region63: #{body_forward.8} parent=60 // pred_check_branch
          %520 = sbr.rel (%p518) target = $region65
        $region64: #{body_forward.8} parent=60 // pred_region
          _
        $region65: #{body_forward.8} parent=60 // pred_fallthru
          _
        %s521 = sand.u32 %s20, 1
        %s522 = sand.u32 %s20, 1
        %s523 = smul.addr %s522, 384
        %s524 = scalar_lea.vmem [#allocation2], %s523
        %p525 = pneg %p33
        %p526 = pneg %p30
        %p527 = pneg %p59
        %p528 = pneg %p56
        %p529 = scmp.lt.s32.totalorder %s12, 1
        %s530 = scalar_select %p529, %s12, 1
        %s531 = smul.addr %s530, 32
        %s532 = smul.addr %s531, 4
        %s533 = scalar_lea.vmem %s1, %s532
        %p534 = scmp.lt.s32.totalorder %s12, 1
        %s535 = scalar_select %p534, %s12, 1
        %s536 = smul.addr %s535, 32
        %s537 = smul.addr %s536, 4
        %s538 = scalar_lea.vmem %s1, %s537
        %v540 = vld [vmem:[%s517] sm:$0xf]
        %v541 = vld [vmem:[%s517 + $0x4] sm:$0xf]
        %v542 = vld [vmem:[%s517 + $0x8] sm:$0xf]
        %v543 = vld [vmem:[%s517 + $0xc] sm:$0xf]
        %v544 = vld [vmem:[%s517 + $0x10] sm:$0xf]
        %v545 = vld [vmem:[%s517 + $0x14] sm:$0xf]
        %v546 = vld [vmem:[%s517 + $0x18] sm:$0xf]
        %v547 = vld [vmem:[%s517 + $0x1c] sm:$0xf]
        %v548 = vld [vmem:[%s517 + $0x20] sm:$0xf]
        %v549 = vld [vmem:[%s517 + $0x24] sm:$0xf]
        %v550 = vld [vmem:[%s517 + $0x28] sm:$0xf]
        %v551 = vld [vmem:[%s517 + $0x2c] sm:$0xf]
        %v552 = vld [vmem:[%s517 + $0x30] sm:$0xf]
        %v553 = vld [vmem:[%s517 + $0x34] sm:$0xf]
        %v554 = vld [vmem:[%s517 + $0x38] sm:$0xf]
        %v555 = vld [vmem:[%s517 + $0x3c] sm:$0xf]
        %v556 = vld [vmem:[%s517 + $0x40] sm:$0xf]
        %v557 = vld [vmem:[%s517 + $0x44] sm:$0xf]
        %v558 = vld [vmem:[%s517 + $0x48] sm:$0xf]
        %v559 = vld [vmem:[%s517 + $0x4c] sm:$0xf]
        %v560 = vld [vmem:[%s517 + $0x50] sm:$0xf]
        %v561 = vld [vmem:[%s517 + $0x54] sm:$0xf]
        %v562 = vld [vmem:[%s517 + $0x58] sm:$0xf]
        %v563 = vld [vmem:[%s517 + $0x5c] sm:$0xf]
        %v564 = vld [vmem:[%s517 + $0x60] sm:$0xf]
        %v565 = vld [vmem:[%s517 + $0x64] sm:$0xf]
        %v566 = vld [vmem:[%s517 + $0x68] sm:$0xf]
        %v567 = vld [vmem:[%s517 + $0x6c] sm:$0xf]
        %v568 = vld [vmem:[%s517 + $0x70] sm:$0xf]
        %v569 = vld [vmem:[%s517 + $0x74] sm:$0xf]
        %v570 = vld [vmem:[%s517 + $0x78] sm:$0xf]
        %v571 = vld [vmem:[%s517 + $0x7c] sm:$0xf]
        %s572 = scalar_lea.vmem %s517, 128 [#allocation2]
        %v573 = vld [vmem:[%s572] sm:$0xf]
        %v574 = vld [vmem:[%s572 + $0x4] sm:$0xf]
        %v575 = vld [vmem:[%s572 + $0x8] sm:$0xf]
        %v576 = vld [vmem:[%s572 + $0xc] sm:$0xf]
        %v577 = vld [vmem:[%s572 + $0x10] sm:$0xf]
        %v578 = vld [vmem:[%s572 + $0x14] sm:$0xf]
        %v579 = vld [vmem:[%s572 + $0x18] sm:$0xf]
        %v580 = vld [vmem:[%s572 + $0x1c] sm:$0xf]
        %v581 = vld [vmem:[%s572 + $0x20] sm:$0xf]
        %v582 = vld [vmem:[%s572 + $0x24] sm:$0xf]
        %v583 = vld [vmem:[%s572 + $0x28] sm:$0xf]
        %v584 = vld [vmem:[%s572 + $0x2c] sm:$0xf]
        %v585 = vld [vmem:[%s572 + $0x30] sm:$0xf]
        %v586 = vld [vmem:[%s572 + $0x34] sm:$0xf]
        %v587 = vld [vmem:[%s572 + $0x38] sm:$0xf]
        %v588 = vld [vmem:[%s572 + $0x3c] sm:$0xf]
        %v589 = vld [vmem:[%s572 + $0x40] sm:$0xf]
        %v590 = vld [vmem:[%s572 + $0x44] sm:$0xf]
        %v591 = vld [vmem:[%s572 + $0x48] sm:$0xf]
        %v592 = vld [vmem:[%s572 + $0x4c] sm:$0xf]
        %v593 = vld [vmem:[%s572 + $0x50] sm:$0xf]
        %v594 = vld [vmem:[%s572 + $0x54] sm:$0xf]
        %v595 = vld [vmem:[%s572 + $0x58] sm:$0xf]
        %v596 = vld [vmem:[%s572 + $0x5c] sm:$0xf]
        %v597 = vld [vmem:[%s572 + $0x60] sm:$0xf]
        %v598 = vld [vmem:[%s572 + $0x64] sm:$0xf]
        %v599 = vld [vmem:[%s572 + $0x68] sm:$0xf]
        %v600 = vld [vmem:[%s572 + $0x6c] sm:$0xf]
        %v601 = vld [vmem:[%s572 + $0x70] sm:$0xf]
        %v602 = vld [vmem:[%s572 + $0x74] sm:$0xf]
        %v603 = vld [vmem:[%s572 + $0x78] sm:$0xf]
        %v604 = vld [vmem:[%s572 + $0x7c] sm:$0xf]
        %s605 = scalar_lea.vmem %s517, 256 [#allocation2]
        %v606 = vld [vmem:[%s605] sm:$0xf]
        %v607 = vld [vmem:[%s605 + $0x4] sm:$0xf]
        %v608 = vld [vmem:[%s605 + $0x8] sm:$0xf]
        %v609 = vld [vmem:[%s605 + $0xc] sm:$0xf]
        %v610 = vld [vmem:[%s605 + $0x10] sm:$0xf]
        %v611 = vld [vmem:[%s605 + $0x14] sm:$0xf]
        %v612 = vld [vmem:[%s605 + $0x18] sm:$0xf]
        %v613 = vld [vmem:[%s605 + $0x1c] sm:$0xf]
        %v614 = vld [vmem:[%s605 + $0x20] sm:$0xf]
        %v615 = vld [vmem:[%s605 + $0x24] sm:$0xf]
        %v616 = vld [vmem:[%s605 + $0x28] sm:$0xf]
        %v617 = vld [vmem:[%s605 + $0x2c] sm:$0xf]
        %v618 = vld [vmem:[%s605 + $0x30] sm:$0xf]
        %v619 = vld [vmem:[%s605 + $0x34] sm:$0xf]
        %v620 = vld [vmem:[%s605 + $0x38] sm:$0xf]
        %v621 = vld [vmem:[%s605 + $0x3c] sm:$0xf]
        %v622 = vld [vmem:[%s605 + $0x40] sm:$0xf]
        %v623 = vld [vmem:[%s605 + $0x44] sm:$0xf]
        %v624 = vld [vmem:[%s605 + $0x48] sm:$0xf]
        %v625 = vld [vmem:[%s605 + $0x4c] sm:$0xf]
        %v626 = vld [vmem:[%s605 + $0x50] sm:$0xf]
        %v627 = vld [vmem:[%s605 + $0x54] sm:$0xf]
        %v628 = vld [vmem:[%s605 + $0x58] sm:$0xf]
        %v629 = vld [vmem:[%s605 + $0x5c] sm:$0xf]
        %v630 = vld [vmem:[%s605 + $0x60] sm:$0xf]
        %v631 = vld [vmem:[%s605 + $0x64] sm:$0xf]
        %v632 = vld [vmem:[%s605 + $0x68] sm:$0xf]
        %v633 = vld [vmem:[%s605 + $0x6c] sm:$0xf]
        %v634 = vld [vmem:[%s605 + $0x70] sm:$0xf]
        %v635 = vld [vmem:[%s605 + $0x74] sm:$0xf]
        %v636 = vld [vmem:[%s605 + $0x78] sm:$0xf]
        %v637 = vld [vmem:[%s605 + $0x7c] sm:$0xf]
        %v670 = vunpack.c.l.b16 %v540
        %v671 = vunpack.c.l.b16 %v541
        %v672 = vunpack.c.l.b16 %v542
        %v673 = vunpack.c.l.b16 %v543
        %v674 = vunpack.c.l.b16 %v544
        %v675 = vunpack.c.l.b16 %v545
        %v676 = vunpack.c.l.b16 %v546
        %v677 = vunpack.c.l.b16 %v547
        %v678 = vunpack.c.l.b16 %v548
        %v679 = vunpack.c.l.b16 %v549
        %v680 = vunpack.c.l.b16 %v550
        %v681 = vunpack.c.l.b16 %v551
        %v682 = vunpack.c.l.b16 %v552
        %v683 = vunpack.c.l.b16 %v553
        %v684 = vunpack.c.l.b16 %v554
        %v685 = vunpack.c.l.b16 %v555
        %v686 = vunpack.c.l.b16 %v556
        %v687 = vunpack.c.l.b16 %v557
        %v688 = vunpack.c.l.b16 %v558
        %v689 = vunpack.c.l.b16 %v559
        %v690 = vunpack.c.l.b16 %v560
        %v691 = vunpack.c.l.b16 %v561
        %v692 = vunpack.c.l.b16 %v562
        %v693 = vunpack.c.l.b16 %v563
        %v694 = vunpack.c.l.b16 %v564
        %v695 = vunpack.c.l.b16 %v565
        %v696 = vunpack.c.l.b16 %v566
        %v697 = vunpack.c.l.b16 %v567
        %v698 = vunpack.c.l.b16 %v568
        %v699 = vunpack.c.l.b16 %v569
        %v700 = vunpack.c.l.b16 %v570
        %v701 = vunpack.c.l.b16 %v571
        %v702 = vpack.c.b16 %v671, %v670
        %v703 = vpack.c.b16 %v673, %v672
        %v704 = vpack.c.b16 %v675, %v674
        %v705 = vpack.c.b16 %v677, %v676
        %v706 = vpack.c.b16 %v679, %v678
        %v707 = vpack.c.b16 %v681, %v680
        %v708 = vpack.c.b16 %v683, %v682
        %v709 = vpack.c.b16 %v685, %v684
        %v710 = vpack.c.b16 %v687, %v686
        %v711 = vpack.c.b16 %v689, %v688
        %v712 = vpack.c.b16 %v691, %v690
        %v713 = vpack.c.b16 %v693, %v692
        %v714 = vpack.c.b16 %v695, %v694
        %v715 = vpack.c.b16 %v697, %v696
        %v716 = vpack.c.b16 %v699, %v698
        %v717 = vpack.c.b16 %v701, %v700
        %v750 = vunpack.c.l.b16 %v573
        %v751 = vunpack.c.l.b16 %v574
        %v752 = vunpack.c.l.b16 %v575
        %v753 = vunpack.c.l.b16 %v576
        %v754 = vunpack.c.l.b16 %v577
        %v755 = vunpack.c.l.b16 %v578
        %v756 = vunpack.c.l.b16 %v579
        %v757 = vunpack.c.l.b16 %v580
        %v758 = vunpack.c.l.b16 %v581
        %v759 = vunpack.c.l.b16 %v582
        %v760 = vunpack.c.l.b16 %v583
        %v761 = vunpack.c.l.b16 %v584
        %v762 = vunpack.c.l.b16 %v585
        %v763 = vunpack.c.l.b16 %v586
        %v764 = vunpack.c.l.b16 %v587
        %v765 = vunpack.c.l.b16 %v588
        %v766 = vunpack.c.l.b16 %v589
        %v767 = vunpack.c.l.b16 %v590
        %v768 = vunpack.c.l.b16 %v591
        %v769 = vunpack.c.l.b16 %v592
        %v770 = vunpack.c.l.b16 %v593
        %v771 = vunpack.c.l.b16 %v594
        %v772 = vunpack.c.l.b16 %v595
        %v773 = vunpack.c.l.b16 %v596
        %v774 = vunpack.c.l.b16 %v597
        %v775 = vunpack.c.l.b16 %v598
        %v776 = vunpack.c.l.b16 %v599
        %v777 = vunpack.c.l.b16 %v600
        %v778 = vunpack.c.l.b16 %v601
        %v779 = vunpack.c.l.b16 %v602
        %v780 = vunpack.c.l.b16 %v603
        %v781 = vunpack.c.l.b16 %v604
        %v782 = vpack.c.b16 %v751, %v750
        %v783 = vpack.c.b16 %v753, %v752
        %v784 = vpack.c.b16 %v755, %v754
        %v785 = vpack.c.b16 %v757, %v756
        %v786 = vpack.c.b16 %v759, %v758
        %v787 = vpack.c.b16 %v761, %v760
        %v788 = vpack.c.b16 %v763, %v762
        %v789 = vpack.c.b16 %v765, %v764
        %v790 = vpack.c.b16 %v767, %v766
        %v791 = vpack.c.b16 %v769, %v768
        %v792 = vpack.c.b16 %v771, %v770
        %v793 = vpack.c.b16 %v773, %v772
        %v794 = vpack.c.b16 %v775, %v774
        %v795 = vpack.c.b16 %v777, %v776
        %v796 = vpack.c.b16 %v779, %v778
        %v797 = vpack.c.b16 %v781, %v780
        %vm798 = vcmask 130048
        %v800 = vsel %vm798, %v702, 0
        %v803 = vsel %vm798, %v703, 0
        %v806 = vsel %vm798, %v704, 0
        %v809 = vsel %vm798, %v705, 0
        %v812 = vsel %vm798, %v706, 0
        %v815 = vsel %vm798, %v707, 0
        %v818 = vsel %vm798, %v708, 0
        %v821 = vsel %vm798, %v709, 0
        %v824 = vsel %vm798, %v710, 0
        %v827 = vsel %vm798, %v711, 0
        %v830 = vsel %vm798, %v712, 0
        %v833 = vsel %vm798, %v713, 0
        %v836 = vsel %vm798, %v714, 0
        %v839 = vsel %vm798, %v715, 0
        %v842 = vsel %vm798, %v716, 0
        %v845 = vsel %vm798, %v717, 0
        %v848 = vsel %vm798, %v782, 0
        %v851 = vsel %vm798, %v783, 0
        %v854 = vsel %vm798, %v784, 0
        %v857 = vsel %vm798, %v785, 0
        %v860 = vsel %vm798, %v786, 0
        %v863 = vsel %vm798, %v787, 0
        %v866 = vsel %vm798, %v788, 0
        %v869 = vsel %vm798, %v789, 0
        %v872 = vsel %vm798, %v790, 0
        %v875 = vsel %vm798, %v791, 0
        %v878 = vsel %vm798, %v792, 0
        %v881 = vsel %vm798, %v793, 0
        %v884 = vsel %vm798, %v794, 0
        %v887 = vsel %vm798, %v795, 0
        %v890 = vsel %vm798, %v796, 0
        %v893 = vsel %vm798, %v797, 0
        %895 = vmatprep.subr.bf16.mxu0 0
        %896 = vmatpush1.bf16.xpose.msra.mxu0 %v848
        %897 = vmatprep.subr.bf16.mxu0 0
        %898 = vmatpush1.bf16.xpose.msra.mxu0 %v851
        %899 = vmatprep.subr.bf16.mxu0 0
        %900 = vmatpush1.bf16.xpose.msra.mxu0 %v854
        %901 = vmatprep.subr.bf16.mxu0 0
        %902 = vmatpush1.bf16.xpose.msra.mxu0 %v857
        %903 = vmatprep.subr.bf16.mxu0 0
        %904 = vmatpush1.bf16.xpose.msra.mxu0 %v860
        %905 = vmatprep.subr.bf16.mxu0 0
        %906 = vmatpush1.bf16.xpose.msra.mxu0 %v863
        %907 = vmatprep.subr.bf16.mxu0 0
        %908 = vmatpush1.bf16.xpose.msra.mxu0 %v866
        %909 = vmatprep.subr.bf16.mxu0 0
        %910 = vmatpush1.bf16.xpose.msra.mxu0 %v869
        %911 = vmatprep.subr.bf16.mxu0 0
        %912 = vmatpush1.bf16.xpose.msra.mxu0 %v872
        %913 = vmatprep.subr.bf16.mxu0 0
        %914 = vmatpush1.bf16.xpose.msra.mxu0 %v875
        %915 = vmatprep.subr.bf16.mxu0 0
        %916 = vmatpush1.bf16.xpose.msra.mxu0 %v878
        %917 = vmatprep.subr.bf16.mxu0 0
        %918 = vmatpush1.bf16.xpose.msra.mxu0 %v881
        %919 = vmatprep.subr.bf16.mxu0 0
        %920 = vmatpush1.bf16.xpose.msra.mxu0 %v884
        %921 = vmatprep.subr.bf16.mxu0 0
        %922 = vmatpush1.bf16.xpose.msra.mxu0 %v887
        %923 = vmatprep.subr.bf16.mxu0 0
        %924 = vmatpush1.bf16.xpose.msra.mxu0 %v890
        %925 = vmatprep.subr.bf16.mxu0 0
        %926 = vmatpush1.bf16.xpose.msra.mxu0 %v893
        %927 = vmatprep.mubr.bf16.mxu0 0
        %928 = vmatmul.mubr.bf16.gmra.mrb[0].mxu0 %v800
        %v929 = vpop.f32.mrb[0].mxu0
        %v930 = vadd.f32 0.0, %v929
        %v931 = vpop.f32.mrb[0].mxu0
        %v932 = vadd.f32 0.0, %v931
        %v933 = vpop.f32.mrb[0].mxu0
        %v934 = vadd.f32 0.0, %v933
        %v935 = vpop.f32.mrb[0].mxu0
        %v936 = vadd.f32 0.0, %v935
        %937 = vmatprep.mubr.bf16.mxu0 0
        %938 = vmatmul.mubr.bf16.gmra.mrb[0].mxu0 %v803
        %v939 = vpop.f32.mrb[0].mxu0
        %v940 = vadd.f32 0.0, %v939
        %v941 = vpop.f32.mrb[0].mxu0
        %v942 = vadd.f32 0.0, %v941
        %v943 = vpop.f32.mrb[0].mxu0
        %v944 = vadd.f32 0.0, %v943
        %v945 = vpop.f32.mrb[0].mxu0
        %v946 = vadd.f32 0.0, %v945
        %947 = vmatprep.mubr.bf16.mxu0 0
        %948 = vmatmul.mubr.bf16.gmra.mrb[0].mxu0 %v806
        %v949 = vpop.f32.mrb[0].mxu0
        %v950 = vadd.f32 0.0, %v949
        %v951 = vpop.f32.mrb[0].mxu0
        %v952 = vadd.f32 0.0, %v951
        %v953 = vpop.f32.mrb[0].mxu0
        %v954 = vadd.f32 0.0, %v953
        %v955 = vpop.f32.mrb[0].mxu0
        %v956 = vadd.f32 0.0, %v955
        %957 = vmatprep.mubr.bf16.mxu0 0
        %958 = vmatmul.mubr.bf16.gmra.mrb[0].mxu0 %v809
        %v959 = vpop.f32.mrb[0].mxu0
        %v960 = vadd.f32 0.0, %v959
        %v961 = vpop.f32.mrb[0].mxu0
        %v962 = vadd.f32 0.0, %v961
        %v963 = vpop.f32.mrb[0].mxu0
        %v964 = vadd.f32 0.0, %v963
        %v965 = vpop.f32.mrb[0].mxu0
        %v966 = vadd.f32 0.0, %v965
        %967 = vmatprep.mubr.bf16.mxu0 0
        %968 = vmatmul.mubr.bf16.gmra.mrb[0].mxu0 %v812
        %v969 = vpop.f32.mrb[0].mxu0
        %v970 = vadd.f32 0.0, %v969
        %v971 = vpop.f32.mrb[0].mxu0
        %v972 = vadd.f32 0.0, %v971
        %v973 = vpop.f32.mrb[0].mxu0
        %v974 = vadd.f32 0.0, %v973
        %v975 = vpop.f32.mrb[0].mxu0
        %v976 = vadd.f32 0.0, %v975
        %977 = vmatprep.mubr.bf16.mxu0 0
        %978 = vmatmul.mubr.bf16.gmra.mrb[0].mxu0 %v815
        %v979 = vpop.f32.mrb[0].mxu0
        %v980 = vadd.f32 0.0, %v979
        %v981 = vpop.f32.mrb[0].mxu0
        %v982 = vadd.f32 0.0, %v981
        %v983 = vpop.f32.mrb[0].mxu0
        %v984 = vadd.f32 0.0, %v983
        %v985 = vpop.f32.mrb[0].mxu0
        %v986 = vadd.f32 0.0, %v985
        %987 = vmatprep.mubr.bf16.mxu0 0
        %988 = vmatmul.mubr.bf16.gmra.mrb[0].mxu0 %v818
        %v989 = vpop.f32.mrb[0].mxu0
        %v990 = vadd.f32 0.0, %v989
        %v991 = vpop.f32.mrb[0].mxu0
        %v992 = vadd.f32 0.0, %v991
        %v993 = vpop.f32.mrb[0].mxu0
        %v994 = vadd.f32 0.0, %v993
        %v995 = vpop.f32.mrb[0].mxu0
        %v996 = vadd.f32 0.0, %v995
        %997 = vmatprep.mubr.bf16.mxu0 0
        %998 = vmatmul.mubr.bf16.gmra.mrb[0].mxu0 %v821
        %v999 = vpop.f32.mrb[0].mxu0
        %v1000 = vadd.f32 0.0, %v999
        %v1001 = vpop.f32.mrb[0].mxu0
        %v1002 = vadd.f32 0.0, %v1001
        %v1003 = vpop.f32.mrb[0].mxu0
        %v1004 = vadd.f32 0.0, %v1003
        %v1005 = vpop.f32.mrb[0].mxu0
        %v1006 = vadd.f32 0.0, %v1005
        %1007 = vmatprep.mubr.bf16.mxu0 0
        %1008 = vmatmul.mubr.bf16.gmra.mrb[0].mxu0 %v824
        %v1009 = vpop.f32.mrb[0].mxu0
        %v1010 = vadd.f32 0.0, %v1009
        %v1011 = vpop.f32.mrb[0].mxu0
        %v1012 = vadd.f32 0.0, %v1011
        %v1013 = vpop.f32.mrb[0].mxu0
        %v1014 = vadd.f32 0.0, %v1013
        %v1015 = vpop.f32.mrb[0].mxu0
        %v1016 = vadd.f32 0.0, %v1015
        %1017 = vmatprep.mubr.bf16.mxu0 0
        %1018 = vmatmul.mubr.bf16.gmra.mrb[0].mxu0 %v827
        %v1019 = vpop.f32.mrb[0].mxu0
        %v1020 = vadd.f32 0.0, %v1019
        %v1021 = vpop.f32.mrb[0].mxu0
        %v1022 = vadd.f32 0.0, %v1021
        %v1023 = vpop.f32.mrb[0].mxu0
        %v1024 = vadd.f32 0.0, %v1023
        %v1025 = vpop.f32.mrb[0].mxu0
        %v1026 = vadd.f32 0.0, %v1025
        %1027 = vmatprep.mubr.bf16.mxu0 0
        %1028 = vmatmul.mubr.bf16.gmra.mrb[0].mxu0 %v830
        %v1029 = vpop.f32.mrb[0].mxu0
        %v1030 = vadd.f32 0.0, %v1029
        %v1031 = vpop.f32.mrb[0].mxu0
        %v1032 = vadd.f32 0.0, %v1031
        %v1033 = vpop.f32.mrb[0].mxu0
        %v1034 = vadd.f32 0.0, %v1033
        %v1035 = vpop.f32.mrb[0].mxu0
        %v1036 = vadd.f32 0.0, %v1035
        %1037 = vmatprep.mubr.bf16.mxu0 0
        %1038 = vmatmul.mubr.bf16.gmra.mrb[0].mxu0 %v833
        %v1039 = vpop.f32.mrb[0].mxu0
        %v1040 = vadd.f32 0.0, %v1039
        %v1041 = vpop.f32.mrb[0].mxu0
        %v1042 = vadd.f32 0.0, %v1041
        %v1043 = vpop.f32.mrb[0].mxu0
        %v1044 = vadd.f32 0.0, %v1043
        %v1045 = vpop.f32.mrb[0].mxu0
        %v1046 = vadd.f32 0.0, %v1045
        %1047 = vmatprep.mubr.bf16.mxu0 0
        %1048 = vmatmul.mubr.bf16.gmra.mrb[0].mxu0 %v836
        %v1049 = vpop.f32.mrb[0].mxu0
        %v1050 = vadd.f32 0.0, %v1049
        %v1051 = vpop.f32.mrb[0].mxu0
        %v1052 = vadd.f32 0.0, %v1051
        %v1053 = vpop.f32.mrb[0].mxu0
        %v1054 = vadd.f32 0.0, %v1053
        %v1055 = vpop.f32.mrb[0].mxu0
        %v1056 = vadd.f32 0.0, %v1055
        %1057 = vmatprep.mubr.bf16.mxu0 0
        %1058 = vmatmul.mubr.bf16.gmra.mrb[0].mxu0 %v839
        %v1059 = vpop.f32.mrb[0].mxu0
        %v1060 = vadd.f32 0.0, %v1059
        %v1061 = vpop.f32.mrb[0].mxu0
        %v1062 = vadd.f32 0.0, %v1061
        %v1063 = vpop.f32.mrb[0].mxu0
        %v1064 = vadd.f32 0.0, %v1063
        %v1065 = vpop.f32.mrb[0].mxu0
        %v1066 = vadd.f32 0.0, %v1065
        %1067 = vmatprep.mubr.bf16.mxu0 0
        %1068 = vmatmul.mubr.bf16.gmra.mrb[0].mxu0 %v842
        %v1069 = vpop.f32.mrb[0].mxu0
        %v1070 = vadd.f32 0.0, %v1069
        %v1071 = vpop.f32.mrb[0].mxu0
        %v1072 = vadd.f32 0.0, %v1071
        %v1073 = vpop.f32.mrb[0].mxu0
        %v1074 = vadd.f32 0.0, %v1073
        %v1075 = vpop.f32.mrb[0].mxu0
        %v1076 = vadd.f32 0.0, %v1075
        %1077 = vmatprep.mubr.bf16.mxu0 0
        %1078 = vmatmul.mubr.bf16.gmra.mrb[0].mxu0 %v845
        %v1079 = vpop.f32.mrb[0].mxu0
        %v1080 = vadd.f32 0.0, %v1079
        %v1081 = vpop.f32.mrb[0].mxu0
        %v1082 = vadd.f32 0.0, %v1081
        %v1083 = vpop.f32.mrb[0].mxu0
        %v1084 = vadd.f32 0.0, %v1083
        %v1085 = vpop.f32.mrb[0].mxu0
        %v1086 = vadd.f32 0.0, %v1085
        %1087 = vdwg.mxu0
        %v1088 = vmax.f32 %v930, %v932
        %1089 = vmax.xlane.f32.xlu0 %v1088
        %v1090 = vpop.xlane.xlu0 %1089
        %v1091 = vmax.f32 %v934, %v936
        %1092 = vmax.xlane.f32.xlu0 %v1091
        %v1093 = vpop.xlane.xlu0 %1092
        %v1094 = vmax.f32 %v940, %v942
        %1095 = vmax.xlane.f32.xlu0 %v1094
        %v1096 = vpop.xlane.xlu0 %1095
        %v1097 = vmax.f32 %v944, %v946
        %1098 = vmax.xlane.f32.xlu0 %v1097
        %v1099 = vpop.xlane.xlu0 %1098
        %v1100 = vmax.f32 %v950, %v952
        %1101 = vmax.xlane.f32.xlu0 %v1100
        %v1102 = vpop.xlane.xlu0 %1101
        %v1103 = vmax.f32 %v954, %v956
        %1104 = vmax.xlane.f32.xlu0 %v1103
        %v1105 = vpop.xlane.xlu0 %1104
        %v1106 = vmax.f32 %v960, %v962
        %1107 = vmax.xlane.f32.xlu0 %v1106
        %v1108 = vpop.xlane.xlu0 %1107
        %v1109 = vmax.f32 %v964, %v966
        %1110 = vmax.xlane.f32.xlu0 %v1109
        %v1111 = vpop.xlane.xlu0 %1110
        %v1112 = vmax.f32 %v970, %v972
        %1113 = vmax.xlane.f32.xlu0 %v1112
        %v1114 = vpop.xlane.xlu0 %1113
        %v1115 = vmax.f32 %v974, %v976
        %1116 = vmax.xlane.f32.xlu0 %v1115
        %v1117 = vpop.xlane.xlu0 %1116
        %v1118 = vmax.f32 %v980, %v982
        %1119 = vmax.xlane.f32.xlu0 %v1118
        %v1120 = vpop.xlane.xlu0 %1119
        %v1121 = vmax.f32 %v984, %v986
        %1122 = vmax.xlane.f32.xlu0 %v1121
        %v1123 = vpop.xlane.xlu0 %1122
        %v1124 = vmax.f32 %v990, %v992
        %1125 = vmax.xlane.f32.xlu0 %v1124
        %v1126 = vpop.xlane.xlu0 %1125
        %v1127 = vmax.f32 %v994, %v996
        %1128 = vmax.xlane.f32.xlu0 %v1127
        %v1129 = vpop.xlane.xlu0 %1128
        %v1130 = vmax.f32 %v1000, %v1002
        %1131 = vmax.xlane.f32.xlu0 %v1130
        %v1132 = vpop.xlane.xlu0 %1131
        %v1133 = vmax.f32 %v1004, %v1006
        %1134 = vmax.xlane.f32.xlu0 %v1133
        %v1135 = vpop.xlane.xlu0 %1134
        %v1136 = vmax.f32 %v1010, %v1012
        %1137 = vmax.xlane.f32.xlu0 %v1136
        %v1138 = vpop.xlane.xlu0 %1137
        %v1139 = vmax.f32 %v1014, %v1016
        %1140 = vmax.xlane.f32.xlu0 %v1139
        %v1141 = vpop.xlane.xlu0 %1140
        %v1142 = vmax.f32 %v1020, %v1022
        %1143 = vmax.xlane.f32.xlu0 %v1142
        %v1144 = vpop.xlane.xlu0 %1143
        %v1145 = vmax.f32 %v1024, %v1026
        %1146 = vmax.xlane.f32.xlu0 %v1145
        %v1147 = vpop.xlane.xlu0 %1146
        %v1148 = vmax.f32 %v1030, %v1032
        %1149 = vmax.xlane.f32.xlu0 %v1148
        %v1150 = vpop.xlane.xlu0 %1149
        %v1151 = vmax.f32 %v1034, %v1036
        %1152 = vmax.xlane.f32.xlu0 %v1151
        %v1153 = vpop.xlane.xlu0 %1152
        %v1154 = vmax.f32 %v1040, %v1042
        %1155 = vmax.xlane.f32.xlu0 %v1154
        %v1156 = vpop.xlane.xlu0 %1155
        %v1157 = vmax.f32 %v1044, %v1046
        %1158 = vmax.xlane.f32.xlu0 %v1157
        %v1159 = vpop.xlane.xlu0 %1158
        %v1160 = vmax.f32 %v1050, %v1052
        %1161 = vmax.xlane.f32.xlu0 %v1160
        %v1162 = vpop.xlane.xlu0 %1161
        %v1163 = vmax.f32 %v1054, %v1056
        %1164 = vmax.xlane.f32.xlu0 %v1163
        %v1165 = vpop.xlane.xlu0 %1164
        %v1166 = vmax.f32 %v1060, %v1062
        %1167 = vmax.xlane.f32.xlu0 %v1166
        %v1168 = vpop.xlane.xlu0 %1167
        %v1169 = vmax.f32 %v1064, %v1066
        %1170 = vmax.xlane.f32.xlu0 %v1169
        %v1171 = vpop.xlane.xlu0 %1170
        %v1172 = vmax.f32 %v1070, %v1072
        %1173 = vmax.xlane.f32.xlu0 %v1172
        %v1174 = vpop.xlane.xlu0 %1173
        %v1175 = vmax.f32 %v1074, %v1076
        %1176 = vmax.xlane.f32.xlu0 %v1175
        %v1177 = vpop.xlane.xlu0 %1176
        %v1178 = vmax.f32 %v1080, %v1082
        %1179 = vmax.xlane.f32.xlu0 %v1178
        %v1180 = vpop.xlane.xlu0 %1179
        %v1181 = vmax.f32 %v1084, %v1086
        %1182 = vmax.xlane.f32.xlu0 %v1181
        %v1183 = vpop.xlane.xlu0 %1182
        %v1184 = vsub.f32 %v930, %v1090
        %v1185 = vsub.f32 %v932, %v1090
        %v1186 = vsub.f32 %v934, %v1093
        %v1187 = vsub.f32 %v936, %v1093
        %v1188 = vsub.f32 %v940, %v1096
        %v1189 = vsub.f32 %v942, %v1096
        %v1190 = vsub.f32 %v944, %v1099
        %v1191 = vsub.f32 %v946, %v1099
        %v1192 = vsub.f32 %v950, %v1102
        %v1193 = vsub.f32 %v952, %v1102
        %v1194 = vsub.f32 %v954, %v1105
        %v1195 = vsub.f32 %v956, %v1105
        %v1196 = vsub.f32 %v960, %v1108
        %v1197 = vsub.f32 %v962, %v1108
        %v1198 = vsub.f32 %v964, %v1111
        %v1199 = vsub.f32 %v966, %v1111
        %v1200 = vsub.f32 %v970, %v1114
        %v1201 = vsub.f32 %v972, %v1114
        %v1202 = vsub.f32 %v974, %v1117
        %v1203 = vsub.f32 %v976, %v1117
        %v1204 = vsub.f32 %v980, %v1120
        %v1205 = vsub.f32 %v982, %v1120
        %v1206 = vsub.f32 %v984, %v1123
        %v1207 = vsub.f32 %v986, %v1123
        %v1208 = vsub.f32 %v990, %v1126
        %v1209 = vsub.f32 %v992, %v1126
        %v1210 = vsub.f32 %v994, %v1129
        %v1211 = vsub.f32 %v996, %v1129
        %v1212 = vsub.f32 %v1000, %v1132
        %v1213 = vsub.f32 %v1002, %v1132
        %v1214 = vsub.f32 %v1004, %v1135
        %v1215 = vsub.f32 %v1006, %v1135
        %v1216 = vsub.f32 %v1010, %v1138
        %v1217 = vsub.f32 %v1012, %v1138
        %v1218 = vsub.f32 %v1014, %v1141
        %v1219 = vsub.f32 %v1016, %v1141
        %v1220 = vsub.f32 %v1020, %v1144
        %v1221 = vsub.f32 %v1022, %v1144
        %v1222 = vsub.f32 %v1024, %v1147
        %v1223 = vsub.f32 %v1026, %v1147
        %v1224 = vsub.f32 %v1030, %v1150
        %v1225 = vsub.f32 %v1032, %v1150
        %v1226 = vsub.f32 %v1034, %v1153
        %v1227 = vsub.f32 %v1036, %v1153
        %v1228 = vsub.f32 %v1040, %v1156
        %v1229 = vsub.f32 %v1042, %v1156
        %v1230 = vsub.f32 %v1044, %v1159
        %v1231 = vsub.f32 %v1046, %v1159
        %v1232 = vsub.f32 %v1050, %v1162
        %v1233 = vsub.f32 %v1052, %v1162
        %v1234 = vsub.f32 %v1054, %v1165
        %v1235 = vsub.f32 %v1056, %v1165
        %v1236 = vsub.f32 %v1060, %v1168
        %v1237 = vsub.f32 %v1062, %v1168
        %v1238 = vsub.f32 %v1064, %v1171
        %v1239 = vsub.f32 %v1066, %v1171
        %v1240 = vsub.f32 %v1070, %v1174
        %v1241 = vsub.f32 %v1072, %v1174
        %v1242 = vsub.f32 %v1074, %v1177
        %v1243 = vsub.f32 %v1076, %v1177
        %v1244 = vsub.f32 %v1080, %v1180
        %v1245 = vsub.f32 %v1082, %v1180
        %v1246 = vsub.f32 %v1084, %v1183
        %v1247 = vsub.f32 %v1086, %v1183
        %v1248 = vmul.f32 %v1184, 1.442695
        %v1249 = vpow.pop %v1248
        %v1250 = vmul.f32 %v1185, 1.442695
        %v1251 = vpow.pop %v1250
        %v1252 = vmul.f32 %v1186, 1.442695
        %v1253 = vpow.pop %v1252
        %v1254 = vmul.f32 %v1187, 1.442695
        %v1255 = vpow.pop %v1254
        %v1256 = vmul.f32 %v1188, 1.442695
        %v1257 = vpow.pop %v1256
        %v1258 = vmul.f32 %v1189, 1.442695
        %v1259 = vpow.pop %v1258
        %v1260 = vmul.f32 %v1190, 1.442695
        %v1261 = vpow.pop %v1260
        %v1262 = vmul.f32 %v1191, 1.442695
        %v1263 = vpow.pop %v1262
        %v1264 = vmul.f32 %v1192, 1.442695
        %v1265 = vpow.pop %v1264
        %v1266 = vmul.f32 %v1193, 1.442695
        %v1267 = vpow.pop %v1266
        %v1268 = vmul.f32 %v1194, 1.442695
        %v1269 = vpow.pop %v1268
        %v1270 = vmul.f32 %v1195, 1.442695
        %v1271 = vpow.pop %v1270
        %v1272 = vmul.f32 %v1196, 1.442695
        %v1273 = vpow.pop %v1272
        %v1274 = vmul.f32 %v1197, 1.442695
        %v1275 = vpow.pop %v1274
        %v1276 = vmul.f32 %v1198, 1.442695
        %v1277 = vpow.pop %v1276
        %v1278 = vmul.f32 %v1199, 1.442695
        %v1279 = vpow.pop %v1278
        %v1280 = vmul.f32 %v1200, 1.442695
        %v1281 = vpow.pop %v1280
        %v1282 = vmul.f32 %v1201, 1.442695
        %v1283 = vpow.pop %v1282
        %v1284 = vmul.f32 %v1202, 1.442695
        %v1285 = vpow.pop %v1284
        %v1286 = vmul.f32 %v1203, 1.442695
        %v1287 = vpow.pop %v1286
        %v1288 = vmul.f32 %v1204, 1.442695
        %v1289 = vpow.pop %v1288
        %v1290 = vmul.f32 %v1205, 1.442695
        %v1291 = vpow.pop %v1290
        %v1292 = vmul.f32 %v1206, 1.442695
        %v1293 = vpow.pop %v1292
        %v1294 = vmul.f32 %v1207, 1.442695
        %v1295 = vpow.pop %v1294
        %v1296 = vmul.f32 %v1208, 1.442695
        %v1297 = vpow.pop %v1296
        %v1298 = vmul.f32 %v1209, 1.442695
        %v1299 = vpow.pop %v1298
        %v1300 = vmul.f32 %v1210, 1.442695
        %v1301 = vpow.pop %v1300
        %v1302 = vmul.f32 %v1211, 1.442695
        %v1303 = vpow.pop %v1302
        %v1304 = vmul.f32 %v1212, 1.442695
        %v1305 = vpow.pop %v1304
        %v1306 = vmul.f32 %v1213, 1.442695
        %v1307 = vpow.pop %v1306
        %v1308 = vmul.f32 %v1214, 1.442695
        %v1309 = vpow.pop %v1308
        %v1310 = vmul.f32 %v1215, 1.442695
        %v1311 = vpow.pop %v1310
        %v1312 = vmul.f32 %v1216, 1.442695
        %v1313 = vpow.pop %v1312
        %v1314 = vmul.f32 %v1217, 1.442695
        %v1315 = vpow.pop %v1314
        %v1316 = vmul.f32 %v1218, 1.442695
        %v1317 = vpow.pop %v1316
        %v1318 = vmul.f32 %v1219, 1.442695
        %v1319 = vpow.pop %v1318
        %v1320 = vmul.f32 %v1220, 1.442695
        %v1321 = vpow.pop %v1320
        %v1322 = vmul.f32 %v1221, 1.442695
        %v1323 = vpow.pop %v1322
        %v1324 = vmul.f32 %v1222, 1.442695
        %v1325 = vpow.pop %v1324
        %v1326 = vmul.f32 %v1223, 1.442695
        %v1327 = vpow.pop %v1326
        %v1328 = vmul.f32 %v1224, 1.442695
        %v1329 = vpow.pop %v1328
        %v1330 = vmul.f32 %v1225, 1.442695
        %v1331 = vpow.pop %v1330
        %v1332 = vmul.f32 %v1226, 1.442695
        %v1333 = vpow.pop %v1332
        %v1334 = vmul.f32 %v1227, 1.442695
        %v1335 = vpow.pop %v1334
        %v1336 = vmul.f32 %v1228, 1.442695
        %v1337 = vpow.pop %v1336
        %v1338 = vmul.f32 %v1229, 1.442695
        %v1339 = vpow.pop %v1338
        %v1340 = vmul.f32 %v1230, 1.442695
        %v1341 = vpow.pop %v1340
        %v1342 = vmul.f32 %v1231, 1.442695
        %v1343 = vpow.pop %v1342
        %v1344 = vmul.f32 %v1232, 1.442695
        %v1345 = vpow.pop %v1344
        %v1346 = vmul.f32 %v1233, 1.442695
        %v1347 = vpow.pop %v1346
        %v1348 = vmul.f32 %v1234, 1.442695
        %v1349 = vpow.pop %v1348
        %v1350 = vmul.f32 %v1235, 1.442695
        %v1351 = vpow.pop %v1350
        %v1352 = vmul.f32 %v1236, 1.442695
        %v1353 = vpow.pop %v1352
        %v1354 = vmul.f32 %v1237, 1.442695
        %v1355 = vpow.pop %v1354
        %v1356 = vmul.f32 %v1238, 1.442695
        %v1357 = vpow.pop %v1356
        %v1358 = vmul.f32 %v1239, 1.442695
        %v1359 = vpow.pop %v1358
        %v1360 = vmul.f32 %v1240, 1.442695
        %v1361 = vpow.pop %v1360
        %v1362 = vmul.f32 %v1241, 1.442695
        %v1363 = vpow.pop %v1362
        %v1364 = vmul.f32 %v1242, 1.442695
        %v1365 = vpow.pop %v1364
        %v1366 = vmul.f32 %v1243, 1.442695
        %v1367 = vpow.pop %v1366
        %v1368 = vmul.f32 %v1244, 1.442695
        %v1369 = vpow.pop %v1368
        %v1370 = vmul.f32 %v1245, 1.442695
        %v1371 = vpow.pop %v1370
        %v1372 = vmul.f32 %v1246, 1.442695
        %v1373 = vpow.pop %v1372
        %v1374 = vmul.f32 %v1247, 1.442695
        %v1375 = vpow.pop %v1374
        %v1376 = vadd.f32 %v1249, %v1251
        %1377 = vadd.xlane.f32.xlu0 %v1376
        %v1378 = vpop.xlane.xlu0 %1377
        %v1379 = vadd.f32 %v1253, %v1255
        %1380 = vadd.xlane.f32.xlu0 %v1379
        %v1381 = vpop.xlane.xlu0 %1380
        %v1382 = vadd.f32 %v1257, %v1259
        %1383 = vadd.xlane.f32.xlu0 %v1382
        %v1384 = vpop.xlane.xlu0 %1383
        %v1385 = vadd.f32 %v1261, %v1263
        %1386 = vadd.xlane.f32.xlu0 %v1385
        %v1387 = vpop.xlane.xlu0 %1386
        %v1388 = vadd.f32 %v1265, %v1267
        %1389 = vadd.xlane.f32.xlu0 %v1388
        %v1390 = vpop.xlane.xlu0 %1389
        %v1391 = vadd.f32 %v1269, %v1271
        %1392 = vadd.xlane.f32.xlu0 %v1391
        %v1393 = vpop.xlane.xlu0 %1392
        %v1394 = vadd.f32 %v1273, %v1275
        %1395 = vadd.xlane.f32.xlu0 %v1394
        %v1396 = vpop.xlane.xlu0 %1395
        %v1397 = vadd.f32 %v1277, %v1279
        %1398 = vadd.xlane.f32.xlu0 %v1397
        %v1399 = vpop.xlane.xlu0 %1398
        %v1400 = vadd.f32 %v1281, %v1283
        %1401 = vadd.xlane.f32.xlu0 %v1400
        %v1402 = vpop.xlane.xlu0 %1401
        %v1403 = vadd.f32 %v1285, %v1287
        %1404 = vadd.xlane.f32.xlu0 %v1403
        %v1405 = vpop.xlane.xlu0 %1404
        %v1406 = vadd.f32 %v1289, %v1291
        %1407 = vadd.xlane.f32.xlu0 %v1406
        %v1408 = vpop.xlane.xlu0 %1407
        %v1409 = vadd.f32 %v1293, %v1295
        %1410 = vadd.xlane.f32.xlu0 %v1409
        %v1411 = vpop.xlane.xlu0 %1410
        %v1412 = vadd.f32 %v1297, %v1299
        %1413 = vadd.xlane.f32.xlu0 %v1412
        %v1414 = vpop.xlane.xlu0 %1413
        %v1415 = vadd.f32 %v1301, %v1303
        %1416 = vadd.xlane.f32.xlu0 %v1415
        %v1417 = vpop.xlane.xlu0 %1416
        %v1418 = vadd.f32 %v1305, %v1307
        %1419 = vadd.xlane.f32.xlu0 %v1418
        %v1420 = vpop.xlane.xlu0 %1419
        %v1421 = vadd.f32 %v1309, %v1311
        %1422 = vadd.xlane.f32.xlu0 %v1421
        %v1423 = vpop.xlane.xlu0 %1422
        %v1424 = vadd.f32 %v1313, %v1315
        %1425 = vadd.xlane.f32.xlu0 %v1424
        %v1426 = vpop.xlane.xlu0 %1425
        %v1427 = vadd.f32 %v1317, %v1319
        %1428 = vadd.xlane.f32.xlu0 %v1427
        %v1429 = vpop.xlane.xlu0 %1428
        %v1430 = vadd.f32 %v1321, %v1323
        %1431 = vadd.xlane.f32.xlu0 %v1430
        %v1432 = vpop.xlane.xlu0 %1431
        %v1433 = vadd.f32 %v1325, %v1327
        %1434 = vadd.xlane.f32.xlu0 %v1433
        %v1435 = vpop.xlane.xlu0 %1434
        %v1436 = vadd.f32 %v1329, %v1331
        %1437 = vadd.xlane.f32.xlu0 %v1436
        %v1438 = vpop.xlane.xlu0 %1437
        %v1439 = vadd.f32 %v1333, %v1335
        %1440 = vadd.xlane.f32.xlu0 %v1439
        %v1441 = vpop.xlane.xlu0 %1440
        %v1442 = vadd.f32 %v1337, %v1339
        %1443 = vadd.xlane.f32.xlu0 %v1442
        %v1444 = vpop.xlane.xlu0 %1443
        %v1445 = vadd.f32 %v1341, %v1343
        %1446 = vadd.xlane.f32.xlu0 %v1445
        %v1447 = vpop.xlane.xlu0 %1446
        %v1448 = vadd.f32 %v1345, %v1347
        %1449 = vadd.xlane.f32.xlu0 %v1448
        %v1450 = vpop.xlane.xlu0 %1449
        %v1451 = vadd.f32 %v1349, %v1351
        %1452 = vadd.xlane.f32.xlu0 %v1451
        %v1453 = vpop.xlane.xlu0 %1452
        %v1454 = vadd.f32 %v1353, %v1355
        %1455 = vadd.xlane.f32.xlu0 %v1454
        %v1456 = vpop.xlane.xlu0 %1455
        %v1457 = vadd.f32 %v1357, %v1359
        %1458 = vadd.xlane.f32.xlu0 %v1457
        %v1459 = vpop.xlane.xlu0 %1458
        %v1460 = vadd.f32 %v1361, %v1363
        %1461 = vadd.xlane.f32.xlu0 %v1460
        %v1462 = vpop.xlane.xlu0 %1461
        %v1463 = vadd.f32 %v1365, %v1367
        %1464 = vadd.xlane.f32.xlu0 %v1463
        %v1465 = vpop.xlane.xlu0 %1464
        %v1466 = vadd.f32 %v1369, %v1371
        %1467 = vadd.xlane.f32.xlu0 %v1466
        %v1468 = vpop.xlane.xlu0 %1467
        %v1469 = vadd.f32 %v1373, %v1375
        %1470 = vadd.xlane.f32.xlu0 %v1469
        %v1471 = vpop.xlane.xlu0 %1470
        %v1472 = vrcp.pop %v1378
        %v1473 = vmul.f32 %v1249, %v1472
        %v1474 = vmul.f32 %v1251, %v1472
        %v1475 = vrcp.pop %v1381
        %v1476 = vmul.f32 %v1253, %v1475
        %v1477 = vmul.f32 %v1255, %v1475
        %v1478 = vrcp.pop %v1384
        %v1479 = vmul.f32 %v1257, %v1478
        %v1480 = vmul.f32 %v1259, %v1478
        %v1481 = vrcp.pop %v1387
        %v1482 = vmul.f32 %v1261, %v1481
        %v1483 = vmul.f32 %v1263, %v1481
        %v1484 = vrcp.pop %v1390
        %v1485 = vmul.f32 %v1265, %v1484
        %v1486 = vmul.f32 %v1267, %v1484
        %v1487 = vrcp.pop %v1393
        %v1488 = vmul.f32 %v1269, %v1487
        %v1489 = vmul.f32 %v1271, %v1487
        %v1490 = vrcp.pop %v1396
        %v1491 = vmul.f32 %v1273, %v1490
        %v1492 = vmul.f32 %v1275, %v1490
        %v1493 = vrcp.pop %v1399
        %v1494 = vmul.f32 %v1277, %v1493
        %v1495 = vmul.f32 %v1279, %v1493
        %v1496 = vrcp.pop %v1402
        %v1497 = vmul.f32 %v1281, %v1496
        %v1498 = vmul.f32 %v1283, %v1496
        %v1499 = vrcp.pop %v1405
        %v1500 = vmul.f32 %v1285, %v1499
        %v1501 = vmul.f32 %v1287, %v1499
        %v1502 = vrcp.pop %v1408
        %v1503 = vmul.f32 %v1289, %v1502
        %v1504 = vmul.f32 %v1291, %v1502
        %v1505 = vrcp.pop %v1411
        %v1506 = vmul.f32 %v1293, %v1505
        %v1507 = vmul.f32 %v1295, %v1505
        %v1508 = vrcp.pop %v1414
        %v1509 = vmul.f32 %v1297, %v1508
        %v1510 = vmul.f32 %v1299, %v1508
        %v1511 = vrcp.pop %v1417
        %v1512 = vmul.f32 %v1301, %v1511
        %v1513 = vmul.f32 %v1303, %v1511
        %v1514 = vrcp.pop %v1420
        %v1515 = vmul.f32 %v1305, %v1514
        %v1516 = vmul.f32 %v1307, %v1514
        %v1517 = vrcp.pop %v1423
        %v1518 = vmul.f32 %v1309, %v1517
        %v1519 = vmul.f32 %v1311, %v1517
        %v1520 = vrcp.pop %v1426
        %v1521 = vmul.f32 %v1313, %v1520
        %v1522 = vmul.f32 %v1315, %v1520
        %v1523 = vrcp.pop %v1429
        %v1524 = vmul.f32 %v1317, %v1523
        %v1525 = vmul.f32 %v1319, %v1523
        %v1526 = vrcp.pop %v1432
        %v1527 = vmul.f32 %v1321, %v1526
        %v1528 = vmul.f32 %v1323, %v1526
        %v1529 = vrcp.pop %v1435
        %v1530 = vmul.f32 %v1325, %v1529
        %v1531 = vmul.f32 %v1327, %v1529
        %v1532 = vrcp.pop %v1438
        %v1533 = vmul.f32 %v1329, %v1532
        %v1534 = vmul.f32 %v1331, %v1532
        %v1535 = vrcp.pop %v1441
        %v1536 = vmul.f32 %v1333, %v1535
        %v1537 = vmul.f32 %v1335, %v1535
        %v1538 = vrcp.pop %v1444
        %v1539 = vmul.f32 %v1337, %v1538
        %v1540 = vmul.f32 %v1339, %v1538
        %v1541 = vrcp.pop %v1447
        %v1542 = vmul.f32 %v1341, %v1541
        %v1543 = vmul.f32 %v1343, %v1541
        %v1544 = vrcp.pop %v1450
        %v1545 = vmul.f32 %v1345, %v1544
        %v1546 = vmul.f32 %v1347, %v1544
        %v1547 = vrcp.pop %v1453
        %v1548 = vmul.f32 %v1349, %v1547
        %v1549 = vmul.f32 %v1351, %v1547
        %v1550 = vrcp.pop %v1456
        %v1551 = vmul.f32 %v1353, %v1550
        %v1552 = vmul.f32 %v1355, %v1550
        %v1553 = vrcp.pop %v1459
        %v1554 = vmul.f32 %v1357, %v1553
        %v1555 = vmul.f32 %v1359, %v1553
        %v1556 = vrcp.pop %v1462
        %v1557 = vmul.f32 %v1361, %v1556
        %v1558 = vmul.f32 %v1363, %v1556
        %v1559 = vrcp.pop %v1465
        %v1560 = vmul.f32 %v1365, %v1559
        %v1561 = vmul.f32 %v1367, %v1559
        %v1562 = vrcp.pop %v1468
        %v1563 = vmul.f32 %v1369, %v1562
        %v1564 = vmul.f32 %v1371, %v1562
        %v1565 = vrcp.pop %v1471
        %v1566 = vmul.f32 %v1373, %v1565
        %v1567 = vmul.f32 %v1375, %v1565
        %v1568 = vpack.c.bf16 %v1476, %v1473
        %v1569 = vpack.c.bf16 %v1477, %v1474
        %v1570 = vpack.c.bf16 %v1482, %v1479
        %v1571 = vpack.c.bf16 %v1483, %v1480
        %v1572 = vpack.c.bf16 %v1488, %v1485
        %v1573 = vpack.c.bf16 %v1489, %v1486
        %v1574 = vpack.c.bf16 %v1494, %v1491
        %v1575 = vpack.c.bf16 %v1495, %v1492
        %v1576 = vpack.c.bf16 %v1500, %v1497
        %v1577 = vpack.c.bf16 %v1501, %v1498
        %v1578 = vpack.c.bf16 %v1506, %v1503
        %v1579 = vpack.c.bf16 %v1507, %v1504
        %v1580 = vpack.c.bf16 %v1512, %v1509
        %v1581 = vpack.c.bf16 %v1513, %v1510
        %v1582 = vpack.c.bf16 %v1518, %v1515
        %v1583 = vpack.c.bf16 %v1519, %v1516
        %v1584 = vpack.c.bf16 %v1524, %v1521
        %v1585 = vpack.c.bf16 %v1525, %v1522
        %v1586 = vpack.c.bf16 %v1530, %v1527
        %v1587 = vpack.c.bf16 %v1531, %v1528
        %v1588 = vpack.c.bf16 %v1536, %v1533
        %v1589 = vpack.c.bf16 %v1537, %v1534
        %v1590 = vpack.c.bf16 %v1542, %v1539
        %v1591 = vpack.c.bf16 %v1543, %v1540
        %v1592 = vpack.c.bf16 %v1548, %v1545
        %v1593 = vpack.c.bf16 %v1549, %v1546
        %v1594 = vpack.c.bf16 %v1554, %v1551
        %v1595 = vpack.c.bf16 %v1555, %v1552
        %v1596 = vpack.c.bf16 %v1560, %v1557
        %v1597 = vpack.c.bf16 %v1561, %v1558
        %v1598 = vpack.c.bf16 %v1566, %v1563
        %v1599 = vpack.c.bf16 %v1567, %v1564
        %v1632 = vunpack.c.l.b16 %v606
        %v1633 = vunpack.c.l.b16 %v607
        %v1634 = vunpack.c.l.b16 %v608
        %v1635 = vunpack.c.l.b16 %v609
        %v1636 = vunpack.c.l.b16 %v610
        %v1637 = vunpack.c.l.b16 %v611
        %v1638 = vunpack.c.l.b16 %v612
        %v1639 = vunpack.c.l.b16 %v613
        %v1640 = vunpack.c.l.b16 %v614
        %v1641 = vunpack.c.l.b16 %v615
        %v1642 = vunpack.c.l.b16 %v616
        %v1643 = vunpack.c.l.b16 %v617
        %v1644 = vunpack.c.l.b16 %v618
        %v1645 = vunpack.c.l.b16 %v619
        %v1646 = vunpack.c.l.b16 %v620
        %v1647 = vunpack.c.l.b16 %v621
        %v1648 = vunpack.c.l.b16 %v622
        %v1649 = vunpack.c.l.b16 %v623
        %v1650 = vunpack.c.l.b16 %v624
        %v1651 = vunpack.c.l.b16 %v625
        %v1652 = vunpack.c.l.b16 %v626
        %v1653 = vunpack.c.l.b16 %v627
        %v1654 = vunpack.c.l.b16 %v628
        %v1655 = vunpack.c.l.b16 %v629
        %v1656 = vunpack.c.l.b16 %v630
        %v1657 = vunpack.c.l.b16 %v631
        %v1658 = vunpack.c.l.b16 %v632
        %v1659 = vunpack.c.l.b16 %v633
        %v1660 = vunpack.c.l.b16 %v634
        %v1661 = vunpack.c.l.b16 %v635
        %v1662 = vunpack.c.l.b16 %v636
        %v1663 = vunpack.c.l.b16 %v637
        %v1664 = vpack.c.b16 %v1633, %v1632
        %v1665 = vpack.c.b16 %v1635, %v1634
        %v1666 = vpack.c.b16 %v1637, %v1636
        %v1667 = vpack.c.b16 %v1639, %v1638
        %v1668 = vpack.c.b16 %v1641, %v1640
        %v1669 = vpack.c.b16 %v1643, %v1642
        %v1670 = vpack.c.b16 %v1645, %v1644
        %v1671 = vpack.c.b16 %v1647, %v1646
        %v1672 = vpack.c.b16 %v1649, %v1648
        %v1673 = vpack.c.b16 %v1651, %v1650
        %v1674 = vpack.c.b16 %v1653, %v1652
        %v1675 = vpack.c.b16 %v1655, %v1654
        %v1676 = vpack.c.b16 %v1657, %v1656
        %v1677 = vpack.c.b16 %v1659, %v1658
        %v1678 = vpack.c.b16 %v1661, %v1660
        %v1679 = vpack.c.b16 %v1663, %v1662
        %1696 = vmatprep.subr.bf16.mxu0 0
        %1697 = vmatpush1.bf16.msra.mxu0 %v1664
        %1698 = vmatprep.subr.bf16.mxu0 0
        %1699 = vmatpush1.bf16.msra.mxu0 %v1665
        %1700 = vmatprep.subr.bf16.mxu0 0
        %1701 = vmatpush1.bf16.msra.mxu0 %v1666
        %1702 = vmatprep.subr.bf16.mxu0 0
        %1703 = vmatpush1.bf16.msra.mxu0 %v1667
        %1704 = vmatprep.subr.bf16.mxu0 0
        %1705 = vmatpush1.bf16.msra.mxu0 %v1668
        %1706 = vmatprep.subr.bf16.mxu0 0
        %1707 = vmatpush1.bf16.msra.mxu0 %v1669
        %1708 = vmatprep.subr.bf16.mxu0 0
        %1709 = vmatpush1.bf16.msra.mxu0 %v1670
        %1710 = vmatprep.subr.bf16.mxu0 0
        %1711 = vmatpush1.bf16.msra.mxu0 %v1671
        %1712 = vmatprep.subr.bf16.mxu0 0
        %1713 = vmatpush1.bf16.msra.mxu0 %v1672
        %1714 = vmatprep.subr.bf16.mxu0 0
        %1715 = vmatpush1.bf16.msra.mxu0 %v1673
        %1716 = vmatprep.subr.bf16.mxu0 0
        %1717 = vmatpush1.bf16.msra.mxu0 %v1674
        %1718 = vmatprep.subr.bf16.mxu0 0
        %1719 = vmatpush1.bf16.msra.mxu0 %v1675
        %1720 = vmatprep.subr.bf16.mxu0 0
        %1721 = vmatpush1.bf16.msra.mxu0 %v1676
        %1722 = vmatprep.subr.bf16.mxu0 0
        %1723 = vmatpush1.bf16.msra.mxu0 %v1677
        %1724 = vmatprep.subr.bf16.mxu0 0
        %1725 = vmatpush1.bf16.msra.mxu0 %v1678
        %1726 = vmatprep.subr.bf16.mxu0 0
        %1727 = vmatpush1.bf16.msra.mxu0 %v1679
        %1728 = vmatprep.mubr.bf16.mxu0 %v1569
        %1729 = vmatmul.mubr.bf16.gmra.mrb[0].mxu0 %v1568
        %v1730 = vpop.f32.mrb[0].mxu0
        %v1731 = vadd.f32 0.0, %v1730
        %v1732 = vpop.f32.mrb[0].mxu0
        %v1733 = vpop.f32.mrb[0].mxu0
        %v1734 = vadd.f32 0.0, %v1733
        %v1735 = vpop.f32.mrb[0].mxu0
        %1736 = vmatprep.mubr.bf16.mxu0 %v1571
        %1737 = vmatmul.mubr.bf16.gmra.mrb[0].mxu0 %v1570
        %v1738 = vpop.f32.mrb[0].mxu0
        %v1739 = vadd.f32 0.0, %v1738
        %v1740 = vpop.f32.mrb[0].mxu0
        %v1741 = vpop.f32.mrb[0].mxu0
        %v1742 = vadd.f32 0.0, %v1741
        %v1743 = vpop.f32.mrb[0].mxu0
        %1744 = vmatprep.mubr.bf16.mxu0 %v1573
        %1745 = vmatmul.mubr.bf16.gmra.mrb[0].mxu0 %v1572
        %v1746 = vpop.f32.mrb[0].mxu0
        %v1747 = vadd.f32 0.0, %v1746
        %v1748 = vpop.f32.mrb[0].mxu0
        %v1749 = vpop.f32.mrb[0].mxu0
        %v1750 = vadd.f32 0.0, %v1749
        %v1751 = vpop.f32.mrb[0].mxu0
        %1752 = vmatprep.mubr.bf16.mxu0 %v1575
        %1753 = vmatmul.mubr.bf16.gmra.mrb[0].mxu0 %v1574
        %v1754 = vpop.f32.mrb[0].mxu0
        %v1755 = vadd.f32 0.0, %v1754
        %v1756 = vpop.f32.mrb[0].mxu0
        %v1757 = vpop.f32.mrb[0].mxu0
        %v1758 = vadd.f32 0.0, %v1757
        %v1759 = vpop.f32.mrb[0].mxu0
        %1760 = vmatprep.mubr.bf16.mxu0 %v1577
        %1761 = vmatmul.mubr.bf16.gmra.mrb[0].mxu0 %v1576
        %v1762 = vpop.f32.mrb[0].mxu0
        %v1763 = vadd.f32 0.0, %v1762
        %v1764 = vpop.f32.mrb[0].mxu0
        %v1765 = vpop.f32.mrb[0].mxu0
        %v1766 = vadd.f32 0.0, %v1765
        %v1767 = vpop.f32.mrb[0].mxu0
        %1768 = vmatprep.mubr.bf16.mxu0 %v1579
        %1769 = vmatmul.mubr.bf16.gmra.mrb[0].mxu0 %v1578
        %v1770 = vpop.f32.mrb[0].mxu0
        %v1771 = vadd.f32 0.0, %v1770
        %v1772 = vpop.f32.mrb[0].mxu0
        %v1773 = vpop.f32.mrb[0].mxu0
        %v1774 = vadd.f32 0.0, %v1773
        %v1775 = vpop.f32.mrb[0].mxu0
        %1776 = vmatprep.mubr.bf16.mxu0 %v1581
        %1777 = vmatmul.mubr.bf16.gmra.mrb[0].mxu0 %v1580
        %v1778 = vpop.f32.mrb[0].mxu0
        %v1779 = vadd.f32 0.0, %v1778
        %v1780 = vpop.f32.mrb[0].mxu0
        %v1781 = vpop.f32.mrb[0].mxu0
        %v1782 = vadd.f32 0.0, %v1781
        %v1783 = vpop.f32.mrb[0].mxu0
        %1784 = vmatprep.mubr.bf16.mxu0 %v1583
        %1785 = vmatmul.mubr.bf16.gmra.mrb[0].mxu0 %v1582
        %v1786 = vpop.f32.mrb[0].mxu0
        %v1787 = vadd.f32 0.0, %v1786
        %v1788 = vpop.f32.mrb[0].mxu0
        %v1789 = vpop.f32.mrb[0].mxu0
        %v1790 = vadd.f32 0.0, %v1789
        %v1791 = vpop.f32.mrb[0].mxu0
        %1792 = vmatprep.mubr.bf16.mxu0 %v1585
        %1793 = vmatmul.mubr.bf16.gmra.mrb[0].mxu0 %v1584
        %v1794 = vpop.f32.mrb[0].mxu0
        %v1795 = vadd.f32 0.0, %v1794
        %v1796 = vpop.f32.mrb[0].mxu0
        %v1797 = vpop.f32.mrb[0].mxu0
        %v1798 = vadd.f32 0.0, %v1797
        %v1799 = vpop.f32.mrb[0].mxu0
        %1800 = vmatprep.mubr.bf16.mxu0 %v1587
        %1801 = vmatmul.mubr.bf16.gmra.mrb[0].mxu0 %v1586
        %v1802 = vpop.f32.mrb[0].mxu0
        %v1803 = vadd.f32 0.0, %v1802
        %v1804 = vpop.f32.mrb[0].mxu0
        %v1805 = vpop.f32.mrb[0].mxu0
        %v1806 = vadd.f32 0.0, %v1805
        %v1807 = vpop.f32.mrb[0].mxu0
        %1808 = vmatprep.mubr.bf16.mxu0 %v1589
        %1809 = vmatmul.mubr.bf16.gmra.mrb[0].mxu0 %v1588
        %v1810 = vpop.f32.mrb[0].mxu0
        %v1811 = vadd.f32 0.0, %v1810
        %v1812 = vpop.f32.mrb[0].mxu0
        %v1813 = vpop.f32.mrb[0].mxu0
        %v1814 = vadd.f32 0.0, %v1813
        %v1815 = vpop.f32.mrb[0].mxu0
        %1816 = vmatprep.mubr.bf16.mxu0 %v1591
        %1817 = vmatmul.mubr.bf16.gmra.mrb[0].mxu0 %v1590
        %v1818 = vpop.f32.mrb[0].mxu0
        %v1819 = vadd.f32 0.0, %v1818
        %v1820 = vpop.f32.mrb[0].mxu0
        %v1821 = vpop.f32.mrb[0].mxu0
        %v1822 = vadd.f32 0.0, %v1821
        %v1823 = vpop.f32.mrb[0].mxu0
        %1824 = vmatprep.mubr.bf16.mxu0 %v1593
        %1825 = vmatmul.mubr.bf16.gmra.mrb[0].mxu0 %v1592
        %v1826 = vpop.f32.mrb[0].mxu0
        %v1827 = vadd.f32 0.0, %v1826
        %v1828 = vpop.f32.mrb[0].mxu0
        %v1829 = vpop.f32.mrb[0].mxu0
        %v1830 = vadd.f32 0.0, %v1829
        %v1831 = vpop.f32.mrb[0].mxu0
        %1832 = vmatprep.mubr.bf16.mxu0 %v1595
        %1833 = vmatmul.mubr.bf16.gmra.mrb[0].mxu0 %v1594
        %v1834 = vpop.f32.mrb[0].mxu0
        %v1835 = vadd.f32 0.0, %v1834
        %v1836 = vpop.f32.mrb[0].mxu0
        %v1837 = vpop.f32.mrb[0].mxu0
        %v1838 = vadd.f32 0.0, %v1837
        %v1839 = vpop.f32.mrb[0].mxu0
        %1840 = vmatprep.mubr.bf16.mxu0 %v1597
        %1841 = vmatmul.mubr.bf16.gmra.mrb[0].mxu0 %v1596
        %v1842 = vpop.f32.mrb[0].mxu0
        %v1843 = vadd.f32 0.0, %v1842
        %v1844 = vpop.f32.mrb[0].mxu0
        %v1845 = vpop.f32.mrb[0].mxu0
        %v1846 = vadd.f32 0.0, %v1845
        %v1847 = vpop.f32.mrb[0].mxu0
        %1848 = vmatprep.mubr.bf16.mxu0 %v1599
        %1849 = vmatmul.mubr.bf16.gmra.mrb[0].mxu0 %v1598
        %v1850 = vpop.f32.mrb[0].mxu0
        %v1851 = vadd.f32 0.0, %v1850
        %v1852 = vpop.f32.mrb[0].mxu0
        %v1853 = vpop.f32.mrb[0].mxu0
        %v1854 = vadd.f32 0.0, %v1853
        %v1855 = vpop.f32.mrb[0].mxu0
        %1856 = vdwg.mxu0
        %v1857 = vpack.c.bf16 %v1734, %v1731
        %v1858 = vpack.c.bf16 %v1742, %v1739
        %v1859 = vpack.c.bf16 %v1750, %v1747
        %v1860 = vpack.c.bf16 %v1758, %v1755
        %v1861 = vpack.c.bf16 %v1766, %v1763
        %v1862 = vpack.c.bf16 %v1774, %v1771
        %v1863 = vpack.c.bf16 %v1782, %v1779
        %v1864 = vpack.c.bf16 %v1790, %v1787
        %v1865 = vpack.c.bf16 %v1798, %v1795
        %v1866 = vpack.c.bf16 %v1806, %v1803
        %v1867 = vpack.c.bf16 %v1814, %v1811
        %v1868 = vpack.c.bf16 %v1822, %v1819
        %v1869 = vpack.c.bf16 %v1830, %v1827
        %v1870 = vpack.c.bf16 %v1838, %v1835
        %v1871 = vpack.c.bf16 %v1846, %v1843
        %v1872 = vpack.c.bf16 %v1854, %v1851
        %v1889 = vunpack.c.l.b16 %v1857
        %v1890 = vunpack.c.h.b16 %v1857
        %v1891 = vunpack.c.l.b16 %v1858
        %v1892 = vunpack.c.h.b16 %v1858
        %v1893 = vunpack.c.l.b16 %v1859
        %v1894 = vunpack.c.h.b16 %v1859
        %v1895 = vunpack.c.l.b16 %v1860
        %v1896 = vunpack.c.h.b16 %v1860
        %v1897 = vunpack.c.l.b16 %v1861
        %v1898 = vunpack.c.h.b16 %v1861
        %v1899 = vunpack.c.l.b16 %v1862
        %v1900 = vunpack.c.h.b16 %v1862
        %v1901 = vunpack.c.l.b16 %v1863
        %v1902 = vunpack.c.h.b16 %v1863
        %v1903 = vunpack.c.l.b16 %v1864
        %v1904 = vunpack.c.h.b16 %v1864
        %v1905 = vunpack.c.l.b16 %v1865
        %v1906 = vunpack.c.h.b16 %v1865
        %v1907 = vunpack.c.l.b16 %v1866
        %v1908 = vunpack.c.h.b16 %v1866
        %v1909 = vunpack.c.l.b16 %v1867
        %v1910 = vunpack.c.h.b16 %v1867
        %v1911 = vunpack.c.l.b16 %v1868
        %v1912 = vunpack.c.h.b16 %v1868
        %v1913 = vunpack.c.l.b16 %v1869
        %v1914 = vunpack.c.h.b16 %v1869
        %v1915 = vunpack.c.l.b16 %v1870
        %v1916 = vunpack.c.h.b16 %v1870
        %v1917 = vunpack.c.l.b16 %v1871
        %v1918 = vunpack.c.h.b16 %v1871
        %v1919 = vunpack.c.l.b16 %v1872
        %v1920 = vunpack.c.h.b16 %v1872
        %v1921 = vpack.c.b16 %v1889, %v1889
        %v1922 = vpack.c.b16 %v1890, %v1890
        %v1923 = vpack.c.b16 %v1891, %v1891
        %v1924 = vpack.c.b16 %v1892, %v1892
        %v1925 = vpack.c.b16 %v1893, %v1893
        %v1926 = vpack.c.b16 %v1894, %v1894
        %v1927 = vpack.c.b16 %v1895, %v1895
        %v1928 = vpack.c.b16 %v1896, %v1896
        %v1929 = vpack.c.b16 %v1897, %v1897
        %v1930 = vpack.c.b16 %v1898, %v1898
        %v1931 = vpack.c.b16 %v1899, %v1899
        %v1932 = vpack.c.b16 %v1900, %v1900
        %v1933 = vpack.c.b16 %v1901, %v1901
        %v1934 = vpack.c.b16 %v1902, %v1902
        %v1935 = vpack.c.b16 %v1903, %v1903
        %v1936 = vpack.c.b16 %v1904, %v1904
        %v1937 = vpack.c.b16 %v1905, %v1905
        %v1938 = vpack.c.b16 %v1906, %v1906
        %v1939 = vpack.c.b16 %v1907, %v1907
        %v1940 = vpack.c.b16 %v1908, %v1908
        %v1941 = vpack.c.b16 %v1909, %v1909
        %v1942 = vpack.c.b16 %v1910, %v1910
        %v1943 = vpack.c.b16 %v1911, %v1911
        %v1944 = vpack.c.b16 %v1912, %v1912
        %v1945 = vpack.c.b16 %v1913, %v1913
        %v1946 = vpack.c.b16 %v1914, %v1914
        %v1947 = vpack.c.b16 %v1915, %v1915
        %v1948 = vpack.c.b16 %v1916, %v1916
        %v1949 = vpack.c.b16 %v1917, %v1917
        %v1950 = vpack.c.b16 %v1918, %v1918
        %v1951 = vpack.c.b16 %v1919, %v1919
        %v1952 = vpack.c.b16 %v1920, %v1920
        %vm1985 = vcmask 125952
        %1986 = vst.msk [vmem:[%s538] sm:$0xf] %vm1985, %v1921
        %1987 = vst.msk [vmem:[%s538 + $0x4] sm:$0xf] %vm1985, %v1922
        %1988 = vst.msk [vmem:[%s538 + $0x8] sm:$0xf] %vm1985, %v1923
        %1989 = vst.msk [vmem:[%s538 + $0xc] sm:$0xf] %vm1985, %v1924
        %1990 = vst.msk [vmem:[%s538 + $0x10] sm:$0xf] %vm1985, %v1925
        %1991 = vst.msk [vmem:[%s538 + $0x14] sm:$0xf] %vm1985, %v1926
        %1992 = vst.msk [vmem:[%s538 + $0x18] sm:$0xf] %vm1985, %v1927
        %1993 = vst.msk [vmem:[%s538 + $0x1c] sm:$0xf] %vm1985, %v1928
        %1994 = vst.msk [vmem:[%s538 + $0x20] sm:$0xf] %vm1985, %v1929
        %1995 = vst.msk [vmem:[%s538 + $0x24] sm:$0xf] %vm1985, %v1930
        %1996 = vst.msk [vmem:[%s538 + $0x28] sm:$0xf] %vm1985, %v1931
        %1997 = vst.msk [vmem:[%s538 + $0x2c] sm:$0xf] %vm1985, %v1932
        %1998 = vst.msk [vmem:[%s538 + $0x30] sm:$0xf] %vm1985, %v1933
        %1999 = vst.msk [vmem:[%s538 + $0x34] sm:$0xf] %vm1985, %v1934
        %2000 = vst.msk [vmem:[%s538 + $0x38] sm:$0xf] %vm1985, %v1935
        %2001 = vst.msk [vmem:[%s538 + $0x3c] sm:$0xf] %vm1985, %v1936
        %2002 = vst.msk [vmem:[%s538 + $0x40] sm:$0xf] %vm1985, %v1937
        %2003 = vst.msk [vmem:[%s538 + $0x44] sm:$0xf] %vm1985, %v1938
        %2004 = vst.msk [vmem:[%s538 + $0x48] sm:$0xf] %vm1985, %v1939
        %2005 = vst.msk [vmem:[%s538 + $0x4c] sm:$0xf] %vm1985, %v1940
        %2006 = vst.msk [vmem:[%s538 + $0x50] sm:$0xf] %vm1985, %v1941
        %2007 = vst.msk [vmem:[%s538 + $0x54] sm:$0xf] %vm1985, %v1942
        %2008 = vst.msk [vmem:[%s538 + $0x58] sm:$0xf] %vm1985, %v1943
        %2009 = vst.msk [vmem:[%s538 + $0x5c] sm:$0xf] %vm1985, %v1944
        %2010 = vst.msk [vmem:[%s538 + $0x60] sm:$0xf] %vm1985, %v1945
        %2011 = vst.msk [vmem:[%s538 + $0x64] sm:$0xf] %vm1985, %v1946
        %2012 = vst.msk [vmem:[%s538 + $0x68] sm:$0xf] %vm1985, %v1947
        %2013 = vst.msk [vmem:[%s538 + $0x6c] sm:$0xf] %vm1985, %v1948
        %2014 = vst.msk [vmem:[%s538 + $0x70] sm:$0xf] %vm1985, %v1949
        %2015 = vst.msk [vmem:[%s538 + $0x74] sm:$0xf] %vm1985, %v1950
        %2016 = vst.msk [vmem:[%s538 + $0x78] sm:$0xf] %vm1985, %v1951
        %2017 = vst.msk [vmem:[%s538 + $0x7c] sm:$0xf] %vm1985, %v1952
        %p2018 = scmp.lt.s32.totalorder %s12, 1
        %s2019 = scalar_select %p2018, %s12, 1
        %s2020 = smul.addr %s2019, 32
        %s2021 = smul.addr %s2020, 4
        %s2022 = scalar_lea.vmem %s1, %s2021
        // Predicated region
        $region66: #{body_forward.8} parent=60 // pred_check
          %p2023 = pneg %p56
        $region67: #{body_forward.8} parent=60 // pred_check_branch
          %2025 = sbr.rel (%p2023) target = $region69
        $region68: #{body_forward.8} parent=60 // pred_region
          _
        $region69: #{body_forward.8} parent=60 // pred_fallthru
          _
      $region61: #{body_forward.8} parent=5 // pred_fallthru
        _
      %p2026 = scmp.le.s32.totalorder 2, %s7
      // Predicated region
      $region70: #{body_forward.8} parent=5 // pred_check
        %p2027 = pneg %p2026
      $region71: #{body_forward.8} parent=5 // pred_check_branch
        %2029 = sbr.rel (%p2027) target = $region73
      $region72: #{body_forward.8} parent=5 // pred_region
        %s2030 = ssub.s32 %s7, 2
        // Predicated region
        $region74: #{body_forward.8} parent=72 // pred_check
          %p2031 = pneg %p62
        $region75: #{body_forward.8} parent=72 // pred_check_branch
          %2033 = sbr.rel (%p2031) target = $region77
        $region76: #{body_forward.8} parent=72 // pred_region
          %p2034 = scmp.lt.s32.totalorder %s13, 1
          %s2035 = scalar_select %p2034, %s13, 1
          %s2036 = smul.addr %s2035, 32
          %s2037 = smul.addr %s2036, 4
          %s2038 = scalar_lea.vmem %s1, %s2037
        $region77: #{body_forward.8} parent=72 // pred_fallthru
          _
      $region73: #{body_forward.8} parent=5 // pred_fallthru
        _
    $region6: #{body_forward.8} parent=1 // loop_footer
      %s11 = sadd.s32 1, %s7
    $region7: #{body_forward.8} parent=1 // loop_footer_branch
      %6 = sbr.rel target = $region3
    $region8: #{body_forward.8} parent=1 // loop_exit
      _

// kernel: body_forward.6
$region0: #{body_forward.6}
  #allocation0 [shape = 'u32[]', space=smem, size = 0x4, offset = 0x4, fixed_abs, tag = 'smem constant byte address 0x4 - core index']
  #allocation1 [shape = 'u32[144,128]{1,0:T(1,128)}', space=vmem, size = 0x12000, scoped, tag = 'internal scratch']
  %s0 = inlined_call_operand.vmem [shape: bf16[3,32,16,16], index: 0, kind: input, shape index: {}]
  %s1 = inlined_call_operand.vmem [shape: bf16[32,16,16], index: 1, kind: output, shape index: {}]
  %s2 = sld [smem:[#allocation0]]
  $region78: #{body_forward.6} parent=0
    _
  %s4 = ssub.s32 1, %s2
  %s5 = scalar_select 0, %s4, %s2
  $region1: #{body_forward.6} parent=0
    #allocation2 [shape = 'u8[393216]{0}', space=vmem, size = 0x60000, scoped, tag = 'input window, operand 0']
    loop: start=0, step=1, limit=4
    $region2: #{body_forward.6} parent=1 // loop_pre_header
      _
    $region3: #{body_forward.6} parent=1 // loop_header
      %s7 = sphi 0, %s11
      %p8 = scmp.ge.s32.totalorder %s7, 4
      %s17 = sphi 0, %s19
      %s20 = sphi 0, %s17
      %s21 = sphi 0, %s20
      %s37 = sphi 0, %s21
      %s43 = sphi 0, %s45
      %s46 = sphi 0, %s43
      %s47 = sphi 0, %s46
      %s63 = sphi 0, %s47
    $region4: #{body_forward.6} parent=1 // loop_header_branch
      %10 = sbr.rel (%p8) target = $region8
    $region5: #{body_forward.6} parent=1 // loop_body
      %s12 = ssub.s32 %s7, 1
      %s13 = ssub.s32 %s7, 2
      %s14 = sadd.s32 %s7, 1
      %s15 = ssub.s32 %s7, %s14
      %p16 = scmp.eq.s32.totalorder %s15, 0
      %s18 = sadd.s32 %s17, 1
      %s19 = scalar_select %p16, %s17, %s18
      %p22 = pneg %p16
      %p23 = scmp.eq.s32.totalorder %s7, 1
      %p24 = por %p22, %p23
      %p25 = scmp.ne.s32.totalorder %s17, %s20
      %p26 = scmp.eq.s32.totalorder %s7, 0
      %p27 = por %p25, %p26
      %p28 = scmp.ne.s32.totalorder %s17, %s20
      %p29 = scmp.eq.s32.totalorder %s12, 1
      %p30 = por %p28, %p29
      %p31 = scmp.ne.s32.totalorder %s20, %s21
      %p32 = scmp.eq.s32.totalorder %s12, 0
      %p33 = por %p31, %p32
      %p34 = scmp.ne.s32.totalorder %s20, %s21
      %p35 = scmp.eq.s32.totalorder %s13, 1
      %p36 = por %p34, %p35
      %p38 = scmp.ne.s32.totalorder %s21, %s37
      %p39 = scmp.eq.s32.totalorder %s13, 0
      %p40 = por %p38, %p39
      %s41 = ssub.s32 %s7, %s14
      %p42 = scmp.eq.s32.totalorder %s41, 0
      %s44 = sadd.s32 %s43, 1
      %s45 = scalar_select %p42, %s43, %s44
      %p48 = pneg %p42
      %p49 = scmp.eq.s32.totalorder %s7, 1
      %p50 = por %p48, %p49
      %p51 = scmp.ne.s32.totalorder %s43, %s46
      %p52 = scmp.eq.s32.totalorder %s7, 0
      %p53 = por %p51, %p52
      %p54 = scmp.ne.s32.totalorder %s43, %s46
      %p55 = scmp.eq.s32.totalorder %s12, 1
      %p56 = por %p54, %p55
      %p57 = scmp.ne.s32.totalorder %s46, %s47
      %p58 = scmp.eq.s32.totalorder %s12, 0
      %p59 = por %p57, %p58
      %p60 = scmp.ne.s32.totalorder %s46, %s47
      %p61 = scmp.eq.s32.totalorder %s13, 1
      %p62 = por %p60, %p61
      %p64 = scmp.ne.s32.totalorder %s47, %s63
      %p65 = scmp.eq.s32.totalorder %s13, 0
      %p66 = por %p64, %p65
      %p67 = scmp.le.s32.totalorder 1, %s7
      %p68 = scmp.lt.s32.totalorder %s7, 3
      %p69 = pnand %p67, %p68
      %p70 = pneg %p69
      // Predicated region
      $region9: #{body_forward.6} parent=5 // pred_check
        _
      $region10: #{body_forward.6} parent=5 // pred_check_branch
        %72 = sbr.rel (%p69) target = $region12
      $region11: #{body_forward.6} parent=5 // pred_region
        %s73 = ssub.s32 %s7, 1
      $region12: #{body_forward.6} parent=5 // pred_fallthru
        _
      %p74 = scmp.lt.s32.totalorder %s7, 2
      // Predicated region
      $region13: #{body_forward.6} parent=5 // pred_check
        %p75 = pneg %p74
      $region14: #{body_forward.6} parent=5 // pred_check_branch
        %77 = sbr.rel (%p75) target = $region16
      $region15: #{body_forward.6} parent=5 // pred_region
        // Predicated region
        $region17: #{body_forward.6} parent=15 // pred_check
          %p78 = pneg %p27
        $region18: #{body_forward.6} parent=15 // pred_check_branch
          %80 = sbr.rel (%p78) target = $region20
        $region19: #{body_forward.6} parent=15 // pred_region
          %s81 = sand.u32 %s17, 1
          %s82 = sand.u32 %s17, 1
          %s83 = smul.addr %s82, 384
          %s84 = scalar_lea.vmem [#allocation2], %s83
          %s85 = smul.u32 16, %s7
          %s86 = smul.addr %s85, 2
          %s87 = smul.addr %s86, 4
          %s88 = scalar_lea.vmem %s0, %s87
          // Predicated region
          $region21: #{body_forward.6} parent=19 // pred_check
            _
          $region22: #{body_forward.6} parent=19 // pred_check_branch
            %90 = sbr.rel (0) target = $region24
          $region23: #{body_forward.6} parent=19 // pred_region
            // Predicated region
            $region25: #{body_forward.6} parent=23 // pred_check
              _
            $region26: #{body_forward.6} parent=23 // pred_check_branch
              %92 = sbr.rel target = $region28
            $region27: #{body_forward.6} parent=23 // pred_region
              // Predicated region
              $region40: #{body_forward.6} parent=27 // pred_check
                _
              $region41: #{body_forward.6} parent=27 // pred_check_branch
                %297 = sbr.rel (0) target = $region43
              $region42: #{body_forward.6} parent=27 // pred_region
                loop: start=0, step=1, limit=1
                $region44: #{body_forward.6} parent=42 // loop_pre_header
                  _
                $region45: #{body_forward.6} parent=42 // loop_header
                  %s299 = sphi 0, %s303
                  %p300 = scmp.ge.s32.totalorder %s299, 1
                  %s304 = sphi %s88, %s88
                  %s305 = sphi %s84, %s84
                $region46: #{body_forward.6} parent=42 // loop_header_branch
                  %302 = sbr.rel (%p300) target = $region50
                $region47: #{body_forward.6} parent=42 // loop_body
                  _
                $region48: #{body_forward.6} parent=42 // loop_footer
                  %s303 = sadd.s32 1, %s299
                $region49: #{body_forward.6} parent=42 // loop_footer_branch
                  %298 = sbr.rel target = $region45
                $region50: #{body_forward.6} parent=42 // loop_exit
                  _
                loop: start=0, step=1, limit=1
                $region51: #{body_forward.6} parent=42 // loop_pre_header
                  _
                $region52: #{body_forward.6} parent=42 // loop_header
                  %s308 = sphi 0, %s312
                  %p309 = scmp.ge.s32.totalorder %s308, 1
                  %s313 = sphi %s88, %s88
                  %s314 = sphi %s84, %s84
                $region53: #{body_forward.6} parent=42 // loop_header_branch
                  %311 = sbr.rel (%p309) target = $region57
                $region54: #{body_forward.6} parent=42 // loop_body
                  %v315 = vld [vmem:[%s313] sm:$0xf]
                  %316 = vst [vmem:[%s314] sm:$0xf] %v315
                  %v317 = vld [vmem:[%s313 + $0x4] sm:$0xf]
                  %318 = vst [vmem:[%s314 + $0x4] sm:$0xf] %v317
                  %v319 = vld [vmem:[%s313 + $0x8] sm:$0xf]
                  %320 = vst [vmem:[%s314 + $0x8] sm:$0xf] %v319
                  %v321 = vld [vmem:[%s313 + $0xc] sm:$0xf]
                  %322 = vst [vmem:[%s314 + $0xc] sm:$0xf] %v321
                  %v323 = vld [vmem:[%s313 + $0x10] sm:$0xf]
                  %324 = vst [vmem:[%s314 + $0x10] sm:$0xf] %v323
                  %v325 = vld [vmem:[%s313 + $0x14] sm:$0xf]
                  %326 = vst [vmem:[%s314 + $0x14] sm:$0xf] %v325
                  %v327 = vld [vmem:[%s313 + $0x18] sm:$0xf]
                  %328 = vst [vmem:[%s314 + $0x18] sm:$0xf] %v327
                  %v329 = vld [vmem:[%s313 + $0x1c] sm:$0xf]
                  %330 = vst [vmem:[%s314 + $0x1c] sm:$0xf] %v329
                  %v331 = vld [vmem:[%s313 + $0x20] sm:$0xf]
                  %332 = vst [vmem:[%s314 + $0x20] sm:$0xf] %v331
                  %v333 = vld [vmem:[%s313 + $0x24] sm:$0xf]
                  %334 = vst [vmem:[%s314 + $0x24] sm:$0xf] %v333
                  %v335 = vld [vmem:[%s313 + $0x28] sm:$0xf]
                  %336 = vst [vmem:[%s314 + $0x28] sm:$0xf] %v335
                  %v337 = vld [vmem:[%s313 + $0x2c] sm:$0xf]
                  %338 = vst [vmem:[%s314 + $0x2c] sm:$0xf] %v337
                  %v339 = vld [vmem:[%s313 + $0x30] sm:$0xf]
                  %340 = vst [vmem:[%s314 + $0x30] sm:$0xf] %v339
                  %v341 = vld [vmem:[%s313 + $0x34] sm:$0xf]
                  %342 = vst [vmem:[%s314 + $0x34] sm:$0xf] %v341
                  %v343 = vld [vmem:[%s313 + $0x38] sm:$0xf]
                  %344 = vst [vmem:[%s314 + $0x38] sm:$0xf] %v343
                  %v345 = vld [vmem:[%s313 + $0x3c] sm:$0xf]
                  %346 = vst [vmem:[%s314 + $0x3c] sm:$0xf] %v345
                  %v347 = vld [vmem:[%s313 + $0x40] sm:$0xf]
                  %348 = vst [vmem:[%s314 + $0x40] sm:$0xf] %v347
                  %v349 = vld [vmem:[%s313 + $0x44] sm:$0xf]
                  %350 = vst [vmem:[%s314 + $0x44] sm:$0xf] %v349
                  %v351 = vld [vmem:[%s313 + $0x48] sm:$0xf]
                  %352 = vst [vmem:[%s314 + $0x48] sm:$0xf] %v351
                  %v353 = vld [vmem:[%s313 + $0x4c] sm:$0xf]
                  %354 = vst [vmem:[%s314 + $0x4c] sm:$0xf] %v353
                  %v355 = vld [vmem:[%s313 + $0x50] sm:$0xf]
                  %356 = vst [vmem:[%s314 + $0x50] sm:$0xf] %v355
                  %v357 = vld [vmem:[%s313 + $0x54] sm:$0xf]
                  %358 = vst [vmem:[%s314 + $0x54] sm:$0xf] %v357
                  %v359 = vld [vmem:[%s313 + $0x58] sm:$0xf]
                  %360 = vst [vmem:[%s314 + $0x58] sm:$0xf] %v359
                  %v361 = vld [vmem:[%s313 + $0x5c] sm:$0xf]
                  %362 = vst [vmem:[%s314 + $0x5c] sm:$0xf] %v361
                  %v363 = vld [vmem:[%s313 + $0x60] sm:$0xf]
                  %364 = vst [vmem:[%s314 + $0x60] sm:$0xf] %v363
                  %v365 = vld [vmem:[%s313 + $0x64] sm:$0xf]
                  %366 = vst [vmem:[%s314 + $0x64] sm:$0xf] %v365
                  %v367 = vld [vmem:[%s313 + $0x68] sm:$0xf]
                  %368 = vst [vmem:[%s314 + $0x68] sm:$0xf] %v367
                  %v369 = vld [vmem:[%s313 + $0x6c] sm:$0xf]
                  %370 = vst [vmem:[%s314 + $0x6c] sm:$0xf] %v369
                  %v371 = vld [vmem:[%s313 + $0x70] sm:$0xf]
                  %372 = vst [vmem:[%s314 + $0x70] sm:$0xf] %v371
                  %v373 = vld [vmem:[%s313 + $0x74] sm:$0xf]
                  %374 = vst [vmem:[%s314 + $0x74] sm:$0xf] %v373
                  %v375 = vld [vmem:[%s313 + $0x78] sm:$0xf]
                  %376 = vst [vmem:[%s314 + $0x78] sm:$0xf] %v375
                  %v377 = vld [vmem:[%s313 + $0x7c] sm:$0xf]
                  %378 = vst [vmem:[%s314 + $0x7c] sm:$0xf] %v377
                  %v379 = vld [vmem:[%s313 + $0x100] sm:$0xf]
                  %380 = vst [vmem:[%s314 + $0x80] sm:$0xf] %v379
                  %v381 = vld [vmem:[%s313 + $0x104] sm:$0xf]
                  %382 = vst [vmem:[%s314 + $0x84] sm:$0xf] %v381
                  %v383 = vld [vmem:[%s313 + $0x108] sm:$0xf]
                  %384 = vst [vmem:[%s314 + $0x88] sm:$0xf] %v383
                  %v385 = vld [vmem:[%s313 + $0x10c] sm:$0xf]
                  %386 = vst [vmem:[%s314 + $0x8c] sm:$0xf] %v385
                  %v387 = vld [vmem:[%s313 + $0x110] sm:$0xf]
                  %388 = vst [vmem:[%s314 + $0x90] sm:$0xf] %v387
                  %v389 = vld [vmem:[%s313 + $0x114] sm:$0xf]
                  %390 = vst [vmem:[%s314 + $0x94] sm:$0xf] %v389
                  %v391 = vld [vmem:[%s313 + $0x118] sm:$0xf]
                  %392 = vst [vmem:[%s314 + $0x98] sm:$0xf] %v391
                  %v393 = vld [vmem:[%s313 + $0x11c] sm:$0xf]
                  %394 = vst [vmem:[%s314 + $0x9c] sm:$0xf] %v393
                  %v395 = vld [vmem:[%s313 + $0x120] sm:$0xf]
                  %396 = vst [vmem:[%s314 + $0xa0] sm:$0xf] %v395
                  %v397 = vld [vmem:[%s313 + $0x124] sm:$0xf]
                  %398 = vst [vmem:[%s314 + $0xa4] sm:$0xf] %v397
                  %v399 = vld [vmem:[%s313 + $0x128] sm:$0xf]
                  %400 = vst [vmem:[%s314 + $0xa8] sm:$0xf] %v399
                  %v401 = vld [vmem:[%s313 + $0x12c] sm:$0xf]
                  %402 = vst [vmem:[%s314 + $0xac] sm:$0xf] %v401
                  %v403 = vld [vmem:[%s313 + $0x130] sm:$0xf]
                  %404 = vst [vmem:[%s314 + $0xb0] sm:$0xf] %v403
                  %v405 = vld [vmem:[%s313 + $0x134] sm:$0xf]
                  %406 = vst [vmem:[%s314 + $0xb4] sm:$0xf] %v405
                  %v407 = vld [vmem:[%s313 + $0x138] sm:$0xf]
                  %408 = vst [vmem:[%s314 + $0xb8] sm:$0xf] %v407
                  %v409 = vld [vmem:[%s313 + $0x13c] sm:$0xf]
                  %410 = vst [vmem:[%s314 + $0xbc] sm:$0xf] %v409
                  %v411 = vld [vmem:[%s313 + $0x140] sm:$0xf]
                  %412 = vst [vmem:[%s314 + $0xc0] sm:$0xf] %v411
                  %v413 = vld [vmem:[%s313 + $0x144] sm:$0xf]
                  %414 = vst [vmem:[%s314 + $0xc4] sm:$0xf] %v413
                  %v415 = vld [vmem:[%s313 + $0x148] sm:$0xf]
                  %416 = vst [vmem:[%s314 + $0xc8] sm:$0xf] %v415
                  %v417 = vld [vmem:[%s313 + $0x14c] sm:$0xf]
                  %418 = vst [vmem:[%s314 + $0xcc] sm:$0xf] %v417
                  %v419 = vld [vmem:[%s313 + $0x150] sm:$0xf]
                  %420 = vst [vmem:[%s314 + $0xd0] sm:$0xf] %v419
                  %v421 = vld [vmem:[%s313 + $0x154] sm:$0xf]
                  %422 = vst [vmem:[%s314 + $0xd4] sm:$0xf] %v421
                  %v423 = vld [vmem:[%s313 + $0x158] sm:$0xf]
                  %424 = vst [vmem:[%s314 + $0xd8] sm:$0xf] %v423
                  %v425 = vld [vmem:[%s313 + $0x15c] sm:$0xf]
                  %426 = vst [vmem:[%s314 + $0xdc] sm:$0xf] %v425
                  %v427 = vld [vmem:[%s313 + $0x160] sm:$0xf]
                  %428 = vst [vmem:[%s314 + $0xe0] sm:$0xf] %v427
                  %v429 = vld [vmem:[%s313 + $0x164] sm:$0xf]
                  %430 = vst [vmem:[%s314 + $0xe4] sm:$0xf] %v429
                  %v431 = vld [vmem:[%s313 + $0x168] sm:$0xf]
                  %432 = vst [vmem:[%s314 + $0xe8] sm:$0xf] %v431
                  %v433 = vld [vmem:[%s313 + $0x16c] sm:$0xf]
                  %434 = vst [vmem:[%s314 + $0xec] sm:$0xf] %v433
                  %v435 = vld [vmem:[%s313 + $0x170] sm:$0xf]
                  %436 = vst [vmem:[%s314 + $0xf0] sm:$0xf] %v435
                  %v437 = vld [vmem:[%s313 + $0x174] sm:$0xf]
                  %438 = vst [vmem:[%s314 + $0xf4] sm:$0xf] %v437
                  %v439 = vld [vmem:[%s313 + $0x178] sm:$0xf]
                  %440 = vst [vmem:[%s314 + $0xf8] sm:$0xf] %v439
                  %v441 = vld [vmem:[%s313 + $0x17c] sm:$0xf]
                  %442 = vst [vmem:[%s314 + $0xfc] sm:$0xf] %v441
                  %v443 = vld [vmem:[%s313 + $0x200] sm:$0xf]
                  %444 = vst [vmem:[%s314 + $0x100] sm:$0xf] %v443
                  %v445 = vld [vmem:[%s313 + $0x204] sm:$0xf]
                  %446 = vst [vmem:[%s314 + $0x104] sm:$0xf] %v445
                  %v447 = vld [vmem:[%s313 + $0x208] sm:$0xf]
                  %448 = vst [vmem:[%s314 + $0x108] sm:$0xf] %v447
                  %v449 = vld [vmem:[%s313 + $0x20c] sm:$0xf]
                  %450 = vst [vmem:[%s314 + $0x10c] sm:$0xf] %v449
                  %v451 = vld [vmem:[%s313 + $0x210] sm:$0xf]
                  %452 = vst [vmem:[%s314 + $0x110] sm:$0xf] %v451
                  %v453 = vld [vmem:[%s313 + $0x214] sm:$0xf]
                  %454 = vst [vmem:[%s314 + $0x114] sm:$0xf] %v453
                  %v455 = vld [vmem:[%s313 + $0x218] sm:$0xf]
                  %456 = vst [vmem:[%s314 + $0x118] sm:$0xf] %v455
                  %v457 = vld [vmem:[%s313 + $0x21c] sm:$0xf]
                  %458 = vst [vmem:[%s314 + $0x11c] sm:$0xf] %v457
                  %v459 = vld [vmem:[%s313 + $0x220] sm:$0xf]
                  %460 = vst [vmem:[%s314 + $0x120] sm:$0xf] %v459
                  %v461 = vld [vmem:[%s313 + $0x224] sm:$0xf]
                  %462 = vst [vmem:[%s314 + $0x124] sm:$0xf] %v461
                  %v463 = vld [vmem:[%s313 + $0x228] sm:$0xf]
                  %464 = vst [vmem:[%s314 + $0x128] sm:$0xf] %v463
                  %v465 = vld [vmem:[%s313 + $0x22c] sm:$0xf]
                  %466 = vst [vmem:[%s314 + $0x12c] sm:$0xf] %v465
                  %v467 = vld [vmem:[%s313 + $0x230] sm:$0xf]
                  %468 = vst [vmem:[%s314 + $0x130] sm:$0xf] %v467
                  %v469 = vld [vmem:[%s313 + $0x234] sm:$0xf]
                  %470 = vst [vmem:[%s314 + $0x134] sm:$0xf] %v469
                  %v471 = vld [vmem:[%s313 + $0x238] sm:$0xf]
                  %472 = vst [vmem:[%s314 + $0x138] sm:$0xf] %v471
                  %v473 = vld [vmem:[%s313 + $0x23c] sm:$0xf]
                  %474 = vst [vmem:[%s314 + $0x13c] sm:$0xf] %v473
                  %v475 = vld [vmem:[%s313 + $0x240] sm:$0xf]
                  %476 = vst [vmem:[%s314 + $0x140] sm:$0xf] %v475
                  %v477 = vld [vmem:[%s313 + $0x244] sm:$0xf]
                  %478 = vst [vmem:[%s314 + $0x144] sm:$0xf] %v477
                  %v479 = vld [vmem:[%s313 + $0x248] sm:$0xf]
                  %480 = vst [vmem:[%s314 + $0x148] sm:$0xf] %v479
                  %v481 = vld [vmem:[%s313 + $0x24c] sm:$0xf]
                  %482 = vst [vmem:[%s314 + $0x14c] sm:$0xf] %v481
                  %v483 = vld [vmem:[%s313 + $0x250] sm:$0xf]
                  %484 = vst [vmem:[%s314 + $0x150] sm:$0xf] %v483
                  %v485 = vld [vmem:[%s313 + $0x254] sm:$0xf]
                  %486 = vst [vmem:[%s314 + $0x154] sm:$0xf] %v485
                  %v487 = vld [vmem:[%s313 + $0x258] sm:$0xf]
                  %488 = vst [vmem:[%s314 + $0x158] sm:$0xf] %v487
                  %v489 = vld [vmem:[%s313 + $0x25c] sm:$0xf]
                  %490 = vst [vmem:[%s314 + $0x15c] sm:$0xf] %v489
                  %v491 = vld [vmem:[%s313 + $0x260] sm:$0xf]
                  %492 = vst [vmem:[%s314 + $0x160] sm:$0xf] %v491
                  %v493 = vld [vmem:[%s313 + $0x264] sm:$0xf]
                  %494 = vst [vmem:[%s314 + $0x164] sm:$0xf] %v493
                  %v495 = vld [vmem:[%s313 + $0x268] sm:$0xf]
                  %496 = vst [vmem:[%s314 + $0x168] sm:$0xf] %v495
                  %v497 = vld [vmem:[%s313 + $0x26c] sm:$0xf]
                  %498 = vst [vmem:[%s314 + $0x16c] sm:$0xf] %v497
                  %v499 = vld [vmem:[%s313 + $0x270] sm:$0xf]
                  %500 = vst [vmem:[%s314 + $0x170] sm:$0xf] %v499
                  %v501 = vld [vmem:[%s313 + $0x274] sm:$0xf]
                  %502 = vst [vmem:[%s314 + $0x174] sm:$0xf] %v501
                  %v503 = vld [vmem:[%s313 + $0x278] sm:$0xf]
                  %504 = vst [vmem:[%s314 + $0x178] sm:$0xf] %v503
                  %v505 = vld [vmem:[%s313 + $0x27c] sm:$0xf]
                  %506 = vst [vmem:[%s314 + $0x17c] sm:$0xf] %v505
                $region55: #{body_forward.6} parent=42 // loop_footer
                  %s312 = sadd.s32 1, %s308
                $region56: #{body_forward.6} parent=42 // loop_footer_branch
                  %307 = sbr.rel target = $region52
                $region57: #{body_forward.6} parent=42 // loop_exit
                  _
              $region43: #{body_forward.6} parent=27 // pred_fallthru
                _
            $region28: #{body_forward.6} parent=23 // pred_fallthru
              _
            // Predicated region
            $region29: #{body_forward.6} parent=23 // pred_check
              _
            $region30: #{body_forward.6} parent=23 // pred_check_branch
              %94 = sbr.rel (0) target = $region32
            $region31: #{body_forward.6} parent=23 // pred_region
              loop: start=0, step=1, limit=1
              $region33: #{body_forward.6} parent=31 // loop_pre_header
                _
              $region34: #{body_forward.6} parent=31 // loop_header
                %s97 = sphi 0, %s101
                %p98 = scmp.ge.s32.totalorder %s97, 1
                %s102 = sphi %s88, %s88
                %s103 = sphi %s84, %s84
              $region35: #{body_forward.6} parent=31 // loop_header_branch
                %100 = sbr.rel (%p98) target = $region39
              $region36: #{body_forward.6} parent=31 // loop_body
                %v104 = vld [vmem:[%s102] sm:$0xf]
                %105 = vst [vmem:[%s103] sm:$0xf] %v104
                %v106 = vld [vmem:[%s102 + $0x4] sm:$0xf]
                %107 = vst [vmem:[%s103 + $0x4] sm:$0xf] %v106
                %v108 = vld [vmem:[%s102 + $0x8] sm:$0xf]
                %109 = vst [vmem:[%s103 + $0x8] sm:$0xf] %v108
                %v110 = vld [vmem:[%s102 + $0xc] sm:$0xf]
                %111 = vst [vmem:[%s103 + $0xc] sm:$0xf] %v110
                %v112 = vld [vmem:[%s102 + $0x10] sm:$0xf]
                %113 = vst [vmem:[%s103 + $0x10] sm:$0xf] %v112
                %v114 = vld [vmem:[%s102 + $0x14] sm:$0xf]
                %115 = vst [vmem:[%s103 + $0x14] sm:$0xf] %v114
                %v116 = vld [vmem:[%s102 + $0x18] sm:$0xf]
                %117 = vst [vmem:[%s103 + $0x18] sm:$0xf] %v116
                %v118 = vld [vmem:[%s102 + $0x1c] sm:$0xf]
                %119 = vst [vmem:[%s103 + $0x1c] sm:$0xf] %v118
                %v120 = vld [vmem:[%s102 + $0x20] sm:$0xf]
                %121 = vst [vmem:[%s103 + $0x20] sm:$0xf] %v120
                %v122 = vld [vmem:[%s102 + $0x24] sm:$0xf]
                %123 = vst [vmem:[%s103 + $0x24] sm:$0xf] %v122
                %v124 = vld [vmem:[%s102 + $0x28] sm:$0xf]
                %125 = vst [vmem:[%s103 + $0x28] sm:$0xf] %v124
                %v126 = vld [vmem:[%s102 + $0x2c] sm:$0xf]
                %127 = vst [vmem:[%s103 + $0x2c] sm:$0xf] %v126
                %v128 = vld [vmem:[%s102 + $0x30] sm:$0xf]
                %129 = vst [vmem:[%s103 + $0x30] sm:$0xf] %v128
                %v130 = vld [vmem:[%s102 + $0x34] sm:$0xf]
                %131 = vst [vmem:[%s103 + $0x34] sm:$0xf] %v130
                %v132 = vld [vmem:[%s102 + $0x38] sm:$0xf]
                %133 = vst [vmem:[%s103 + $0x38] sm:$0xf] %v132
                %v134 = vld [vmem:[%s102 + $0x3c] sm:$0xf]
                %135 = vst [vmem:[%s103 + $0x3c] sm:$0xf] %v134
                %v136 = vld [vmem:[%s102 + $0x40] sm:$0xf]
                %137 = vst [vmem:[%s103 + $0x40] sm:$0xf] %v136
                %v138 = vld [vmem:[%s102 + $0x44] sm:$0xf]
                %139 = vst [vmem:[%s103 + $0x44] sm:$0xf] %v138
                %v140 = vld [vmem:[%s102 + $0x48] sm:$0xf]
                %141 = vst [vmem:[%s103 + $0x48] sm:$0xf] %v140
                %v142 = vld [vmem:[%s102 + $0x4c] sm:$0xf]
                %143 = vst [vmem:[%s103 + $0x4c] sm:$0xf] %v142
                %v144 = vld [vmem:[%s102 + $0x50] sm:$0xf]
                %145 = vst [vmem:[%s103 + $0x50] sm:$0xf] %v144
                %v146 = vld [vmem:[%s102 + $0x54] sm:$0xf]
                %147 = vst [vmem:[%s103 + $0x54] sm:$0xf] %v146
                %v148 = vld [vmem:[%s102 + $0x58] sm:$0xf]
                %149 = vst [vmem:[%s103 + $0x58] sm:$0xf] %v148
                %v150 = vld [vmem:[%s102 + $0x5c] sm:$0xf]
                %151 = vst [vmem:[%s103 + $0x5c] sm:$0xf] %v150
                %v152 = vld [vmem:[%s102 + $0x60] sm:$0xf]
                %153 = vst [vmem:[%s103 + $0x60] sm:$0xf] %v152
                %v154 = vld [vmem:[%s102 + $0x64] sm:$0xf]
                %155 = vst [vmem:[%s103 + $0x64] sm:$0xf] %v154
                %v156 = vld [vmem:[%s102 + $0x68] sm:$0xf]
                %157 = vst [vmem:[%s103 + $0x68] sm:$0xf] %v156
                %v158 = vld [vmem:[%s102 + $0x6c] sm:$0xf]
                %159 = vst [vmem:[%s103 + $0x6c] sm:$0xf] %v158
                %v160 = vld [vmem:[%s102 + $0x70] sm:$0xf]
                %161 = vst [vmem:[%s103 + $0x70] sm:$0xf] %v160
                %v162 = vld [vmem:[%s102 + $0x74] sm:$0xf]
                %163 = vst [vmem:[%s103 + $0x74] sm:$0xf] %v162
                %v164 = vld [vmem:[%s102 + $0x78] sm:$0xf]
                %165 = vst [vmem:[%s103 + $0x78] sm:$0xf] %v164
                %v166 = vld [vmem:[%s102 + $0x7c] sm:$0xf]
                %167 = vst [vmem:[%s103 + $0x7c] sm:$0xf] %v166
                %v168 = vld [vmem:[%s102 + $0x100] sm:$0xf]
                %169 = vst [vmem:[%s103 + $0x80] sm:$0xf] %v168
                %v170 = vld [vmem:[%s102 + $0x104] sm:$0xf]
                %171 = vst [vmem:[%s103 + $0x84] sm:$0xf] %v170
                %v172 = vld [vmem:[%s102 + $0x108] sm:$0xf]
                %173 = vst [vmem:[%s103 + $0x88] sm:$0xf] %v172
                %v174 = vld [vmem:[%s102 + $0x10c] sm:$0xf]
                %175 = vst [vmem:[%s103 + $0x8c] sm:$0xf] %v174
                %v176 = vld [vmem:[%s102 + $0x110] sm:$0xf]
                %177 = vst [vmem:[%s103 + $0x90] sm:$0xf] %v176
                %v178 = vld [vmem:[%s102 + $0x114] sm:$0xf]
                %179 = vst [vmem:[%s103 + $0x94] sm:$0xf] %v178
                %v180 = vld [vmem:[%s102 + $0x118] sm:$0xf]
                %181 = vst [vmem:[%s103 + $0x98] sm:$0xf] %v180
                %v182 = vld [vmem:[%s102 + $0x11c] sm:$0xf]
                %183 = vst [vmem:[%s103 + $0x9c] sm:$0xf] %v182
                %v184 = vld [vmem:[%s102 + $0x120] sm:$0xf]
                %185 = vst [vmem:[%s103 + $0xa0] sm:$0xf] %v184
                %v186 = vld [vmem:[%s102 + $0x124] sm:$0xf]
                %187 = vst [vmem:[%s103 + $0xa4] sm:$0xf] %v186
                %v188 = vld [vmem:[%s102 + $0x128] sm:$0xf]
                %189 = vst [vmem:[%s103 + $0xa8] sm:$0xf] %v188
                %v190 = vld [vmem:[%s102 + $0x12c] sm:$0xf]
                %191 = vst [vmem:[%s103 + $0xac] sm:$0xf] %v190
                %v192 = vld [vmem:[%s102 + $0x130] sm:$0xf]
                %193 = vst [vmem:[%s103 + $0xb0] sm:$0xf] %v192
                %v194 = vld [vmem:[%s102 + $0x134] sm:$0xf]
                %195 = vst [vmem:[%s103 + $0xb4] sm:$0xf] %v194
                %v196 = vld [vmem:[%s102 + $0x138] sm:$0xf]
                %197 = vst [vmem:[%s103 + $0xb8] sm:$0xf] %v196
                %v198 = vld [vmem:[%s102 + $0x13c] sm:$0xf]
                %199 = vst [vmem:[%s103 + $0xbc] sm:$0xf] %v198
                %v200 = vld [vmem:[%s102 + $0x140] sm:$0xf]
                %201 = vst [vmem:[%s103 + $0xc0] sm:$0xf] %v200
                %v202 = vld [vmem:[%s102 + $0x144] sm:$0xf]
                %203 = vst [vmem:[%s103 + $0xc4] sm:$0xf] %v202
                %v204 = vld [vmem:[%s102 + $0x148] sm:$0xf]
                %205 = vst [vmem:[%s103 + $0xc8] sm:$0xf] %v204
                %v206 = vld [vmem:[%s102 + $0x14c] sm:$0xf]
                %207 = vst [vmem:[%s103 + $0xcc] sm:$0xf] %v206
                %v208 = vld [vmem:[%s102 + $0x150] sm:$0xf]
                %209 = vst [vmem:[%s103 + $0xd0] sm:$0xf] %v208
                %v210 = vld [vmem:[%s102 + $0x154] sm:$0xf]
                %211 = vst [vmem:[%s103 + $0xd4] sm:$0xf] %v210
                %v212 = vld [vmem:[%s102 + $0x158] sm:$0xf]
                %213 = vst [vmem:[%s103 + $0xd8] sm:$0xf] %v212
                %v214 = vld [vmem:[%s102 + $0x15c] sm:$0xf]
                %215 = vst [vmem:[%s103 + $0xdc] sm:$0xf] %v214
                %v216 = vld [vmem:[%s102 + $0x160] sm:$0xf]
                %217 = vst [vmem:[%s103 + $0xe0] sm:$0xf] %v216
                %v218 = vld [vmem:[%s102 + $0x164] sm:$0xf]
                %219 = vst [vmem:[%s103 + $0xe4] sm:$0xf] %v218
                %v220 = vld [vmem:[%s102 + $0x168] sm:$0xf]
                %221 = vst [vmem:[%s103 + $0xe8] sm:$0xf] %v220
                %v222 = vld [vmem:[%s102 + $0x16c] sm:$0xf]
                %223 = vst [vmem:[%s103 + $0xec] sm:$0xf] %v222
                %v224 = vld [vmem:[%s102 + $0x170] sm:$0xf]
                %225 = vst [vmem:[%s103 + $0xf0] sm:$0xf] %v224
                %v226 = vld [vmem:[%s102 + $0x174] sm:$0xf]
                %227 = vst [vmem:[%s103 + $0xf4] sm:$0xf] %v226
                %v228 = vld [vmem:[%s102 + $0x178] sm:$0xf]
                %229 = vst [vmem:[%s103 + $0xf8] sm:$0xf] %v228
                %v230 = vld [vmem:[%s102 + $0x17c] sm:$0xf]
                %231 = vst [vmem:[%s103 + $0xfc] sm:$0xf] %v230
                %v232 = vld [vmem:[%s102 + $0x200] sm:$0xf]
                %233 = vst [vmem:[%s103 + $0x100] sm:$0xf] %v232
                %v234 = vld [vmem:[%s102 + $0x204] sm:$0xf]
                %235 = vst [vmem:[%s103 + $0x104] sm:$0xf] %v234
                %v236 = vld [vmem:[%s102 + $0x208] sm:$0xf]
                %237 = vst [vmem:[%s103 + $0x108] sm:$0xf] %v236
                %v238 = vld [vmem:[%s102 + $0x20c] sm:$0xf]
                %239 = vst [vmem:[%s103 + $0x10c] sm:$0xf] %v238
                %v240 = vld [vmem:[%s102 + $0x210] sm:$0xf]
                %241 = vst [vmem:[%s103 + $0x110] sm:$0xf] %v240
                %v242 = vld [vmem:[%s102 + $0x214] sm:$0xf]
                %243 = vst [vmem:[%s103 + $0x114] sm:$0xf] %v242
                %v244 = vld [vmem:[%s102 + $0x218] sm:$0xf]
                %245 = vst [vmem:[%s103 + $0x118] sm:$0xf] %v244
                %v246 = vld [vmem:[%s102 + $0x21c] sm:$0xf]
                %247 = vst [vmem:[%s103 + $0x11c] sm:$0xf] %v246
                %v248 = vld [vmem:[%s102 + $0x220] sm:$0xf]
                %249 = vst [vmem:[%s103 + $0x120] sm:$0xf] %v248
                %v250 = vld [vmem:[%s102 + $0x224] sm:$0xf]
                %251 = vst [vmem:[%s103 + $0x124] sm:$0xf] %v250
                %v252 = vld [vmem:[%s102 + $0x228] sm:$0xf]
                %253 = vst [vmem:[%s103 + $0x128] sm:$0xf] %v252
                %v254 = vld [vmem:[%s102 + $0x22c] sm:$0xf]
                %255 = vst [vmem:[%s103 + $0x12c] sm:$0xf] %v254
                %v256 = vld [vmem:[%s102 + $0x230] sm:$0xf]
                %257 = vst [vmem:[%s103 + $0x130] sm:$0xf] %v256
                %v258 = vld [vmem:[%s102 + $0x234] sm:$0xf]
                %259 = vst [vmem:[%s103 + $0x134] sm:$0xf] %v258
                %v260 = vld [vmem:[%s102 + $0x238] sm:$0xf]
                %261 = vst [vmem:[%s103 + $0x138] sm:$0xf] %v260
                %v262 = vld [vmem:[%s102 + $0x23c] sm:$0xf]
                %263 = vst [vmem:[%s103 + $0x13c] sm:$0xf] %v262
                %v264 = vld [vmem:[%s102 + $0x240] sm:$0xf]
                %265 = vst [vmem:[%s103 + $0x140] sm:$0xf] %v264
                %v266 = vld [vmem:[%s102 + $0x244] sm:$0xf]
                %267 = vst [vmem:[%s103 + $0x144] sm:$0xf] %v266
                %v268 = vld [vmem:[%s102 + $0x248] sm:$0xf]
                %269 = vst [vmem:[%s103 + $0x148] sm:$0xf] %v268
                %v270 = vld [vmem:[%s102 + $0x24c] sm:$0xf]
                %271 = vst [vmem:[%s103 + $0x14c] sm:$0xf] %v270
                %v272 = vld [vmem:[%s102 + $0x250] sm:$0xf]
                %273 = vst [vmem:[%s103 + $0x150] sm:$0xf] %v272
                %v274 = vld [vmem:[%s102 + $0x254] sm:$0xf]
                %275 = vst [vmem:[%s103 + $0x154] sm:$0xf] %v274
                %v276 = vld [vmem:[%s102 + $0x258] sm:$0xf]
                %277 = vst [vmem:[%s103 + $0x158] sm:$0xf] %v276
                %v278 = vld [vmem:[%s102 + $0x25c] sm:$0xf]
                %279 = vst [vmem:[%s103 + $0x15c] sm:$0xf] %v278
                %v280 = vld [vmem:[%s102 + $0x260] sm:$0xf]
                %281 = vst [vmem:[%s103 + $0x160] sm:$0xf] %v280
                %v282 = vld [vmem:[%s102 + $0x264] sm:$0xf]
                %283 = vst [vmem:[%s103 + $0x164] sm:$0xf] %v282
                %v284 = vld [vmem:[%s102 + $0x268] sm:$0xf]
                %285 = vst [vmem:[%s103 + $0x168] sm:$0xf] %v284
                %v286 = vld [vmem:[%s102 + $0x26c] sm:$0xf]
                %287 = vst [vmem:[%s103 + $0x16c] sm:$0xf] %v286
                %v288 = vld [vmem:[%s102 + $0x270] sm:$0xf]
                %289 = vst [vmem:[%s103 + $0x170] sm:$0xf] %v288
                %v290 = vld [vmem:[%s102 + $0x274] sm:$0xf]
                %291 = vst [vmem:[%s103 + $0x174] sm:$0xf] %v290
                %v292 = vld [vmem:[%s102 + $0x278] sm:$0xf]
                %293 = vst [vmem:[%s103 + $0x178] sm:$0xf] %v292
                %v294 = vld [vmem:[%s102 + $0x27c] sm:$0xf]
                %295 = vst [vmem:[%s103 + $0x17c] sm:$0xf] %v294
              $region37: #{body_forward.6} parent=31 // loop_footer
                %s101 = sadd.s32 1, %s97
              $region38: #{body_forward.6} parent=31 // loop_footer_branch
                %96 = sbr.rel target = $region34
              $region39: #{body_forward.6} parent=31 // loop_exit
                _
            $region32: #{body_forward.6} parent=23 // pred_fallthru
              _
          $region24: #{body_forward.6} parent=19 // pred_fallthru
            _
          %507 = vnop
        $region20: #{body_forward.6} parent=15 // pred_fallthru
          _
      $region16: #{body_forward.6} parent=5 // pred_fallthru
        _
      %p508 = scmp.le.s32.totalorder 1, %s7
      %p509 = scmp.lt.s32.totalorder %s7, 3
      %p510 = pnand %p508, %p509
      %p511 = pneg %p510
      // Predicated region
      $region58: #{body_forward.6} parent=5 // pred_check
        _
      $region59: #{body_forward.6} parent=5 // pred_check_branch
        %513 = sbr.rel (%p510) target = $region61
      $region60: #{body_forward.6} parent=5 // pred_region
        %s514 = ssub.s32 %s7, 1
        %s515 = sand.u32 %s20, 1
        %s516 = sand.u32 %s20, 1
        %s517 = smul.addr %s516, 384
        %s518 = scalar_lea.vmem [#allocation2], %s517
        // Predicated region
        $region62: #{body_forward.6} parent=60 // pred_check
          %p519 = pneg %p33
        $region63: #{body_forward.6} parent=60 // pred_check_branch
          %521 = sbr.rel (%p519) target = $region65
        $region64: #{body_forward.6} parent=60 // pred_region
          _
        $region65: #{body_forward.6} parent=60 // pred_fallthru
          _
        %s522 = sand.u32 %s20, 1
        %s523 = sand.u32 %s20, 1
        %s524 = smul.addr %s523, 384
        %s525 = scalar_lea.vmem [#allocation2], %s524
        %p526 = pneg %p33
        %p527 = pneg %p30
        %p528 = pneg %p59
        %p529 = pneg %p56
        %s530 = smul.u32 16, %s12
        %p531 = scmp.lt.s32.totalorder %s530, 31
        %s532 = scalar_select %p531, %s530, 31
        %s533 = smul.addr %s532, 2
        %s534 = smul.addr %s533, 4
        %s535 = scalar_lea.vmem %s1, %s534
        %s536 = smul.u32 16, %s12
        %s537 = smul.u32 16, %s12
        %p538 = scmp.lt.s32.totalorder %s537, 31
        %s539 = scalar_select %p538, %s537, 31
        %s540 = smul.addr %s539, 2
        %s541 = smul.addr %s540, 4
        %s542 = scalar_lea.vmem %s1, %s541
        %s543 = smul.u32 16, %s12
        %v545 = vld [vmem:[%s518] sm:$0xf]
        %v546 = vld [vmem:[%s518 + $0x4] sm:$0xf]
        %v547 = vld [vmem:[%s518 + $0x8] sm:$0xf]
        %v548 = vld [vmem:[%s518 + $0xc] sm:$0xf]
        %v549 = vld [vmem:[%s518 + $0x10] sm:$0xf]
        %v550 = vld [vmem:[%s518 + $0x14] sm:$0xf]
        %v551 = vld [vmem:[%s518 + $0x18] sm:$0xf]
        %v552 = vld [vmem:[%s518 + $0x1c] sm:$0xf]
        %v553 = vld [vmem:[%s518 + $0x20] sm:$0xf]
        %v554 = vld [vmem:[%s518 + $0x24] sm:$0xf]
        %v555 = vld [vmem:[%s518 + $0x28] sm:$0xf]
        %v556 = vld [vmem:[%s518 + $0x2c] sm:$0xf]
        %v557 = vld [vmem:[%s518 + $0x30] sm:$0xf]
        %v558 = vld [vmem:[%s518 + $0x34] sm:$0xf]
        %v559 = vld [vmem:[%s518 + $0x38] sm:$0xf]
        %v560 = vld [vmem:[%s518 + $0x3c] sm:$0xf]
        %v561 = vld [vmem:[%s518 + $0x40] sm:$0xf]
        %v562 = vld [vmem:[%s518 + $0x44] sm:$0xf]
        %v563 = vld [vmem:[%s518 + $0x48] sm:$0xf]
        %v564 = vld [vmem:[%s518 + $0x4c] sm:$0xf]
        %v565 = vld [vmem:[%s518 + $0x50] sm:$0xf]
        %v566 = vld [vmem:[%s518 + $0x54] sm:$0xf]
        %v567 = vld [vmem:[%s518 + $0x58] sm:$0xf]
        %v568 = vld [vmem:[%s518 + $0x5c] sm:$0xf]
        %v569 = vld [vmem:[%s518 + $0x60] sm:$0xf]
        %v570 = vld [vmem:[%s518 + $0x64] sm:$0xf]
        %v571 = vld [vmem:[%s518 + $0x68] sm:$0xf]
        %v572 = vld [vmem:[%s518 + $0x6c] sm:$0xf]
        %v573 = vld [vmem:[%s518 + $0x70] sm:$0xf]
        %v574 = vld [vmem:[%s518 + $0x74] sm:$0xf]
        %v575 = vld [vmem:[%s518 + $0x78] sm:$0xf]
        %v576 = vld [vmem:[%s518 + $0x7c] sm:$0xf]
        %s577 = scalar_lea.vmem %s518, 128 [#allocation2]
        %v578 = vld [vmem:[%s577] sm:$0xf]
        %v579 = vld [vmem:[%s577 + $0x4] sm:$0xf]
        %v580 = vld [vmem:[%s577 + $0x8] sm:$0xf]
        %v581 = vld [vmem:[%s577 + $0xc] sm:$0xf]
        %v582 = vld [vmem:[%s577 + $0x10] sm:$0xf]
        %v583 = vld [vmem:[%s577 + $0x14] sm:$0xf]
        %v584 = vld [vmem:[%s577 + $0x18] sm:$0xf]
        %v585 = vld [vmem:[%s577 + $0x1c] sm:$0xf]
        %v586 = vld [vmem:[%s577 + $0x20] sm:$0xf]
        %v587 = vld [vmem:[%s577 + $0x24] sm:$0xf]
        %v588 = vld [vmem:[%s577 + $0x28] sm:$0xf]
        %v589 = vld [vmem:[%s577 + $0x2c] sm:$0xf]
        %v590 = vld [vmem:[%s577 + $0x30] sm:$0xf]
        %v591 = vld [vmem:[%s577 + $0x34] sm:$0xf]
        %v592 = vld [vmem:[%s577 + $0x38] sm:$0xf]
        %v593 = vld [vmem:[%s577 + $0x3c] sm:$0xf]
        %v594 = vld [vmem:[%s577 + $0x40] sm:$0xf]
        %v595 = vld [vmem:[%s577 + $0x44] sm:$0xf]
        %v596 = vld [vmem:[%s577 + $0x48] sm:$0xf]
        %v597 = vld [vmem:[%s577 + $0x4c] sm:$0xf]
        %v598 = vld [vmem:[%s577 + $0x50] sm:$0xf]
        %v599 = vld [vmem:[%s577 + $0x54] sm:$0xf]
        %v600 = vld [vmem:[%s577 + $0x58] sm:$0xf]
        %v601 = vld [vmem:[%s577 + $0x5c] sm:$0xf]
        %v602 = vld [vmem:[%s577 + $0x60] sm:$0xf]
        %v603 = vld [vmem:[%s577 + $0x64] sm:$0xf]
        %v604 = vld [vmem:[%s577 + $0x68] sm:$0xf]
        %v605 = vld [vmem:[%s577 + $0x6c] sm:$0xf]
        %v606 = vld [vmem:[%s577 + $0x70] sm:$0xf]
        %v607 = vld [vmem:[%s577 + $0x74] sm:$0xf]
        %v608 = vld [vmem:[%s577 + $0x78] sm:$0xf]
        %v609 = vld [vmem:[%s577 + $0x7c] sm:$0xf]
        %s610 = scalar_lea.vmem %s518, 256 [#allocation2]
        %v611 = vld [vmem:[%s610] sm:$0xf]
        %v612 = vld [vmem:[%s610 + $0x4] sm:$0xf]
        %v613 = vld [vmem:[%s610 + $0x8] sm:$0xf]
        %v614 = vld [vmem:[%s610 + $0xc] sm:$0xf]
        %v615 = vld [vmem:[%s610 + $0x10] sm:$0xf]
        %v616 = vld [vmem:[%s610 + $0x14] sm:$0xf]
        %v617 = vld [vmem:[%s610 + $0x18] sm:$0xf]
        %v618 = vld [vmem:[%s610 + $0x1c] sm:$0xf]
        %v619 = vld [vmem:[%s610 + $0x20] sm:$0xf]
        %v620 = vld [vmem:[%s610 + $0x24] sm:$0xf]
        %v621 = vld [vmem:[%s610 + $0x28] sm:$0xf]
        %v622 = vld [vmem:[%s610 + $0x2c] sm:$0xf]
        %v623 = vld [vmem:[%s610 + $0x30] sm:$0xf]
        %v624 = vld [vmem:[%s610 + $0x34] sm:$0xf]
        %v625 = vld [vmem:[%s610 + $0x38] sm:$0xf]
        %v626 = vld [vmem:[%s610 + $0x3c] sm:$0xf]
        %v627 = vld [vmem:[%s610 + $0x40] sm:$0xf]
        %v628 = vld [vmem:[%s610 + $0x44] sm:$0xf]
        %v629 = vld [vmem:[%s610 + $0x48] sm:$0xf]
        %v630 = vld [vmem:[%s610 + $0x4c] sm:$0xf]
        %v631 = vld [vmem:[%s610 + $0x50] sm:$0xf]
        %v632 = vld [vmem:[%s610 + $0x54] sm:$0xf]
        %v633 = vld [vmem:[%s610 + $0x58] sm:$0xf]
        %v634 = vld [vmem:[%s610 + $0x5c] sm:$0xf]
        %v635 = vld [vmem:[%s610 + $0x60] sm:$0xf]
        %v636 = vld [vmem:[%s610 + $0x64] sm:$0xf]
        %v637 = vld [vmem:[%s610 + $0x68] sm:$0xf]
        %v638 = vld [vmem:[%s610 + $0x6c] sm:$0xf]
        %v639 = vld [vmem:[%s610 + $0x70] sm:$0xf]
        %v640 = vld [vmem:[%s610 + $0x74] sm:$0xf]
        %v641 = vld [vmem:[%s610 + $0x78] sm:$0xf]
        %v642 = vld [vmem:[%s610 + $0x7c] sm:$0xf]
        %v645 = vunpack.c.l.b16 %v545
        %v646 = vunpack.c.l.b16 %v546
        %v647 = vpack.c.b16 %v646, %v645
        %v650 = vunpack.c.l.b16 %v578
        %v651 = vunpack.c.l.b16 %v579
        %v652 = vpack.c.b16 %v651, %v650
        %vm653 = vcmask 130048
        %v655 = vsel %vm653, %v647, 0
        %v658 = vsel %vm653, %v652, 0
        %660 = vmatprep.subr.bf16.mxu0 0
        %661 = vmatpush1.bf16.xpose.msra.mxu0 %v658
        %662 = vmatprep.subr.bf16.mxu0 0
        %663 = vmatpush1.bf16.xpose.msra.mxu0 0
        %664 = vmatprep.subr.bf16.mxu0 0
        %665 = vmatpush1.bf16.xpose.msra.mxu0 0
        %666 = vmatprep.subr.bf16.mxu0 0
        %667 = vmatpush1.bf16.xpose.msra.mxu0 0
        %668 = vmatprep.subr.bf16.mxu0 0
        %669 = vmatpush1.bf16.xpose.msra.mxu0 0
        %670 = vmatprep.subr.bf16.mxu0 0
        %671 = vmatpush1.bf16.xpose.msra.mxu0 0
        %672 = vmatprep.subr.bf16.mxu0 0
        %673 = vmatpush1.bf16.xpose.msra.mxu0 0
        %674 = vmatprep.subr.bf16.mxu0 0
        %675 = vmatpush1.bf16.xpose.msra.mxu0 0
        %676 = vmatprep.subr.bf16.mxu0 0
        %677 = vmatpush1.bf16.xpose.msra.mxu0 0
        %678 = vmatprep.subr.bf16.mxu0 0
        %679 = vmatpush1.bf16.xpose.msra.mxu0 0
        %680 = vmatprep.subr.bf16.mxu0 0
        %681 = vmatpush1.bf16.xpose.msra.mxu0 0
        %682 = vmatprep.subr.bf16.mxu0 0
        %683 = vmatpush1.bf16.xpose.msra.mxu0 0
        %684 = vmatprep.subr.bf16.mxu0 0
        %685 = vmatpush1.bf16.xpose.msra.mxu0 0
        %686 = vmatprep.subr.bf16.mxu0 0
        %687 = vmatpush1.bf16.xpose.msra.mxu0 0
        %688 = vmatprep.subr.bf16.mxu0 0
        %689 = vmatpush1.bf16.xpose.msra.mxu0 0
        %690 = vmatprep.subr.bf16.mxu0 0
        %691 = vmatpush1.bf16.xpose.msra.mxu0 0
        %692 = vmatprep.mubr.bf16.mxu0 0
        %693 = vmatmul.mubr.bf16.gmra.mrb[0].mxu0 %v655
        %v694 = vpop.f32.mrb[0].mxu0
        %v695 = vadd.f32 0.0, %v694
        %v696 = vpop.f32.mrb[0].mxu0
        %v697 = vpop.f32.mrb[0].mxu0
        %v698 = vadd.f32 0.0, %v697
        %v699 = vpop.f32.mrb[0].mxu0
        %700 = vdwg.mxu0
        %v703 = vunpack.c.l.b16 %v547
        %v704 = vunpack.c.l.b16 %v548
        %v705 = vpack.c.b16 %v704, %v703
        %v708 = vunpack.c.l.b16 %v580
        %v709 = vunpack.c.l.b16 %v581
        %v710 = vpack.c.b16 %v709, %v708
        %v712 = vsel %vm653, %v705, 0
        %v715 = vsel %vm653, %v710, 0
        %717 = vmatprep.subr.bf16.mxu0 0
        %718 = vmatpush1.bf16.xpose.msra.mxu0 %v715
        %719 = vmatprep.subr.bf16.mxu0 0
        %720 = vmatpush1.bf16.xpose.msra.mxu0 0
        %721 = vmatprep.subr.bf16.mxu0 0
        %722 = vmatpush1.bf16.xpose.msra.mxu0 0
        %723 = vmatprep.subr.bf16.mxu0 0
        %724 = vmatpush1.bf16.xpose.msra.mxu0 0
        %725 = vmatprep.subr.bf16.mxu0 0
        %726 = vmatpush1.bf16.xpose.msra.mxu0 0
        %727 = vmatprep.subr.bf16.mxu0 0
        %728 = vmatpush1.bf16.xpose.msra.mxu0 0
        %729 = vmatprep.subr.bf16.mxu0 0
        %730 = vmatpush1.bf16.xpose.msra.mxu0 0
        %731 = vmatprep.subr.bf16.mxu0 0
        %732 = vmatpush1.bf16.xpose.msra.mxu0 0
        %733 = vmatprep.subr.bf16.mxu0 0
        %734 = vmatpush1.bf16.xpose.msra.mxu0 0
        %735 = vmatprep.subr.bf16.mxu0 0
        %736 = vmatpush1.bf16.xpose.msra.mxu0 0
        %737 = vmatprep.subr.bf16.mxu0 0
        %738 = vmatpush1.bf16.xpose.msra.mxu0 0
        %739 = vmatprep.subr.bf16.mxu0 0
        %740 = vmatpush1.bf16.xpose.msra.mxu0 0
        %741 = vmatprep.subr.bf16.mxu0 0
        %742 = vmatpush1.bf16.xpose.msra.mxu0 0
        %743 = vmatprep.subr.bf16.mxu0 0
        %744 = vmatpush1.bf16.xpose.msra.mxu0 0
        %745 = vmatprep.subr.bf16.mxu0 0
        %746 = vmatpush1.bf16.xpose.msra.mxu0 0
        %747 = vmatprep.subr.bf16.mxu0 0
        %748 = vmatpush1.bf16.xpose.msra.mxu0 0
        %749 = vmatprep.mubr.bf16.mxu0 0
        %750 = vmatmul.mubr.bf16.gmra.mrb[0].mxu0 %v712
        %v751 = vpop.f32.mrb[0].mxu0
        %v752 = vadd.f32 0.0, %v751
        %v753 = vpop.f32.mrb[0].mxu0
        %v754 = vpop.f32.mrb[0].mxu0
        %v755 = vadd.f32 0.0, %v754
        %v756 = vpop.f32.mrb[0].mxu0
        %757 = vdwg.mxu0
        %v760 = vunpack.c.l.b16 %v549
        %v761 = vunpack.c.l.b16 %v550
        %v762 = vpack.c.b16 %v761, %v760
        %v765 = vunpack.c.l.b16 %v582
        %v766 = vunpack.c.l.b16 %v583
        %v767 = vpack.c.b16 %v766, %v765
        %v769 = vsel %vm653, %v762, 0
        %v772 = vsel %vm653, %v767, 0
        %774 = vmatprep.subr.bf16.mxu0 0
        %775 = vmatpush1.bf16.xpose.msra.mxu0 %v772
        %776 = vmatprep.subr.bf16.mxu0 0
        %777 = vmatpush1.bf16.xpose.msra.mxu0 0
        %778 = vmatprep.subr.bf16.mxu0 0
        %779 = vmatpush1.bf16.xpose.msra.mxu0 0
        %780 = vmatprep.subr.bf16.mxu0 0
        %781 = vmatpush1.bf16.xpose.msra.mxu0 0
        %782 = vmatprep.subr.bf16.mxu0 0
        %783 = vmatpush1.bf16.xpose.msra.mxu0 0
        %784 = vmatprep.subr.bf16.mxu0 0
        %785 = vmatpush1.bf16.xpose.msra.mxu0 0
        %786 = vmatprep.subr.bf16.mxu0 0
        %787 = vmatpush1.bf16.xpose.msra.mxu0 0
        %788 = vmatprep.subr.bf16.mxu0 0
        %789 = vmatpush1.bf16.xpose.msra.mxu0 0
        %790 = vmatprep.subr.bf16.mxu0 0
        %791 = vmatpush1.bf16.xpose.msra.mxu0 0
        %792 = vmatprep.subr.bf16.mxu0 0
        %793 = vmatpush1.bf16.xpose.msra.mxu0 0
        %794 = vmatprep.subr.bf16.mxu0 0
        %795 = vmatpush1.bf16.xpose.msra.mxu0 0
        %796 = vmatprep.subr.bf16.mxu0 0
        %797 = vmatpush1.bf16.xpose.msra.mxu0 0
        %798 = vmatprep.subr.bf16.mxu0 0
        %799 = vmatpush1.bf16.xpose.msra.mxu0 0
        %800 = vmatprep.subr.bf16.mxu0 0
        %801 = vmatpush1.bf16.xpose.msra.mxu0 0
        %802 = vmatprep.subr.bf16.mxu0 0
        %803 = vmatpush1.bf16.xpose.msra.mxu0 0
        %804 = vmatprep.subr.bf16.mxu0 0
        %805 = vmatpush1.bf16.xpose.msra.mxu0 0
        %806 = vmatprep.mubr.bf16.mxu0 0
        %807 = vmatmul.mubr.bf16.gmra.mrb[0].mxu0 %v769
        %v808 = vpop.f32.mrb[0].mxu0
        %v809 = vadd.f32 0.0, %v808
        %v810 = vpop.f32.mrb[0].mxu0
        %v811 = vpop.f32.mrb[0].mxu0
        %v812 = vadd.f32 0.0, %v811
        %v813 = vpop.f32.mrb[0].mxu0
        %814 = vdwg.mxu0
        %v817 = vunpack.c.l.b16 %v551
        %v818 = vunpack.c.l.b16 %v552
        %v819 = vpack.c.b16 %v818, %v817
        %v822 = vunpack.c.l.b16 %v584
        %v823 = vunpack.c.l.b16 %v585
        %v824 = vpack.c.b16 %v823, %v822
        %v826 = vsel %vm653, %v819, 0
        %v829 = vsel %vm653, %v824, 0
        %831 = vmatprep.subr.bf16.mxu0 0
        %832 = vmatpush1.bf16.xpose.msra.mxu0 %v829
        %833 = vmatprep.subr.bf16.mxu0 0
        %834 = vmatpush1.bf16.xpose.msra.mxu0 0
        %835 = vmatprep.subr.bf16.mxu0 0
        %836 = vmatpush1.bf16.xpose.msra.mxu0 0
        %837 = vmatprep.subr.bf16.mxu0 0
        %838 = vmatpush1.bf16.xpose.msra.mxu0 0
        %839 = vmatprep.subr.bf16.mxu0 0
        %840 = vmatpush1.bf16.xpose.msra.mxu0 0
        %841 = vmatprep.subr.bf16.mxu0 0
        %842 = vmatpush1.bf16.xpose.msra.mxu0 0
        %843 = vmatprep.subr.bf16.mxu0 0
        %844 = vmatpush1.bf16.xpose.msra.mxu0 0
        %845 = vmatprep.subr.bf16.mxu0 0
        %846 = vmatpush1.bf16.xpose.msra.mxu0 0
        %847 = vmatprep.subr.bf16.mxu0 0
        %848 = vmatpush1.bf16.xpose.msra.mxu0 0
        %849 = vmatprep.subr.bf16.mxu0 0
        %850 = vmatpush1.bf16.xpose.msra.mxu0 0
        %851 = vmatprep.subr.bf16.mxu0 0
        %852 = vmatpush1.bf16.xpose.msra.mxu0 0
        %853 = vmatprep.subr.bf16.mxu0 0
        %854 = vmatpush1.bf16.xpose.msra.mxu0 0
        %855 = vmatprep.subr.bf16.mxu0 0
        %856 = vmatpush1.bf16.xpose.msra.mxu0 0
        %857 = vmatprep.subr.bf16.mxu0 0
        %858 = vmatpush1.bf16.xpose.msra.mxu0 0
        %859 = vmatprep.subr.bf16.mxu0 0
        %860 = vmatpush1.bf16.xpose.msra.mxu0 0
        %861 = vmatprep.subr.bf16.mxu0 0
        %862 = vmatpush1.bf16.xpose.msra.mxu0 0
        %863 = vmatprep.mubr.bf16.mxu0 0
        %864 = vmatmul.mubr.bf16.gmra.mrb[0].mxu0 %v826
        %v865 = vpop.f32.mrb[0].mxu0
        %v866 = vadd.f32 0.0, %v865
        %v867 = vpop.f32.mrb[0].mxu0
        %v868 = vpop.f32.mrb[0].mxu0
        %v869 = vadd.f32 0.0, %v868
        %v870 = vpop.f32.mrb[0].mxu0
        %871 = vdwg.mxu0
        %v874 = vunpack.c.l.b16 %v553
        %v875 = vunpack.c.l.b16 %v554
        %v876 = vpack.c.b16 %v875, %v874
        %v879 = vunpack.c.l.b16 %v586
        %v880 = vunpack.c.l.b16 %v587
        %v881 = vpack.c.b16 %v880, %v879
        %v883 = vsel %vm653, %v876, 0
        %v886 = vsel %vm653, %v881, 0
        %888 = vmatprep.subr.bf16.mxu0 0
        %889 = vmatpush1.bf16.xpose.msra.mxu0 %v886
        %890 = vmatprep.subr.bf16.mxu0 0
        %891 = vmatpush1.bf16.xpose.msra.mxu0 0
        %892 = vmatprep.subr.bf16.mxu0 0
        %893 = vmatpush1.bf16.xpose.msra.mxu0 0
        %894 = vmatprep.subr.bf16.mxu0 0
        %895 = vmatpush1.bf16.xpose.msra.mxu0 0
        %896 = vmatprep.subr.bf16.mxu0 0
        %897 = vmatpush1.bf16.xpose.msra.mxu0 0
        %898 = vmatprep.subr.bf16.mxu0 0
        %899 = vmatpush1.bf16.xpose.msra.mxu0 0
        %900 = vmatprep.subr.bf16.mxu0 0
        %901 = vmatpush1.bf16.xpose.msra.mxu0 0
        %902 = vmatprep.subr.bf16.mxu0 0
        %903 = vmatpush1.bf16.xpose.msra.mxu0 0
        %904 = vmatprep.subr.bf16.mxu0 0
        %905 = vmatpush1.bf16.xpose.msra.mxu0 0
        %906 = vmatprep.subr.bf16.mxu0 0
        %907 = vmatpush1.bf16.xpose.msra.mxu0 0
        %908 = vmatprep.subr.bf16.mxu0 0
        %909 = vmatpush1.bf16.xpose.msra.mxu0 0
        %910 = vmatprep.subr.bf16.mxu0 0
        %911 = vmatpush1.bf16.xpose.msra.mxu0 0
        %912 = vmatprep.subr.bf16.mxu0 0
        %913 = vmatpush1.bf16.xpose.msra.mxu0 0
        %914 = vmatprep.subr.bf16.mxu0 0
        %915 = vmatpush1.bf16.xpose.msra.mxu0 0
        %916 = vmatprep.subr.bf16.mxu0 0
        %917 = vmatpush1.bf16.xpose.msra.mxu0 0
        %918 = vmatprep.subr.bf16.mxu0 0
        %919 = vmatpush1.bf16.xpose.msra.mxu0 0
        %920 = vmatprep.mubr.bf16.mxu0 0
        %921 = vmatmul.mubr.bf16.gmra.mrb[0].mxu0 %v883
        %v922 = vpop.f32.mrb[0].mxu0
        %v923 = vadd.f32 0.0, %v922
        %v924 = vpop.f32.mrb[0].mxu0
        %v925 = vpop.f32.mrb[0].mxu0
        %v926 = vadd.f32 0.0, %v925
        %v927 = vpop.f32.mrb[0].mxu0
        %928 = vdwg.mxu0
        %v931 = vunpack.c.l.b16 %v555
        %v932 = vunpack.c.l.b16 %v556
        %v933 = vpack.c.b16 %v932, %v931
        %v936 = vunpack.c.l.b16 %v588
        %v937 = vunpack.c.l.b16 %v589
        %v938 = vpack.c.b16 %v937, %v936
        %v940 = vsel %vm653, %v933, 0
        %v943 = vsel %vm653, %v938, 0
        %945 = vmatprep.subr.bf16.mxu0 0
        %946 = vmatpush1.bf16.xpose.msra.mxu0 %v943
        %947 = vmatprep.subr.bf16.mxu0 0
        %948 = vmatpush1.bf16.xpose.msra.mxu0 0
        %949 = vmatprep.subr.bf16.mxu0 0
        %950 = vmatpush1.bf16.xpose.msra.mxu0 0
        %951 = vmatprep.subr.bf16.mxu0 0
        %952 = vmatpush1.bf16.xpose.msra.mxu0 0
        %953 = vmatprep.subr.bf16.mxu0 0
        %954 = vmatpush1.bf16.xpose.msra.mxu0 0
        %955 = vmatprep.subr.bf16.mxu0 0
        %956 = vmatpush1.bf16.xpose.msra.mxu0 0
        %957 = vmatprep.subr.bf16.mxu0 0
        %958 = vmatpush1.bf16.xpose.msra.mxu0 0
        %959 = vmatprep.subr.bf16.mxu0 0
        %960 = vmatpush1.bf16.xpose.msra.mxu0 0
        %961 = vmatprep.subr.bf16.mxu0 0
        %962 = vmatpush1.bf16.xpose.msra.mxu0 0
        %963 = vmatprep.subr.bf16.mxu0 0
        %964 = vmatpush1.bf16.xpose.msra.mxu0 0
        %965 = vmatprep.subr.bf16.mxu0 0
        %966 = vmatpush1.bf16.xpose.msra.mxu0 0
        %967 = vmatprep.subr.bf16.mxu0 0
        %968 = vmatpush1.bf16.xpose.msra.mxu0 0
        %969 = vmatprep.subr.bf16.mxu0 0
        %970 = vmatpush1.bf16.xpose.msra.mxu0 0
        %971 = vmatprep.subr.bf16.mxu0 0
        %972 = vmatpush1.bf16.xpose.msra.mxu0 0
        %973 = vmatprep.subr.bf16.mxu0 0
        %974 = vmatpush1.bf16.xpose.msra.mxu0 0
        %975 = vmatprep.subr.bf16.mxu0 0
        %976 = vmatpush1.bf16.xpose.msra.mxu0 0
        %977 = vmatprep.mubr.bf16.mxu0 0
        %978 = vmatmul.mubr.bf16.gmra.mrb[0].mxu0 %v940
        %v979 = vpop.f32.mrb[0].mxu0
        %v980 = vadd.f32 0.0, %v979
        %v981 = vpop.f32.mrb[0].mxu0
        %v982 = vpop.f32.mrb[0].mxu0
        %v983 = vadd.f32 0.0, %v982
        %v984 = vpop.f32.mrb[0].mxu0
        %985 = vdwg.mxu0
        %v988 = vunpack.c.l.b16 %v557
        %v989 = vunpack.c.l.b16 %v558
        %v990 = vpack.c.b16 %v989, %v988
        %v993 = vunpack.c.l.b16 %v590
        %v994 = vunpack.c.l.b16 %v591
        %v995 = vpack.c.b16 %v994, %v993
        %v997 = vsel %vm653, %v990, 0
        %v1000 = vsel %vm653, %v995, 0
        %1002 = vmatprep.subr.bf16.mxu0 0
        %1003 = vmatpush1.bf16.xpose.msra.mxu0 %v1000
        %1004 = vmatprep.subr.bf16.mxu0 0
        %1005 = vmatpush1.bf16.xpose.msra.mxu0 0
        %1006 = vmatprep.subr.bf16.mxu0 0
        %1007 = vmatpush1.bf16.xpose.msra.mxu0 0
        %1008 = vmatprep.subr.bf16.mxu0 0
        %1009 = vmatpush1.bf16.xpose.msra.mxu0 0
        %1010 = vmatprep.subr.bf16.mxu0 0
        %1011 = vmatpush1.bf16.xpose.msra.mxu0 0
        %1012 = vmatprep.subr.bf16.mxu0 0
        %1013 = vmatpush1.bf16.xpose.msra.mxu0 0
        %1014 = vmatprep.subr.bf16.mxu0 0
        %1015 = vmatpush1.bf16.xpose.msra.mxu0 0
        %1016 = vmatprep.subr.bf16.mxu0 0
        %1017 = vmatpush1.bf16.xpose.msra.mxu0 0
        %1018 = vmatprep.subr.bf16.mxu0 0
        %1019 = vmatpush1.bf16.xpose.msra.mxu0 0
        %1020 = vmatprep.subr.bf16.mxu0 0
        %1021 = vmatpush1.bf16.xpose.msra.mxu0 0
        %1022 = vmatprep.subr.bf16.mxu0 0
        %1023 = vmatpush1.bf16.xpose.msra.mxu0 0
        %1024 = vmatprep.subr.bf16.mxu0 0
        %1025 = vmatpush1.bf16.xpose.msra.mxu0 0
        %1026 = vmatprep.subr.bf16.mxu0 0
        %1027 = vmatpush1.bf16.xpose.msra.mxu0 0
        %1028 = vmatprep.subr.bf16.mxu0 0
        %1029 = vmatpush1.bf16.xpose.msra.mxu0 0
        %1030 = vmatprep.subr.bf16.mxu0 0
        %1031 = vmatpush1.bf16.xpose.msra.mxu0 0
        %1032 = vmatprep.subr.bf16.mxu0 0
        %1033 = vmatpush1.bf16.xpose.msra.mxu0 0
        %1034 = vmatprep.mubr.bf16.mxu0 0
        %1035 = vmatmul.mubr.bf16.gmra.mrb[0].mxu0 %v997
        %v1036 = vpop.f32.mrb[0].mxu0
        %v1037 = vadd.f32 0.0, %v1036
        %v1038 = vpop.f32.mrb[0].mxu0
        %v1039 = vpop.f32.mrb[0].mxu0
        %v1040 = vadd.f32 0.0, %v1039
        %v1041 = vpop.f32.mrb[0].mxu0
        %1042 = vdwg.mxu0
        %v1045 = vunpack.c.l.b16 %v559
        %v1046 = vunpack.c.l.b16 %v560
        %v1047 = vpack.c.b16 %v1046, %v1045
        %v1050 = vunpack.c.l.b16 %v592
        %v1051 = vunpack.c.l.b16 %v593
        %v1052 = vpack.c.b16 %v1051, %v1050
        %v1054 = vsel %vm653, %v1047, 0
        %v1057 = vsel %vm653, %v1052, 0
        %1059 = vmatprep.subr.bf16.mxu0 0
        %1060 = vmatpush1.bf16.xpose.msra.mxu0 %v1057
        %1061 = vmatprep.subr.bf16.mxu0 0
        %1062 = vmatpush1.bf16.xpose.msra.mxu0 0
        %1063 = vmatprep.subr.bf16.mxu0 0
        %1064 = vmatpush1.bf16.xpose.msra.mxu0 0
        %1065 = vmatprep.subr.bf16.mxu0 0
        %1066 = vmatpush1.bf16.xpose.msra.mxu0 0
        %1067 = vmatprep.subr.bf16.mxu0 0
        %1068 = vmatpush1.bf16.xpose.msra.mxu0 0
        %1069 = vmatprep.subr.bf16.mxu0 0
        %1070 = vmatpush1.bf16.xpose.msra.mxu0 0
        %1071 = vmatprep.subr.bf16.mxu0 0
        %1072 = vmatpush1.bf16.xpose.msra.mxu0 0
        %1073 = vmatprep.subr.bf16.mxu0 0
        %1074 = vmatpush1.bf16.xpose.msra.mxu0 0
        %1075 = vmatprep.subr.bf16.mxu0 0
        %1076 = vmatpush1.bf16.xpose.msra.mxu0 0
        %1077 = vmatprep.subr.bf16.mxu0 0
        %1078 = vmatpush1.bf16.xpose.msra.mxu0 0
        %1079 = vmatprep.subr.bf16.mxu0 0
        %1080 = vmatpush1.bf16.xpose.msra.mxu0 0
        %1081 = vmatprep.subr.bf16.mxu0 0
        %1082 = vmatpush1.bf16.xpose.msra.mxu0 0
        %1083 = vmatprep.subr.bf16.mxu0 0
        %1084 = vmatpush1.bf16.xpose.msra.mxu0 0
        %1085 = vmatprep.subr.bf16.mxu0 0
        %1086 = vmatpush1.bf16.xpose.msra.mxu0 0
        %1087 = vmatprep.subr.bf16.mxu0 0
        %1088 = vmatpush1.bf16.xpose.msra.mxu0 0
        %1089 = vmatprep.subr.bf16.mxu0 0
        %1090 = vmatpush1.bf16.xpose.msra.mxu0 0
        %1091 = vmatprep.mubr.bf16.mxu0 0
        %1092 = vmatmul.mubr.bf16.gmra.mrb[0].mxu0 %v1054
        %v1093 = vpop.f32.mrb[0].mxu0
        %v1094 = vadd.f32 0.0, %v1093
        %v1095 = vpop.f32.mrb[0].mxu0
        %v1096 = vpop.f32.mrb[0].mxu0
        %v1097 = vadd.f32 0.0, %v1096
        %v1098 = vpop.f32.mrb[0].mxu0
        %1099 = vdwg.mxu0
        %v1102 = vunpack.c.l.b16 %v561
        %v1103 = vunpack.c.l.b16 %v562
        %v1104 = vpack.c.b16 %v1103, %v1102
        %v1107 = vunpack.c.l.b16 %v594
        %v1108 = vunpack.c.l.b16 %v595
        %v1109 = vpack.c.b16 %v1108, %v1107
        %v1111 = vsel %vm653, %v1104, 0
        %v1114 = vsel %vm653, %v1109, 0
        %1116 = vmatprep.subr.bf16.mxu0 0
        %1117 = vmatpush1.bf16.xpose.msra.mxu0 %v1114
        %1118 = vmatprep.subr.bf16.mxu0 0
        %1119 = vmatpush1.bf16.xpose.msra.mxu0 0
        %1120 = vmatprep.subr.bf16.mxu0 0
        %1121 = vmatpush1.bf16.xpose.msra.mxu0 0
        %1122 = vmatprep.subr.bf16.mxu0 0
        %1123 = vmatpush1.bf16.xpose.msra.mxu0 0
        %1124 = vmatprep.subr.bf16.mxu0 0
        %1125 = vmatpush1.bf16.xpose.msra.mxu0 0
        %1126 = vmatprep.subr.bf16.mxu0 0
        %1127 = vmatpush1.bf16.xpose.msra.mxu0 0
        %1128 = vmatprep.subr.bf16.mxu0 0
        %1129 = vmatpush1.bf16.xpose.msra.mxu0 0
        %1130 = vmatprep.subr.bf16.mxu0 0
        %1131 = vmatpush1.bf16.xpose.msra.mxu0 0
        %1132 = vmatprep.subr.bf16.mxu0 0
        %1133 = vmatpush1.bf16.xpose.msra.mxu0 0
        %1134 = vmatprep.subr.bf16.mxu0 0
        %1135 = vmatpush1.bf16.xpose.msra.mxu0 0
        %1136 = vmatprep.subr.bf16.mxu0 0
        %1137 = vmatpush1.bf16.xpose.msra.mxu0 0
        %1138 = vmatprep.subr.bf16.mxu0 0
        %1139 = vmatpush1.bf16.xpose.msra.mxu0 0
        %1140 = vmatprep.subr.bf16.mxu0 0
        %1141 = vmatpush1.bf16.xpose.msra.mxu0 0
        %1142 = vmatprep.subr.bf16.mxu0 0
        %1143 = vmatpush1.bf16.xpose.msra.mxu0 0
        %1144 = vmatprep.subr.bf16.mxu0 0
        %1145 = vmatpush1.bf16.xpose.msra.mxu0 0
        %1146 = vmatprep.subr.bf16.mxu0 0
        %1147 = vmatpush1.bf16.xpose.msra.mxu0 0
        %1148 = vmatprep.mubr.bf16.mxu0 0
        %1149 = vmatmul.mubr.bf16.gmra.mrb[0].mxu0 %v1111
        %v1150 = vpop.f32.mrb[0].mxu0
        %v1151 = vadd.f32 0.0, %v1150
        %v1152 = vpop.f32.mrb[0].mxu0
        %v1153 = vpop.f32.mrb[0].mxu0
        %v1154 = vadd.f32 0.0, %v1153
        %v1155 = vpop.f32.mrb[0].mxu0
        %1156 = vdwg.mxu0
        %v1159 = vunpack.c.l.b16 %v563
        %v1160 = vunpack.c.l.b16 %v564
        %v1161 = vpack.c.b16 %v1160, %v1159
        %v1164 = vunpack.c.l.b16 %v596
        %v1165 = vunpack.c.l.b16 %v597
        %v1166 = vpack.c.b16 %v1165, %v1164
        %v1168 = vsel %vm653, %v1161, 0
        %v1171 = vsel %vm653, %v1166, 0
        %1173 = vmatprep.subr.bf16.mxu0 0
        %1174 = vmatpush1.bf16.xpose.msra.mxu0 %v1171
        %1175 = vmatprep.subr.bf16.mxu0 0
        %1176 = vmatpush1.bf16.xpose.msra.mxu0 0
        %1177 = vmatprep.subr.bf16.mxu0 0
        %1178 = vmatpush1.bf16.xpose.msra.mxu0 0
        %1179 = vmatprep.subr.bf16.mxu0 0
        %1180 = vmatpush1.bf16.xpose.msra.mxu0 0
        %1181 = vmatprep.subr.bf16.mxu0 0
        %1182 = vmatpush1.bf16.xpose.msra.mxu0 0
        %1183 = vmatprep.subr.bf16.mxu0 0
        %1184 = vmatpush1.bf16.xpose.msra.mxu0 0
        %1185 = vmatprep.subr.bf16.mxu0 0
        %1186 = vmatpush1.bf16.xpose.msra.mxu0 0
        %1187 = vmatprep.subr.bf16.mxu0 0
        %1188 = vmatpush1.bf16.xpose.msra.mxu0 0
        %1189 = vmatprep.subr.bf16.mxu0 0
        %1190 = vmatpush1.bf16.xpose.msra.mxu0 0
        %1191 = vmatprep.subr.bf16.mxu0 0
        %1192 = vmatpush1.bf16.xpose.msra.mxu0 0
        %1193 = vmatprep.subr.bf16.mxu0 0
        %1194 = vmatpush1.bf16.xpose.msra.mxu0 0
        %1195 = vmatprep.subr.bf16.mxu0 0
        %1196 = vmatpush1.bf16.xpose.msra.mxu0 0
        %1197 = vmatprep.subr.bf16.mxu0 0
        %1198 = vmatpush1.bf16.xpose.msra.mxu0 0
        %1199 = vmatprep.subr.bf16.mxu0 0
        %1200 = vmatpush1.bf16.xpose.msra.mxu0 0
        %1201 = vmatprep.subr.bf16.mxu0 0
        %1202 = vmatpush1.bf16.xpose.msra.mxu0 0
        %1203 = vmatprep.subr.bf16.mxu0 0
        %1204 = vmatpush1.bf16.xpose.msra.mxu0 0
        %1205 = vmatprep.mubr.bf16.mxu0 0
        %1206 = vmatmul.mubr.bf16.gmra.mrb[0].mxu0 %v1168
        %v1207 = vpop.f32.mrb[0].mxu0
        %v1208 = vadd.f32 0.0, %v1207
        %v1209 = vpop.f32.mrb[0].mxu0
        %v1210 = vpop.f32.mrb[0].mxu0
        %v1211 = vadd.f32 0.0, %v1210
        %v1212 = vpop.f32.mrb[0].mxu0
        %1213 = vdwg.mxu0
        %v1216 = vunpack.c.l.b16 %v565
        %v1217 = vunpack.c.l.b16 %v566
        %v1218 = vpack.c.b16 %v1217, %v1216
        %v1221 = vunpack.c.l.b16 %v598
        %v1222 = vunpack.c.l.b16 %v599
        %v1223 = vpack.c.b16 %v1222, %v1221
        %v1225 = vsel %vm653, %v1218, 0
        %v1228 = vsel %vm653, %v1223, 0
        %1230 = vmatprep.subr.bf16.mxu0 0
        %1231 = vmatpush1.bf16.xpose.msra.mxu0 %v1228
        %1232 = vmatprep.subr.bf16.mxu0 0
        %1233 = vmatpush1.bf16.xpose.msra.mxu0 0
        %1234 = vmatprep.subr.bf16.mxu0 0
        %1235 = vmatpush1.bf16.xpose.msra.mxu0 0
        %1236 = vmatprep.subr.bf16.mxu0 0
        %1237 = vmatpush1.bf16.xpose.msra.mxu0 0
        %1238 = vmatprep.subr.bf16.mxu0 0
        %1239 = vmatpush1.bf16.xpose.msra.mxu0 0
        %1240 = vmatprep.subr.bf16.mxu0 0
        %1241 = vmatpush1.bf16.xpose.msra.mxu0 0
        %1242 = vmatprep.subr.bf16.mxu0 0
        %1243 = vmatpush1.bf16.xpose.msra.mxu0 0
        %1244 = vmatprep.subr.bf16.mxu0 0
        %1245 = vmatpush1.bf16.xpose.msra.mxu0 0
        %1246 = vmatprep.subr.bf16.mxu0 0
        %1247 = vmatpush1.bf16.xpose.msra.mxu0 0
        %1248 = vmatprep.subr.bf16.mxu0 0
        %1249 = vmatpush1.bf16.xpose.msra.mxu0 0
        %1250 = vmatprep.subr.bf16.mxu0 0
        %1251 = vmatpush1.bf16.xpose.msra.mxu0 0
        %1252 = vmatprep.subr.bf16.mxu0 0
        %1253 = vmatpush1.bf16.xpose.msra.mxu0 0
        %1254 = vmatprep.subr.bf16.mxu0 0
        %1255 = vmatpush1.bf16.xpose.msra.mxu0 0
        %1256 = vmatprep.subr.bf16.mxu0 0
        %1257 = vmatpush1.bf16.xpose.msra.mxu0 0
        %1258 = vmatprep.subr.bf16.mxu0 0
        %1259 = vmatpush1.bf16.xpose.msra.mxu0 0
        %1260 = vmatprep.subr.bf16.mxu0 0
        %1261 = vmatpush1.bf16.xpose.msra.mxu0 0
        %1262 = vmatprep.mubr.bf16.mxu0 0
        %1263 = vmatmul.mubr.bf16.gmra.mrb[0].mxu0 %v1225
        %v1264 = vpop.f32.mrb[0].mxu0
        %v1265 = vadd.f32 0.0, %v1264
        %v1266 = vpop.f32.mrb[0].mxu0
        %v1267 = vpop.f32.mrb[0].mxu0
        %v1268 = vadd.f32 0.0, %v1267
        %v1269 = vpop.f32.mrb[0].mxu0
        %1270 = vdwg.mxu0
        %v1273 = vunpack.c.l.b16 %v567
        %v1274 = vunpack.c.l.b16 %v568
        %v1275 = vpack.c.b16 %v1274, %v1273
        %v1278 = vunpack.c.l.b16 %v600
        %v1279 = vunpack.c.l.b16 %v601
        %v1280 = vpack.c.b16 %v1279, %v1278
        %v1282 = vsel %vm653, %v1275, 0
        %v1285 = vsel %vm653, %v1280, 0
        %1287 = vmatprep.subr.bf16.mxu0 0
        %1288 = vmatpush1.bf16.xpose.msra.mxu0 %v1285
        %1289 = vmatprep.subr.bf16.mxu0 0
        %1290 = vmatpush1.bf16.xpose.msra.mxu0 0
        %1291 = vmatprep.subr.bf16.mxu0 0
        %1292 = vmatpush1.bf16.xpose.msra.mxu0 0
        %1293 = vmatprep.subr.bf16.mxu0 0
        %1294 = vmatpush1.bf16.xpose.msra.mxu0 0
        %1295 = vmatprep.subr.bf16.mxu0 0
        %1296 = vmatpush1.bf16.xpose.msra.mxu0 0
        %1297 = vmatprep.subr.bf16.mxu0 0
        %1298 = vmatpush1.bf16.xpose.msra.mxu0 0
        %1299 = vmatprep.subr.bf16.mxu0 0
        %1300 = vmatpush1.bf16.xpose.msra.mxu0 0
        %1301 = vmatprep.subr.bf16.mxu0 0
        %1302 = vmatpush1.bf16.xpose.msra.mxu0 0
        %1303 = vmatprep.subr.bf16.mxu0 0
        %1304 = vmatpush1.bf16.xpose.msra.mxu0 0
        %1305 = vmatprep.subr.bf16.mxu0 0
        %1306 = vmatpush1.bf16.xpose.msra.mxu0 0
        %1307 = vmatprep.subr.bf16.mxu0 0
        %1308 = vmatpush1.bf16.xpose.msra.mxu0 0
        %1309 = vmatprep.subr.bf16.mxu0 0
        %1310 = vmatpush1.bf16.xpose.msra.mxu0 0
        %1311 = vmatprep.subr.bf16.mxu0 0
        %1312 = vmatpush1.bf16.xpose.msra.mxu0 0
        %1313 = vmatprep.subr.bf16.mxu0 0
        %1314 = vmatpush1.bf16.xpose.msra.mxu0 0
        %1315 = vmatprep.subr.bf16.mxu0 0
        %1316 = vmatpush1.bf16.xpose.msra.mxu0 0
        %1317 = vmatprep.subr.bf16.mxu0 0
        %1318 = vmatpush1.bf16.xpose.msra.mxu0 0
        %1319 = vmatprep.mubr.bf16.mxu0 0
        %1320 = vmatmul.mubr.bf16.gmra.mrb[0].mxu0 %v1282
        %v1321 = vpop.f32.mrb[0].mxu0
        %v1322 = vadd.f32 0.0, %v1321
        %v1323 = vpop.f32.mrb[0].mxu0
        %v1324 = vpop.f32.mrb[0].mxu0
        %v1325 = vadd.f32 0.0, %v1324
        %v1326 = vpop.f32.mrb[0].mxu0
        %1327 = vdwg.mxu0
        %v1330 = vunpack.c.l.b16 %v569
        %v1331 = vunpack.c.l.b16 %v570
        %v1332 = vpack.c.b16 %v1331, %v1330
        %v1335 = vunpack.c.l.b16 %v602
        %v1336 = vunpack.c.l.b16 %v603
        %v1337 = vpack.c.b16 %v1336, %v1335
        %v1339 = vsel %vm653, %v1332, 0
        %v1342 = vsel %vm653, %v1337, 0
        %1344 = vmatprep.subr.bf16.mxu0 0
        %1345 = vmatpush1.bf16.xpose.msra.mxu0 %v1342
        %1346 = vmatprep.subr.bf16.mxu0 0
        %1347 = vmatpush1.bf16.xpose.msra.mxu0 0
        %1348 = vmatprep.subr.bf16.mxu0 0
        %1349 = vmatpush1.bf16.xpose.msra.mxu0 0
        %1350 = vmatprep.subr.bf16.mxu0 0
        %1351 = vmatpush1.bf16.xpose.msra.mxu0 0
        %1352 = vmatprep.subr.bf16.mxu0 0
        %1353 = vmatpush1.bf16.xpose.msra.mxu0 0
        %1354 = vmatprep.subr.bf16.mxu0 0
        %1355 = vmatpush1.bf16.xpose.msra.mxu0 0
        %1356 = vmatprep.subr.bf16.mxu0 0
        %1357 = vmatpush1.bf16.xpose.msra.mxu0 0
        %1358 = vmatprep.subr.bf16.mxu0 0
        %1359 = vmatpush1.bf16.xpose.msra.mxu0 0
        %1360 = vmatprep.subr.bf16.mxu0 0
        %1361 = vmatpush1.bf16.xpose.msra.mxu0 0
        %1362 = vmatprep.subr.bf16.mxu0 0
        %1363 = vmatpush1.bf16.xpose.msra.mxu0 0
        %1364 = vmatprep.subr.bf16.mxu0 0
        %1365 = vmatpush1.bf16.xpose.msra.mxu0 0
        %1366 = vmatprep.subr.bf16.mxu0 0
        %1367 = vmatpush1.bf16.xpose.msra.mxu0 0
        %1368 = vmatprep.subr.bf16.mxu0 0
        %1369 = vmatpush1.bf16.xpose.msra.mxu0 0
        %1370 = vmatprep.subr.bf16.mxu0 0
        %1371 = vmatpush1.bf16.xpose.msra.mxu0 0
        %1372 = vmatprep.subr.bf16.mxu0 0
        %1373 = vmatpush1.bf16.xpose.msra.mxu0 0
        %1374 = vmatprep.subr.bf16.mxu0 0
        %1375 = vmatpush1.bf16.xpose.msra.mxu0 0
        %1376 = vmatprep.mubr.bf16.mxu0 0
        %1377 = vmatmul.mubr.bf16.gmra.mrb[0].mxu0 %v1339
        %v1378 = vpop.f32.mrb[0].mxu0
        %v1379 = vadd.f32 0.0, %v1378
        %v1380 = vpop.f32.mrb[0].mxu0
        %v1381 = vpop.f32.mrb[0].mxu0
        %v1382 = vadd.f32 0.0, %v1381
        %v1383 = vpop.f32.mrb[0].mxu0
        %1384 = vdwg.mxu0
        %v1387 = vunpack.c.l.b16 %v571
        %v1388 = vunpack.c.l.b16 %v572
        %v1389 = vpack.c.b16 %v1388, %v1387
        %v1392 = vunpack.c.l.b16 %v604
        %v1393 = vunpack.c.l.b16 %v605
        %v1394 = vpack.c.b16 %v1393, %v1392
        %v1396 = vsel %vm653, %v1389, 0
        %v1399 = vsel %vm653, %v1394, 0
        %1401 = vmatprep.subr.bf16.mxu0 0
        %1402 = vmatpush1.bf16.xpose.msra.mxu0 %v1399
        %1403 = vmatprep.subr.bf16.mxu0 0
        %1404 = vmatpush1.bf16.xpose.msra.mxu0 0
        %1405 = vmatprep.subr.bf16.mxu0 0
        %1406 = vmatpush1.bf16.xpose.msra.mxu0 0
        %1407 = vmatprep.subr.bf16.mxu0 0
        %1408 = vmatpush1.bf16.xpose.msra.mxu0 0
        %1409 = vmatprep.subr.bf16.mxu0 0
        %1410 = vmatpush1.bf16.xpose.msra.mxu0 0
        %1411 = vmatprep.subr.bf16.mxu0 0
        %1412 = vmatpush1.bf16.xpose.msra.mxu0 0
        %1413 = vmatprep.subr.bf16.mxu0 0
        %1414 = vmatpush1.bf16.xpose.msra.mxu0 0
        %1415 = vmatprep.subr.bf16.mxu0 0
        %1416 = vmatpush1.bf16.xpose.msra.mxu0 0
        %1417 = vmatprep.subr.bf16.mxu0 0
        %1418 = vmatpush1.bf16.xpose.msra.mxu0 0
        %1419 = vmatprep.subr.bf16.mxu0 0
        %1420 = vmatpush1.bf16.xpose.msra.mxu0 0
        %1421 = vmatprep.subr.bf16.mxu0 0
        %1422 = vmatpush1.bf16.xpose.msra.mxu0 0
        %1423 = vmatprep.subr.bf16.mxu0 0
        %1424 = vmatpush1.bf16.xpose.msra.mxu0 0
        %1425 = vmatprep.subr.bf16.mxu0 0
        %1426 = vmatpush1.bf16.xpose.msra.mxu0 0
        %1427 = vmatprep.subr.bf16.mxu0 0
        %1428 = vmatpush1.bf16.xpose.msra.mxu0 0
        %1429 = vmatprep.subr.bf16.mxu0 0
        %1430 = vmatpush1.bf16.xpose.msra.mxu0 0
        %1431 = vmatprep.subr.bf16.mxu0 0
        %1432 = vmatpush1.bf16.xpose.msra.mxu0 0
        %1433 = vmatprep.mubr.bf16.mxu0 0
        %1434 = vmatmul.mubr.bf16.gmra.mrb[0].mxu0 %v1396
        %v1435 = vpop.f32.mrb[0].mxu0
        %v1436 = vadd.f32 0.0, %v1435
        %v1437 = vpop.f32.mrb[0].mxu0
        %v1438 = vpop.f32.mrb[0].mxu0
        %v1439 = vadd.f32 0.0, %v1438
        %v1440 = vpop.f32.mrb[0].mxu0
        %1441 = vdwg.mxu0
        %v1444 = vunpack.c.l.b16 %v573
        %v1445 = vunpack.c.l.b16 %v574
        %v1446 = vpack.c.b16 %v1445, %v1444
        %v1449 = vunpack.c.l.b16 %v606
        %v1450 = vunpack.c.l.b16 %v607
        %v1451 = vpack.c.b16 %v1450, %v1449
        %v1453 = vsel %vm653, %v1446, 0
        %v1456 = vsel %vm653, %v1451, 0
        %1458 = vmatprep.subr.bf16.mxu0 0
        %1459 = vmatpush1.bf16.xpose.msra.mxu0 %v1456
        %1460 = vmatprep.subr.bf16.mxu0 0
        %1461 = vmatpush1.bf16.xpose.msra.mxu0 0
        %1462 = vmatprep.subr.bf16.mxu0 0
        %1463 = vmatpush1.bf16.xpose.msra.mxu0 0
        %1464 = vmatprep.subr.bf16.mxu0 0
        %1465 = vmatpush1.bf16.xpose.msra.mxu0 0
        %1466 = vmatprep.subr.bf16.mxu0 0
        %1467 = vmatpush1.bf16.xpose.msra.mxu0 0
        %1468 = vmatprep.subr.bf16.mxu0 0
        %1469 = vmatpush1.bf16.xpose.msra.mxu0 0
        %1470 = vmatprep.subr.bf16.mxu0 0
        %1471 = vmatpush1.bf16.xpose.msra.mxu0 0
        %1472 = vmatprep.subr.bf16.mxu0 0
        %1473 = vmatpush1.bf16.xpose.msra.mxu0 0
        %1474 = vmatprep.subr.bf16.mxu0 0
        %1475 = vmatpush1.bf16.xpose.msra.mxu0 0
        %1476 = vmatprep.subr.bf16.mxu0 0
        %1477 = vmatpush1.bf16.xpose.msra.mxu0 0
        %1478 = vmatprep.subr.bf16.mxu0 0
        %1479 = vmatpush1.bf16.xpose.msra.mxu0 0
        %1480 = vmatprep.subr.bf16.mxu0 0
        %1481 = vmatpush1.bf16.xpose.msra.mxu0 0
        %1482 = vmatprep.subr.bf16.mxu0 0
        %1483 = vmatpush1.bf16.xpose.msra.mxu0 0
        %1484 = vmatprep.subr.bf16.mxu0 0
        %1485 = vmatpush1.bf16.xpose.msra.mxu0 0
        %1486 = vmatprep.subr.bf16.mxu0 0
        %1487 = vmatpush1.bf16.xpose.msra.mxu0 0
        %1488 = vmatprep.subr.bf16.mxu0 0
        %1489 = vmatpush1.bf16.xpose.msra.mxu0 0
        %1490 = vmatprep.mubr.bf16.mxu0 0
        %1491 = vmatmul.mubr.bf16.gmra.mrb[0].mxu0 %v1453
        %v1492 = vpop.f32.mrb[0].mxu0
        %v1493 = vadd.f32 0.0, %v1492
        %v1494 = vpop.f32.mrb[0].mxu0
        %v1495 = vpop.f32.mrb[0].mxu0
        %v1496 = vadd.f32 0.0, %v1495
        %v1497 = vpop.f32.mrb[0].mxu0
        %1498 = vdwg.mxu0
        %v1501 = vunpack.c.l.b16 %v575
        %v1502 = vunpack.c.l.b16 %v576
        %v1503 = vpack.c.b16 %v1502, %v1501
        %v1506 = vunpack.c.l.b16 %v608
        %v1507 = vunpack.c.l.b16 %v609
        %v1508 = vpack.c.b16 %v1507, %v1506
        %v1510 = vsel %vm653, %v1503, 0
        %v1513 = vsel %vm653, %v1508, 0
        %1515 = vmatprep.subr.bf16.mxu0 0
        %1516 = vmatpush1.bf16.xpose.msra.mxu0 %v1513
        %1517 = vmatprep.subr.bf16.mxu0 0
        %1518 = vmatpush1.bf16.xpose.msra.mxu0 0
        %1519 = vmatprep.subr.bf16.mxu0 0
        %1520 = vmatpush1.bf16.xpose.msra.mxu0 0
        %1521 = vmatprep.subr.bf16.mxu0 0
        %1522 = vmatpush1.bf16.xpose.msra.mxu0 0
        %1523 = vmatprep.subr.bf16.mxu0 0
        %1524 = vmatpush1.bf16.xpose.msra.mxu0 0
        %1525 = vmatprep.subr.bf16.mxu0 0
        %1526 = vmatpush1.bf16.xpose.msra.mxu0 0
        %1527 = vmatprep.subr.bf16.mxu0 0
        %1528 = vmatpush1.bf16.xpose.msra.mxu0 0
        %1529 = vmatprep.subr.bf16.mxu0 0
        %1530 = vmatpush1.bf16.xpose.msra.mxu0 0
        %1531 = vmatprep.subr.bf16.mxu0 0
        %1532 = vmatpush1.bf16.xpose.msra.mxu0 0
        %1533 = vmatprep.subr.bf16.mxu0 0
        %1534 = vmatpush1.bf16.xpose.msra.mxu0 0
        %1535 = vmatprep.subr.bf16.mxu0 0
        %1536 = vmatpush1.bf16.xpose.msra.mxu0 0
        %1537 = vmatprep.subr.bf16.mxu0 0
        %1538 = vmatpush1.bf16.xpose.msra.mxu0 0
        %1539 = vmatprep.subr.bf16.mxu0 0
        %1540 = vmatpush1.bf16.xpose.msra.mxu0 0
        %1541 = vmatprep.subr.bf16.mxu0 0
        %1542 = vmatpush1.bf16.xpose.msra.mxu0 0
        %1543 = vmatprep.subr.bf16.mxu0 0
        %1544 = vmatpush1.bf16.xpose.msra.mxu0 0
        %1545 = vmatprep.subr.bf16.mxu0 0
        %1546 = vmatpush1.bf16.xpose.msra.mxu0 0
        %1547 = vmatprep.mubr.bf16.mxu0 0
        %1548 = vmatmul.mubr.bf16.gmra.mrb[0].mxu0 %v1510
        %v1549 = vpop.f32.mrb[0].mxu0
        %v1550 = vadd.f32 0.0, %v1549
        %v1551 = vpop.f32.mrb[0].mxu0
        %v1552 = vpop.f32.mrb[0].mxu0
        %v1553 = vadd.f32 0.0, %v1552
        %v1554 = vpop.f32.mrb[0].mxu0
        %1555 = vdwg.mxu0
        %v1556 = vsel %vm653, %v695, -inf
        %1557 = vmax.xlane.f32.xlu0 %v1556
        %v1558 = vpop.xlane.xlu0 %1557
        %v1559 = vsel %vm653, %v698, -inf
        %1560 = vmax.xlane.f32.xlu0 %v1559
        %v1561 = vpop.xlane.xlu0 %1560
        %v1562 = vsel %vm653, %v752, -inf
        %1563 = vmax.xlane.f32.xlu0 %v1562
        %v1564 = vpop.xlane.xlu0 %1563
        %v1565 = vsel %vm653, %v755, -inf
        %1566 = vmax.xlane.f32.xlu0 %v1565
        %v1567 = vpop.xlane.xlu0 %1566
        %v1568 = vsel %vm653, %v809, -inf
        %1569 = vmax.xlane.f32.xlu0 %v1568
        %v1570 = vpop.xlane.xlu0 %1569
        %v1571 = vsel %vm653, %v812, -inf
        %1572 = vmax.xlane.f32.xlu0 %v1571
        %v1573 = vpop.xlane.xlu0 %1572
        %v1574 = vsel %vm653, %v866, -inf
        %1575 = vmax.xlane.f32.xlu0 %v1574
        %v1576 = vpop.xlane.xlu0 %1575
        %v1577 = vsel %vm653, %v869, -inf
        %1578 = vmax.xlane.f32.xlu0 %v1577
        %v1579 = vpop.xlane.xlu0 %1578
        %v1580 = vsel %vm653, %v923, -inf
        %1581 = vmax.xlane.f32.xlu0 %v1580
        %v1582 = vpop.xlane.xlu0 %1581
        %v1583 = vsel %vm653, %v926, -inf
        %1584 = vmax.xlane.f32.xlu0 %v1583
        %v1585 = vpop.xlane.xlu0 %1584
        %v1586 = vsel %vm653, %v980, -inf
        %1587 = vmax.xlane.f32.xlu0 %v1586
        %v1588 = vpop.xlane.xlu0 %1587
        %v1589 = vsel %vm653, %v983, -inf
        %1590 = vmax.xlane.f32.xlu0 %v1589
        %v1591 = vpop.xlane.xlu0 %1590
        %v1592 = vsel %vm653, %v1037, -inf
        %1593 = vmax.xlane.f32.xlu0 %v1592
        %v1594 = vpop.xlane.xlu0 %1593
        %v1595 = vsel %vm653, %v1040, -inf
        %1596 = vmax.xlane.f32.xlu0 %v1595
        %v1597 = vpop.xlane.xlu0 %1596
        %v1598 = vsel %vm653, %v1094, -inf
        %1599 = vmax.xlane.f32.xlu0 %v1598
        %v1600 = vpop.xlane.xlu0 %1599
        %v1601 = vsel %vm653, %v1097, -inf
        %1602 = vmax.xlane.f32.xlu0 %v1601
        %v1603 = vpop.xlane.xlu0 %1602
        %v1604 = vsel %vm653, %v1151, -inf
        %1605 = vmax.xlane.f32.xlu0 %v1604
        %v1606 = vpop.xlane.xlu0 %1605
        %v1607 = vsel %vm653, %v1154, -inf
        %1608 = vmax.xlane.f32.xlu0 %v1607
        %v1609 = vpop.xlane.xlu0 %1608
        %v1610 = vsel %vm653, %v1208, -inf
        %1611 = vmax.xlane.f32.xlu0 %v1610
        %v1612 = vpop.xlane.xlu0 %1611
        %v1613 = vsel %vm653, %v1211, -inf
        %1614 = vmax.xlane.f32.xlu0 %v1613
        %v1615 = vpop.xlane.xlu0 %1614
        %v1616 = vsel %vm653, %v1265, -inf
        %1617 = vmax.xlane.f32.xlu0 %v1616
        %v1618 = vpop.xlane.xlu0 %1617
        %v1619 = vsel %vm653, %v1268, -inf
        %1620 = vmax.xlane.f32.xlu0 %v1619
        %v1621 = vpop.xlane.xlu0 %1620
        %v1622 = vsel %vm653, %v1322, -inf
        %1623 = vmax.xlane.f32.xlu0 %v1622
        %v1624 = vpop.xlane.xlu0 %1623
        %v1625 = vsel %vm653, %v1325, -inf
        %1626 = vmax.xlane.f32.xlu0 %v1625
        %v1627 = vpop.xlane.xlu0 %1626
        %v1628 = vsel %vm653, %v1379, -inf
        %1629 = vmax.xlane.f32.xlu0 %v1628
        %v1630 = vpop.xlane.xlu0 %1629
        %v1631 = vsel %vm653, %v1382, -inf
        %1632 = vmax.xlane.f32.xlu0 %v1631
        %v1633 = vpop.xlane.xlu0 %1632
        %v1634 = vsel %vm653, %v1436, -inf
        %1635 = vmax.xlane.f32.xlu0 %v1634
        %v1636 = vpop.xlane.xlu0 %1635
        %v1637 = vsel %vm653, %v1439, -inf
        %1638 = vmax.xlane.f32.xlu0 %v1637
        %v1639 = vpop.xlane.xlu0 %1638
        %v1640 = vsel %vm653, %v1493, -inf
        %1641 = vmax.xlane.f32.xlu0 %v1640
        %v1642 = vpop.xlane.xlu0 %1641
        %v1643 = vsel %vm653, %v1496, -inf
        %1644 = vmax.xlane.f32.xlu0 %v1643
        %v1645 = vpop.xlane.xlu0 %1644
        %v1646 = vsel %vm653, %v1550, -inf
        %1647 = vmax.xlane.f32.xlu0 %v1646
        %v1648 = vpop.xlane.xlu0 %1647
        %v1649 = vsel %vm653, %v1553, -inf
        %1650 = vmax.xlane.f32.xlu0 %v1649
        %v1651 = vpop.xlane.xlu0 %1650
        %v1652 = vsub.f32 %v695, %v1558
        %v1653 = vsub.f32 %v698, %v1561
        %v1654 = vsub.f32 %v752, %v1564
        %v1655 = vsub.f32 %v755, %v1567
        %v1656 = vsub.f32 %v809, %v1570
        %v1657 = vsub.f32 %v812, %v1573
        %v1658 = vsub.f32 %v866, %v1576
        %v1659 = vsub.f32 %v869, %v1579
        %v1660 = vsub.f32 %v923, %v1582
        %v1661 = vsub.f32 %v926, %v1585
        %v1662 = vsub.f32 %v980, %v1588
        %v1663 = vsub.f32 %v983, %v1591
        %v1664 = vsub.f32 %v1037, %v1594
        %v1665 = vsub.f32 %v1040, %v1597
        %v1666 = vsub.f32 %v1094, %v1600
        %v1667 = vsub.f32 %v1097, %v1603
        %v1668 = vsub.f32 %v1151, %v1606
        %v1669 = vsub.f32 %v1154, %v1609
        %v1670 = vsub.f32 %v1208, %v1612
        %v1671 = vsub.f32 %v1211, %v1615
        %v1672 = vsub.f32 %v1265, %v1618
        %v1673 = vsub.f32 %v1268, %v1621
        %v1674 = vsub.f32 %v1322, %v1624
        %v1675 = vsub.f32 %v1325, %v1627
        %v1676 = vsub.f32 %v1379, %v1630
        %v1677 = vsub.f32 %v1382, %v1633
        %v1678 = vsub.f32 %v1436, %v1636
        %v1679 = vsub.f32 %v1439, %v1639
        %v1680 = vsub.f32 %v1493, %v1642
        %v1681 = vsub.f32 %v1496, %v1645
        %v1682 = vsub.f32 %v1550, %v1648
        %v1683 = vsub.f32 %v1553, %v1651
        %v1684 = vmul.f32 %v1652, 1.442695
        %v1685 = vpow.pop %v1684
        %v1686 = vmul.f32 %v1653, 1.442695
        %v1687 = vpow.pop %v1686
        %v1688 = vmul.f32 %v1654, 1.442695
        %v1689 = vpow.pop %v1688
        %v1690 = vmul.f32 %v1655, 1.442695
        %v1691 = vpow.pop %v1690
        %v1692 = vmul.f32 %v1656, 1.442695
        %v1693 = vpow.pop %v1692
        %v1694 = vmul.f32 %v1657, 1.442695
        %v1695 = vpow.pop %v1694
        %v1696 = vmul.f32 %v1658, 1.442695
        %v1697 = vpow.pop %v1696
        %v1698 = vmul.f32 %v1659, 1.442695
        %v1699 = vpow.pop %v1698
        %v1700 = vmul.f32 %v1660, 1.442695
        %v1701 = vpow.pop %v1700
        %v1702 = vmul.f32 %v1661, 1.442695
        %v1703 = vpow.pop %v1702
        %v1704 = vmul.f32 %v1662, 1.442695
        %v1705 = vpow.pop %v1704
        %v1706 = vmul.f32 %v1663, 1.442695
        %v1707 = vpow.pop %v1706
        %v1708 = vmul.f32 %v1664, 1.442695
        %v1709 = vpow.pop %v1708
        %v1710 = vmul.f32 %v1665, 1.442695
        %v1711 = vpow.pop %v1710
        %v1712 = vmul.f32 %v1666, 1.442695
        %v1713 = vpow.pop %v1712
        %v1714 = vmul.f32 %v1667, 1.442695
        %v1715 = vpow.pop %v1714
        %v1716 = vmul.f32 %v1668, 1.442695
        %v1717 = vpow.pop %v1716
        %v1718 = vmul.f32 %v1669, 1.442695
        %v1719 = vpow.pop %v1718
        %v1720 = vmul.f32 %v1670, 1.442695
        %v1721 = vpow.pop %v1720
        %v1722 = vmul.f32 %v1671, 1.442695
        %v1723 = vpow.pop %v1722
        %v1724 = vmul.f32 %v1672, 1.442695
        %v1725 = vpow.pop %v1724
        %v1726 = vmul.f32 %v1673, 1.442695
        %v1727 = vpow.pop %v1726
        %v1728 = vmul.f32 %v1674, 1.442695
        %v1729 = vpow.pop %v1728
        %v1730 = vmul.f32 %v1675, 1.442695
        %v1731 = vpow.pop %v1730
        %v1732 = vmul.f32 %v1676, 1.442695
        %v1733 = vpow.pop %v1732
        %v1734 = vmul.f32 %v1677, 1.442695
        %v1735 = vpow.pop %v1734
        %v1736 = vmul.f32 %v1678, 1.442695
        %v1737 = vpow.pop %v1736
        %v1738 = vmul.f32 %v1679, 1.442695
        %v1739 = vpow.pop %v1738
        %v1740 = vmul.f32 %v1680, 1.442695
        %v1741 = vpow.pop %v1740
        %v1742 = vmul.f32 %v1681, 1.442695
        %v1743 = vpow.pop %v1742
        %v1744 = vmul.f32 %v1682, 1.442695
        %v1745 = vpow.pop %v1744
        %v1746 = vmul.f32 %v1683, 1.442695
        %v1747 = vpow.pop %v1746
        %v1748 = vsel %vm653, %v1685, 0.0
        %1749 = vadd.xlane.f32.xlu0 %v1748
        %v1750 = vpop.xlane.xlu0 %1749
        %v1751 = vsel %vm653, %v1687, 0.0
        %1752 = vadd.xlane.f32.xlu0 %v1751
        %v1753 = vpop.xlane.xlu0 %1752
        %v1754 = vsel %vm653, %v1689, 0.0
        %1755 = vadd.xlane.f32.xlu0 %v1754
        %v1756 = vpop.xlane.xlu0 %1755
        %v1757 = vsel %vm653, %v1691, 0.0
        %1758 = vadd.xlane.f32.xlu0 %v1757
        %v1759 = vpop.xlane.xlu0 %1758
        %v1760 = vsel %vm653, %v1693, 0.0
        %1761 = vadd.xlane.f32.xlu0 %v1760
        %v1762 = vpop.xlane.xlu0 %1761
        %v1763 = vsel %vm653, %v1695, 0.0
        %1764 = vadd.xlane.f32.xlu0 %v1763
        %v1765 = vpop.xlane.xlu0 %1764
        %v1766 = vsel %vm653, %v1697, 0.0
        %1767 = vadd.xlane.f32.xlu0 %v1766
        %v1768 = vpop.xlane.xlu0 %1767
        %v1769 = vsel %vm653, %v1699, 0.0
        %1770 = vadd.xlane.f32.xlu0 %v1769
        %v1771 = vpop.xlane.xlu0 %1770
        %v1772 = vsel %vm653, %v1701, 0.0
        %1773 = vadd.xlane.f32.xlu0 %v1772
        %v1774 = vpop.xlane.xlu0 %1773
        %v1775 = vsel %vm653, %v1703, 0.0
        %1776 = vadd.xlane.f32.xlu0 %v1775
        %v1777 = vpop.xlane.xlu0 %1776
        %v1778 = vsel %vm653, %v1705, 0.0
        %1779 = vadd.xlane.f32.xlu0 %v1778
        %v1780 = vpop.xlane.xlu0 %1779
        %v1781 = vsel %vm653, %v1707, 0.0
        %1782 = vadd.xlane.f32.xlu0 %v1781
        %v1783 = vpop.xlane.xlu0 %1782
        %v1784 = vsel %vm653, %v1709, 0.0
        %1785 = vadd.xlane.f32.xlu0 %v1784
        %v1786 = vpop.xlane.xlu0 %1785
        %v1787 = vsel %vm653, %v1711, 0.0
        %1788 = vadd.xlane.f32.xlu0 %v1787
        %v1789 = vpop.xlane.xlu0 %1788
        %v1790 = vsel %vm653, %v1713, 0.0
        %1791 = vadd.xlane.f32.xlu0 %v1790
        %v1792 = vpop.xlane.xlu0 %1791
        %v1793 = vsel %vm653, %v1715, 0.0
        %1794 = vadd.xlane.f32.xlu0 %v1793
        %v1795 = vpop.xlane.xlu0 %1794
        %v1796 = vsel %vm653, %v1717, 0.0
        %1797 = vadd.xlane.f32.xlu0 %v1796
        %v1798 = vpop.xlane.xlu0 %1797
        %v1799 = vsel %vm653, %v1719, 0.0
        %1800 = vadd.xlane.f32.xlu0 %v1799
        %v1801 = vpop.xlane.xlu0 %1800
        %v1802 = vsel %vm653, %v1721, 0.0
        %1803 = vadd.xlane.f32.xlu0 %v1802
        %v1804 = vpop.xlane.xlu0 %1803
        %v1805 = vsel %vm653, %v1723, 0.0
        %1806 = vadd.xlane.f32.xlu0 %v1805
        %v1807 = vpop.xlane.xlu0 %1806
        %v1808 = vsel %vm653, %v1725, 0.0
        %1809 = vadd.xlane.f32.xlu0 %v1808
        %v1810 = vpop.xlane.xlu0 %1809
        %v1811 = vsel %vm653, %v1727, 0.0
        %1812 = vadd.xlane.f32.xlu0 %v1811
        %v1813 = vpop.xlane.xlu0 %1812
        %v1814 = vsel %vm653, %v1729, 0.0
        %1815 = vadd.xlane.f32.xlu0 %v1814
        %v1816 = vpop.xlane.xlu0 %1815
        %v1817 = vsel %vm653, %v1731, 0.0
        %1818 = vadd.xlane.f32.xlu0 %v1817
        %v1819 = vpop.xlane.xlu0 %1818
        %v1820 = vsel %vm653, %v1733, 0.0
        %1821 = vadd.xlane.f32.xlu0 %v1820
        %v1822 = vpop.xlane.xlu0 %1821
        %v1823 = vsel %vm653, %v1735, 0.0
        %1824 = vadd.xlane.f32.xlu0 %v1823
        %v1825 = vpop.xlane.xlu0 %1824
        %v1826 = vsel %vm653, %v1737, 0.0
        %1827 = vadd.xlane.f32.xlu0 %v1826
        %v1828 = vpop.xlane.xlu0 %1827
        %v1829 = vsel %vm653, %v1739, 0.0
        %1830 = vadd.xlane.f32.xlu0 %v1829
        %v1831 = vpop.xlane.xlu0 %1830
        %v1832 = vsel %vm653, %v1741, 0.0
        %1833 = vadd.xlane.f32.xlu0 %v1832
        %v1834 = vpop.xlane.xlu0 %1833
        %v1835 = vsel %vm653, %v1743, 0.0
        %1836 = vadd.xlane.f32.xlu0 %v1835
        %v1837 = vpop.xlane.xlu0 %1836
        %v1838 = vsel %vm653, %v1745, 0.0
        %1839 = vadd.xlane.f32.xlu0 %v1838
        %v1840 = vpop.xlane.xlu0 %1839
        %v1841 = vsel %vm653, %v1747, 0.0
        %1842 = vadd.xlane.f32.xlu0 %v1841
        %v1843 = vpop.xlane.xlu0 %1842
        %v1844 = vrcp.pop %v1750
        %v1845 = vmul.f32 %v1685, %v1844
        %v1846 = vrcp.pop %v1753
        %v1847 = vmul.f32 %v1687, %v1846
        %v1848 = vrcp.pop %v1756
        %v1849 = vmul.f32 %v1689, %v1848
        %v1850 = vrcp.pop %v1759
        %v1851 = vmul.f32 %v1691, %v1850
        %v1852 = vrcp.pop %v1762
        %v1853 = vmul.f32 %v1693, %v1852
        %v1854 = vrcp.pop %v1765
        %v1855 = vmul.f32 %v1695, %v1854
        %v1856 = vrcp.pop %v1768
        %v1857 = vmul.f32 %v1697, %v1856
        %v1858 = vrcp.pop %v1771
        %v1859 = vmul.f32 %v1699, %v1858
        %v1860 = vrcp.pop %v1774
        %v1861 = vmul.f32 %v1701, %v1860
        %v1862 = vrcp.pop %v1777
        %v1863 = vmul.f32 %v1703, %v1862
        %v1864 = vrcp.pop %v1780
        %v1865 = vmul.f32 %v1705, %v1864
        %v1866 = vrcp.pop %v1783
        %v1867 = vmul.f32 %v1707, %v1866
        %v1868 = vrcp.pop %v1786
        %v1869 = vmul.f32 %v1709, %v1868
        %v1870 = vrcp.pop %v1789
        %v1871 = vmul.f32 %v1711, %v1870
        %v1872 = vrcp.pop %v1792
        %v1873 = vmul.f32 %v1713, %v1872
        %v1874 = vrcp.pop %v1795
        %v1875 = vmul.f32 %v1715, %v1874
        %v1876 = vrcp.pop %v1798
        %v1877 = vmul.f32 %v1717, %v1876
        %v1878 = vrcp.pop %v1801
        %v1879 = vmul.f32 %v1719, %v1878
        %v1880 = vrcp.pop %v1804
        %v1881 = vmul.f32 %v1721, %v1880
        %v1882 = vrcp.pop %v1807
        %v1883 = vmul.f32 %v1723, %v1882
        %v1884 = vrcp.pop %v1810
        %v1885 = vmul.f32 %v1725, %v1884
        %v1886 = vrcp.pop %v1813
        %v1887 = vmul.f32 %v1727, %v1886
        %v1888 = vrcp.pop %v1816
        %v1889 = vmul.f32 %v1729, %v1888
        %v1890 = vrcp.pop %v1819
        %v1891 = vmul.f32 %v1731, %v1890
        %v1892 = vrcp.pop %v1822
        %v1893 = vmul.f32 %v1733, %v1892
        %v1894 = vrcp.pop %v1825
        %v1895 = vmul.f32 %v1735, %v1894
        %v1896 = vrcp.pop %v1828
        %v1897 = vmul.f32 %v1737, %v1896
        %v1898 = vrcp.pop %v1831
        %v1899 = vmul.f32 %v1739, %v1898
        %v1900 = vrcp.pop %v1834
        %v1901 = vmul.f32 %v1741, %v1900
        %v1902 = vrcp.pop %v1837
        %v1903 = vmul.f32 %v1743, %v1902
        %v1904 = vrcp.pop %v1840
        %v1905 = vmul.f32 %v1745, %v1904
        %v1906 = vrcp.pop %v1843
        %v1907 = vmul.f32 %v1747, %v1906
        %v1908 = vpack.c.bf16 %v1847, %v1845
        %v1909 = vpack.c.bf16 %v1851, %v1849
        %v1910 = vpack.c.bf16 %v1855, %v1853
        %v1911 = vpack.c.bf16 %v1859, %v1857
        %v1912 = vpack.c.bf16 %v1863, %v1861
        %v1913 = vpack.c.bf16 %v1867, %v1865
        %v1914 = vpack.c.bf16 %v1871, %v1869
        %v1915 = vpack.c.bf16 %v1875, %v1873
        %v1916 = vpack.c.bf16 %v1879, %v1877
        %v1917 = vpack.c.bf16 %v1883, %v1881
        %v1918 = vpack.c.bf16 %v1887, %v1885
        %v1919 = vpack.c.bf16 %v1891, %v1889
        %v1920 = vpack.c.bf16 %v1895, %v1893
        %v1921 = vpack.c.bf16 %v1899, %v1897
        %v1922 = vpack.c.bf16 %v1903, %v1901
        %v1923 = vpack.c.bf16 %v1907, %v1905
        %v1926 = vunpack.c.l.b16 %v611
        %v1927 = vunpack.c.l.b16 %v612
        %v1928 = vpack.c.b16 %v1927, %v1926
        %v1931 = vsel %vm653, %v1908, 0
        %1933 = vmatprep.subr.bf16.mxu0 0
        %1934 = vmatpush1.bf16.msra.mxu0 %v1928
        %1935 = vmatprep.subr.bf16.mxu0 0
        %1936 = vmatpush1.bf16.msra.mxu0 0
        %1937 = vmatprep.subr.bf16.mxu0 0
        %1938 = vmatpush1.bf16.msra.mxu0 0
        %1939 = vmatprep.subr.bf16.mxu0 0
        %1940 = vmatpush1.bf16.msra.mxu0 0
        %1941 = vmatprep.subr.bf16.mxu0 0
        %1942 = vmatpush1.bf16.msra.mxu0 0
        %1943 = vmatprep.subr.bf16.mxu0 0
        %1944 = vmatpush1.bf16.msra.mxu0 0
        %1945 = vmatprep.subr.bf16.mxu0 0
        %1946 = vmatpush1.bf16.msra.mxu0 0
        %1947 = vmatprep.subr.bf16.mxu0 0
        %1948 = vmatpush1.bf16.msra.mxu0 0
        %1949 = vmatprep.subr.bf16.mxu0 0
        %1950 = vmatpush1.bf16.msra.mxu0 0
        %1951 = vmatprep.subr.bf16.mxu0 0
        %1952 = vmatpush1.bf16.msra.mxu0 0
        %1953 = vmatprep.subr.bf16.mxu0 0
        %1954 = vmatpush1.bf16.msra.mxu0 0
        %1955 = vmatprep.subr.bf16.mxu0 0
        %1956 = vmatpush1.bf16.msra.mxu0 0
        %1957 = vmatprep.subr.bf16.mxu0 0
        %1958 = vmatpush1.bf16.msra.mxu0 0
        %1959 = vmatprep.subr.bf16.mxu0 0
        %1960 = vmatpush1.bf16.msra.mxu0 0
        %1961 = vmatprep.subr.bf16.mxu0 0
        %1962 = vmatpush1.bf16.msra.mxu0 0
        %1963 = vmatprep.subr.bf16.mxu0 0
        %1964 = vmatpush1.bf16.msra.mxu0 0
        %1965 = vmatprep.mubr.bf16.mxu0 0
        %1966 = vmatmul.mubr.bf16.gmra.mrb[0].mxu0 %v1931
        %v1967 = vpop.f32.mrb[0].mxu0
        %v1968 = vadd.f32 0.0, %v1967
        %v1969 = vpop.f32.mrb[0].mxu0
        %v1970 = vpop.f32.mrb[0].mxu0
        %v1971 = vadd.f32 0.0, %v1970
        %v1972 = vpop.f32.mrb[0].mxu0
        %1973 = vdwg.mxu0
        %v1976 = vunpack.c.l.b16 %v613
        %v1977 = vunpack.c.l.b16 %v614
        %v1978 = vpack.c.b16 %v1977, %v1976
        %v1981 = vsel %vm653, %v1909, 0
        %1983 = vmatprep.subr.bf16.mxu0 0
        %1984 = vmatpush1.bf16.msra.mxu0 %v1978
        %1985 = vmatprep.subr.bf16.mxu0 0
        %1986 = vmatpush1.bf16.msra.mxu0 0
        %1987 = vmatprep.subr.bf16.mxu0 0
        %1988 = vmatpush1.bf16.msra.mxu0 0
        %1989 = vmatprep.subr.bf16.mxu0 0
        %1990 = vmatpush1.bf16.msra.mxu0 0
        %1991 = vmatprep.subr.bf16.mxu0 0
        %1992 = vmatpush1.bf16.msra.mxu0 0
        %1993 = vmatprep.subr.bf16.mxu0 0
        %1994 = vmatpush1.bf16.msra.mxu0 0
        %1995 = vmatprep.subr.bf16.mxu0 0
        %1996 = vmatpush1.bf16.msra.mxu0 0
        %1997 = vmatprep.subr.bf16.mxu0 0
        %1998 = vmatpush1.bf16.msra.mxu0 0
        %1999 = vmatprep.subr.bf16.mxu0 0
        %2000 = vmatpush1.bf16.msra.mxu0 0
        %2001 = vmatprep.subr.bf16.mxu0 0
        %2002 = vmatpush1.bf16.msra.mxu0 0
        %2003 = vmatprep.subr.bf16.mxu0 0
        %2004 = vmatpush1.bf16.msra.mxu0 0
        %2005 = vmatprep.subr.bf16.mxu0 0
        %2006 = vmatpush1.bf16.msra.mxu0 0
        %2007 = vmatprep.subr.bf16.mxu0 0
        %2008 = vmatpush1.bf16.msra.mxu0 0
        %2009 = vmatprep.subr.bf16.mxu0 0
        %2010 = vmatpush1.bf16.msra.mxu0 0
        %2011 = vmatprep.subr.bf16.mxu0 0
        %2012 = vmatpush1.bf16.msra.mxu0 0
        %2013 = vmatprep.subr.bf16.mxu0 0
        %2014 = vmatpush1.bf16.msra.mxu0 0
        %2015 = vmatprep.mubr.bf16.mxu0 0
        %2016 = vmatmul.mubr.bf16.gmra.mrb[0].mxu0 %v1981
        %v2017 = vpop.f32.mrb[0].mxu0
        %v2018 = vadd.f32 0.0, %v2017
        %v2019 = vpop.f32.mrb[0].mxu0
        %v2020 = vpop.f32.mrb[0].mxu0
        %v2021 = vadd.f32 0.0, %v2020
        %v2022 = vpop.f32.mrb[0].mxu0
        %2023 = vdwg.mxu0
        %v2026 = vunpack.c.l.b16 %v615
        %v2027 = vunpack.c.l.b16 %v616
        %v2028 = vpack.c.b16 %v2027, %v2026
        %v2031 = vsel %vm653, %v1910, 0
        %2033 = vmatprep.subr.bf16.mxu0 0
        %2034 = vmatpush1.bf16.msra.mxu0 %v2028
        %2035 = vmatprep.subr.bf16.mxu0 0
        %2036 = vmatpush1.bf16.msra.mxu0 0
        %2037 = vmatprep.subr.bf16.mxu0 0
        %2038 = vmatpush1.bf16.msra.mxu0 0
        %2039 = vmatprep.subr.bf16.mxu0 0
        %2040 = vmatpush1.bf16.msra.mxu0 0
        %2041 = vmatprep.subr.bf16.mxu0 0
        %2042 = vmatpush1.bf16.msra.mxu0 0
        %2043 = vmatprep.subr.bf16.mxu0 0
        %2044 = vmatpush1.bf16.msra.mxu0 0
        %2045 = vmatprep.subr.bf16.mxu0 0
        %2046 = vmatpush1.bf16.msra.mxu0 0
        %2047 = vmatprep.subr.bf16.mxu0 0
        %2048 = vmatpush1.bf16.msra.mxu0 0
        %2049 = vmatprep.subr.bf16.mxu0 0
        %2050 = vmatpush1.bf16.msra.mxu0 0
        %2051 = vmatprep.subr.bf16.mxu0 0
        %2052 = vmatpush1.bf16.msra.mxu0 0
        %2053 = vmatprep.subr.bf16.mxu0 0
        %2054 = vmatpush1.bf16.msra.mxu0 0
        %2055 = vmatprep.subr.bf16.mxu0 0
        %2056 = vmatpush1.bf16.msra.mxu0 0
        %2057 = vmatprep.subr.bf16.mxu0 0
        %2058 = vmatpush1.bf16.msra.mxu0 0
        %2059 = vmatprep.subr.bf16.mxu0 0
        %2060 = vmatpush1.bf16.msra.mxu0 0
        %2061 = vmatprep.subr.bf16.mxu0 0
        %2062 = vmatpush1.bf16.msra.mxu0 0
        %2063 = vmatprep.subr.bf16.mxu0 0
        %2064 = vmatpush1.bf16.msra.mxu0 0
        %2065 = vmatprep.mubr.bf16.mxu0 0
        %2066 = vmatmul.mubr.bf16.gmra.mrb[0].mxu0 %v2031
        %v2067 = vpop.f32.mrb[0].mxu0
        %v2068 = vadd.f32 0.0, %v2067
        %v2069 = vpop.f32.mrb[0].mxu0
        %v2070 = vpop.f32.mrb[0].mxu0
        %v2071 = vadd.f32 0.0, %v2070
        %v2072 = vpop.f32.mrb[0].mxu0
        %2073 = vdwg.mxu0
        %v2076 = vunpack.c.l.b16 %v617
        %v2077 = vunpack.c.l.b16 %v618
        %v2078 = vpack.c.b16 %v2077, %v2076
        %v2081 = vsel %vm653, %v1911, 0
        %2083 = vmatprep.subr.bf16.mxu0 0
        %2084 = vmatpush1.bf16.msra.mxu0 %v2078
        %2085 = vmatprep.subr.bf16.mxu0 0
        %2086 = vmatpush1.bf16.msra.mxu0 0
        %2087 = vmatprep.subr.bf16.mxu0 0
        %2088 = vmatpush1.bf16.msra.mxu0 0
        %2089 = vmatprep.subr.bf16.mxu0 0
        %2090 = vmatpush1.bf16.msra.mxu0 0
        %2091 = vmatprep.subr.bf16.mxu0 0
        %2092 = vmatpush1.bf16.msra.mxu0 0
        %2093 = vmatprep.subr.bf16.mxu0 0
        %2094 = vmatpush1.bf16.msra.mxu0 0
        %2095 = vmatprep.subr.bf16.mxu0 0
        %2096 = vmatpush1.bf16.msra.mxu0 0
        %2097 = vmatprep.subr.bf16.mxu0 0
        %2098 = vmatpush1.bf16.msra.mxu0 0
        %2099 = vmatprep.subr.bf16.mxu0 0
        %2100 = vmatpush1.bf16.msra.mxu0 0
        %2101 = vmatprep.subr.bf16.mxu0 0
        %2102 = vmatpush1.bf16.msra.mxu0 0
        %2103 = vmatprep.subr.bf16.mxu0 0
        %2104 = vmatpush1.bf16.msra.mxu0 0
        %2105 = vmatprep.subr.bf16.mxu0 0
        %2106 = vmatpush1.bf16.msra.mxu0 0
        %2107 = vmatprep.subr.bf16.mxu0 0
        %2108 = vmatpush1.bf16.msra.mxu0 0
        %2109 = vmatprep.subr.bf16.mxu0 0
        %2110 = vmatpush1.bf16.msra.mxu0 0
        %2111 = vmatprep.subr.bf16.mxu0 0
        %2112 = vmatpush1.bf16.msra.mxu0 0
        %2113 = vmatprep.subr.bf16.mxu0 0
        %2114 = vmatpush1.bf16.msra.mxu0 0
        %2115 = vmatprep.mubr.bf16.mxu0 0
        %2116 = vmatmul.mubr.bf16.gmra.mrb[0].mxu0 %v2081
        %v2117 = vpop.f32.mrb[0].mxu0
        %v2118 = vadd.f32 0.0, %v2117
        %v2119 = vpop.f32.mrb[0].mxu0
        %v2120 = vpop.f32.mrb[0].mxu0
        %v2121 = vadd.f32 0.0, %v2120
        %v2122 = vpop.f32.mrb[0].mxu0
        %2123 = vdwg.mxu0
        %v2126 = vunpack.c.l.b16 %v619
        %v2127 = vunpack.c.l.b16 %v620
        %v2128 = vpack.c.b16 %v2127, %v2126
        %v2131 = vsel %vm653, %v1912, 0
        %2133 = vmatprep.subr.bf16.mxu0 0
        %2134 = vmatpush1.bf16.msra.mxu0 %v2128
        %2135 = vmatprep.subr.bf16.mxu0 0
        %2136 = vmatpush1.bf16.msra.mxu0 0
        %2137 = vmatprep.subr.bf16.mxu0 0
        %2138 = vmatpush1.bf16.msra.mxu0 0
        %2139 = vmatprep.subr.bf16.mxu0 0
        %2140 = vmatpush1.bf16.msra.mxu0 0
        %2141 = vmatprep.subr.bf16.mxu0 0
        %2142 = vmatpush1.bf16.msra.mxu0 0
        %2143 = vmatprep.subr.bf16.mxu0 0
        %2144 = vmatpush1.bf16.msra.mxu0 0
        %2145 = vmatprep.subr.bf16.mxu0 0
        %2146 = vmatpush1.bf16.msra.mxu0 0
        %2147 = vmatprep.subr.bf16.mxu0 0
        %2148 = vmatpush1.bf16.msra.mxu0 0
        %2149 = vmatprep.subr.bf16.mxu0 0
        %2150 = vmatpush1.bf16.msra.mxu0 0
        %2151 = vmatprep.subr.bf16.mxu0 0
        %2152 = vmatpush1.bf16.msra.mxu0 0
        %2153 = vmatprep.subr.bf16.mxu0 0
        %2154 = vmatpush1.bf16.msra.mxu0 0
        %2155 = vmatprep.subr.bf16.mxu0 0
        %2156 = vmatpush1.bf16.msra.mxu0 0
        %2157 = vmatprep.subr.bf16.mxu0 0
        %2158 = vmatpush1.bf16.msra.mxu0 0
        %2159 = vmatprep.subr.bf16.mxu0 0
        %2160 = vmatpush1.bf16.msra.mxu0 0
        %2161 = vmatprep.subr.bf16.mxu0 0
        %2162 = vmatpush1.bf16.msra.mxu0 0
        %2163 = vmatprep.subr.bf16.mxu0 0
        %2164 = vmatpush1.bf16.msra.mxu0 0
        %2165 = vmatprep.mubr.bf16.mxu0 0
        %2166 = vmatmul.mubr.bf16.gmra.mrb[0].mxu0 %v2131
        %v2167 = vpop.f32.mrb[0].mxu0
        %v2168 = vadd.f32 0.0, %v2167
        %v2169 = vpop.f32.mrb[0].mxu0
        %v2170 = vpop.f32.mrb[0].mxu0
        %v2171 = vadd.f32 0.0, %v2170
        %v2172 = vpop.f32.mrb[0].mxu0
        %2173 = vdwg.mxu0
        %v2176 = vunpack.c.l.b16 %v621
        %v2177 = vunpack.c.l.b16 %v622
        %v2178 = vpack.c.b16 %v2177, %v2176
        %v2181 = vsel %vm653, %v1913, 0
        %2183 = vmatprep.subr.bf16.mxu0 0
        %2184 = vmatpush1.bf16.msra.mxu0 %v2178
        %2185 = vmatprep.subr.bf16.mxu0 0
        %2186 = vmatpush1.bf16.msra.mxu0 0
        %2187 = vmatprep.subr.bf16.mxu0 0
        %2188 = vmatpush1.bf16.msra.mxu0 0
        %2189 = vmatprep.subr.bf16.mxu0 0
        %2190 = vmatpush1.bf16.msra.mxu0 0
        %2191 = vmatprep.subr.bf16.mxu0 0
        %2192 = vmatpush1.bf16.msra.mxu0 0
        %2193 = vmatprep.subr.bf16.mxu0 0
        %2194 = vmatpush1.bf16.msra.mxu0 0
        %2195 = vmatprep.subr.bf16.mxu0 0
        %2196 = vmatpush1.bf16.msra.mxu0 0
        %2197 = vmatprep.subr.bf16.mxu0 0
        %2198 = vmatpush1.bf16.msra.mxu0 0
        %2199 = vmatprep.subr.bf16.mxu0 0
        %2200 = vmatpush1.bf16.msra.mxu0 0
        %2201 = vmatprep.subr.bf16.mxu0 0
        %2202 = vmatpush1.bf16.msra.mxu0 0
        %2203 = vmatprep.subr.bf16.mxu0 0
        %2204 = vmatpush1.bf16.msra.mxu0 0
        %2205 = vmatprep.subr.bf16.mxu0 0
        %2206 = vmatpush1.bf16.msra.mxu0 0
        %2207 = vmatprep.subr.bf16.mxu0 0
        %2208 = vmatpush1.bf16.msra.mxu0 0
        %2209 = vmatprep.subr.bf16.mxu0 0
        %2210 = vmatpush1.bf16.msra.mxu0 0
        %2211 = vmatprep.subr.bf16.mxu0 0
        %2212 = vmatpush1.bf16.msra.mxu0 0
        %2213 = vmatprep.subr.bf16.mxu0 0
        %2214 = vmatpush1.bf16.msra.mxu0 0
        %2215 = vmatprep.mubr.bf16.mxu0 0
        %2216 = vmatmul.mubr.bf16.gmra.mrb[0].mxu0 %v2181
        %v2217 = vpop.f32.mrb[0].mxu0
        %v2218 = vadd.f32 0.0, %v2217
        %v2219 = vpop.f32.mrb[0].mxu0
        %v2220 = vpop.f32.mrb[0].mxu0
        %v2221 = vadd.f32 0.0, %v2220
        %v2222 = vpop.f32.mrb[0].mxu0
        %2223 = vdwg.mxu0
        %v2226 = vunpack.c.l.b16 %v623
        %v2227 = vunpack.c.l.b16 %v624
        %v2228 = vpack.c.b16 %v2227, %v2226
        %v2231 = vsel %vm653, %v1914, 0
        %2233 = vmatprep.subr.bf16.mxu0 0
        %2234 = vmatpush1.bf16.msra.mxu0 %v2228
        %2235 = vmatprep.subr.bf16.mxu0 0
        %2236 = vmatpush1.bf16.msra.mxu0 0
        %2237 = vmatprep.subr.bf16.mxu0 0
        %2238 = vmatpush1.bf16.msra.mxu0 0
        %2239 = vmatprep.subr.bf16.mxu0 0
        %2240 = vmatpush1.bf16.msra.mxu0 0
        %2241 = vmatprep.subr.bf16.mxu0 0
        %2242 = vmatpush1.bf16.msra.mxu0 0
        %2243 = vmatprep.subr.bf16.mxu0 0
        %2244 = vmatpush1.bf16.msra.mxu0 0
        %2245 = vmatprep.subr.bf16.mxu0 0
        %2246 = vmatpush1.bf16.msra.mxu0 0
        %2247 = vmatprep.subr.bf16.mxu0 0
        %2248 = vmatpush1.bf16.msra.mxu0 0
        %2249 = vmatprep.subr.bf16.mxu0 0
        %2250 = vmatpush1.bf16.msra.mxu0 0
        %2251 = vmatprep.subr.bf16.mxu0 0
        %2252 = vmatpush1.bf16.msra.mxu0 0
        %2253 = vmatprep.subr.bf16.mxu0 0
        %2254 = vmatpush1.bf16.msra.mxu0 0
        %2255 = vmatprep.subr.bf16.mxu0 0
        %2256 = vmatpush1.bf16.msra.mxu0 0
        %2257 = vmatprep.subr.bf16.mxu0 0
        %2258 = vmatpush1.bf16.msra.mxu0 0
        %2259 = vmatprep.subr.bf16.mxu0 0
        %2260 = vmatpush1.bf16.msra.mxu0 0
        %2261 = vmatprep.subr.bf16.mxu0 0
        %2262 = vmatpush1.bf16.msra.mxu0 0
        %2263 = vmatprep.subr.bf16.mxu0 0
        %2264 = vmatpush1.bf16.msra.mxu0 0
        %2265 = vmatprep.mubr.bf16.mxu0 0
        %2266 = vmatmul.mubr.bf16.gmra.mrb[0].mxu0 %v2231
        %v2267 = vpop.f32.mrb[0].mxu0
        %v2268 = vadd.f32 0.0, %v2267
        %v2269 = vpop.f32.mrb[0].mxu0
        %v2270 = vpop.f32.mrb[0].mxu0
        %v2271 = vadd.f32 0.0, %v2270
        %v2272 = vpop.f32.mrb[0].mxu0
        %2273 = vdwg.mxu0
        %v2276 = vunpack.c.l.b16 %v625
        %v2277 = vunpack.c.l.b16 %v626
        %v2278 = vpack.c.b16 %v2277, %v2276
        %v2281 = vsel %vm653, %v1915, 0
        %2283 = vmatprep.subr.bf16.mxu0 0
        %2284 = vmatpush1.bf16.msra.mxu0 %v2278
        %2285 = vmatprep.subr.bf16.mxu0 0
        %2286 = vmatpush1.bf16.msra.mxu0 0
        %2287 = vmatprep.subr.bf16.mxu0 0
        %2288 = vmatpush1.bf16.msra.mxu0 0
        %2289 = vmatprep.subr.bf16.mxu0 0
        %2290 = vmatpush1.bf16.msra.mxu0 0
        %2291 = vmatprep.subr.bf16.mxu0 0
        %2292 = vmatpush1.bf16.msra.mxu0 0
        %2293 = vmatprep.subr.bf16.mxu0 0
        %2294 = vmatpush1.bf16.msra.mxu0 0
        %2295 = vmatprep.subr.bf16.mxu0 0
        %2296 = vmatpush1.bf16.msra.mxu0 0
        %2297 = vmatprep.subr.bf16.mxu0 0
        %2298 = vmatpush1.bf16.msra.mxu0 0
        %2299 = vmatprep.subr.bf16.mxu0 0
        %2300 = vmatpush1.bf16.msra.mxu0 0
        %2301 = vmatprep.subr.bf16.mxu0 0
        %2302 = vmatpush1.bf16.msra.mxu0 0
        %2303 = vmatprep.subr.bf16.mxu0 0
        %2304 = vmatpush1.bf16.msra.mxu0 0
        %2305 = vmatprep.subr.bf16.mxu0 0
        %2306 = vmatpush1.bf16.msra.mxu0 0
        %2307 = vmatprep.subr.bf16.mxu0 0
        %2308 = vmatpush1.bf16.msra.mxu0 0
        %2309 = vmatprep.subr.bf16.mxu0 0
        %2310 = vmatpush1.bf16.msra.mxu0 0
        %2311 = vmatprep.subr.bf16.mxu0 0
        %2312 = vmatpush1.bf16.msra.mxu0 0
        %2313 = vmatprep.subr.bf16.mxu0 0
        %2314 = vmatpush1.bf16.msra.mxu0 0
        %2315 = vmatprep.mubr.bf16.mxu0 0
        %2316 = vmatmul.mubr.bf16.gmra.mrb[0].mxu0 %v2281
        %v2317 = vpop.f32.mrb[0].mxu0
        %v2318 = vadd.f32 0.0, %v2317
        %v2319 = vpop.f32.mrb[0].mxu0
        %v2320 = vpop.f32.mrb[0].mxu0
        %v2321 = vadd.f32 0.0, %v2320
        %v2322 = vpop.f32.mrb[0].mxu0
        %2323 = vdwg.mxu0
        %v2326 = vunpack.c.l.b16 %v627
        %v2327 = vunpack.c.l.b16 %v628
        %v2328 = vpack.c.b16 %v2327, %v2326
        %v2331 = vsel %vm653, %v1916, 0
        %2333 = vmatprep.subr.bf16.mxu0 0
        %2334 = vmatpush1.bf16.msra.mxu0 %v2328
        %2335 = vmatprep.subr.bf16.mxu0 0
        %2336 = vmatpush1.bf16.msra.mxu0 0
        %2337 = vmatprep.subr.bf16.mxu0 0
        %2338 = vmatpush1.bf16.msra.mxu0 0
        %2339 = vmatprep.subr.bf16.mxu0 0
        %2340 = vmatpush1.bf16.msra.mxu0 0
        %2341 = vmatprep.subr.bf16.mxu0 0
        %2342 = vmatpush1.bf16.msra.mxu0 0
        %2343 = vmatprep.subr.bf16.mxu0 0
        %2344 = vmatpush1.bf16.msra.mxu0 0
        %2345 = vmatprep.subr.bf16.mxu0 0
        %2346 = vmatpush1.bf16.msra.mxu0 0
        %2347 = vmatprep.subr.bf16.mxu0 0
        %2348 = vmatpush1.bf16.msra.mxu0 0
        %2349 = vmatprep.subr.bf16.mxu0 0
        %2350 = vmatpush1.bf16.msra.mxu0 0
        %2351 = vmatprep.subr.bf16.mxu0 0
        %2352 = vmatpush1.bf16.msra.mxu0 0
        %2353 = vmatprep.subr.bf16.mxu0 0
        %2354 = vmatpush1.bf16.msra.mxu0 0
        %2355 = vmatprep.subr.bf16.mxu0 0
        %2356 = vmatpush1.bf16.msra.mxu0 0
        %2357 = vmatprep.subr.bf16.mxu0 0
        %2358 = vmatpush1.bf16.msra.mxu0 0
        %2359 = vmatprep.subr.bf16.mxu0 0
        %2360 = vmatpush1.bf16.msra.mxu0 0
        %2361 = vmatprep.subr.bf16.mxu0 0
        %2362 = vmatpush1.bf16.msra.mxu0 0
        %2363 = vmatprep.subr.bf16.mxu0 0
        %2364 = vmatpush1.bf16.msra.mxu0 0
        %2365 = vmatprep.mubr.bf16.mxu0 0
        %2366 = vmatmul.mubr.bf16.gmra.mrb[0].mxu0 %v2331
        %v2367 = vpop.f32.mrb[0].mxu0
        %v2368 = vadd.f32 0.0, %v2367
        %v2369 = vpop.f32.mrb[0].mxu0
        %v2370 = vpop.f32.mrb[0].mxu0
        %v2371 = vadd.f32 0.0, %v2370
        %v2372 = vpop.f32.mrb[0].mxu0
        %2373 = vdwg.mxu0
        %v2376 = vunpack.c.l.b16 %v629
        %v2377 = vunpack.c.l.b16 %v630
        %v2378 = vpack.c.b16 %v2377, %v2376
        %v2381 = vsel %vm653, %v1917, 0
        %2383 = vmatprep.subr.bf16.mxu0 0
        %2384 = vmatpush1.bf16.msra.mxu0 %v2378
        %2385 = vmatprep.subr.bf16.mxu0 0
        %2386 = vmatpush1.bf16.msra.mxu0 0
        %2387 = vmatprep.subr.bf16.mxu0 0
        %2388 = vmatpush1.bf16.msra.mxu0 0
        %2389 = vmatprep.subr.bf16.mxu0 0
        %2390 = vmatpush1.bf16.msra.mxu0 0
        %2391 = vmatprep.subr.bf16.mxu0 0
        %2392 = vmatpush1.bf16.msra.mxu0 0
        %2393 = vmatprep.subr.bf16.mxu0 0
        %2394 = vmatpush1.bf16.msra.mxu0 0
        %2395 = vmatprep.subr.bf16.mxu0 0
        %2396 = vmatpush1.bf16.msra.mxu0 0
        %2397 = vmatprep.subr.bf16.mxu0 0
        %2398 = vmatpush1.bf16.msra.mxu0 0
        %2399 = vmatprep.subr.bf16.mxu0 0
        %2400 = vmatpush1.bf16.msra.mxu0 0
        %2401 = vmatprep.subr.bf16.mxu0 0
        %2402 = vmatpush1.bf16.msra.mxu0 0
        %2403 = vmatprep.subr.bf16.mxu0 0
        %2404 = vmatpush1.bf16.msra.mxu0 0
        %2405 = vmatprep.subr.bf16.mxu0 0
        %2406 = vmatpush1.bf16.msra.mxu0 0
        %2407 = vmatprep.subr.bf16.mxu0 0
        %2408 = vmatpush1.bf16.msra.mxu0 0
        %2409 = vmatprep.subr.bf16.mxu0 0
        %2410 = vmatpush1.bf16.msra.mxu0 0
        %2411 = vmatprep.subr.bf16.mxu0 0
        %2412 = vmatpush1.bf16.msra.mxu0 0
        %2413 = vmatprep.subr.bf16.mxu0 0
        %2414 = vmatpush1.bf16.msra.mxu0 0
        %2415 = vmatprep.mubr.bf16.mxu0 0
        %2416 = vmatmul.mubr.bf16.gmra.mrb[0].mxu0 %v2381
        %v2417 = vpop.f32.mrb[0].mxu0
        %v2418 = vadd.f32 0.0, %v2417
        %v2419 = vpop.f32.mrb[0].mxu0
        %v2420 = vpop.f32.mrb[0].mxu0
        %v2421 = vadd.f32 0.0, %v2420
        %v2422 = vpop.f32.mrb[0].mxu0
        %2423 = vdwg.mxu0
        %v2426 = vunpack.c.l.b16 %v631
        %v2427 = vunpack.c.l.b16 %v632
        %v2428 = vpack.c.b16 %v2427, %v2426
        %v2431 = vsel %vm653, %v1918, 0
        %2433 = vmatprep.subr.bf16.mxu0 0
        %2434 = vmatpush1.bf16.msra.mxu0 %v2428
        %2435 = vmatprep.subr.bf16.mxu0 0
        %2436 = vmatpush1.bf16.msra.mxu0 0
        %2437 = vmatprep.subr.bf16.mxu0 0
        %2438 = vmatpush1.bf16.msra.mxu0 0
        %2439 = vmatprep.subr.bf16.mxu0 0
        %2440 = vmatpush1.bf16.msra.mxu0 0
        %2441 = vmatprep.subr.bf16.mxu0 0
        %2442 = vmatpush1.bf16.msra.mxu0 0
        %2443 = vmatprep.subr.bf16.mxu0 0
        %2444 = vmatpush1.bf16.msra.mxu0 0
        %2445 = vmatprep.subr.bf16.mxu0 0
        %2446 = vmatpush1.bf16.msra.mxu0 0
        %2447 = vmatprep.subr.bf16.mxu0 0
        %2448 = vmatpush1.bf16.msra.mxu0 0
        %2449 = vmatprep.subr.bf16.mxu0 0
        %2450 = vmatpush1.bf16.msra.mxu0 0
        %2451 = vmatprep.subr.bf16.mxu0 0
        %2452 = vmatpush1.bf16.msra.mxu0 0
        %2453 = vmatprep.subr.bf16.mxu0 0
        %2454 = vmatpush1.bf16.msra.mxu0 0
        %2455 = vmatprep.subr.bf16.mxu0 0
        %2456 = vmatpush1.bf16.msra.mxu0 0
        %2457 = vmatprep.subr.bf16.mxu0 0
        %2458 = vmatpush1.bf16.msra.mxu0 0
        %2459 = vmatprep.subr.bf16.mxu0 0
        %2460 = vmatpush1.bf16.msra.mxu0 0
        %2461 = vmatprep.subr.bf16.mxu0 0
        %2462 = vmatpush1.bf16.msra.mxu0 0
        %2463 = vmatprep.subr.bf16.mxu0 0
        %2464 = vmatpush1.bf16.msra.mxu0 0
        %2465 = vmatprep.mubr.bf16.mxu0 0
        %2466 = vmatmul.mubr.bf16.gmra.mrb[0].mxu0 %v2431
        %v2467 = vpop.f32.mrb[0].mxu0
        %v2468 = vadd.f32 0.0, %v2467
        %v2469 = vpop.f32.mrb[0].mxu0
        %v2470 = vpop.f32.mrb[0].mxu0
        %v2471 = vadd.f32 0.0, %v2470
        %v2472 = vpop.f32.mrb[0].mxu0
        %2473 = vdwg.mxu0
        %v2476 = vunpack.c.l.b16 %v633
        %v2477 = vunpack.c.l.b16 %v634
        %v2478 = vpack.c.b16 %v2477, %v2476
        %v2481 = vsel %vm653, %v1919, 0
        %2483 = vmatprep.subr.bf16.mxu0 0
        %2484 = vmatpush1.bf16.msra.mxu0 %v2478
        %2485 = vmatprep.subr.bf16.mxu0 0
        %2486 = vmatpush1.bf16.msra.mxu0 0
        %2487 = vmatprep.subr.bf16.mxu0 0
        %2488 = vmatpush1.bf16.msra.mxu0 0
        %2489 = vmatprep.subr.bf16.mxu0 0
        %2490 = vmatpush1.bf16.msra.mxu0 0
        %2491 = vmatprep.subr.bf16.mxu0 0
        %2492 = vmatpush1.bf16.msra.mxu0 0
        %2493 = vmatprep.subr.bf16.mxu0 0
        %2494 = vmatpush1.bf16.msra.mxu0 0
        %2495 = vmatprep.subr.bf16.mxu0 0
        %2496 = vmatpush1.bf16.msra.mxu0 0
        %2497 = vmatprep.subr.bf16.mxu0 0
        %2498 = vmatpush1.bf16.msra.mxu0 0
        %2499 = vmatprep.subr.bf16.mxu0 0
        %2500 = vmatpush1.bf16.msra.mxu0 0
        %2501 = vmatprep.subr.bf16.mxu0 0
        %2502 = vmatpush1.bf16.msra.mxu0 0
        %2503 = vmatprep.subr.bf16.mxu0 0
        %2504 = vmatpush1.bf16.msra.mxu0 0
        %2505 = vmatprep.subr.bf16.mxu0 0
        %2506 = vmatpush1.bf16.msra.mxu0 0
        %2507 = vmatprep.subr.bf16.mxu0 0
        %2508 = vmatpush1.bf16.msra.mxu0 0
        %2509 = vmatprep.subr.bf16.mxu0 0
        %2510 = vmatpush1.bf16.msra.mxu0 0
        %2511 = vmatprep.subr.bf16.mxu0 0
        %2512 = vmatpush1.bf16.msra.mxu0 0
        %2513 = vmatprep.subr.bf16.mxu0 0
        %2514 = vmatpush1.bf16.msra.mxu0 0
        %2515 = vmatprep.mubr.bf16.mxu0 0
        %2516 = vmatmul.mubr.bf16.gmra.mrb[0].mxu0 %v2481
        %v2517 = vpop.f32.mrb[0].mxu0
        %v2518 = vadd.f32 0.0, %v2517
        %v2519 = vpop.f32.mrb[0].mxu0
        %v2520 = vpop.f32.mrb[0].mxu0
        %v2521 = vadd.f32 0.0, %v2520
        %v2522 = vpop.f32.mrb[0].mxu0
        %2523 = vdwg.mxu0
        %v2526 = vunpack.c.l.b16 %v635
        %v2527 = vunpack.c.l.b16 %v636
        %v2528 = vpack.c.b16 %v2527, %v2526
        %v2531 = vsel %vm653, %v1920, 0
        %2533 = vmatprep.subr.bf16.mxu0 0
        %2534 = vmatpush1.bf16.msra.mxu0 %v2528
        %2535 = vmatprep.subr.bf16.mxu0 0
        %2536 = vmatpush1.bf16.msra.mxu0 0
        %2537 = vmatprep.subr.bf16.mxu0 0
        %2538 = vmatpush1.bf16.msra.mxu0 0
        %2539 = vmatprep.subr.bf16.mxu0 0
        %2540 = vmatpush1.bf16.msra.mxu0 0
        %2541 = vmatprep.subr.bf16.mxu0 0
        %2542 = vmatpush1.bf16.msra.mxu0 0
        %2543 = vmatprep.subr.bf16.mxu0 0
        %2544 = vmatpush1.bf16.msra.mxu0 0
        %2545 = vmatprep.subr.bf16.mxu0 0
        %2546 = vmatpush1.bf16.msra.mxu0 0
        %2547 = vmatprep.subr.bf16.mxu0 0
        %2548 = vmatpush1.bf16.msra.mxu0 0
        %2549 = vmatprep.subr.bf16.mxu0 0
        %2550 = vmatpush1.bf16.msra.mxu0 0
        %2551 = vmatprep.subr.bf16.mxu0 0
        %2552 = vmatpush1.bf16.msra.mxu0 0
        %2553 = vmatprep.subr.bf16.mxu0 0
        %2554 = vmatpush1.bf16.msra.mxu0 0
        %2555 = vmatprep.subr.bf16.mxu0 0
        %2556 = vmatpush1.bf16.msra.mxu0 0
        %2557 = vmatprep.subr.bf16.mxu0 0
        %2558 = vmatpush1.bf16.msra.mxu0 0
        %2559 = vmatprep.subr.bf16.mxu0 0
        %2560 = vmatpush1.bf16.msra.mxu0 0
        %2561 = vmatprep.subr.bf16.mxu0 0
        %2562 = vmatpush1.bf16.msra.mxu0 0
        %2563 = vmatprep.subr.bf16.mxu0 0
        %2564 = vmatpush1.bf16.msra.mxu0 0
        %2565 = vmatprep.mubr.bf16.mxu0 0
        %2566 = vmatmul.mubr.bf16.gmra.mrb[0].mxu0 %v2531
        %v2567 = vpop.f32.mrb[0].mxu0
        %v2568 = vadd.f32 0.0, %v2567
        %v2569 = vpop.f32.mrb[0].mxu0
        %v2570 = vpop.f32.mrb[0].mxu0
        %v2571 = vadd.f32 0.0, %v2570
        %v2572 = vpop.f32.mrb[0].mxu0
        %2573 = vdwg.mxu0
        %v2576 = vunpack.c.l.b16 %v637
        %v2577 = vunpack.c.l.b16 %v638
        %v2578 = vpack.c.b16 %v2577, %v2576
        %v2581 = vsel %vm653, %v1921, 0
        %2583 = vmatprep.subr.bf16.mxu0 0
        %2584 = vmatpush1.bf16.msra.mxu0 %v2578
        %2585 = vmatprep.subr.bf16.mxu0 0
        %2586 = vmatpush1.bf16.msra.mxu0 0
        %2587 = vmatprep.subr.bf16.mxu0 0
        %2588 = vmatpush1.bf16.msra.mxu0 0
        %2589 = vmatprep.subr.bf16.mxu0 0
        %2590 = vmatpush1.bf16.msra.mxu0 0
        %2591 = vmatprep.subr.bf16.mxu0 0
        %2592 = vmatpush1.bf16.msra.mxu0 0
        %2593 = vmatprep.subr.bf16.mxu0 0
        %2594 = vmatpush1.bf16.msra.mxu0 0
        %2595 = vmatprep.subr.bf16.mxu0 0
        %2596 = vmatpush1.bf16.msra.mxu0 0
        %2597 = vmatprep.subr.bf16.mxu0 0
        %2598 = vmatpush1.bf16.msra.mxu0 0
        %2599 = vmatprep.subr.bf16.mxu0 0
        %2600 = vmatpush1.bf16.msra.mxu0 0
        %2601 = vmatprep.subr.bf16.mxu0 0
        %2602 = vmatpush1.bf16.msra.mxu0 0
        %2603 = vmatprep.subr.bf16.mxu0 0
        %2604 = vmatpush1.bf16.msra.mxu0 0
        %2605 = vmatprep.subr.bf16.mxu0 0
        %2606 = vmatpush1.bf16.msra.mxu0 0
        %2607 = vmatprep.subr.bf16.mxu0 0
        %2608 = vmatpush1.bf16.msra.mxu0 0
        %2609 = vmatprep.subr.bf16.mxu0 0
        %2610 = vmatpush1.bf16.msra.mxu0 0
        %2611 = vmatprep.subr.bf16.mxu0 0
        %2612 = vmatpush1.bf16.msra.mxu0 0
        %2613 = vmatprep.subr.bf16.mxu0 0
        %2614 = vmatpush1.bf16.msra.mxu0 0
        %2615 = vmatprep.mubr.bf16.mxu0 0
        %2616 = vmatmul.mubr.bf16.gmra.mrb[0].mxu0 %v2581
        %v2617 = vpop.f32.mrb[0].mxu0
        %v2618 = vadd.f32 0.0, %v2617
        %v2619 = vpop.f32.mrb[0].mxu0
        %v2620 = vpop.f32.mrb[0].mxu0
        %v2621 = vadd.f32 0.0, %v2620
        %v2622 = vpop.f32.mrb[0].mxu0
        %2623 = vdwg.mxu0
        %v2626 = vunpack.c.l.b16 %v639
        %v2627 = vunpack.c.l.b16 %v640
        %v2628 = vpack.c.b16 %v2627, %v2626
        %v2631 = vsel %vm653, %v1922, 0
        %2633 = vmatprep.subr.bf16.mxu0 0
        %2634 = vmatpush1.bf16.msra.mxu0 %v2628
        %2635 = vmatprep.subr.bf16.mxu0 0
        %2636 = vmatpush1.bf16.msra.mxu0 0
        %2637 = vmatprep.subr.bf16.mxu0 0
        %2638 = vmatpush1.bf16.msra.mxu0 0
        %2639 = vmatprep.subr.bf16.mxu0 0
        %2640 = vmatpush1.bf16.msra.mxu0 0
        %2641 = vmatprep.subr.bf16.mxu0 0
        %2642 = vmatpush1.bf16.msra.mxu0 0
        %2643 = vmatprep.subr.bf16.mxu0 0
        %2644 = vmatpush1.bf16.msra.mxu0 0
        %2645 = vmatprep.subr.bf16.mxu0 0
        %2646 = vmatpush1.bf16.msra.mxu0 0
        %2647 = vmatprep.subr.bf16.mxu0 0
        %2648 = vmatpush1.bf16.msra.mxu0 0
        %2649 = vmatprep.subr.bf16.mxu0 0
        %2650 = vmatpush1.bf16.msra.mxu0 0
        %2651 = vmatprep.subr.bf16.mxu0 0
        %2652 = vmatpush1.bf16.msra.mxu0 0
        %2653 = vmatprep.subr.bf16.mxu0 0
        %2654 = vmatpush1.bf16.msra.mxu0 0
        %2655 = vmatprep.subr.bf16.mxu0 0
        %2656 = vmatpush1.bf16.msra.mxu0 0
        %2657 = vmatprep.subr.bf16.mxu0 0
        %2658 = vmatpush1.bf16.msra.mxu0 0
        %2659 = vmatprep.subr.bf16.mxu0 0
        %2660 = vmatpush1.bf16.msra.mxu0 0
        %2661 = vmatprep.subr.bf16.mxu0 0
        %2662 = vmatpush1.bf16.msra.mxu0 0
        %2663 = vmatprep.subr.bf16.mxu0 0
        %2664 = vmatpush1.bf16.msra.mxu0 0
        %2665 = vmatprep.mubr.bf16.mxu0 0
        %2666 = vmatmul.mubr.bf16.gmra.mrb[0].mxu0 %v2631
        %v2667 = vpop.f32.mrb[0].mxu0
        %v2668 = vadd.f32 0.0, %v2667
        %v2669 = vpop.f32.mrb[0].mxu0
        %v2670 = vpop.f32.mrb[0].mxu0
        %v2671 = vadd.f32 0.0, %v2670
        %v2672 = vpop.f32.mrb[0].mxu0
        %2673 = vdwg.mxu0
        %v2676 = vunpack.c.l.b16 %v641
        %v2677 = vunpack.c.l.b16 %v642
        %v2678 = vpack.c.b16 %v2677, %v2676
        %v2681 = vsel %vm653, %v1923, 0
        %2683 = vmatprep.subr.bf16.mxu0 0
        %2684 = vmatpush1.bf16.msra.mxu0 %v2678
        %2685 = vmatprep.subr.bf16.mxu0 0
        %2686 = vmatpush1.bf16.msra.mxu0 0
        %2687 = vmatprep.subr.bf16.mxu0 0
        %2688 = vmatpush1.bf16.msra.mxu0 0
        %2689 = vmatprep.subr.bf16.mxu0 0
        %2690 = vmatpush1.bf16.msra.mxu0 0
        %2691 = vmatprep.subr.bf16.mxu0 0
        %2692 = vmatpush1.bf16.msra.mxu0 0
        %2693 = vmatprep.subr.bf16.mxu0 0
        %2694 = vmatpush1.bf16.msra.mxu0 0
        %2695 = vmatprep.subr.bf16.mxu0 0
        %2696 = vmatpush1.bf16.msra.mxu0 0
        %2697 = vmatprep.subr.bf16.mxu0 0
        %2698 = vmatpush1.bf16.msra.mxu0 0
        %2699 = vmatprep.subr.bf16.mxu0 0
        %2700 = vmatpush1.bf16.msra.mxu0 0
        %2701 = vmatprep.subr.bf16.mxu0 0
        %2702 = vmatpush1.bf16.msra.mxu0 0
        %2703 = vmatprep.subr.bf16.mxu0 0
        %2704 = vmatpush1.bf16.msra.mxu0 0
        %2705 = vmatprep.subr.bf16.mxu0 0
        %2706 = vmatpush1.bf16.msra.mxu0 0
        %2707 = vmatprep.subr.bf16.mxu0 0
        %2708 = vmatpush1.bf16.msra.mxu0 0
        %2709 = vmatprep.subr.bf16.mxu0 0
        %2710 = vmatpush1.bf16.msra.mxu0 0
        %2711 = vmatprep.subr.bf16.mxu0 0
        %2712 = vmatpush1.bf16.msra.mxu0 0
        %2713 = vmatprep.subr.bf16.mxu0 0
        %2714 = vmatpush1.bf16.msra.mxu0 0
        %2715 = vmatprep.mubr.bf16.mxu0 0
        %2716 = vmatmul.mubr.bf16.gmra.mrb[0].mxu0 %v2681
        %v2717 = vpop.f32.mrb[0].mxu0
        %v2718 = vadd.f32 0.0, %v2717
        %v2719 = vpop.f32.mrb[0].mxu0
        %v2720 = vpop.f32.mrb[0].mxu0
        %v2721 = vadd.f32 0.0, %v2720
        %v2722 = vpop.f32.mrb[0].mxu0
        %2723 = vdwg.mxu0
        %v2724 = vpack.c.bf16 %v1971, %v1968
        %v2725 = vpack.c.bf16 %v2021, %v2018
        %v2726 = vpack.c.bf16 %v2071, %v2068
        %v2727 = vpack.c.bf16 %v2121, %v2118
        %v2728 = vpack.c.bf16 %v2171, %v2168
        %v2729 = vpack.c.bf16 %v2221, %v2218
        %v2730 = vpack.c.bf16 %v2271, %v2268
        %v2731 = vpack.c.bf16 %v2321, %v2318
        %v2732 = vpack.c.bf16 %v2371, %v2368
        %v2733 = vpack.c.bf16 %v2421, %v2418
        %v2734 = vpack.c.bf16 %v2471, %v2468
        %v2735 = vpack.c.bf16 %v2521, %v2518
        %v2736 = vpack.c.bf16 %v2571, %v2568
        %v2737 = vpack.c.bf16 %v2621, %v2618
        %v2738 = vpack.c.bf16 %v2671, %v2668
        %v2739 = vpack.c.bf16 %v2721, %v2718
        %v2756 = vunpack.c.l.b16 %v2724
        %v2757 = vunpack.c.h.b16 %v2724
        %v2758 = vunpack.c.l.b16 %v2725
        %v2759 = vunpack.c.h.b16 %v2725
        %v2760 = vunpack.c.l.b16 %v2726
        %v2761 = vunpack.c.h.b16 %v2726
        %v2762 = vunpack.c.l.b16 %v2727
        %v2763 = vunpack.c.h.b16 %v2727
        %v2764 = vunpack.c.l.b16 %v2728
        %v2765 = vunpack.c.h.b16 %v2728
        %v2766 = vunpack.c.l.b16 %v2729
        %v2767 = vunpack.c.h.b16 %v2729
        %v2768 = vunpack.c.l.b16 %v2730
        %v2769 = vunpack.c.h.b16 %v2730
        %v2770 = vunpack.c.l.b16 %v2731
        %v2771 = vunpack.c.h.b16 %v2731
        %v2772 = vunpack.c.l.b16 %v2732
        %v2773 = vunpack.c.h.b16 %v2732
        %v2774 = vunpack.c.l.b16 %v2733
        %v2775 = vunpack.c.h.b16 %v2733
        %v2776 = vunpack.c.l.b16 %v2734
        %v2777 = vunpack.c.h.b16 %v2734
        %v2778 = vunpack.c.l.b16 %v2735
        %v2779 = vunpack.c.h.b16 %v2735
        %v2780 = vunpack.c.l.b16 %v2736
        %v2781 = vunpack.c.h.b16 %v2736
        %v2782 = vunpack.c.l.b16 %v2737
        %v2783 = vunpack.c.h.b16 %v2737
        %v2784 = vunpack.c.l.b16 %v2738
        %v2785 = vunpack.c.h.b16 %v2738
        %v2786 = vunpack.c.l.b16 %v2739
        %v2787 = vunpack.c.h.b16 %v2739
        %v2788 = vpack.c.b16 %v2756, %v2756
        %v2789 = vpack.c.b16 %v2757, %v2757
        %v2790 = vpack.c.b16 %v2758, %v2758
        %v2791 = vpack.c.b16 %v2759, %v2759
        %v2792 = vpack.c.b16 %v2760, %v2760
        %v2793 = vpack.c.b16 %v2761, %v2761
        %v2794 = vpack.c.b16 %v2762, %v2762
        %v2795 = vpack.c.b16 %v2763, %v2763
        %v2796 = vpack.c.b16 %v2764, %v2764
        %v2797 = vpack.c.b16 %v2765, %v2765
        %v2798 = vpack.c.b16 %v2766, %v2766
        %v2799 = vpack.c.b16 %v2767, %v2767
        %v2800 = vpack.c.b16 %v2768, %v2768
        %v2801 = vpack.c.b16 %v2769, %v2769
        %v2802 = vpack.c.b16 %v2770, %v2770
        %v2803 = vpack.c.b16 %v2771, %v2771
        %v2804 = vpack.c.b16 %v2772, %v2772
        %v2805 = vpack.c.b16 %v2773, %v2773
        %v2806 = vpack.c.b16 %v2774, %v2774
        %v2807 = vpack.c.b16 %v2775, %v2775
        %v2808 = vpack.c.b16 %v2776, %v2776
        %v2809 = vpack.c.b16 %v2777, %v2777
        %v2810 = vpack.c.b16 %v2778, %v2778
        %v2811 = vpack.c.b16 %v2779, %v2779
        %v2812 = vpack.c.b16 %v2780, %v2780
        %v2813 = vpack.c.b16 %v2781, %v2781
        %v2814 = vpack.c.b16 %v2782, %v2782
        %v2815 = vpack.c.b16 %v2783, %v2783
        %v2816 = vpack.c.b16 %v2784, %v2784
        %v2817 = vpack.c.b16 %v2785, %v2785
        %v2818 = vpack.c.b16 %v2786, %v2786
        %v2819 = vpack.c.b16 %v2787, %v2787
        %vm2852 = vcmask 125952
        %2853 = vst.msk [vmem:[%s542] sm:$0xf] %vm2852, %v2788
        %2854 = vst.msk [vmem:[%s542 + $0x4] sm:$0xf] %vm2852, %v2789
        %2855 = vst.msk [vmem:[%s542 + $0x8] sm:$0xf] %vm2852, %v2790
        %2856 = vst.msk [vmem:[%s542 + $0xc] sm:$0xf] %vm2852, %v2791
        %2857 = vst.msk [vmem:[%s542 + $0x10] sm:$0xf] %vm2852, %v2792
        %2858 = vst.msk [vmem:[%s542 + $0x14] sm:$0xf] %vm2852, %v2793
        %2859 = vst.msk [vmem:[%s542 + $0x18] sm:$0xf] %vm2852, %v2794
        %2860 = vst.msk [vmem:[%s542 + $0x1c] sm:$0xf] %vm2852, %v2795
        %2861 = vst.msk [vmem:[%s542 + $0x20] sm:$0xf] %vm2852, %v2796
        %2862 = vst.msk [vmem:[%s542 + $0x24] sm:$0xf] %vm2852, %v2797
        %2863 = vst.msk [vmem:[%s542 + $0x28] sm:$0xf] %vm2852, %v2798
        %2864 = vst.msk [vmem:[%s542 + $0x2c] sm:$0xf] %vm2852, %v2799
        %2865 = vst.msk [vmem:[%s542 + $0x30] sm:$0xf] %vm2852, %v2800
        %2866 = vst.msk [vmem:[%s542 + $0x34] sm:$0xf] %vm2852, %v2801
        %2867 = vst.msk [vmem:[%s542 + $0x38] sm:$0xf] %vm2852, %v2802
        %2868 = vst.msk [vmem:[%s542 + $0x3c] sm:$0xf] %vm2852, %v2803
        %2869 = vst.msk [vmem:[%s542 + $0x40] sm:$0xf] %vm2852, %v2804
        %2870 = vst.msk [vmem:[%s542 + $0x44] sm:$0xf] %vm2852, %v2805
        %2871 = vst.msk [vmem:[%s542 + $0x48] sm:$0xf] %vm2852, %v2806
        %2872 = vst.msk [vmem:[%s542 + $0x4c] sm:$0xf] %vm2852, %v2807
        %2873 = vst.msk [vmem:[%s542 + $0x50] sm:$0xf] %vm2852, %v2808
        %2874 = vst.msk [vmem:[%s542 + $0x54] sm:$0xf] %vm2852, %v2809
        %2875 = vst.msk [vmem:[%s542 + $0x58] sm:$0xf] %vm2852, %v2810
        %2876 = vst.msk [vmem:[%s542 + $0x5c] sm:$0xf] %vm2852, %v2811
        %2877 = vst.msk [vmem:[%s542 + $0x60] sm:$0xf] %vm2852, %v2812
        %2878 = vst.msk [vmem:[%s542 + $0x64] sm:$0xf] %vm2852, %v2813
        %2879 = vst.msk [vmem:[%s542 + $0x68] sm:$0xf] %vm2852, %v2814
        %2880 = vst.msk [vmem:[%s542 + $0x6c] sm:$0xf] %vm2852, %v2815
        %2881 = vst.msk [vmem:[%s542 + $0x70] sm:$0xf] %vm2852, %v2816
        %2882 = vst.msk [vmem:[%s542 + $0x74] sm:$0xf] %vm2852, %v2817
        %2883 = vst.msk [vmem:[%s542 + $0x78] sm:$0xf] %vm2852, %v2818
        %2884 = vst.msk [vmem:[%s542 + $0x7c] sm:$0xf] %vm2852, %v2819
        %s2885 = smul.u32 16, %s12
        %p2886 = scmp.lt.s32.totalorder %s2885, 31
        %s2887 = scalar_select %p2886, %s2885, 31
        %s2888 = smul.addr %s2887, 2
        %s2889 = smul.addr %s2888, 4
        %s2890 = scalar_lea.vmem %s1, %s2889
        // Predicated region
        $region66: #{body_forward.6} parent=60 // pred_check
          %p2891 = pneg %p56
        $region67: #{body_forward.6} parent=60 // pred_check_branch
          %2893 = sbr.rel (%p2891) target = $region69
        $region68: #{body_forward.6} parent=60 // pred_region
          %s2894 = smul.u32 16, %s12
        $region69: #{body_forward.6} parent=60 // pred_fallthru
          _
      $region61: #{body_forward.6} parent=5 // pred_fallthru
        _
      %p2895 = scmp.le.s32.totalorder 2, %s7
      // Predicated region
      $region70: #{body_forward.6} parent=5 // pred_check
        %p2896 = pneg %p2895
      $region71: #{body_forward.6} parent=5 // pred_check_branch
        %2898 = sbr.rel (%p2896) target = $region73
      $region72: #{body_forward.6} parent=5 // pred_region
        %s2899 = ssub.s32 %s7, 2
        // Predicated region
        $region74: #{body_forward.6} parent=72 // pred_check
          %p2900 = pneg %p62
        $region75: #{body_forward.6} parent=72 // pred_check_branch
          %2902 = sbr.rel (%p2900) target = $region77
        $region76: #{body_forward.6} parent=72 // pred_region
          %s2903 = smul.u32 16, %s13
          %p2904 = scmp.lt.s32.totalorder %s2903, 31
          %s2905 = scalar_select %p2904, %s2903, 31
          %s2906 = smul.addr %s2905, 2
          %s2907 = smul.addr %s2906, 4
          %s2908 = scalar_lea.vmem %s1, %s2907
        $region77: #{body_forward.6} parent=72 // pred_fallthru
          _
      $region73: #{body_forward.6} parent=5 // pred_fallthru
        _
    $region6: #{body_forward.6} parent=1 // loop_footer
      %s11 = sadd.s32 1, %s7
    $region7: #{body_forward.6} parent=1 // loop_footer_branch
      %6 = sbr.rel target = $region3
    $region8: #{body_forward.6} parent=1 // loop_exit
      _

// kernel: body_forward.9
$region0: #{body_forward.9}
  #allocation0 [shape = 'u32[]', space=smem, size = 0x4, offset = 0x4, fixed_abs, tag = 'smem constant byte address 0x4 - core index']
  #allocation1 [shape = 'u32[144,128]{1,0:T(1,128)}', space=vmem, size = 0x12000, scoped, tag = 'internal scratch']
  %s0 = inlined_call_operand.vmem [shape: bf16[2,48,256], index: 0, kind: input, shape index: {}]
  %s1 = inlined_call_operand.vmem [shape: bf16[48,48], index: 1, kind: input, shape index: {}]
  %s2 = inlined_call_operand.vmem [shape: f32[48,1], index: 2, kind: input, shape index: {}]
  %s3 = inlined_call_operand.vmem [shape: f32[2,48,256], index: 3, kind: output, shape index: {}]
  %s4 = sld [smem:[#allocation0]]
  $region45: #{body_forward.9} parent=0
    _
  %s6 = ssub.s32 1, %s4
  %s7 = scalar_select 0, %s6, %s4
  loop: start=0, step=1, limit=4
  $region2: #{body_forward.9} parent=0 // loop_pre_header
    _
  $region3: #{body_forward.9} parent=0 // loop_header
    %s9 = sphi 0, %s13
    %p10 = scmp.ge.s32.totalorder %s9, 4
    %s16 = sphi 0, %s28
    %s17 = sphi 0, %s24
    %s18 = sphi 0, %s16
    %s19 = sphi 0, %s17
    %s20 = sphi 0, %s18
    %s21 = sphi 0, %s19
    %s33 = sphi 0, %s35
    %s36 = sphi 0, %s33
    %s37 = sphi 0, %s36
    %s53 = sphi 0, %s37
    %s57 = sphi 0, %s57
    %s59 = sphi 0, %s57
    %s60 = sphi 0, %s59
    %s74 = sphi 0, %s60
    %s78 = sphi 0, %s78
    %s80 = sphi 0, %s78
    %s81 = sphi 0, %s80
    %s95 = sphi 0, %s81
    %s103 = sphi 0, %s105
    %s106 = sphi 0, %s103
    %s107 = sphi 0, %s106
    %s123 = sphi 0, %s107
  $region4: #{body_forward.9} parent=0 // loop_header_branch
    %12 = sbr.rel (%p10) target = $region8
  $region5: #{body_forward.9} parent=0 // loop_body
    %s14 = ssub.s32 %s9, 1
    %s15 = ssub.s32 %s9, 2
    %s22 = sadd.s32 1, %s17
    %p23 = scmp.ge.s32.totalorder %s22, 1
    %s24 = scalar_select %p23, 0, %s22
    %s25 = sadd.s32 1, %s16
    %s26 = scalar_select %p23, %s25, %s16
    %p27 = scmp.ge.s32.totalorder %s26, 2
    %s28 = scalar_select %p27, 0, %s26
    %s29 = ssub.s32 %s16, %s28
    %s30 = ssub.s32 %s17, %s24
    %s31 = sor.u32 %s29, %s30
    %p32 = scmp.eq.s32.totalorder %s31, 0
    %s34 = sadd.s32 %s33, 1
    %s35 = scalar_select %p32, %s33, %s34
    %p38 = pneg %p32
    %p39 = scmp.eq.s32.totalorder %s9, 1
    %p40 = por %p38, %p39
    %p41 = scmp.ne.s32.totalorder %s33, %s36
    %p42 = scmp.eq.s32.totalorder %s9, 0
    %p43 = por %p41, %p42
    %p44 = scmp.ne.s32.totalorder %s33, %s36
    %p45 = scmp.eq.s32.totalorder %s14, 1
    %p46 = por %p44, %p45
    %p47 = scmp.ne.s32.totalorder %s36, %s37
    %p48 = scmp.eq.s32.totalorder %s14, 0
    %p49 = por %p47, %p48
    %p50 = scmp.ne.s32.totalorder %s36, %s37
    %p51 = scmp.eq.s32.totalorder %s15, 1
    %p52 = por %p50, %p51
    %p54 = scmp.ne.s32.totalorder %s37, %s53
    %p55 = scmp.eq.s32.totalorder %s15, 0
    %p56 = por %p54, %p55
    %s58 = sadd.s32 %s57, 1
    %p61 = scmp.eq.s32.totalorder %s9, 1
    %p62 = scmp.ne.s32.totalorder %s57, %s59
    %p63 = scmp.eq.s32.totalorder %s9, 0
    %p64 = por %p62, %p63
    %p65 = scmp.ne.s32.totalorder %s57, %s59
    %p66 = scmp.eq.s32.totalorder %s14, 1
    %p67 = por %p65, %p66
    %p68 = scmp.ne.s32.totalorder %s59, %s60
    %p69 = scmp.eq.s32.totalorder %s14, 0
    %p70 = por %p68, %p69
    %p71 = scmp.ne.s32.totalorder %s59, %s60
    %p72 = scmp.eq.s32.totalorder %s15, 1
    %p73 = por %p71, %p72
    %p75 = scmp.ne.s32.totalorder %s60, %s74
    %p76 = scmp.eq.s32.totalorder %s15, 0
    %p77 = por %p75, %p76
    %s79 = sadd.s32 %s78, 1
    %p82 = scmp.eq.s32.totalorder %s9, 1
    %p83 = scmp.ne.s32.totalorder %s78, %s80
    %p84 = scmp.eq.s32.totalorder %s9, 0
    %p85 = por %p83, %p84
    %p86 = scmp.ne.s32.totalorder %s78, %s80
    %p87 = scmp.eq.s32.totalorder %s14, 1
    %p88 = por %p86, %p87
    %p89 = scmp.ne.s32.totalorder %s80, %s81
    %p90 = scmp.eq.s32.totalorder %s14, 0
    %p91 = por %p89, %p90
    %p92 = scmp.ne.s32.totalorder %s80, %s81
    %p93 = scmp.eq.s32.totalorder %s15, 1
    %p94 = por %p92, %p93
    %p96 = scmp.ne.s32.totalorder %s81, %s95
    %p97 = scmp.eq.s32.totalorder %s15, 0
    %p98 = por %p96, %p97
    %s99 = ssub.s32 %s16, %s28
    %s100 = ssub.s32 %s17, %s24
    %s101 = sor.u32 %s99, %s100
    %p102 = scmp.eq.s32.totalorder %s101, 0
    %s104 = sadd.s32 %s103, 1
    %s105 = scalar_select %p102, %s103, %s104
    %p108 = pneg %p102
    %p109 = scmp.eq.s32.totalorder %s9, 1
    %p110 = por %p108, %p109
    %p111 = scmp.ne.s32.totalorder %s103, %s106
    %p112 = scmp.eq.s32.totalorder %s9, 0
    %p113 = por %p111, %p112
    %p114 = scmp.ne.s32.totalorder %s103, %s106
    %p115 = scmp.eq.s32.totalorder %s14, 1
    %p116 = por %p114, %p115
    %p117 = scmp.ne.s32.totalorder %s106, %s107
    %p118 = scmp.eq.s32.totalorder %s14, 0
    %p119 = por %p117, %p118
    %p120 = scmp.ne.s32.totalorder %s106, %s107
    %p121 = scmp.eq.s32.totalorder %s15, 1
    %p122 = por %p120, %p121
    %p124 = scmp.ne.s32.totalorder %s107, %s123
    %p125 = scmp.eq.s32.totalorder %s15, 0
    %p126 = por %p124, %p125
    %p127 = scmp.le.s32.totalorder 1, %s9
    %p128 = scmp.lt.s32.totalorder %s9, 3
    %p129 = pnand %p127, %p128
    %p130 = pneg %p129
    // Predicated region
    $region9: #{body_forward.9} parent=5 // pred_check
      _
    $region10: #{body_forward.9} parent=5 // pred_check_branch
      %132 = sbr.rel (%p129) target = $region12
    $region11: #{body_forward.9} parent=5 // pred_region
      %s133 = ssub.s32 %s9, 1
      // Predicated region
      $region13: #{body_forward.9} parent=11 // pred_check
        %p134 = pneg %p70
      $region14: #{body_forward.9} parent=11 // pred_check_branch
        %136 = sbr.rel (%p134) target = $region16
      $region15: #{body_forward.9} parent=11 // pred_region
        _
      $region16: #{body_forward.9} parent=11 // pred_fallthru
        _
      // Predicated region
      $region17: #{body_forward.9} parent=11 // pred_check
        %p137 = pneg %p91
      $region18: #{body_forward.9} parent=11 // pred_check_branch
        %139 = sbr.rel (%p137) target = $region20
      $region19: #{body_forward.9} parent=11 // pred_region
        _
      $region20: #{body_forward.9} parent=11 // pred_fallthru
        _
    $region12: #{body_forward.9} parent=5 // pred_fallthru
      _
    %p140 = scmp.lt.s32.totalorder %s9, 2
    // Predicated region
    $region21: #{body_forward.9} parent=5 // pred_check
      %p141 = pneg %p140
    $region22: #{body_forward.9} parent=5 // pred_check_branch
      %143 = sbr.rel (%p141) target = $region24
    $region23: #{body_forward.9} parent=5 // pred_region
      // Predicated region
      $region25: #{body_forward.9} parent=23 // pred_check
        %p144 = pneg %p43
      $region26: #{body_forward.9} parent=23 // pred_check_branch
        %146 = sbr.rel (%p144) target = $region28
      $region27: #{body_forward.9} parent=23 // pred_region
        %s147 = smul.u32 2, %s17
        %p148 = scmp.lt.s32.totalorder %s16, 1
        %s149 = scalar_select %p148, %s16, 1
        %p150 = scmp.lt.s32.totalorder %s147, 1
        %s151 = scalar_select %p150, %s147, 1
        %s152 = smul.addr %s149, 12
        %s153 = sadd.s32 %s151, %s152
        %s154 = smul.addr %s153, 4
        %s155 = scalar_lea.vmem %s0, %s154
        %s156 = smul.u32 2, %s17
      $region28: #{body_forward.9} parent=23 // pred_fallthru
        _
    $region24: #{body_forward.9} parent=5 // pred_fallthru
      _
    %p157 = scmp.le.s32.totalorder 1, %s9
    %p158 = scmp.lt.s32.totalorder %s9, 3
    %p159 = pnand %p157, %p158
    %p160 = pneg %p159
    // Predicated region
    $region29: #{body_forward.9} parent=5 // pred_check
      _
    $region30: #{body_forward.9} parent=5 // pred_check_branch
      %162 = sbr.rel (%p159) target = $region32
    $region31: #{body_forward.9} parent=5 // pred_region
      %s163 = ssub.s32 %s9, 1
      %s164 = smul.u32 2, %s19
      %p165 = scmp.lt.s32.totalorder %s18, 1
      %s166 = scalar_select %p165, %s18, 1
      %p167 = scmp.lt.s32.totalorder %s164, 1
      %s168 = scalar_select %p167, %s164, 1
      %s169 = smul.addr %s166, 12
      %s170 = sadd.s32 %s168, %s169
      %s171 = smul.addr %s170, 4
      %s172 = scalar_lea.vmem %s0, %s171
      %p173 = pneg %p49
      %p174 = pneg %p46
      %p175 = pneg %p70
      %p176 = pneg %p67
      %p177 = pneg %p91
      %p178 = pneg %p88
      %p179 = pneg %p119
      %p180 = pneg %p116
      %s181 = smul.u32 2, %s19
      %p182 = scmp.lt.s32.totalorder %s18, 1
      %s183 = scalar_select %p182, %s18, 1
      %p184 = scmp.lt.s32.totalorder %s181, 1
      %s185 = scalar_select %p184, %s181, 1
      %s186 = smul.addr %s183, 12
      %s187 = sadd.s32 %s185, %s186
      %s188 = smul.addr %s187, 8
      %s189 = scalar_lea.vmem %s3, %s188
      %s190 = smul.u32 2, %s19
      %p191 = scmp.lt.s32.totalorder %s18, 1
      %s192 = scalar_select %p191, %s18, 1
      %p193 = scmp.lt.s32.totalorder %s190, 1
      %s194 = scalar_select %p193, %s190, 1
      %s195 = smul.addr %s192, 12
      %s196 = sadd.s32 %s194, %s195
      %s197 = smul.addr %s196, 4
      %s198 = scalar_lea.vmem %s0, %s197
      %s199 = smul.u32 2, %s19
      %s200 = smul.u32 2, %s19
      %p201 = scmp.lt.s32.totalorder %s18, 1
      %s202 = scalar_select %p201, %s18, 1
      %p203 = scmp.lt.s32.totalorder %s200, 1
      %s204 = scalar_select %p203, %s200, 1
      %s205 = smul.addr %s202, 12
      %s206 = sadd.s32 %s204, %s205
      %s207 = smul.addr %s206, 8
      %s208 = scalar_lea.vmem %s3, %s207
      %s209 = smul.u32 2, %s19
      %v211 = vld [vmem:[%s1] sm:$0xf]
      %v212 = vld [vmem:[%s1 + $0x4] sm:$0xf]
      %v213 = vld [vmem:[%s1 + $0x8] sm:$0xf]
      %v214 = vld [vmem:[%s1 + $0xc] sm:$0xf]
      %v215 = vld [vmem:[%s1 + $0x10] sm:$0xf]
      %v216 = vld [vmem:[%s1 + $0x14] sm:$0xf]
      %v217 = vld [vmem:[%s198] sm:$0xff]
      %v218 = vld [vmem:[%s198 + $0x8] sm:$0xff]
      %v219 = vld [vmem:[%s198 + $0x10] sm:$0xff]
      %v220 = vld [vmem:[%s198 + $0x18] sm:$0xff]
      %v221 = vld [vmem:[%s198 + $0x20] sm:$0xff]
      %v222 = vld [vmem:[%s198 + $0x28] sm:$0xff]
      %v223 = vld [vmem:[%s2] sm:$0xff]
      %v224 = vld [vmem:[%s2 + $0x8] sm:$0xff]
      %v225 = vld [vmem:[%s2 + $0x10] sm:$0xff]
      %v226 = vld [vmem:[%s2 + $0x18] sm:$0xff]
      %v227 = vld [vmem:[%s2 + $0x20] sm:$0xff]
      %v228 = vld [vmem:[%s2 + $0x28] sm:$0xff]
      %230 = vset.pattern.permute.xlu0 0
      %231 = vperm.xlu0 %230, %v223
      %v232 = vpop.permute.xlu0 %231
      %235 = vset.pattern.permute.xlu0 0
      %236 = vperm.xlu0 %235, %v224
      %v237 = vpop.permute.xlu0 %236
      %240 = vset.pattern.permute.xlu0 0
      %241 = vperm.xlu0 %240, %v225
      %v242 = vpop.permute.xlu0 %241
      %245 = vset.pattern.permute.xlu0 0
      %246 = vperm.xlu0 %245, %v226
      %v247 = vpop.permute.xlu0 %246
      %250 = vset.pattern.permute.xlu0 0
      %251 = vperm.xlu0 %250, %v227
      %v252 = vpop.permute.xlu0 %251
      %255 = vset.pattern.permute.xlu0 0
      %256 = vperm.xlu0 %255, %v228
      %v257 = vpop.permute.xlu0 %256
      %v265 = vunpack.c.l.b16 %v211
      %v266 = vunpack.c.l.b16 %v212
      %v267 = vunpack.c.l.b16 %v213
      %v268 = vunpack.c.l.b16 %v214
      %v269 = vunpack.c.l.b16 %v215
      %v270 = vunpack.c.l.b16 %v216
      %v271 = vpack.c.b16 %v266, %v265
      %v272 = vpack.c.b16 %v268, %v267
      %v273 = vpack.c.b16 %v270, %v269
      %v280 = vunpack.c.l.b16 %v217
      %v281 = vunpack.c.h.b16 %v217
      %v282 = vunpack.c.l.b16 %v218
      %v283 = vunpack.c.h.b16 %v218
      %v284 = vunpack.c.l.b16 %v219
      %v285 = vunpack.c.h.b16 %v219
      %v286 = vunpack.c.l.b16 %v220
      %v287 = vunpack.c.h.b16 %v220
      %v288 = vunpack.c.l.b16 %v221
      %v289 = vunpack.c.h.b16 %v221
      %v290 = vunpack.c.l.b16 %v222
      %v291 = vunpack.c.h.b16 %v222
      %v292 = vpack.c.b16 %v282, %v280
      %v293 = vpack.c.b16 %v283, %v281
      %v294 = vpack.c.b16 %v286, %v284
      %v295 = vpack.c.b16 %v287, %v285
      %v296 = vpack.c.b16 %v290, %v288
      %v297 = vpack.c.b16 %v291, %v289
      %vm304 = vcmask 392192
      %v306 = vsel %vm304, %v271, 0
      %v309 = vsel %vm304, %v272, 0
      %v312 = vsel %vm304, %v273, 0
      %314 = vmatprep.subr.bf16.mxu0 %v293
      %315 = vmatpush1.bf16.msra.mxu0 %v292
      %316 = vmatprep.subr.bf16.mxu0 %v295
      %317 = vmatpush1.bf16.msra.mxu0 %v294
      %318 = vmatprep.subr.bf16.mxu0 %v297
      %319 = vmatpush1.bf16.msra.mxu0 %v296
      %320 = vmatprep.subr.bf16.mxu0 0
      %321 = vmatpush1.bf16.msra.mxu0 0
      %322 = vmatprep.subr.bf16.mxu0 0
      %323 = vmatpush1.bf16.msra.mxu0 0
      %324 = vmatprep.subr.bf16.mxu0 0
      %325 = vmatpush1.bf16.msra.mxu0 0
      %326 = vmatprep.subr.bf16.mxu0 0
      %327 = vmatpush1.bf16.msra.mxu0 0
      %328 = vmatprep.subr.bf16.mxu0 0
      %329 = vmatpush1.bf16.msra.mxu0 0
      %330 = vmatprep.subr.bf16.mxu0 0
      %331 = vmatpush1.bf16.msra.mxu0 0
      %332 = vmatprep.subr.bf16.mxu0 0
      %333 = vmatpush1.bf16.msra.mxu0 0
      %334 = vmatprep.subr.bf16.mxu0 0
      %335 = vmatpush1.bf16.msra.mxu0 0
      %336 = vmatprep.subr.bf16.mxu0 0
      %337 = vmatpush1.bf16.msra.mxu0 0
      %338 = vmatprep.subr.bf16.mxu0 0
      %339 = vmatpush1.bf16.msra.mxu0 0
      %340 = vmatprep.subr.bf16.mxu0 0
      %341 = vmatpush1.bf16.msra.mxu0 0
      %342 = vmatprep.subr.bf16.mxu0 0
      %343 = vmatpush1.bf16.msra.mxu0 0
      %344 = vmatprep.subr.bf16.mxu0 0
      %345 = vmatpush1.bf16.msra.mxu0 0
      %346 = vmatprep.mubr.bf16.mxu0 0
      %347 = vmatmul.mubr.bf16.gmra.mrb[0].mxu0 %v306
      %v348 = vpop.f32.mrb[0].mxu0
      %v349 = vadd.f32 %v232, %v348
      %v350 = vpop.f32.mrb[0].mxu0
      %v351 = vadd.f32 %v232, %v350
      %v352 = vpop.f32.mrb[0].mxu0
      %v353 = vadd.f32 %v237, %v352
      %v354 = vpop.f32.mrb[0].mxu0
      %v355 = vadd.f32 %v237, %v354
      %356 = vmatprep.mubr.bf16.mxu0 0
      %357 = vmatmul.mubr.bf16.gmra.mrb[0].mxu0 %v309
      %v358 = vpop.f32.mrb[0].mxu0
      %v359 = vadd.f32 %v242, %v358
      %v360 = vpop.f32.mrb[0].mxu0
      %v361 = vadd.f32 %v242, %v360
      %v362 = vpop.f32.mrb[0].mxu0
      %v363 = vadd.f32 %v247, %v362
      %v364 = vpop.f32.mrb[0].mxu0
      %v365 = vadd.f32 %v247, %v364
      %366 = vmatprep.mubr.bf16.mxu0 0
      %367 = vmatmul.mubr.bf16.gmra.mrb[0].mxu0 %v312
      %v368 = vpop.f32.mrb[0].mxu0
      %v369 = vadd.f32 %v252, %v368
      %v370 = vpop.f32.mrb[0].mxu0
      %v371 = vadd.f32 %v252, %v370
      %v372 = vpop.f32.mrb[0].mxu0
      %v373 = vadd.f32 %v257, %v372
      %v374 = vpop.f32.mrb[0].mxu0
      %v375 = vadd.f32 %v257, %v374
      %376 = vdwg.mxu0
      %377 = vst [vmem:[%s208] sm:$0xff] %v349
      %378 = vst [vmem:[%s208 + $0x8] sm:$0xff] %v351
      %379 = vst [vmem:[%s208 + $0x10] sm:$0xff] %v353
      %380 = vst [vmem:[%s208 + $0x18] sm:$0xff] %v355
      %381 = vst [vmem:[%s208 + $0x20] sm:$0xff] %v359
      %382 = vst [vmem:[%s208 + $0x28] sm:$0xff] %v361
      %383 = vst [vmem:[%s208 + $0x30] sm:$0xff] %v363
      %384 = vst [vmem:[%s208 + $0x38] sm:$0xff] %v365
      %385 = vst [vmem:[%s208 + $0x40] sm:$0xff] %v369
      %386 = vst [vmem:[%s208 + $0x48] sm:$0xff] %v371
      %387 = vst [vmem:[%s208 + $0x50] sm:$0xff] %v373
      %388 = vst [vmem:[%s208 + $0x58] sm:$0xff] %v375
      %s389 = smul.u32 2, %s19
      %p390 = scmp.lt.s32.totalorder %s18, 1
      %s391 = scalar_select %p390, %s18, 1
      %p392 = scmp.lt.s32.totalorder %s389, 1
      %s393 = scalar_select %p392, %s389, 1
      %s394 = smul.addr %s391, 12
      %s395 = sadd.s32 %s393, %s394
      %s396 = smul.addr %s395, 8
      %s397 = scalar_lea.vmem %s3, %s396
      // Predicated region
      $region33: #{body_forward.9} parent=31 // pred_check
        %p398 = pneg %p116
      $region34: #{body_forward.9} parent=31 // pred_check_branch
        %400 = sbr.rel (%p398) target = $region36
      $region35: #{body_forward.9} parent=31 // pred_region
        %s401 = smul.u32 2, %s19
      $region36: #{body_forward.9} parent=31 // pred_fallthru
        _
    $region32: #{body_forward.9} parent=5 // pred_fallthru
      _
    %p402 = scmp.le.s32.totalorder 2, %s9
    // Predicated region
    $region37: #{body_forward.9} parent=5 // pred_check
      %p403 = pneg %p402
    $region38: #{body_forward.9} parent=5 // pred_check_branch
      %405 = sbr.rel (%p403) target = $region40
    $region39: #{body_forward.9} parent=5 // pred_region
      %s406 = ssub.s32 %s9, 2
      // Predicated region
      $region41: #{body_forward.9} parent=39 // pred_check
        %p407 = pneg %p122
      $region42: #{body_forward.9} parent=39 // pred_check_branch
        %409 = sbr.rel (%p407) target = $region44
      $region43: #{body_forward.9} parent=39 // pred_region
        %s410 = smul.u32 2, %s21
        %p411 = scmp.lt.s32.totalorder %s20, 1
        %s412 = scalar_select %p411, %s20, 1
        %p413 = scmp.lt.s32.totalorder %s410, 1
        %s414 = scalar_select %p413, %s410, 1
        %s415 = smul.addr %s412, 12
        %s416 = sadd.s32 %s414, %s415
        %s417 = smul.addr %s416, 8
        %s418 = scalar_lea.vmem %s3, %s417
      $region44: #{body_forward.9} parent=39 // pred_fallthru
        _
    $region40: #{body_forward.9} parent=5 // pred_fallthru
      _
  $region6: #{body_forward.9} parent=0 // loop_footer
    %s13 = sadd.s32 1, %s9
  $region7: #{body_forward.9} parent=0 // loop_footer_branch
    %8 = sbr.rel target = $region3
  $region8: #{body_forward.9} parent=0 // loop_exit
    _

// kernel: body_forward.7
$region0: #{body_forward.7}
  #allocation0 [shape = 'u32[]', space=smem, size = 0x4, offset = 0x4, fixed_abs, tag = 'smem constant byte address 0x4 - core index']
  #allocation1 [shape = 'u32[144,128]{1,0:T(1,128)}', space=vmem, size = 0x12000, scoped, tag = 'internal scratch']
  %s0 = inlined_call_operand.vmem [shape: bf16[3,8,64,16], index: 0, kind: input, shape index: {}]
  %s1 = inlined_call_operand.vmem [shape: bf16[8,64,16], index: 1, kind: output, shape index: {}]
  %s2 = sld [smem:[#allocation0]]
  $region78: #{body_forward.7} parent=0
    _
  %s4 = ssub.s32 1, %s2
  %s5 = scalar_select 0, %s4, %s2
  $region1: #{body_forward.7} parent=0
    #allocation2 [shape = 'u8[393216]{0}', space=vmem, size = 0x60000, scoped, tag = 'input window, operand 0']
    loop: start=0, step=1, limit=4
    $region2: #{body_forward.7} parent=1 // loop_pre_header
      _
    $region3: #{body_forward.7} parent=1 // loop_header
      %s7 = sphi 0, %s11
      %p8 = scmp.ge.s32.totalorder %s7, 4
      %s17 = sphi 0, %s19
      %s20 = sphi 0, %s17
      %s21 = sphi 0, %s20
      %s37 = sphi 0, %s21
      %s43 = sphi 0, %s45
      %s46 = sphi 0, %s43
      %s47 = sphi 0, %s46
      %s63 = sphi 0, %s47
    $region4: #{body_forward.7} parent=1 // loop_header_branch
      %10 = sbr.rel (%p8) target = $region8
    $region5: #{body_forward.7} parent=1 // loop_body
      %s12 = ssub.s32 %s7, 1
      %s13 = ssub.s32 %s7, 2
      %s14 = sadd.s32 %s7, 1
      %s15 = ssub.s32 %s7, %s14
      %p16 = scmp.eq.s32.totalorder %s15, 0
      %s18 = sadd.s32 %s17, 1
      %s19 = scalar_select %p16, %s17, %s18
      %p22 = pneg %p16
      %p23 = scmp.eq.s32.totalorder %s7, 1
      %p24 = por %p22, %p23
      %p25 = scmp.ne.s32.totalorder %s17, %s20
      %p26 = scmp.eq.s32.totalorder %s7, 0
      %p27 = por %p25, %p26
      %p28 = scmp.ne.s32.totalorder %s17, %s20
      %p29 = scmp.eq.s32.totalorder %s12, 1
      %p30 = por %p28, %p29
      %p31 = scmp.ne.s32.totalorder %s20, %s21
      %p32 = scmp.eq.s32.totalorder %s12, 0
      %p33 = por %p31, %p32
      %p34 = scmp.ne.s32.totalorder %s20, %s21
      %p35 = scmp.eq.s32.totalorder %s13, 1
      %p36 = por %p34, %p35
      %p38 = scmp.ne.s32.totalorder %s21, %s37
      %p39 = scmp.eq.s32.totalorder %s13, 0
      %p40 = por %p38, %p39
      %s41 = ssub.s32 %s7, %s14
      %p42 = scmp.eq.s32.totalorder %s41, 0
      %s44 = sadd.s32 %s43, 1
      %s45 = scalar_select %p42, %s43, %s44
      %p48 = pneg %p42
      %p49 = scmp.eq.s32.totalorder %s7, 1
      %p50 = por %p48, %p49
      %p51 = scmp.ne.s32.totalorder %s43, %s46
      %p52 = scmp.eq.s32.totalorder %s7, 0
      %p53 = por %p51, %p52
      %p54 = scmp.ne.s32.totalorder %s43, %s46
      %p55 = scmp.eq.s32.totalorder %s12, 1
      %p56 = por %p54, %p55
      %p57 = scmp.ne.s32.totalorder %s46, %s47
      %p58 = scmp.eq.s32.totalorder %s12, 0
      %p59 = por %p57, %p58
      %p60 = scmp.ne.s32.totalorder %s46, %s47
      %p61 = scmp.eq.s32.totalorder %s13, 1
      %p62 = por %p60, %p61
      %p64 = scmp.ne.s32.totalorder %s47, %s63
      %p65 = scmp.eq.s32.totalorder %s13, 0
      %p66 = por %p64, %p65
      %p67 = scmp.le.s32.totalorder 1, %s7
      %p68 = scmp.lt.s32.totalorder %s7, 3
      %p69 = pnand %p67, %p68
      %p70 = pneg %p69
      // Predicated region
      $region9: #{body_forward.7} parent=5 // pred_check
        _
      $region10: #{body_forward.7} parent=5 // pred_check_branch
        %72 = sbr.rel (%p69) target = $region12
      $region11: #{body_forward.7} parent=5 // pred_region
        %s73 = ssub.s32 %s7, 1
      $region12: #{body_forward.7} parent=5 // pred_fallthru
        _
      %p74 = scmp.lt.s32.totalorder %s7, 2
      // Predicated region
      $region13: #{body_forward.7} parent=5 // pred_check
        %p75 = pneg %p74
      $region14: #{body_forward.7} parent=5 // pred_check_branch
        %77 = sbr.rel (%p75) target = $region16
      $region15: #{body_forward.7} parent=5 // pred_region
        // Predicated region
        $region17: #{body_forward.7} parent=15 // pred_check
          %p78 = pneg %p27
        $region18: #{body_forward.7} parent=15 // pred_check_branch
          %80 = sbr.rel (%p78) target = $region20
        $region19: #{body_forward.7} parent=15 // pred_region
          %s81 = sand.u32 %s17, 1
          %s82 = sand.u32 %s17, 1
          %s83 = smul.addr %s82, 384
          %s84 = scalar_lea.vmem [#allocation2], %s83
          %s85 = smul.u32 4, %s7
          %s86 = smul.addr %s85, 8
          %s87 = smul.addr %s86, 4
          %s88 = scalar_lea.vmem %s0, %s87
          // Predicated region
          $region21: #{body_forward.7} parent=19 // pred_check
            _
          $region22: #{body_forward.7} parent=19 // pred_check_branch
            %90 = sbr.rel (0) target = $region24
          $region23: #{body_forward.7} parent=19 // pred_region
            // Predicated region
            $region25: #{body_forward.7} parent=23 // pred_check
              _
            $region26: #{body_forward.7} parent=23 // pred_check_branch
              %92 = sbr.rel target = $region28
            $region27: #{body_forward.7} parent=23 // pred_region
              // Predicated region
              $region40: #{body_forward.7} parent=27 // pred_check
                _
              $region41: #{body_forward.7} parent=27 // pred_check_branch
                %297 = sbr.rel (0) target = $region43
              $region42: #{body_forward.7} parent=27 // pred_region
                loop: start=0, step=1, limit=1
                $region44: #{body_forward.7} parent=42 // loop_pre_header
                  _
                $region45: #{body_forward.7} parent=42 // loop_header
                  %s299 = sphi 0, %s303
                  %p300 = scmp.ge.s32.totalorder %s299, 1
                  %s304 = sphi %s88, %s88
                  %s305 = sphi %s84, %s84
                $region46: #{body_forward.7} parent=42 // loop_header_branch
                  %302 = sbr.rel (%p300) target = $region50
                $region47: #{body_forward.7} parent=42 // loop_body
                  _
                $region48: #{body_forward.7} parent=42 // loop_footer
                  %s303 = sadd.s32 1, %s299
                $region49: #{body_forward.7} parent=42 // loop_footer_branch
                  %298 = sbr.rel target = $region45
                $region50: #{body_forward.7} parent=42 // loop_exit
                  _
                loop: start=0, step=1, limit=1
                $region51: #{body_forward.7} parent=42 // loop_pre_header
                  _
                $region52: #{body_forward.7} parent=42 // loop_header
                  %s308 = sphi 0, %s312
                  %p309 = scmp.ge.s32.totalorder %s308, 1
                  %s313 = sphi %s88, %s88
                  %s314 = sphi %s84, %s84
                $region53: #{body_forward.7} parent=42 // loop_header_branch
                  %311 = sbr.rel (%p309) target = $region57
                $region54: #{body_forward.7} parent=42 // loop_body
                  %v315 = vld [vmem:[%s313] sm:$0xf]
                  %316 = vst [vmem:[%s314] sm:$0xf] %v315
                  %v317 = vld [vmem:[%s313 + $0x4] sm:$0xf]
                  %318 = vst [vmem:[%s314 + $0x4] sm:$0xf] %v317
                  %v319 = vld [vmem:[%s313 + $0x8] sm:$0xf]
                  %320 = vst [vmem:[%s314 + $0x8] sm:$0xf] %v319
                  %v321 = vld [vmem:[%s313 + $0xc] sm:$0xf]
                  %322 = vst [vmem:[%s314 + $0xc] sm:$0xf] %v321
                  %v323 = vld [vmem:[%s313 + $0x10] sm:$0xf]
                  %324 = vst [vmem:[%s314 + $0x10] sm:$0xf] %v323
                  %v325 = vld [vmem:[%s313 + $0x14] sm:$0xf]
                  %326 = vst [vmem:[%s314 + $0x14] sm:$0xf] %v325
                  %v327 = vld [vmem:[%s313 + $0x18] sm:$0xf]
                  %328 = vst [vmem:[%s314 + $0x18] sm:$0xf] %v327
                  %v329 = vld [vmem:[%s313 + $0x1c] sm:$0xf]
                  %330 = vst [vmem:[%s314 + $0x1c] sm:$0xf] %v329
                  %v331 = vld [vmem:[%s313 + $0x20] sm:$0xf]
                  %332 = vst [vmem:[%s314 + $0x20] sm:$0xf] %v331
                  %v333 = vld [vmem:[%s313 + $0x24] sm:$0xf]
                  %334 = vst [vmem:[%s314 + $0x24] sm:$0xf] %v333
                  %v335 = vld [vmem:[%s313 + $0x28] sm:$0xf]
                  %336 = vst [vmem:[%s314 + $0x28] sm:$0xf] %v335
                  %v337 = vld [vmem:[%s313 + $0x2c] sm:$0xf]
                  %338 = vst [vmem:[%s314 + $0x2c] sm:$0xf] %v337
                  %v339 = vld [vmem:[%s313 + $0x30] sm:$0xf]
                  %340 = vst [vmem:[%s314 + $0x30] sm:$0xf] %v339
                  %v341 = vld [vmem:[%s313 + $0x34] sm:$0xf]
                  %342 = vst [vmem:[%s314 + $0x34] sm:$0xf] %v341
                  %v343 = vld [vmem:[%s313 + $0x38] sm:$0xf]
                  %344 = vst [vmem:[%s314 + $0x38] sm:$0xf] %v343
                  %v345 = vld [vmem:[%s313 + $0x3c] sm:$0xf]
                  %346 = vst [vmem:[%s314 + $0x3c] sm:$0xf] %v345
                  %v347 = vld [vmem:[%s313 + $0x40] sm:$0xf]
                  %348 = vst [vmem:[%s314 + $0x40] sm:$0xf] %v347
                  %v349 = vld [vmem:[%s313 + $0x44] sm:$0xf]
                  %350 = vst [vmem:[%s314 + $0x44] sm:$0xf] %v349
                  %v351 = vld [vmem:[%s313 + $0x48] sm:$0xf]
                  %352 = vst [vmem:[%s314 + $0x48] sm:$0xf] %v351
                  %v353 = vld [vmem:[%s313 + $0x4c] sm:$0xf]
                  %354 = vst [vmem:[%s314 + $0x4c] sm:$0xf] %v353
                  %v355 = vld [vmem:[%s313 + $0x50] sm:$0xf]
                  %356 = vst [vmem:[%s314 + $0x50] sm:$0xf] %v355
                  %v357 = vld [vmem:[%s313 + $0x54] sm:$0xf]
                  %358 = vst [vmem:[%s314 + $0x54] sm:$0xf] %v357
                  %v359 = vld [vmem:[%s313 + $0x58] sm:$0xf]
                  %360 = vst [vmem:[%s314 + $0x58] sm:$0xf] %v359
                  %v361 = vld [vmem:[%s313 + $0x5c] sm:$0xf]
                  %362 = vst [vmem:[%s314 + $0x5c] sm:$0xf] %v361
                  %v363 = vld [vmem:[%s313 + $0x60] sm:$0xf]
                  %364 = vst [vmem:[%s314 + $0x60] sm:$0xf] %v363
                  %v365 = vld [vmem:[%s313 + $0x64] sm:$0xf]
                  %366 = vst [vmem:[%s314 + $0x64] sm:$0xf] %v365
                  %v367 = vld [vmem:[%s313 + $0x68] sm:$0xf]
                  %368 = vst [vmem:[%s314 + $0x68] sm:$0xf] %v367
                  %v369 = vld [vmem:[%s313 + $0x6c] sm:$0xf]
                  %370 = vst [vmem:[%s314 + $0x6c] sm:$0xf] %v369
                  %v371 = vld [vmem:[%s313 + $0x70] sm:$0xf]
                  %372 = vst [vmem:[%s314 + $0x70] sm:$0xf] %v371
                  %v373 = vld [vmem:[%s313 + $0x74] sm:$0xf]
                  %374 = vst [vmem:[%s314 + $0x74] sm:$0xf] %v373
                  %v375 = vld [vmem:[%s313 + $0x78] sm:$0xf]
                  %376 = vst [vmem:[%s314 + $0x78] sm:$0xf] %v375
                  %v377 = vld [vmem:[%s313 + $0x7c] sm:$0xf]
                  %378 = vst [vmem:[%s314 + $0x7c] sm:$0xf] %v377
                  %v379 = vld [vmem:[%s313 + $0x100] sm:$0xf]
                  %380 = vst [vmem:[%s314 + $0x80] sm:$0xf] %v379
                  %v381 = vld [vmem:[%s313 + $0x104] sm:$0xf]
                  %382 = vst [vmem:[%s314 + $0x84] sm:$0xf] %v381
                  %v383 = vld [vmem:[%s313 + $0x108] sm:$0xf]
                  %384 = vst [vmem:[%s314 + $0x88] sm:$0xf] %v383
                  %v385 = vld [vmem:[%s313 + $0x10c] sm:$0xf]
                  %386 = vst [vmem:[%s314 + $0x8c] sm:$0xf] %v385
                  %v387 = vld [vmem:[%s313 + $0x110] sm:$0xf]
                  %388 = vst [vmem:[%s314 + $0x90] sm:$0xf] %v387
                  %v389 = vld [vmem:[%s313 + $0x114] sm:$0xf]
                  %390 = vst [vmem:[%s314 + $0x94] sm:$0xf] %v389
                  %v391 = vld [vmem:[%s313 + $0x118] sm:$0xf]
                  %392 = vst [vmem:[%s314 + $0x98] sm:$0xf] %v391
                  %v393 = vld [vmem:[%s313 + $0x11c] sm:$0xf]
                  %394 = vst [vmem:[%s314 + $0x9c] sm:$0xf] %v393
                  %v395 = vld [vmem:[%s313 + $0x120] sm:$0xf]
                  %396 = vst [vmem:[%s314 + $0xa0] sm:$0xf] %v395
                  %v397 = vld [vmem:[%s313 + $0x124] sm:$0xf]
                  %398 = vst [vmem:[%s314 + $0xa4] sm:$0xf] %v397
                  %v399 = vld [vmem:[%s313 + $0x128] sm:$0xf]
                  %400 = vst [vmem:[%s314 + $0xa8] sm:$0xf] %v399
                  %v401 = vld [vmem:[%s313 + $0x12c] sm:$0xf]
                  %402 = vst [vmem:[%s314 + $0xac] sm:$0xf] %v401
                  %v403 = vld [vmem:[%s313 + $0x130] sm:$0xf]
                  %404 = vst [vmem:[%s314 + $0xb0] sm:$0xf] %v403
                  %v405 = vld [vmem:[%s313 + $0x134] sm:$0xf]
                  %406 = vst [vmem:[%s314 + $0xb4] sm:$0xf] %v405
                  %v407 = vld [vmem:[%s313 + $0x138] sm:$0xf]
                  %408 = vst [vmem:[%s314 + $0xb8] sm:$0xf] %v407
                  %v409 = vld [vmem:[%s313 + $0x13c] sm:$0xf]
                  %410 = vst [vmem:[%s314 + $0xbc] sm:$0xf] %v409
                  %v411 = vld [vmem:[%s313 + $0x140] sm:$0xf]
                  %412 = vst [vmem:[%s314 + $0xc0] sm:$0xf] %v411
                  %v413 = vld [vmem:[%s313 + $0x144] sm:$0xf]
                  %414 = vst [vmem:[%s314 + $0xc4] sm:$0xf] %v413
                  %v415 = vld [vmem:[%s313 + $0x148] sm:$0xf]
                  %416 = vst [vmem:[%s314 + $0xc8] sm:$0xf] %v415
                  %v417 = vld [vmem:[%s313 + $0x14c] sm:$0xf]
                  %418 = vst [vmem:[%s314 + $0xcc] sm:$0xf] %v417
                  %v419 = vld [vmem:[%s313 + $0x150] sm:$0xf]
                  %420 = vst [vmem:[%s314 + $0xd0] sm:$0xf] %v419
                  %v421 = vld [vmem:[%s313 + $0x154] sm:$0xf]
                  %422 = vst [vmem:[%s314 + $0xd4] sm:$0xf] %v421
                  %v423 = vld [vmem:[%s313 + $0x158] sm:$0xf]
                  %424 = vst [vmem:[%s314 + $0xd8] sm:$0xf] %v423
                  %v425 = vld [vmem:[%s313 + $0x15c] sm:$0xf]
                  %426 = vst [vmem:[%s314 + $0xdc] sm:$0xf] %v425
                  %v427 = vld [vmem:[%s313 + $0x160] sm:$0xf]
                  %428 = vst [vmem:[%s314 + $0xe0] sm:$0xf] %v427
                  %v429 = vld [vmem:[%s313 + $0x164] sm:$0xf]
                  %430 = vst [vmem:[%s314 + $0xe4] sm:$0xf] %v429
                  %v431 = vld [vmem:[%s313 + $0x168] sm:$0xf]
                  %432 = vst [vmem:[%s314 + $0xe8] sm:$0xf] %v431
                  %v433 = vld [vmem:[%s313 + $0x16c] sm:$0xf]
                  %434 = vst [vmem:[%s314 + $0xec] sm:$0xf] %v433
                  %v435 = vld [vmem:[%s313 + $0x170] sm:$0xf]
                  %436 = vst [vmem:[%s314 + $0xf0] sm:$0xf] %v435
                  %v437 = vld [vmem:[%s313 + $0x174] sm:$0xf]
                  %438 = vst [vmem:[%s314 + $0xf4] sm:$0xf] %v437
                  %v439 = vld [vmem:[%s313 + $0x178] sm:$0xf]
                  %440 = vst [vmem:[%s314 + $0xf8] sm:$0xf] %v439
                  %v441 = vld [vmem:[%s313 + $0x17c] sm:$0xf]
                  %442 = vst [vmem:[%s314 + $0xfc] sm:$0xf] %v441
                  %v443 = vld [vmem:[%s313 + $0x200] sm:$0xf]
                  %444 = vst [vmem:[%s314 + $0x100] sm:$0xf] %v443
                  %v445 = vld [vmem:[%s313 + $0x204] sm:$0xf]
                  %446 = vst [vmem:[%s314 + $0x104] sm:$0xf] %v445
                  %v447 = vld [vmem:[%s313 + $0x208] sm:$0xf]
                  %448 = vst [vmem:[%s314 + $0x108] sm:$0xf] %v447
                  %v449 = vld [vmem:[%s313 + $0x20c] sm:$0xf]
                  %450 = vst [vmem:[%s314 + $0x10c] sm:$0xf] %v449
                  %v451 = vld [vmem:[%s313 + $0x210] sm:$0xf]
                  %452 = vst [vmem:[%s314 + $0x110] sm:$0xf] %v451
                  %v453 = vld [vmem:[%s313 + $0x214] sm:$0xf]
                  %454 = vst [vmem:[%s314 + $0x114] sm:$0xf] %v453
                  %v455 = vld [vmem:[%s313 + $0x218] sm:$0xf]
                  %456 = vst [vmem:[%s314 + $0x118] sm:$0xf] %v455
                  %v457 = vld [vmem:[%s313 + $0x21c] sm:$0xf]
                  %458 = vst [vmem:[%s314 + $0x11c] sm:$0xf] %v457
                  %v459 = vld [vmem:[%s313 + $0x220] sm:$0xf]
                  %460 = vst [vmem:[%s314 + $0x120] sm:$0xf] %v459
                  %v461 = vld [vmem:[%s313 + $0x224] sm:$0xf]
                  %462 = vst [vmem:[%s314 + $0x124] sm:$0xf] %v461
                  %v463 = vld [vmem:[%s313 + $0x228] sm:$0xf]
                  %464 = vst [vmem:[%s314 + $0x128] sm:$0xf] %v463
                  %v465 = vld [vmem:[%s313 + $0x22c] sm:$0xf]
                  %466 = vst [vmem:[%s314 + $0x12c] sm:$0xf] %v465
                  %v467 = vld [vmem:[%s313 + $0x230] sm:$0xf]
                  %468 = vst [vmem:[%s314 + $0x130] sm:$0xf] %v467
                  %v469 = vld [vmem:[%s313 + $0x234] sm:$0xf]
                  %470 = vst [vmem:[%s314 + $0x134] sm:$0xf] %v469
                  %v471 = vld [vmem:[%s313 + $0x238] sm:$0xf]
                  %472 = vst [vmem:[%s314 + $0x138] sm:$0xf] %v471
                  %v473 = vld [vmem:[%s313 + $0x23c] sm:$0xf]
                  %474 = vst [vmem:[%s314 + $0x13c] sm:$0xf] %v473
                  %v475 = vld [vmem:[%s313 + $0x240] sm:$0xf]
                  %476 = vst [vmem:[%s314 + $0x140] sm:$0xf] %v475
                  %v477 = vld [vmem:[%s313 + $0x244] sm:$0xf]
                  %478 = vst [vmem:[%s314 + $0x144] sm:$0xf] %v477
                  %v479 = vld [vmem:[%s313 + $0x248] sm:$0xf]
                  %480 = vst [vmem:[%s314 + $0x148] sm:$0xf] %v479
                  %v481 = vld [vmem:[%s313 + $0x24c] sm:$0xf]
                  %482 = vst [vmem:[%s314 + $0x14c] sm:$0xf] %v481
                  %v483 = vld [vmem:[%s313 + $0x250] sm:$0xf]
                  %484 = vst [vmem:[%s314 + $0x150] sm:$0xf] %v483
                  %v485 = vld [vmem:[%s313 + $0x254] sm:$0xf]
                  %486 = vst [vmem:[%s314 + $0x154] sm:$0xf] %v485
                  %v487 = vld [vmem:[%s313 + $0x258] sm:$0xf]
                  %488 = vst [vmem:[%s314 + $0x158] sm:$0xf] %v487
                  %v489 = vld [vmem:[%s313 + $0x25c] sm:$0xf]
                  %490 = vst [vmem:[%s314 + $0x15c] sm:$0xf] %v489
                  %v491 = vld [vmem:[%s313 + $0x260] sm:$0xf]
                  %492 = vst [vmem:[%s314 + $0x160] sm:$0xf] %v491
                  %v493 = vld [vmem:[%s313 + $0x264] sm:$0xf]
                  %494 = vst [vmem:[%s314 + $0x164] sm:$0xf] %v493
                  %v495 = vld [vmem:[%s313 + $0x268] sm:$0xf]
                  %496 = vst [vmem:[%s314 + $0x168] sm:$0xf] %v495
                  %v497 = vld [vmem:[%s313 + $0x26c] sm:$0xf]
                  %498 = vst [vmem:[%s314 + $0x16c] sm:$0xf] %v497
                  %v499 = vld [vmem:[%s313 + $0x270] sm:$0xf]
                  %500 = vst [vmem:[%s314 + $0x170] sm:$0xf] %v499
                  %v501 = vld [vmem:[%s313 + $0x274] sm:$0xf]
                  %502 = vst [vmem:[%s314 + $0x174] sm:$0xf] %v501
                  %v503 = vld [vmem:[%s313 + $0x278] sm:$0xf]
                  %504 = vst [vmem:[%s314 + $0x178] sm:$0xf] %v503
                  %v505 = vld [vmem:[%s313 + $0x27c] sm:$0xf]
                  %506 = vst [vmem:[%s314 + $0x17c] sm:$0xf] %v505
                $region55: #{body_forward.7} parent=42 // loop_footer
                  %s312 = sadd.s32 1, %s308
                $region56: #{body_forward.7} parent=42 // loop_footer_branch
                  %307 = sbr.rel target = $region52
                $region57: #{body_forward.7} parent=42 // loop_exit
                  _
              $region43: #{body_forward.7} parent=27 // pred_fallthru
                _
            $region28: #{body_forward.7} parent=23 // pred_fallthru
              _
            // Predicated region
            $region29: #{body_forward.7} parent=23 // pred_check
              _
            $region30: #{body_forward.7} parent=23 // pred_check_branch
              %94 = sbr.rel (0) target = $region32
            $region31: #{body_forward.7} parent=23 // pred_region
              loop: start=0, step=1, limit=1
              $region33: #{body_forward.7} parent=31 // loop_pre_header
                _
              $region34: #{body_forward.7} parent=31 // loop_header
                %s97 = sphi 0, %s101
                %p98 = scmp.ge.s32.totalorder %s97, 1
                %s102 = sphi %s88, %s88
                %s103 = sphi %s84, %s84
              $region35: #{body_forward.7} parent=31 // loop_header_branch
                %100 = sbr.rel (%p98) target = $region39
              $region36: #{body_forward.7} parent=31 // loop_body
                %v104 = vld [vmem:[%s102] sm:$0xf]
                %105 = vst [vmem:[%s103] sm:$0xf] %v104
                %v106 = vld [vmem:[%s102 + $0x4] sm:$0xf]
                %107 = vst [vmem:[%s103 + $0x4] sm:$0xf] %v106
                %v108 = vld [vmem:[%s102 + $0x8] sm:$0xf]
                %109 = vst [vmem:[%s103 + $0x8] sm:$0xf] %v108
                %v110 = vld [vmem:[%s102 + $0xc] sm:$0xf]
                %111 = vst [vmem:[%s103 + $0xc] sm:$0xf] %v110
                %v112 = vld [vmem:[%s102 + $0x10] sm:$0xf]
                %113 = vst [vmem:[%s103 + $0x10] sm:$0xf] %v112
                %v114 = vld [vmem:[%s102 + $0x14] sm:$0xf]
                %115 = vst [vmem:[%s103 + $0x14] sm:$0xf] %v114
                %v116 = vld [vmem:[%s102 + $0x18] sm:$0xf]
                %117 = vst [vmem:[%s103 + $0x18] sm:$0xf] %v116
                %v118 = vld [vmem:[%s102 + $0x1c] sm:$0xf]
                %119 = vst [vmem:[%s103 + $0x1c] sm:$0xf] %v118
                %v120 = vld [vmem:[%s102 + $0x20] sm:$0xf]
                %121 = vst [vmem:[%s103 + $0x20] sm:$0xf] %v120
                %v122 = vld [vmem:[%s102 + $0x24] sm:$0xf]
                %123 = vst [vmem:[%s103 + $0x24] sm:$0xf] %v122
                %v124 = vld [vmem:[%s102 + $0x28] sm:$0xf]
                %125 = vst [vmem:[%s103 + $0x28] sm:$0xf] %v124
                %v126 = vld [vmem:[%s102 + $0x2c] sm:$0xf]
                %127 = vst [vmem:[%s103 + $0x2c] sm:$0xf] %v126
                %v128 = vld [vmem:[%s102 + $0x30] sm:$0xf]
                %129 = vst [vmem:[%s103 + $0x30] sm:$0xf] %v128
                %v130 = vld [vmem:[%s102 + $0x34] sm:$0xf]
                %131 = vst [vmem:[%s103 + $0x34] sm:$0xf] %v130
                %v132 = vld [vmem:[%s102 + $0x38] sm:$0xf]
                %133 = vst [vmem:[%s103 + $0x38] sm:$0xf] %v132
                %v134 = vld [vmem:[%s102 + $0x3c] sm:$0xf]
                %135 = vst [vmem:[%s103 + $0x3c] sm:$0xf] %v134
                %v136 = vld [vmem:[%s102 + $0x40] sm:$0xf]
                %137 = vst [vmem:[%s103 + $0x40] sm:$0xf] %v136
                %v138 = vld [vmem:[%s102 + $0x44] sm:$0xf]
                %139 = vst [vmem:[%s103 + $0x44] sm:$0xf] %v138
                %v140 = vld [vmem:[%s102 + $0x48] sm:$0xf]
                %141 = vst [vmem:[%s103 + $0x48] sm:$0xf] %v140
                %v142 = vld [vmem:[%s102 + $0x4c] sm:$0xf]
                %143 = vst [vmem:[%s103 + $0x4c] sm:$0xf] %v142
                %v144 = vld [vmem:[%s102 + $0x50] sm:$0xf]
                %145 = vst [vmem:[%s103 + $0x50] sm:$0xf] %v144
                %v146 = vld [vmem:[%s102 + $0x54] sm:$0xf]
                %147 = vst [vmem:[%s103 + $0x54] sm:$0xf] %v146
                %v148 = vld [vmem:[%s102 + $0x58] sm:$0xf]
                %149 = vst [vmem:[%s103 + $0x58] sm:$0xf] %v148
                %v150 = vld [vmem:[%s102 + $0x5c] sm:$0xf]
                %151 = vst [vmem:[%s103 + $0x5c] sm:$0xf] %v150
                %v152 = vld [vmem:[%s102 + $0x60] sm:$0xf]
                %153 = vst [vmem:[%s103 + $0x60] sm:$0xf] %v152
                %v154 = vld [vmem:[%s102 + $0x64] sm:$0xf]
                %155 = vst [vmem:[%s103 + $0x64] sm:$0xf] %v154
                %v156 = vld [vmem:[%s102 + $0x68] sm:$0xf]
                %157 = vst [vmem:[%s103 + $0x68] sm:$0xf] %v156
                %v158 = vld [vmem:[%s102 + $0x6c] sm:$0xf]
                %159 = vst [vmem:[%s103 + $0x6c] sm:$0xf] %v158
                %v160 = vld [vmem:[%s102 + $0x70] sm:$0xf]
                %161 = vst [vmem:[%s103 + $0x70] sm:$0xf] %v160
                %v162 = vld [vmem:[%s102 + $0x74] sm:$0xf]
                %163 = vst [vmem:[%s103 + $0x74] sm:$0xf] %v162
                %v164 = vld [vmem:[%s102 + $0x78] sm:$0xf]
                %165 = vst [vmem:[%s103 + $0x78] sm:$0xf] %v164
                %v166 = vld [vmem:[%s102 + $0x7c] sm:$0xf]
                %167 = vst [vmem:[%s103 + $0x7c] sm:$0xf] %v166
                %v168 = vld [vmem:[%s102 + $0x100] sm:$0xf]
                %169 = vst [vmem:[%s103 + $0x80] sm:$0xf] %v168
                %v170 = vld [vmem:[%s102 + $0x104] sm:$0xf]
                %171 = vst [vmem:[%s103 + $0x84] sm:$0xf] %v170
                %v172 = vld [vmem:[%s102 + $0x108] sm:$0xf]
                %173 = vst [vmem:[%s103 + $0x88] sm:$0xf] %v172
                %v174 = vld [vmem:[%s102 + $0x10c] sm:$0xf]
                %175 = vst [vmem:[%s103 + $0x8c] sm:$0xf] %v174
                %v176 = vld [vmem:[%s102 + $0x110] sm:$0xf]
                %177 = vst [vmem:[%s103 + $0x90] sm:$0xf] %v176
                %v178 = vld [vmem:[%s102 + $0x114] sm:$0xf]
                %179 = vst [vmem:[%s103 + $0x94] sm:$0xf] %v178
                %v180 = vld [vmem:[%s102 + $0x118] sm:$0xf]
                %181 = vst [vmem:[%s103 + $0x98] sm:$0xf] %v180
                %v182 = vld [vmem:[%s102 + $0x11c] sm:$0xf]
                %183 = vst [vmem:[%s103 + $0x9c] sm:$0xf] %v182
                %v184 = vld [vmem:[%s102 + $0x120] sm:$0xf]
                %185 = vst [vmem:[%s103 + $0xa0] sm:$0xf] %v184
                %v186 = vld [vmem:[%s102 + $0x124] sm:$0xf]
                %187 = vst [vmem:[%s103 + $0xa4] sm:$0xf] %v186
                %v188 = vld [vmem:[%s102 + $0x128] sm:$0xf]
                %189 = vst [vmem:[%s103 + $0xa8] sm:$0xf] %v188
                %v190 = vld [vmem:[%s102 + $0x12c] sm:$0xf]
                %191 = vst [vmem:[%s103 + $0xac] sm:$0xf] %v190
                %v192 = vld [vmem:[%s102 + $0x130] sm:$0xf]
                %193 = vst [vmem:[%s103 + $0xb0] sm:$0xf] %v192
                %v194 = vld [vmem:[%s102 + $0x134] sm:$0xf]
                %195 = vst [vmem:[%s103 + $0xb4] sm:$0xf] %v194
                %v196 = vld [vmem:[%s102 + $0x138] sm:$0xf]
                %197 = vst [vmem:[%s103 + $0xb8] sm:$0xf] %v196
                %v198 = vld [vmem:[%s102 + $0x13c] sm:$0xf]
                %199 = vst [vmem:[%s103 + $0xbc] sm:$0xf] %v198
                %v200 = vld [vmem:[%s102 + $0x140] sm:$0xf]
                %201 = vst [vmem:[%s103 + $0xc0] sm:$0xf] %v200
                %v202 = vld [vmem:[%s102 + $0x144] sm:$0xf]
                %203 = vst [vmem:[%s103 + $0xc4] sm:$0xf] %v202
                %v204 = vld [vmem:[%s102 + $0x148] sm:$0xf]
                %205 = vst [vmem:[%s103 + $0xc8] sm:$0xf] %v204
                %v206 = vld [vmem:[%s102 + $0x14c] sm:$0xf]
                %207 = vst [vmem:[%s103 + $0xcc] sm:$0xf] %v206
                %v208 = vld [vmem:[%s102 + $0x150] sm:$0xf]
                %209 = vst [vmem:[%s103 + $0xd0] sm:$0xf] %v208
                %v210 = vld [vmem:[%s102 + $0x154] sm:$0xf]
                %211 = vst [vmem:[%s103 + $0xd4] sm:$0xf] %v210
                %v212 = vld [vmem:[%s102 + $0x158] sm:$0xf]
                %213 = vst [vmem:[%s103 + $0xd8] sm:$0xf] %v212
                %v214 = vld [vmem:[%s102 + $0x15c] sm:$0xf]
                %215 = vst [vmem:[%s103 + $0xdc] sm:$0xf] %v214
                %v216 = vld [vmem:[%s102 + $0x160] sm:$0xf]
                %217 = vst [vmem:[%s103 + $0xe0] sm:$0xf] %v216
                %v218 = vld [vmem:[%s102 + $0x164] sm:$0xf]
                %219 = vst [vmem:[%s103 + $0xe4] sm:$0xf] %v218
                %v220 = vld [vmem:[%s102 + $0x168] sm:$0xf]
                %221 = vst [vmem:[%s103 + $0xe8] sm:$0xf] %v220
                %v222 = vld [vmem:[%s102 + $0x16c] sm:$0xf]
                %223 = vst [vmem:[%s103 + $0xec] sm:$0xf] %v222
                %v224 = vld [vmem:[%s102 + $0x170] sm:$0xf]
                %225 = vst [vmem:[%s103 + $0xf0] sm:$0xf] %v224
                %v226 = vld [vmem:[%s102 + $0x174] sm:$0xf]
                %227 = vst [vmem:[%s103 + $0xf4] sm:$0xf] %v226
                %v228 = vld [vmem:[%s102 + $0x178] sm:$0xf]
                %229 = vst [vmem:[%s103 + $0xf8] sm:$0xf] %v228
                %v230 = vld [vmem:[%s102 + $0x17c] sm:$0xf]
                %231 = vst [vmem:[%s103 + $0xfc] sm:$0xf] %v230
                %v232 = vld [vmem:[%s102 + $0x200] sm:$0xf]
                %233 = vst [vmem:[%s103 + $0x100] sm:$0xf] %v232
                %v234 = vld [vmem:[%s102 + $0x204] sm:$0xf]
                %235 = vst [vmem:[%s103 + $0x104] sm:$0xf] %v234
                %v236 = vld [vmem:[%s102 + $0x208] sm:$0xf]
                %237 = vst [vmem:[%s103 + $0x108] sm:$0xf] %v236
                %v238 = vld [vmem:[%s102 + $0x20c] sm:$0xf]
                %239 = vst [vmem:[%s103 + $0x10c] sm:$0xf] %v238
                %v240 = vld [vmem:[%s102 + $0x210] sm:$0xf]
                %241 = vst [vmem:[%s103 + $0x110] sm:$0xf] %v240
                %v242 = vld [vmem:[%s102 + $0x214] sm:$0xf]
                %243 = vst [vmem:[%s103 + $0x114] sm:$0xf] %v242
                %v244 = vld [vmem:[%s102 + $0x218] sm:$0xf]
                %245 = vst [vmem:[%s103 + $0x118] sm:$0xf] %v244
                %v246 = vld [vmem:[%s102 + $0x21c] sm:$0xf]
                %247 = vst [vmem:[%s103 + $0x11c] sm:$0xf] %v246
                %v248 = vld [vmem:[%s102 + $0x220] sm:$0xf]
                %249 = vst [vmem:[%s103 + $0x120] sm:$0xf] %v248
                %v250 = vld [vmem:[%s102 + $0x224] sm:$0xf]
                %251 = vst [vmem:[%s103 + $0x124] sm:$0xf] %v250
                %v252 = vld [vmem:[%s102 + $0x228] sm:$0xf]
                %253 = vst [vmem:[%s103 + $0x128] sm:$0xf] %v252
                %v254 = vld [vmem:[%s102 + $0x22c] sm:$0xf]
                %255 = vst [vmem:[%s103 + $0x12c] sm:$0xf] %v254
                %v256 = vld [vmem:[%s102 + $0x230] sm:$0xf]
                %257 = vst [vmem:[%s103 + $0x130] sm:$0xf] %v256
                %v258 = vld [vmem:[%s102 + $0x234] sm:$0xf]
                %259 = vst [vmem:[%s103 + $0x134] sm:$0xf] %v258
                %v260 = vld [vmem:[%s102 + $0x238] sm:$0xf]
                %261 = vst [vmem:[%s103 + $0x138] sm:$0xf] %v260
                %v262 = vld [vmem:[%s102 + $0x23c] sm:$0xf]
                %263 = vst [vmem:[%s103 + $0x13c] sm:$0xf] %v262
                %v264 = vld [vmem:[%s102 + $0x240] sm:$0xf]
                %265 = vst [vmem:[%s103 + $0x140] sm:$0xf] %v264
                %v266 = vld [vmem:[%s102 + $0x244] sm:$0xf]
                %267 = vst [vmem:[%s103 + $0x144] sm:$0xf] %v266
                %v268 = vld [vmem:[%s102 + $0x248] sm:$0xf]
                %269 = vst [vmem:[%s103 + $0x148] sm:$0xf] %v268
                %v270 = vld [vmem:[%s102 + $0x24c] sm:$0xf]
                %271 = vst [vmem:[%s103 + $0x14c] sm:$0xf] %v270
                %v272 = vld [vmem:[%s102 + $0x250] sm:$0xf]
                %273 = vst [vmem:[%s103 + $0x150] sm:$0xf] %v272
                %v274 = vld [vmem:[%s102 + $0x254] sm:$0xf]
                %275 = vst [vmem:[%s103 + $0x154] sm:$0xf] %v274
                %v276 = vld [vmem:[%s102 + $0x258] sm:$0xf]
                %277 = vst [vmem:[%s103 + $0x158] sm:$0xf] %v276
                %v278 = vld [vmem:[%s102 + $0x25c] sm:$0xf]
                %279 = vst [vmem:[%s103 + $0x15c] sm:$0xf] %v278
                %v280 = vld [vmem:[%s102 + $0x260] sm:$0xf]
                %281 = vst [vmem:[%s103 + $0x160] sm:$0xf] %v280
                %v282 = vld [vmem:[%s102 + $0x264] sm:$0xf]
                %283 = vst [vmem:[%s103 + $0x164] sm:$0xf] %v282
                %v284 = vld [vmem:[%s102 + $0x268] sm:$0xf]
                %285 = vst [vmem:[%s103 + $0x168] sm:$0xf] %v284
                %v286 = vld [vmem:[%s102 + $0x26c] sm:$0xf]
                %287 = vst [vmem:[%s103 + $0x16c] sm:$0xf] %v286
                %v288 = vld [vmem:[%s102 + $0x270] sm:$0xf]
                %289 = vst [vmem:[%s103 + $0x170] sm:$0xf] %v288
                %v290 = vld [vmem:[%s102 + $0x274] sm:$0xf]
                %291 = vst [vmem:[%s103 + $0x174] sm:$0xf] %v290
                %v292 = vld [vmem:[%s102 + $0x278] sm:$0xf]
                %293 = vst [vmem:[%s103 + $0x178] sm:$0xf] %v292
                %v294 = vld [vmem:[%s102 + $0x27c] sm:$0xf]
                %295 = vst [vmem:[%s103 + $0x17c] sm:$0xf] %v294
              $region37: #{body_forward.7} parent=31 // loop_footer
                %s101 = sadd.s32 1, %s97
              $region38: #{body_forward.7} parent=31 // loop_footer_branch
                %96 = sbr.rel target = $region34
              $region39: #{body_forward.7} parent=31 // loop_exit
                _
            $region32: #{body_forward.7} parent=23 // pred_fallthru
              _
          $region24: #{body_forward.7} parent=19 // pred_fallthru
            _
          %507 = vnop
        $region20: #{body_forward.7} parent=15 // pred_fallthru
          _
      $region16: #{body_forward.7} parent=5 // pred_fallthru
        _
      %p508 = scmp.le.s32.totalorder 1, %s7
      %p509 = scmp.lt.s32.totalorder %s7, 3
      %p510 = pnand %p508, %p509
      %p511 = pneg %p510
      // Predicated region
      $region58: #{body_forward.7} parent=5 // pred_check
        _
      $region59: #{body_forward.7} parent=5 // pred_check_branch
        %513 = sbr.rel (%p510) target = $region61
      $region60: #{body_forward.7} parent=5 // pred_region
        %s514 = ssub.s32 %s7, 1
        %s515 = sand.u32 %s20, 1
        %s516 = sand.u32 %s20, 1
        %s517 = smul.addr %s516, 384
        %s518 = scalar_lea.vmem [#allocation2], %s517
        // Predicated region
        $region62: #{body_forward.7} parent=60 // pred_check
          %p519 = pneg %p33
        $region63: #{body_forward.7} parent=60 // pred_check_branch
          %521 = sbr.rel (%p519) target = $region65
        $region64: #{body_forward.7} parent=60 // pred_region
          _
        $region65: #{body_forward.7} parent=60 // pred_fallthru
          _
        %s522 = sand.u32 %s20, 1
        %s523 = sand.u32 %s20, 1
        %s524 = smul.addr %s523, 384
        %s525 = scalar_lea.vmem [#allocation2], %s524
        %p526 = pneg %p33
        %p527 = pneg %p30
        %p528 = pneg %p59
        %p529 = pneg %p56
        %s530 = smul.u32 4, %s12
        %p531 = scmp.lt.s32.totalorder %s530, 7
        %s532 = scalar_select %p531, %s530, 7
        %s533 = smul.addr %s532, 8
        %s534 = smul.addr %s533, 4
        %s535 = scalar_lea.vmem %s1, %s534
        %s536 = smul.u32 4, %s12
        %s537 = smul.u32 4, %s12
        %p538 = scmp.lt.s32.totalorder %s537, 7
        %s539 = scalar_select %p538, %s537, 7
        %s540 = smul.addr %s539, 8
        %s541 = smul.addr %s540, 4
        %s542 = scalar_lea.vmem %s1, %s541
        %s543 = smul.u32 4, %s12
        %v545 = vld [vmem:[%s518] sm:$0xf]
        %v546 = vld [vmem:[%s518 + $0x4] sm:$0xf]
        %v547 = vld [vmem:[%s518 + $0x8] sm:$0xf]
        %v548 = vld [vmem:[%s518 + $0xc] sm:$0xf]
        %v549 = vld [vmem:[%s518 + $0x10] sm:$0xf]
        %v550 = vld [vmem:[%s518 + $0x14] sm:$0xf]
        %v551 = vld [vmem:[%s518 + $0x18] sm:$0xf]
        %v552 = vld [vmem:[%s518 + $0x1c] sm:$0xf]
        %v553 = vld [vmem:[%s518 + $0x20] sm:$0xf]
        %v554 = vld [vmem:[%s518 + $0x24] sm:$0xf]
        %v555 = vld [vmem:[%s518 + $0x28] sm:$0xf]
        %v556 = vld [vmem:[%s518 + $0x2c] sm:$0xf]
        %v557 = vld [vmem:[%s518 + $0x30] sm:$0xf]
        %v558 = vld [vmem:[%s518 + $0x34] sm:$0xf]
        %v559 = vld [vmem:[%s518 + $0x38] sm:$0xf]
        %v560 = vld [vmem:[%s518 + $0x3c] sm:$0xf]
        %v561 = vld [vmem:[%s518 + $0x40] sm:$0xf]
        %v562 = vld [vmem:[%s518 + $0x44] sm:$0xf]
        %v563 = vld [vmem:[%s518 + $0x48] sm:$0xf]
        %v564 = vld [vmem:[%s518 + $0x4c] sm:$0xf]
        %v565 = vld [vmem:[%s518 + $0x50] sm:$0xf]
        %v566 = vld [vmem:[%s518 + $0x54] sm:$0xf]
        %v567 = vld [vmem:[%s518 + $0x58] sm:$0xf]
        %v568 = vld [vmem:[%s518 + $0x5c] sm:$0xf]
        %v569 = vld [vmem:[%s518 + $0x60] sm:$0xf]
        %v570 = vld [vmem:[%s518 + $0x64] sm:$0xf]
        %v571 = vld [vmem:[%s518 + $0x68] sm:$0xf]
        %v572 = vld [vmem:[%s518 + $0x6c] sm:$0xf]
        %v573 = vld [vmem:[%s518 + $0x70] sm:$0xf]
        %v574 = vld [vmem:[%s518 + $0x74] sm:$0xf]
        %v575 = vld [vmem:[%s518 + $0x78] sm:$0xf]
        %v576 = vld [vmem:[%s518 + $0x7c] sm:$0xf]
        %s577 = scalar_lea.vmem %s518, 128 [#allocation2]
        %v578 = vld [vmem:[%s577] sm:$0xf]
        %v579 = vld [vmem:[%s577 + $0x4] sm:$0xf]
        %v580 = vld [vmem:[%s577 + $0x8] sm:$0xf]
        %v581 = vld [vmem:[%s577 + $0xc] sm:$0xf]
        %v582 = vld [vmem:[%s577 + $0x10] sm:$0xf]
        %v583 = vld [vmem:[%s577 + $0x14] sm:$0xf]
        %v584 = vld [vmem:[%s577 + $0x18] sm:$0xf]
        %v585 = vld [vmem:[%s577 + $0x1c] sm:$0xf]
        %v586 = vld [vmem:[%s577 + $0x20] sm:$0xf]
        %v587 = vld [vmem:[%s577 + $0x24] sm:$0xf]
        %v588 = vld [vmem:[%s577 + $0x28] sm:$0xf]
        %v589 = vld [vmem:[%s577 + $0x2c] sm:$0xf]
        %v590 = vld [vmem:[%s577 + $0x30] sm:$0xf]
        %v591 = vld [vmem:[%s577 + $0x34] sm:$0xf]
        %v592 = vld [vmem:[%s577 + $0x38] sm:$0xf]
        %v593 = vld [vmem:[%s577 + $0x3c] sm:$0xf]
        %v594 = vld [vmem:[%s577 + $0x40] sm:$0xf]
        %v595 = vld [vmem:[%s577 + $0x44] sm:$0xf]
        %v596 = vld [vmem:[%s577 + $0x48] sm:$0xf]
        %v597 = vld [vmem:[%s577 + $0x4c] sm:$0xf]
        %v598 = vld [vmem:[%s577 + $0x50] sm:$0xf]
        %v599 = vld [vmem:[%s577 + $0x54] sm:$0xf]
        %v600 = vld [vmem:[%s577 + $0x58] sm:$0xf]
        %v601 = vld [vmem:[%s577 + $0x5c] sm:$0xf]
        %v602 = vld [vmem:[%s577 + $0x60] sm:$0xf]
        %v603 = vld [vmem:[%s577 + $0x64] sm:$0xf]
        %v604 = vld [vmem:[%s577 + $0x68] sm:$0xf]
        %v605 = vld [vmem:[%s577 + $0x6c] sm:$0xf]
        %v606 = vld [vmem:[%s577 + $0x70] sm:$0xf]
        %v607 = vld [vmem:[%s577 + $0x74] sm:$0xf]
        %v608 = vld [vmem:[%s577 + $0x78] sm:$0xf]
        %v609 = vld [vmem:[%s577 + $0x7c] sm:$0xf]
        %s610 = scalar_lea.vmem %s518, 256 [#allocation2]
        %v611 = vld [vmem:[%s610] sm:$0xf]
        %v612 = vld [vmem:[%s610 + $0x4] sm:$0xf]
        %v613 = vld [vmem:[%s610 + $0x8] sm:$0xf]
        %v614 = vld [vmem:[%s610 + $0xc] sm:$0xf]
        %v615 = vld [vmem:[%s610 + $0x10] sm:$0xf]
        %v616 = vld [vmem:[%s610 + $0x14] sm:$0xf]
        %v617 = vld [vmem:[%s610 + $0x18] sm:$0xf]
        %v618 = vld [vmem:[%s610 + $0x1c] sm:$0xf]
        %v619 = vld [vmem:[%s610 + $0x20] sm:$0xf]
        %v620 = vld [vmem:[%s610 + $0x24] sm:$0xf]
        %v621 = vld [vmem:[%s610 + $0x28] sm:$0xf]
        %v622 = vld [vmem:[%s610 + $0x2c] sm:$0xf]
        %v623 = vld [vmem:[%s610 + $0x30] sm:$0xf]
        %v624 = vld [vmem:[%s610 + $0x34] sm:$0xf]
        %v625 = vld [vmem:[%s610 + $0x38] sm:$0xf]
        %v626 = vld [vmem:[%s610 + $0x3c] sm:$0xf]
        %v627 = vld [vmem:[%s610 + $0x40] sm:$0xf]
        %v628 = vld [vmem:[%s610 + $0x44] sm:$0xf]
        %v629 = vld [vmem:[%s610 + $0x48] sm:$0xf]
        %v630 = vld [vmem:[%s610 + $0x4c] sm:$0xf]
        %v631 = vld [vmem:[%s610 + $0x50] sm:$0xf]
        %v632 = vld [vmem:[%s610 + $0x54] sm:$0xf]
        %v633 = vld [vmem:[%s610 + $0x58] sm:$0xf]
        %v634 = vld [vmem:[%s610 + $0x5c] sm:$0xf]
        %v635 = vld [vmem:[%s610 + $0x60] sm:$0xf]
        %v636 = vld [vmem:[%s610 + $0x64] sm:$0xf]
        %v637 = vld [vmem:[%s610 + $0x68] sm:$0xf]
        %v638 = vld [vmem:[%s610 + $0x6c] sm:$0xf]
        %v639 = vld [vmem:[%s610 + $0x70] sm:$0xf]
        %v640 = vld [vmem:[%s610 + $0x74] sm:$0xf]
        %v641 = vld [vmem:[%s610 + $0x78] sm:$0xf]
        %v642 = vld [vmem:[%s610 + $0x7c] sm:$0xf]
        %v651 = vunpack.c.l.b16 %v545
        %v652 = vunpack.c.l.b16 %v546
        %v653 = vunpack.c.l.b16 %v547
        %v654 = vunpack.c.l.b16 %v548
        %v655 = vunpack.c.l.b16 %v549
        %v656 = vunpack.c.l.b16 %v550
        %v657 = vunpack.c.l.b16 %v551
        %v658 = vunpack.c.l.b16 %v552
        %v659 = vpack.c.b16 %v652, %v651
        %v660 = vpack.c.b16 %v654, %v653
        %v661 = vpack.c.b16 %v656, %v655
        %v662 = vpack.c.b16 %v658, %v657
        %v671 = vunpack.c.l.b16 %v578
        %v672 = vunpack.c.l.b16 %v579
        %v673 = vunpack.c.l.b16 %v580
        %v674 = vunpack.c.l.b16 %v581
        %v675 = vunpack.c.l.b16 %v582
        %v676 = vunpack.c.l.b16 %v583
        %v677 = vunpack.c.l.b16 %v584
        %v678 = vunpack.c.l.b16 %v585
        %v679 = vpack.c.b16 %v672, %v671
        %v680 = vpack.c.b16 %v674, %v673
        %v681 = vpack.c.b16 %v676, %v675
        %v682 = vpack.c.b16 %v678, %v677
        %vm683 = vcmask 130048
        %v685 = vsel %vm683, %v659, 0
        %v688 = vsel %vm683, %v660, 0
        %v691 = vsel %vm683, %v661, 0
        %v694 = vsel %vm683, %v662, 0
        %v697 = vsel %vm683, %v679, 0
        %v700 = vsel %vm683, %v680, 0
        %v703 = vsel %vm683, %v681, 0
        %v706 = vsel %vm683, %v682, 0
        %708 = vmatprep.subr.bf16.mxu0 0
        %709 = vmatpush1.bf16.xpose.msra.mxu0 %v697
        %710 = vmatprep.subr.bf16.mxu0 0
        %711 = vmatpush1.bf16.xpose.msra.mxu0 %v700
        %712 = vmatprep.subr.bf16.mxu0 0
        %713 = vmatpush1.bf16.xpose.msra.mxu0 %v703
        %714 = vmatprep.subr.bf16.mxu0 0
        %715 = vmatpush1.bf16.xpose.msra.mxu0 %v706
        %716 = vmatprep.subr.bf16.mxu0 0
        %717 = vmatpush1.bf16.xpose.msra.mxu0 0
        %718 = vmatprep.subr.bf16.mxu0 0
        %719 = vmatpush1.bf16.xpose.msra.mxu0 0
        %720 = vmatprep.subr.bf16.mxu0 0
        %721 = vmatpush1.bf16.xpose.msra.mxu0 0
        %722 = vmatprep.subr.bf16.mxu0 0
        %723 = vmatpush1.bf16.xpose.msra.mxu0 0
        %724 = vmatprep.subr.bf16.mxu0 0
        %725 = vmatpush1.bf16.xpose.msra.mxu0 0
        %726 = vmatprep.subr.bf16.mxu0 0
        %727 = vmatpush1.bf16.xpose.msra.mxu0 0
        %728 = vmatprep.subr.bf16.mxu0 0
        %729 = vmatpush1.bf16.xpose.msra.mxu0 0
        %730 = vmatprep.subr.bf16.mxu0 0
        %731 = vmatpush1.bf16.xpose.msra.mxu0 0
        %732 = vmatprep.subr.bf16.mxu0 0
        %733 = vmatpush1.bf16.xpose.msra.mxu0 0
        %734 = vmatprep.subr.bf16.mxu0 0
        %735 = vmatpush1.bf16.xpose.msra.mxu0 0
        %736 = vmatprep.subr.bf16.mxu0 0
        %737 = vmatpush1.bf16.xpose.msra.mxu0 0
        %738 = vmatprep.subr.bf16.mxu0 0
        %739 = vmatpush1.bf16.xpose.msra.mxu0 0
        %740 = vmatprep.mubr.bf16.mxu0 0
        %741 = vmatmul.mubr.bf16.gmra.mrb[0].mxu0 %v685
        %v742 = vpop.f32.mrb[0].mxu0
        %v743 = vadd.f32 0.0, %v742
        %v744 = vpop.f32.mrb[0].mxu0
        %v745 = vpop.f32.mrb[0].mxu0
        %v746 = vadd.f32 0.0, %v745
        %v747 = vpop.f32.mrb[0].mxu0
        %748 = vmatprep.mubr.bf16.mxu0 0
        %749 = vmatmul.mubr.bf16.gmra.mrb[0].mxu0 %v688
        %v750 = vpop.f32.mrb[0].mxu0
        %v751 = vadd.f32 0.0, %v750
        %v752 = vpop.f32.mrb[0].mxu0
        %v753 = vpop.f32.mrb[0].mxu0
        %v754 = vadd.f32 0.0, %v753
        %v755 = vpop.f32.mrb[0].mxu0
        %756 = vmatprep.mubr.bf16.mxu0 0
        %757 = vmatmul.mubr.bf16.gmra.mrb[0].mxu0 %v691
        %v758 = vpop.f32.mrb[0].mxu0
        %v759 = vadd.f32 0.0, %v758
        %v760 = vpop.f32.mrb[0].mxu0
        %v761 = vpop.f32.mrb[0].mxu0
        %v762 = vadd.f32 0.0, %v761
        %v763 = vpop.f32.mrb[0].mxu0
        %764 = vmatprep.mubr.bf16.mxu0 0
        %765 = vmatmul.mubr.bf16.gmra.mrb[0].mxu0 %v694
        %v766 = vpop.f32.mrb[0].mxu0
        %v767 = vadd.f32 0.0, %v766
        %v768 = vpop.f32.mrb[0].mxu0
        %v769 = vpop.f32.mrb[0].mxu0
        %v770 = vadd.f32 0.0, %v769
        %v771 = vpop.f32.mrb[0].mxu0
        %772 = vdwg.mxu0
        %v781 = vunpack.c.l.b16 %v553
        %v782 = vunpack.c.l.b16 %v554
        %v783 = vunpack.c.l.b16 %v555
        %v784 = vunpack.c.l.b16 %v556
        %v785 = vunpack.c.l.b16 %v557
        %v786 = vunpack.c.l.b16 %v558
        %v787 = vunpack.c.l.b16 %v559
        %v788 = vunpack.c.l.b16 %v560
        %v789 = vpack.c.b16 %v782, %v781
        %v790 = vpack.c.b16 %v784, %v783
        %v791 = vpack.c.b16 %v786, %v785
        %v792 = vpack.c.b16 %v788, %v787
        %v801 = vunpack.c.l.b16 %v586
        %v802 = vunpack.c.l.b16 %v587
        %v803 = vunpack.c.l.b16 %v588
        %v804 = vunpack.c.l.b16 %v589
        %v805 = vunpack.c.l.b16 %v590
        %v806 = vunpack.c.l.b16 %v591
        %v807 = vunpack.c.l.b16 %v592
        %v808 = vunpack.c.l.b16 %v593
        %v809 = vpack.c.b16 %v802, %v801
        %v810 = vpack.c.b16 %v804, %v803
        %v811 = vpack.c.b16 %v806, %v805
        %v812 = vpack.c.b16 %v808, %v807
        %v814 = vsel %vm683, %v789, 0
        %v817 = vsel %vm683, %v790, 0
        %v820 = vsel %vm683, %v791, 0
        %v823 = vsel %vm683, %v792, 0
        %v826 = vsel %vm683, %v809, 0
        %v829 = vsel %vm683, %v810, 0
        %v832 = vsel %vm683, %v811, 0
        %v835 = vsel %vm683, %v812, 0
        %837 = vmatprep.subr.bf16.mxu0 0
        %838 = vmatpush1.bf16.xpose.msra.mxu0 %v826
        %839 = vmatprep.subr.bf16.mxu0 0
        %840 = vmatpush1.bf16.xpose.msra.mxu0 %v829
        %841 = vmatprep.subr.bf16.mxu0 0
        %842 = vmatpush1.bf16.xpose.msra.mxu0 %v832
        %843 = vmatprep.subr.bf16.mxu0 0
        %844 = vmatpush1.bf16.xpose.msra.mxu0 %v835
        %845 = vmatprep.subr.bf16.mxu0 0
        %846 = vmatpush1.bf16.xpose.msra.mxu0 0
        %847 = vmatprep.subr.bf16.mxu0 0
        %848 = vmatpush1.bf16.xpose.msra.mxu0 0
        %849 = vmatprep.subr.bf16.mxu0 0
        %850 = vmatpush1.bf16.xpose.msra.mxu0 0
        %851 = vmatprep.subr.bf16.mxu0 0
        %852 = vmatpush1.bf16.xpose.msra.mxu0 0
        %853 = vmatprep.subr.bf16.mxu0 0
        %854 = vmatpush1.bf16.xpose.msra.mxu0 0
        %855 = vmatprep.subr.bf16.mxu0 0
        %856 = vmatpush1.bf16.xpose.msra.mxu0 0
        %857 = vmatprep.subr.bf16.mxu0 0
        %858 = vmatpush1.bf16.xpose.msra.mxu0 0
        %859 = vmatprep.subr.bf16.mxu0 0
        %860 = vmatpush1.bf16.xpose.msra.mxu0 0
        %861 = vmatprep.subr.bf16.mxu0 0
        %862 = vmatpush1.bf16.xpose.msra.mxu0 0
        %863 = vmatprep.subr.bf16.mxu0 0
        %864 = vmatpush1.bf16.xpose.msra.mxu0 0
        %865 = vmatprep.subr.bf16.mxu0 0
        %866 = vmatpush1.bf16.xpose.msra.mxu0 0
        %867 = vmatprep.subr.bf16.mxu0 0
        %868 = vmatpush1.bf16.xpose.msra.mxu0 0
        %869 = vmatprep.mubr.bf16.mxu0 0
        %870 = vmatmul.mubr.bf16.gmra.mrb[0].mxu0 %v814
        %v871 = vpop.f32.mrb[0].mxu0
        %v872 = vadd.f32 0.0, %v871
        %v873 = vpop.f32.mrb[0].mxu0
        %v874 = vpop.f32.mrb[0].mxu0
        %v875 = vadd.f32 0.0, %v874
        %v876 = vpop.f32.mrb[0].mxu0
        %877 = vmatprep.mubr.bf16.mxu0 0
        %878 = vmatmul.mubr.bf16.gmra.mrb[0].mxu0 %v817
        %v879 = vpop.f32.mrb[0].mxu0
        %v880 = vadd.f32 0.0, %v879
        %v881 = vpop.f32.mrb[0].mxu0
        %v882 = vpop.f32.mrb[0].mxu0
        %v883 = vadd.f32 0.0, %v882
        %v884 = vpop.f32.mrb[0].mxu0
        %885 = vmatprep.mubr.bf16.mxu0 0
        %886 = vmatmul.mubr.bf16.gmra.mrb[0].mxu0 %v820
        %v887 = vpop.f32.mrb[0].mxu0
        %v888 = vadd.f32 0.0, %v887
        %v889 = vpop.f32.mrb[0].mxu0
        %v890 = vpop.f32.mrb[0].mxu0
        %v891 = vadd.f32 0.0, %v890
        %v892 = vpop.f32.mrb[0].mxu0
        %893 = vmatprep.mubr.bf16.mxu0 0
        %894 = vmatmul.mubr.bf16.gmra.mrb[0].mxu0 %v823
        %v895 = vpop.f32.mrb[0].mxu0
        %v896 = vadd.f32 0.0, %v895
        %v897 = vpop.f32.mrb[0].mxu0
        %v898 = vpop.f32.mrb[0].mxu0
        %v899 = vadd.f32 0.0, %v898
        %v900 = vpop.f32.mrb[0].mxu0
        %901 = vdwg.mxu0
        %v910 = vunpack.c.l.b16 %v561
        %v911 = vunpack.c.l.b16 %v562
        %v912 = vunpack.c.l.b16 %v563
        %v913 = vunpack.c.l.b16 %v564
        %v914 = vunpack.c.l.b16 %v565
        %v915 = vunpack.c.l.b16 %v566
        %v916 = vunpack.c.l.b16 %v567
        %v917 = vunpack.c.l.b16 %v568
        %v918 = vpack.c.b16 %v911, %v910
        %v919 = vpack.c.b16 %v913, %v912
        %v920 = vpack.c.b16 %v915, %v914
        %v921 = vpack.c.b16 %v917, %v916
        %v930 = vunpack.c.l.b16 %v594
        %v931 = vunpack.c.l.b16 %v595
        %v932 = vunpack.c.l.b16 %v596
        %v933 = vunpack.c.l.b16 %v597
        %v934 = vunpack.c.l.b16 %v598
        %v935 = vunpack.c.l.b16 %v599
        %v936 = vunpack.c.l.b16 %v600
        %v937 = vunpack.c.l.b16 %v601
        %v938 = vpack.c.b16 %v931, %v930
        %v939 = vpack.c.b16 %v933, %v932
        %v940 = vpack.c.b16 %v935, %v934
        %v941 = vpack.c.b16 %v937, %v936
        %v943 = vsel %vm683, %v918, 0
        %v946 = vsel %vm683, %v919, 0
        %v949 = vsel %vm683, %v920, 0
        %v952 = vsel %vm683, %v921, 0
        %v955 = vsel %vm683, %v938, 0
        %v958 = vsel %vm683, %v939, 0
        %v961 = vsel %vm683, %v940, 0
        %v964 = vsel %vm683, %v941, 0
        %966 = vmatprep.subr.bf16.mxu0 0
        %967 = vmatpush1.bf16.xpose.msra.mxu0 %v955
        %968 = vmatprep.subr.bf16.mxu0 0
        %969 = vmatpush1.bf16.xpose.msra.mxu0 %v958
        %970 = vmatprep.subr.bf16.mxu0 0
        %971 = vmatpush1.bf16.xpose.msra.mxu0 %v961
        %972 = vmatprep.subr.bf16.mxu0 0
        %973 = vmatpush1.bf16.xpose.msra.mxu0 %v964
        %974 = vmatprep.subr.bf16.mxu0 0
        %975 = vmatpush1.bf16.xpose.msra.mxu0 0
        %976 = vmatprep.subr.bf16.mxu0 0
        %977 = vmatpush1.bf16.xpose.msra.mxu0 0
        %978 = vmatprep.subr.bf16.mxu0 0
        %979 = vmatpush1.bf16.xpose.msra.mxu0 0
        %980 = vmatprep.subr.bf16.mxu0 0
        %981 = vmatpush1.bf16.xpose.msra.mxu0 0
        %982 = vmatprep.subr.bf16.mxu0 0
        %983 = vmatpush1.bf16.xpose.msra.mxu0 0
        %984 = vmatprep.subr.bf16.mxu0 0
        %985 = vmatpush1.bf16.xpose.msra.mxu0 0
        %986 = vmatprep.subr.bf16.mxu0 0
        %987 = vmatpush1.bf16.xpose.msra.mxu0 0
        %988 = vmatprep.subr.bf16.mxu0 0
        %989 = vmatpush1.bf16.xpose.msra.mxu0 0
        %990 = vmatprep.subr.bf16.mxu0 0
        %991 = vmatpush1.bf16.xpose.msra.mxu0 0
        %992 = vmatprep.subr.bf16.mxu0 0
        %993 = vmatpush1.bf16.xpose.msra.mxu0 0
        %994 = vmatprep.subr.bf16.mxu0 0
        %995 = vmatpush1.bf16.xpose.msra.mxu0 0
        %996 = vmatprep.subr.bf16.mxu0 0
        %997 = vmatpush1.bf16.xpose.msra.mxu0 0
        %998 = vmatprep.mubr.bf16.mxu0 0
        %999 = vmatmul.mubr.bf16.gmra.mrb[0].mxu0 %v943
        %v1000 = vpop.f32.mrb[0].mxu0
        %v1001 = vadd.f32 0.0, %v1000
        %v1002 = vpop.f32.mrb[0].mxu0
        %v1003 = vpop.f32.mrb[0].mxu0
        %v1004 = vadd.f32 0.0, %v1003
        %v1005 = vpop.f32.mrb[0].mxu0
        %1006 = vmatprep.mubr.bf16.mxu0 0
        %1007 = vmatmul.mubr.bf16.gmra.mrb[0].mxu0 %v946
        %v1008 = vpop.f32.mrb[0].mxu0
        %v1009 = vadd.f32 0.0, %v1008
        %v1010 = vpop.f32.mrb[0].mxu0
        %v1011 = vpop.f32.mrb[0].mxu0
        %v1012 = vadd.f32 0.0, %v1011
        %v1013 = vpop.f32.mrb[0].mxu0
        %1014 = vmatprep.mubr.bf16.mxu0 0
        %1015 = vmatmul.mubr.bf16.gmra.mrb[0].mxu0 %v949
        %v1016 = vpop.f32.mrb[0].mxu0
        %v1017 = vadd.f32 0.0, %v1016
        %v1018 = vpop.f32.mrb[0].mxu0
        %v1019 = vpop.f32.mrb[0].mxu0
        %v1020 = vadd.f32 0.0, %v1019
        %v1021 = vpop.f32.mrb[0].mxu0
        %1022 = vmatprep.mubr.bf16.mxu0 0
        %1023 = vmatmul.mubr.bf16.gmra.mrb[0].mxu0 %v952
        %v1024 = vpop.f32.mrb[0].mxu0
        %v1025 = vadd.f32 0.0, %v1024
        %v1026 = vpop.f32.mrb[0].mxu0
        %v1027 = vpop.f32.mrb[0].mxu0
        %v1028 = vadd.f32 0.0, %v1027
        %v1029 = vpop.f32.mrb[0].mxu0
        %1030 = vdwg.mxu0
        %v1039 = vunpack.c.l.b16 %v569
        %v1040 = vunpack.c.l.b16 %v570
        %v1041 = vunpack.c.l.b16 %v571
        %v1042 = vunpack.c.l.b16 %v572
        %v1043 = vunpack.c.l.b16 %v573
        %v1044 = vunpack.c.l.b16 %v574
        %v1045 = vunpack.c.l.b16 %v575
        %v1046 = vunpack.c.l.b16 %v576
        %v1047 = vpack.c.b16 %v1040, %v1039
        %v1048 = vpack.c.b16 %v1042, %v1041
        %v1049 = vpack.c.b16 %v1044, %v1043
        %v1050 = vpack.c.b16 %v1046, %v1045
        %v1059 = vunpack.c.l.b16 %v602
        %v1060 = vunpack.c.l.b16 %v603
        %v1061 = vunpack.c.l.b16 %v604
        %v1062 = vunpack.c.l.b16 %v605
        %v1063 = vunpack.c.l.b16 %v606
        %v1064 = vunpack.c.l.b16 %v607
        %v1065 = vunpack.c.l.b16 %v608
        %v1066 = vunpack.c.l.b16 %v609
        %v1067 = vpack.c.b16 %v1060, %v1059
        %v1068 = vpack.c.b16 %v1062, %v1061
        %v1069 = vpack.c.b16 %v1064, %v1063
        %v1070 = vpack.c.b16 %v1066, %v1065
        %v1072 = vsel %vm683, %v1047, 0
        %v1075 = vsel %vm683, %v1048, 0
        %v1078 = vsel %vm683, %v1049, 0
        %v1081 = vsel %vm683, %v1050, 0
        %v1084 = vsel %vm683, %v1067, 0
        %v1087 = vsel %vm683, %v1068, 0
        %v1090 = vsel %vm683, %v1069, 0
        %v1093 = vsel %vm683, %v1070, 0
        %1095 = vmatprep.subr.bf16.mxu0 0
        %1096 = vmatpush1.bf16.xpose.msra.mxu0 %v1084
        %1097 = vmatprep.subr.bf16.mxu0 0
        %1098 = vmatpush1.bf16.xpose.msra.mxu0 %v1087
        %1099 = vmatprep.subr.bf16.mxu0 0
        %1100 = vmatpush1.bf16.xpose.msra.mxu0 %v1090
        %1101 = vmatprep.subr.bf16.mxu0 0
        %1102 = vmatpush1.bf16.xpose.msra.mxu0 %v1093
        %1103 = vmatprep.subr.bf16.mxu0 0
        %1104 = vmatpush1.bf16.xpose.msra.mxu0 0
        %1105 = vmatprep.subr.bf16.mxu0 0
        %1106 = vmatpush1.bf16.xpose.msra.mxu0 0
        %1107 = vmatprep.subr.bf16.mxu0 0
        %1108 = vmatpush1.bf16.xpose.msra.mxu0 0
        %1109 = vmatprep.subr.bf16.mxu0 0
        %1110 = vmatpush1.bf16.xpose.msra.mxu0 0
        %1111 = vmatprep.subr.bf16.mxu0 0
        %1112 = vmatpush1.bf16.xpose.msra.mxu0 0
        %1113 = vmatprep.subr.bf16.mxu0 0
        %1114 = vmatpush1.bf16.xpose.msra.mxu0 0
        %1115 = vmatprep.subr.bf16.mxu0 0
        %1116 = vmatpush1.bf16.xpose.msra.mxu0 0
        %1117 = vmatprep.subr.bf16.mxu0 0
        %1118 = vmatpush1.bf16.xpose.msra.mxu0 0
        %1119 = vmatprep.subr.bf16.mxu0 0
        %1120 = vmatpush1.bf16.xpose.msra.mxu0 0
        %1121 = vmatprep.subr.bf16.mxu0 0
        %1122 = vmatpush1.bf16.xpose.msra.mxu0 0
        %1123 = vmatprep.subr.bf16.mxu0 0
        %1124 = vmatpush1.bf16.xpose.msra.mxu0 0
        %1125 = vmatprep.subr.bf16.mxu0 0
        %1126 = vmatpush1.bf16.xpose.msra.mxu0 0
        %1127 = vmatprep.mubr.bf16.mxu0 0
        %1128 = vmatmul.mubr.bf16.gmra.mrb[0].mxu0 %v1072
        %v1129 = vpop.f32.mrb[0].mxu0
        %v1130 = vadd.f32 0.0, %v1129
        %v1131 = vpop.f32.mrb[0].mxu0
        %v1132 = vpop.f32.mrb[0].mxu0
        %v1133 = vadd.f32 0.0, %v1132
        %v1134 = vpop.f32.mrb[0].mxu0
        %1135 = vmatprep.mubr.bf16.mxu0 0
        %1136 = vmatmul.mubr.bf16.gmra.mrb[0].mxu0 %v1075
        %v1137 = vpop.f32.mrb[0].mxu0
        %v1138 = vadd.f32 0.0, %v1137
        %v1139 = vpop.f32.mrb[0].mxu0
        %v1140 = vpop.f32.mrb[0].mxu0
        %v1141 = vadd.f32 0.0, %v1140
        %v1142 = vpop.f32.mrb[0].mxu0
        %1143 = vmatprep.mubr.bf16.mxu0 0
        %1144 = vmatmul.mubr.bf16.gmra.mrb[0].mxu0 %v1078
        %v1145 = vpop.f32.mrb[0].mxu0
        %v1146 = vadd.f32 0.0, %v1145
        %v1147 = vpop.f32.mrb[0].mxu0
        %v1148 = vpop.f32.mrb[0].mxu0
        %v1149 = vadd.f32 0.0, %v1148
        %v1150 = vpop.f32.mrb[0].mxu0
        %1151 = vmatprep.mubr.bf16.mxu0 0
        %1152 = vmatmul.mubr.bf16.gmra.mrb[0].mxu0 %v1081
        %v1153 = vpop.f32.mrb[0].mxu0
        %v1154 = vadd.f32 0.0, %v1153
        %v1155 = vpop.f32.mrb[0].mxu0
        %v1156 = vpop.f32.mrb[0].mxu0
        %v1157 = vadd.f32 0.0, %v1156
        %v1158 = vpop.f32.mrb[0].mxu0
        %1159 = vdwg.mxu0
        %vm1160 = vcmask 523264
        %v1161 = vsel %vm1160, %v743, -inf
        %1162 = vmax.xlane.f32.xlu0 %v1161
        %v1163 = vpop.xlane.xlu0 %1162
        %v1164 = vsel %vm1160, %v746, -inf
        %1165 = vmax.xlane.f32.xlu0 %v1164
        %v1166 = vpop.xlane.xlu0 %1165
        %v1167 = vsel %vm1160, %v751, -inf
        %1168 = vmax.xlane.f32.xlu0 %v1167
        %v1169 = vpop.xlane.xlu0 %1168
        %v1170 = vsel %vm1160, %v754, -inf
        %1171 = vmax.xlane.f32.xlu0 %v1170
        %v1172 = vpop.xlane.xlu0 %1171
        %v1173 = vsel %vm1160, %v759, -inf
        %1174 = vmax.xlane.f32.xlu0 %v1173
        %v1175 = vpop.xlane.xlu0 %1174
        %v1176 = vsel %vm1160, %v762, -inf
        %1177 = vmax.xlane.f32.xlu0 %v1176
        %v1178 = vpop.xlane.xlu0 %1177
        %v1179 = vsel %vm1160, %v767, -inf
        %1180 = vmax.xlane.f32.xlu0 %v1179
        %v1181 = vpop.xlane.xlu0 %1180
        %v1182 = vsel %vm1160, %v770, -inf
        %1183 = vmax.xlane.f32.xlu0 %v1182
        %v1184 = vpop.xlane.xlu0 %1183
        %v1185 = vsel %vm1160, %v872, -inf
        %1186 = vmax.xlane.f32.xlu0 %v1185
        %v1187 = vpop.xlane.xlu0 %1186
        %v1188 = vsel %vm1160, %v875, -inf
        %1189 = vmax.xlane.f32.xlu0 %v1188
        %v1190 = vpop.xlane.xlu0 %1189
        %v1191 = vsel %vm1160, %v880, -inf
        %1192 = vmax.xlane.f32.xlu0 %v1191
        %v1193 = vpop.xlane.xlu0 %1192
        %v1194 = vsel %vm1160, %v883, -inf
        %1195 = vmax.xlane.f32.xlu0 %v1194
        %v1196 = vpop.xlane.xlu0 %1195
        %v1197 = vsel %vm1160, %v888, -inf
        %1198 = vmax.xlane.f32.xlu0 %v1197
        %v1199 = vpop.xlane.xlu0 %1198
        %v1200 = vsel %vm1160, %v891, -inf
        %1201 = vmax.xlane.f32.xlu0 %v1200
        %v1202 = vpop.xlane.xlu0 %1201
        %v1203 = vsel %vm1160, %v896, -inf
        %1204 = vmax.xlane.f32.xlu0 %v1203
        %v1205 = vpop.xlane.xlu0 %1204
        %v1206 = vsel %vm1160, %v899, -inf
        %1207 = vmax.xlane.f32.xlu0 %v1206
        %v1208 = vpop.xlane.xlu0 %1207
        %v1209 = vsel %vm1160, %v1001, -inf
        %1210 = vmax.xlane.f32.xlu0 %v1209
        %v1211 = vpop.xlane.xlu0 %1210
        %v1212 = vsel %vm1160, %v1004, -inf
        %1213 = vmax.xlane.f32.xlu0 %v1212
        %v1214 = vpop.xlane.xlu0 %1213
        %v1215 = vsel %vm1160, %v1009, -inf
        %1216 = vmax.xlane.f32.xlu0 %v1215
        %v1217 = vpop.xlane.xlu0 %1216
        %v1218 = vsel %vm1160, %v1012, -inf
        %1219 = vmax.xlane.f32.xlu0 %v1218
        %v1220 = vpop.xlane.xlu0 %1219
        %v1221 = vsel %vm1160, %v1017, -inf
        %1222 = vmax.xlane.f32.xlu0 %v1221
        %v1223 = vpop.xlane.xlu0 %1222
        %v1224 = vsel %vm1160, %v1020, -inf
        %1225 = vmax.xlane.f32.xlu0 %v1224
        %v1226 = vpop.xlane.xlu0 %1225
        %v1227 = vsel %vm1160, %v1025, -inf
        %1228 = vmax.xlane.f32.xlu0 %v1227
        %v1229 = vpop.xlane.xlu0 %1228
        %v1230 = vsel %vm1160, %v1028, -inf
        %1231 = vmax.xlane.f32.xlu0 %v1230
        %v1232 = vpop.xlane.xlu0 %1231
        %v1233 = vsel %vm1160, %v1130, -inf
        %1234 = vmax.xlane.f32.xlu0 %v1233
        %v1235 = vpop.xlane.xlu0 %1234
        %v1236 = vsel %vm1160, %v1133, -inf
        %1237 = vmax.xlane.f32.xlu0 %v1236
        %v1238 = vpop.xlane.xlu0 %1237
        %v1239 = vsel %vm1160, %v1138, -inf
        %1240 = vmax.xlane.f32.xlu0 %v1239
        %v1241 = vpop.xlane.xlu0 %1240
        %v1242 = vsel %vm1160, %v1141, -inf
        %1243 = vmax.xlane.f32.xlu0 %v1242
        %v1244 = vpop.xlane.xlu0 %1243
        %v1245 = vsel %vm1160, %v1146, -inf
        %1246 = vmax.xlane.f32.xlu0 %v1245
        %v1247 = vpop.xlane.xlu0 %1246
        %v1248 = vsel %vm1160, %v1149, -inf
        %1249 = vmax.xlane.f32.xlu0 %v1248
        %v1250 = vpop.xlane.xlu0 %1249
        %v1251 = vsel %vm1160, %v1154, -inf
        %1252 = vmax.xlane.f32.xlu0 %v1251
        %v1253 = vpop.xlane.xlu0 %1252
        %v1254 = vsel %vm1160, %v1157, -inf
        %1255 = vmax.xlane.f32.xlu0 %v1254
        %v1256 = vpop.xlane.xlu0 %1255
        %v1257 = vsub.f32 %v743, %v1163
        %v1258 = vsub.f32 %v746, %v1166
        %v1259 = vsub.f32 %v751, %v1169
        %v1260 = vsub.f32 %v754, %v1172
        %v1261 = vsub.f32 %v759, %v1175
        %v1262 = vsub.f32 %v762, %v1178
        %v1263 = vsub.f32 %v767, %v1181
        %v1264 = vsub.f32 %v770, %v1184
        %v1265 = vsub.f32 %v872, %v1187
        %v1266 = vsub.f32 %v875, %v1190
        %v1267 = vsub.f32 %v880, %v1193
        %v1268 = vsub.f32 %v883, %v1196
        %v1269 = vsub.f32 %v888, %v1199
        %v1270 = vsub.f32 %v891, %v1202
        %v1271 = vsub.f32 %v896, %v1205
        %v1272 = vsub.f32 %v899, %v1208
        %v1273 = vsub.f32 %v1001, %v1211
        %v1274 = vsub.f32 %v1004, %v1214
        %v1275 = vsub.f32 %v1009, %v1217
        %v1276 = vsub.f32 %v1012, %v1220
        %v1277 = vsub.f32 %v1017, %v1223
        %v1278 = vsub.f32 %v1020, %v1226
        %v1279 = vsub.f32 %v1025, %v1229
        %v1280 = vsub.f32 %v1028, %v1232
        %v1281 = vsub.f32 %v1130, %v1235
        %v1282 = vsub.f32 %v1133, %v1238
        %v1283 = vsub.f32 %v1138, %v1241
        %v1284 = vsub.f32 %v1141, %v1244
        %v1285 = vsub.f32 %v1146, %v1247
        %v1286 = vsub.f32 %v1149, %v1250
        %v1287 = vsub.f32 %v1154, %v1253
        %v1288 = vsub.f32 %v1157, %v1256
        %v1289 = vmul.f32 %v1257, 1.442695
        %v1290 = vpow.pop %v1289
        %v1291 = vmul.f32 %v1258, 1.442695
        %v1292 = vpow.pop %v1291
        %v1293 = vmul.f32 %v1259, 1.442695
        %v1294 = vpow.pop %v1293
        %v1295 = vmul.f32 %v1260, 1.442695
        %v1296 = vpow.pop %v1295
        %v1297 = vmul.f32 %v1261, 1.442695
        %v1298 = vpow.pop %v1297
        %v1299 = vmul.f32 %v1262, 1.442695
        %v1300 = vpow.pop %v1299
        %v1301 = vmul.f32 %v1263, 1.442695
        %v1302 = vpow.pop %v1301
        %v1303 = vmul.f32 %v1264, 1.442695
        %v1304 = vpow.pop %v1303
        %v1305 = vmul.f32 %v1265, 1.442695
        %v1306 = vpow.pop %v1305
        %v1307 = vmul.f32 %v1266, 1.442695
        %v1308 = vpow.pop %v1307
        %v1309 = vmul.f32 %v1267, 1.442695
        %v1310 = vpow.pop %v1309
        %v1311 = vmul.f32 %v1268, 1.442695
        %v1312 = vpow.pop %v1311
        %v1313 = vmul.f32 %v1269, 1.442695
        %v1314 = vpow.pop %v1313
        %v1315 = vmul.f32 %v1270, 1.442695
        %v1316 = vpow.pop %v1315
        %v1317 = vmul.f32 %v1271, 1.442695
        %v1318 = vpow.pop %v1317
        %v1319 = vmul.f32 %v1272, 1.442695
        %v1320 = vpow.pop %v1319
        %v1321 = vmul.f32 %v1273, 1.442695
        %v1322 = vpow.pop %v1321
        %v1323 = vmul.f32 %v1274, 1.442695
        %v1324 = vpow.pop %v1323
        %v1325 = vmul.f32 %v1275, 1.442695
        %v1326 = vpow.pop %v1325
        %v1327 = vmul.f32 %v1276, 1.442695
        %v1328 = vpow.pop %v1327
        %v1329 = vmul.f32 %v1277, 1.442695
        %v1330 = vpow.pop %v1329
        %v1331 = vmul.f32 %v1278, 1.442695
        %v1332 = vpow.pop %v1331
        %v1333 = vmul.f32 %v1279, 1.442695
        %v1334 = vpow.pop %v1333
        %v1335 = vmul.f32 %v1280, 1.442695
        %v1336 = vpow.pop %v1335
        %v1337 = vmul.f32 %v1281, 1.442695
        %v1338 = vpow.pop %v1337
        %v1339 = vmul.f32 %v1282, 1.442695
        %v1340 = vpow.pop %v1339
        %v1341 = vmul.f32 %v1283, 1.442695
        %v1342 = vpow.pop %v1341
        %v1343 = vmul.f32 %v1284, 1.442695
        %v1344 = vpow.pop %v1343
        %v1345 = vmul.f32 %v1285, 1.442695
        %v1346 = vpow.pop %v1345
        %v1347 = vmul.f32 %v1286, 1.442695
        %v1348 = vpow.pop %v1347
        %v1349 = vmul.f32 %v1287, 1.442695
        %v1350 = vpow.pop %v1349
        %v1351 = vmul.f32 %v1288, 1.442695
        %v1352 = vpow.pop %v1351
        %v1353 = vsel %vm1160, %v1290, 0.0
        %1354 = vadd.xlane.f32.xlu0 %v1353
        %v1355 = vpop.xlane.xlu0 %1354
        %v1356 = vsel %vm1160, %v1292, 0.0
        %1357 = vadd.xlane.f32.xlu0 %v1356
        %v1358 = vpop.xlane.xlu0 %1357
        %v1359 = vsel %vm1160, %v1294, 0.0
        %1360 = vadd.xlane.f32.xlu0 %v1359
        %v1361 = vpop.xlane.xlu0 %1360
        %v1362 = vsel %vm1160, %v1296, 0.0
        %1363 = vadd.xlane.f32.xlu0 %v1362
        %v1364 = vpop.xlane.xlu0 %1363
        %v1365 = vsel %vm1160, %v1298, 0.0
        %1366 = vadd.xlane.f32.xlu0 %v1365
        %v1367 = vpop.xlane.xlu0 %1366
        %v1368 = vsel %vm1160, %v1300, 0.0
        %1369 = vadd.xlane.f32.xlu0 %v1368
        %v1370 = vpop.xlane.xlu0 %1369
        %v1371 = vsel %vm1160, %v1302, 0.0
        %1372 = vadd.xlane.f32.xlu0 %v1371
        %v1373 = vpop.xlane.xlu0 %1372
        %v1374 = vsel %vm1160, %v1304, 0.0
        %1375 = vadd.xlane.f32.xlu0 %v1374
        %v1376 = vpop.xlane.xlu0 %1375
        %v1377 = vsel %vm1160, %v1306, 0.0
        %1378 = vadd.xlane.f32.xlu0 %v1377
        %v1379 = vpop.xlane.xlu0 %1378
        %v1380 = vsel %vm1160, %v1308, 0.0
        %1381 = vadd.xlane.f32.xlu0 %v1380
        %v1382 = vpop.xlane.xlu0 %1381
        %v1383 = vsel %vm1160, %v1310, 0.0
        %1384 = vadd.xlane.f32.xlu0 %v1383
        %v1385 = vpop.xlane.xlu0 %1384
        %v1386 = vsel %vm1160, %v1312, 0.0
        %1387 = vadd.xlane.f32.xlu0 %v1386
        %v1388 = vpop.xlane.xlu0 %1387
        %v1389 = vsel %vm1160, %v1314, 0.0
        %1390 = vadd.xlane.f32.xlu0 %v1389
        %v1391 = vpop.xlane.xlu0 %1390
        %v1392 = vsel %vm1160, %v1316, 0.0
        %1393 = vadd.xlane.f32.xlu0 %v1392
        %v1394 = vpop.xlane.xlu0 %1393
        %v1395 = vsel %vm1160, %v1318, 0.0
        %1396 = vadd.xlane.f32.xlu0 %v1395
        %v1397 = vpop.xlane.xlu0 %1396
        %v1398 = vsel %vm1160, %v1320, 0.0
        %1399 = vadd.xlane.f32.xlu0 %v1398
        %v1400 = vpop.xlane.xlu0 %1399
        %v1401 = vsel %vm1160, %v1322, 0.0
        %1402 = vadd.xlane.f32.xlu0 %v1401
        %v1403 = vpop.xlane.xlu0 %1402
        %v1404 = vsel %vm1160, %v1324, 0.0
        %1405 = vadd.xlane.f32.xlu0 %v1404
        %v1406 = vpop.xlane.xlu0 %1405
        %v1407 = vsel %vm1160, %v1326, 0.0
        %1408 = vadd.xlane.f32.xlu0 %v1407
        %v1409 = vpop.xlane.xlu0 %1408
        %v1410 = vsel %vm1160, %v1328, 0.0
        %1411 = vadd.xlane.f32.xlu0 %v1410
        %v1412 = vpop.xlane.xlu0 %1411
        %v1413 = vsel %vm1160, %v1330, 0.0
        %1414 = vadd.xlane.f32.xlu0 %v1413
        %v1415 = vpop.xlane.xlu0 %1414
        %v1416 = vsel %vm1160, %v1332, 0.0
        %1417 = vadd.xlane.f32.xlu0 %v1416
        %v1418 = vpop.xlane.xlu0 %1417
        %v1419 = vsel %vm1160, %v1334, 0.0
        %1420 = vadd.xlane.f32.xlu0 %v1419
        %v1421 = vpop.xlane.xlu0 %1420
        %v1422 = vsel %vm1160, %v1336, 0.0
        %1423 = vadd.xlane.f32.xlu0 %v1422
        %v1424 = vpop.xlane.xlu0 %1423
        %v1425 = vsel %vm1160, %v1338, 0.0
        %1426 = vadd.xlane.f32.xlu0 %v1425
        %v1427 = vpop.xlane.xlu0 %1426
        %v1428 = vsel %vm1160, %v1340, 0.0
        %1429 = vadd.xlane.f32.xlu0 %v1428
        %v1430 = vpop.xlane.xlu0 %1429
        %v1431 = vsel %vm1160, %v1342, 0.0
        %1432 = vadd.xlane.f32.xlu0 %v1431
        %v1433 = vpop.xlane.xlu0 %1432
        %v1434 = vsel %vm1160, %v1344, 0.0
        %1435 = vadd.xlane.f32.xlu0 %v1434
        %v1436 = vpop.xlane.xlu0 %1435
        %v1437 = vsel %vm1160, %v1346, 0.0
        %1438 = vadd.xlane.f32.xlu0 %v1437
        %v1439 = vpop.xlane.xlu0 %1438
        %v1440 = vsel %vm1160, %v1348, 0.0
        %1441 = vadd.xlane.f32.xlu0 %v1440
        %v1442 = vpop.xlane.xlu0 %1441
        %v1443 = vsel %vm1160, %v1350, 0.0
        %1444 = vadd.xlane.f32.xlu0 %v1443
        %v1445 = vpop.xlane.xlu0 %1444
        %v1446 = vsel %vm1160, %v1352, 0.0
        %1447 = vadd.xlane.f32.xlu0 %v1446
        %v1448 = vpop.xlane.xlu0 %1447
        %v1449 = vrcp.pop %v1355
        %v1450 = vmul.f32 %v1290, %v1449
        %v1451 = vrcp.pop %v1358
        %v1452 = vmul.f32 %v1292, %v1451
        %v1453 = vrcp.pop %v1361
        %v1454 = vmul.f32 %v1294, %v1453
        %v1455 = vrcp.pop %v1364
        %v1456 = vmul.f32 %v1296, %v1455
        %v1457 = vrcp.pop %v1367
        %v1458 = vmul.f32 %v1298, %v1457
        %v1459 = vrcp.pop %v1370
        %v1460 = vmul.f32 %v1300, %v1459
        %v1461 = vrcp.pop %v1373
        %v1462 = vmul.f32 %v1302, %v1461
        %v1463 = vrcp.pop %v1376
        %v1464 = vmul.f32 %v1304, %v1463
        %v1465 = vrcp.pop %v1379
        %v1466 = vmul.f32 %v1306, %v1465
        %v1467 = vrcp.pop %v1382
        %v1468 = vmul.f32 %v1308, %v1467
        %v1469 = vrcp.pop %v1385
        %v1470 = vmul.f32 %v1310, %v1469
        %v1471 = vrcp.pop %v1388
        %v1472 = vmul.f32 %v1312, %v1471
        %v1473 = vrcp.pop %v1391
        %v1474 = vmul.f32 %v1314, %v1473
        %v1475 = vrcp.pop %v1394
        %v1476 = vmul.f32 %v1316, %v1475
        %v1477 = vrcp.pop %v1397
        %v1478 = vmul.f32 %v1318, %v1477
        %v1479 = vrcp.pop %v1400
        %v1480 = vmul.f32 %v1320, %v1479
        %v1481 = vrcp.pop %v1403
        %v1482 = vmul.f32 %v1322, %v1481
        %v1483 = vrcp.pop %v1406
        %v1484 = vmul.f32 %v1324, %v1483
        %v1485 = vrcp.pop %v1409
        %v1486 = vmul.f32 %v1326, %v1485
        %v1487 = vrcp.pop %v1412
        %v1488 = vmul.f32 %v1328, %v1487
        %v1489 = vrcp.pop %v1415
        %v1490 = vmul.f32 %v1330, %v1489
        %v1491 = vrcp.pop %v1418
        %v1492 = vmul.f32 %v1332, %v1491
        %v1493 = vrcp.pop %v1421
        %v1494 = vmul.f32 %v1334, %v1493
        %v1495 = vrcp.pop %v1424
        %v1496 = vmul.f32 %v1336, %v1495
        %v1497 = vrcp.pop %v1427
        %v1498 = vmul.f32 %v1338, %v1497
        %v1499 = vrcp.pop %v1430
        %v1500 = vmul.f32 %v1340, %v1499
        %v1501 = vrcp.pop %v1433
        %v1502 = vmul.f32 %v1342, %v1501
        %v1503 = vrcp.pop %v1436
        %v1504 = vmul.f32 %v1344, %v1503
        %v1505 = vrcp.pop %v1439
        %v1506 = vmul.f32 %v1346, %v1505
        %v1507 = vrcp.pop %v1442
        %v1508 = vmul.f32 %v1348, %v1507
        %v1509 = vrcp.pop %v1445
        %v1510 = vmul.f32 %v1350, %v1509
        %v1511 = vrcp.pop %v1448
        %v1512 = vmul.f32 %v1352, %v1511
        %v1513 = vpack.c.bf16 %v1452, %v1450
        %v1514 = vpack.c.bf16 %v1456, %v1454
        %v1515 = vpack.c.bf16 %v1460, %v1458
        %v1516 = vpack.c.bf16 %v1464, %v1462
        %v1517 = vpack.c.bf16 %v1468, %v1466
        %v1518 = vpack.c.bf16 %v1472, %v1470
        %v1519 = vpack.c.bf16 %v1476, %v1474
        %v1520 = vpack.c.bf16 %v1480, %v1478
        %v1521 = vpack.c.bf16 %v1484, %v1482
        %v1522 = vpack.c.bf16 %v1488, %v1486
        %v1523 = vpack.c.bf16 %v1492, %v1490
        %v1524 = vpack.c.bf16 %v1496, %v1494
        %v1525 = vpack.c.bf16 %v1500, %v1498
        %v1526 = vpack.c.bf16 %v1504, %v1502
        %v1527 = vpack.c.bf16 %v1508, %v1506
        %v1528 = vpack.c.bf16 %v1512, %v1510
        %v1537 = vunpack.c.l.b16 %v611
        %v1538 = vunpack.c.l.b16 %v612
        %v1539 = vunpack.c.l.b16 %v613
        %v1540 = vunpack.c.l.b16 %v614
        %v1541 = vunpack.c.l.b16 %v615
        %v1542 = vunpack.c.l.b16 %v616
        %v1543 = vunpack.c.l.b16 %v617
        %v1544 = vunpack.c.l.b16 %v618
        %v1545 = vpack.c.b16 %v1538, %v1537
        %v1546 = vpack.c.b16 %v1540, %v1539
        %v1547 = vpack.c.b16 %v1542, %v1541
        %v1548 = vpack.c.b16 %v1544, %v1543
        %v1554 = vsel %vm1160, %v1513, 0
        %v1557 = vsel %vm1160, %v1514, 0
        %v1560 = vsel %vm1160, %v1515, 0
        %v1563 = vsel %vm1160, %v1516, 0
        %1565 = vmatprep.subr.bf16.mxu0 0
        %1566 = vmatpush1.bf16.msra.mxu0 %v1545
        %1567 = vmatprep.subr.bf16.mxu0 0
        %1568 = vmatpush1.bf16.msra.mxu0 %v1546
        %1569 = vmatprep.subr.bf16.mxu0 0
        %1570 = vmatpush1.bf16.msra.mxu0 %v1547
        %1571 = vmatprep.subr.bf16.mxu0 0
        %1572 = vmatpush1.bf16.msra.mxu0 %v1548
        %1573 = vmatprep.subr.bf16.mxu0 0
        %1574 = vmatpush1.bf16.msra.mxu0 0
        %1575 = vmatprep.subr.bf16.mxu0 0
        %1576 = vmatpush1.bf16.msra.mxu0 0
        %1577 = vmatprep.subr.bf16.mxu0 0
        %1578 = vmatpush1.bf16.msra.mxu0 0
        %1579 = vmatprep.subr.bf16.mxu0 0
        %1580 = vmatpush1.bf16.msra.mxu0 0
        %1581 = vmatprep.subr.bf16.mxu0 0
        %1582 = vmatpush1.bf16.msra.mxu0 0
        %1583 = vmatprep.subr.bf16.mxu0 0
        %1584 = vmatpush1.bf16.msra.mxu0 0
        %1585 = vmatprep.subr.bf16.mxu0 0
        %1586 = vmatpush1.bf16.msra.mxu0 0
        %1587 = vmatprep.subr.bf16.mxu0 0
        %1588 = vmatpush1.bf16.msra.mxu0 0
        %1589 = vmatprep.subr.bf16.mxu0 0
        %1590 = vmatpush1.bf16.msra.mxu0 0
        %1591 = vmatprep.subr.bf16.mxu0 0
        %1592 = vmatpush1.bf16.msra.mxu0 0
        %1593 = vmatprep.subr.bf16.mxu0 0
        %1594 = vmatpush1.bf16.msra.mxu0 0
        %1595 = vmatprep.subr.bf16.mxu0 0
        %1596 = vmatpush1.bf16.msra.mxu0 0
        %1597 = vmatprep.mubr.bf16.mxu0 0
        %1598 = vmatmul.mubr.bf16.gmra.mrb[0].mxu0 %v1554
        %v1599 = vpop.f32.mrb[0].mxu0
        %v1600 = vadd.f32 0.0, %v1599
        %v1601 = vpop.f32.mrb[0].mxu0
        %v1602 = vpop.f32.mrb[0].mxu0
        %v1603 = vadd.f32 0.0, %v1602
        %v1604 = vpop.f32.mrb[0].mxu0
        %1605 = vmatprep.mubr.bf16.mxu0 0
        %1606 = vmatmul.mubr.bf16.gmra.mrb[0].mxu0 %v1557
        %v1607 = vpop.f32.mrb[0].mxu0
        %v1608 = vadd.f32 0.0, %v1607
        %v1609 = vpop.f32.mrb[0].mxu0
        %v1610 = vpop.f32.mrb[0].mxu0
        %v1611 = vadd.f32 0.0, %v1610
        %v1612 = vpop.f32.mrb[0].mxu0
        %1613 = vmatprep.mubr.bf16.mxu0 0
        %1614 = vmatmul.mubr.bf16.gmra.mrb[0].mxu0 %v1560
        %v1615 = vpop.f32.mrb[0].mxu0
        %v1616 = vadd.f32 0.0, %v1615
        %v1617 = vpop.f32.mrb[0].mxu0
        %v1618 = vpop.f32.mrb[0].mxu0
        %v1619 = vadd.f32 0.0, %v1618
        %v1620 = vpop.f32.mrb[0].mxu0
        %1621 = vmatprep.mubr.bf16.mxu0 0
        %1622 = vmatmul.mubr.bf16.gmra.mrb[0].mxu0 %v1563
        %v1623 = vpop.f32.mrb[0].mxu0
        %v1624 = vadd.f32 0.0, %v1623
        %v1625 = vpop.f32.mrb[0].mxu0
        %v1626 = vpop.f32.mrb[0].mxu0
        %v1627 = vadd.f32 0.0, %v1626
        %v1628 = vpop.f32.mrb[0].mxu0
        %1629 = vdwg.mxu0
        %v1638 = vunpack.c.l.b16 %v619
        %v1639 = vunpack.c.l.b16 %v620
        %v1640 = vunpack.c.l.b16 %v621
        %v1641 = vunpack.c.l.b16 %v622
        %v1642 = vunpack.c.l.b16 %v623
        %v1643 = vunpack.c.l.b16 %v624
        %v1644 = vunpack.c.l.b16 %v625
        %v1645 = vunpack.c.l.b16 %v626
        %v1646 = vpack.c.b16 %v1639, %v1638
        %v1647 = vpack.c.b16 %v1641, %v1640
        %v1648 = vpack.c.b16 %v1643, %v1642
        %v1649 = vpack.c.b16 %v1645, %v1644
        %v1655 = vsel %vm1160, %v1517, 0
        %v1658 = vsel %vm1160, %v1518, 0
        %v1661 = vsel %vm1160, %v1519, 0
        %v1664 = vsel %vm1160, %v1520, 0
        %1666 = vmatprep.subr.bf16.mxu0 0
        %1667 = vmatpush1.bf16.msra.mxu0 %v1646
        %1668 = vmatprep.subr.bf16.mxu0 0
        %1669 = vmatpush1.bf16.msra.mxu0 %v1647
        %1670 = vmatprep.subr.bf16.mxu0 0
        %1671 = vmatpush1.bf16.msra.mxu0 %v1648
        %1672 = vmatprep.subr.bf16.mxu0 0
        %1673 = vmatpush1.bf16.msra.mxu0 %v1649
        %1674 = vmatprep.subr.bf16.mxu0 0
        %1675 = vmatpush1.bf16.msra.mxu0 0
        %1676 = vmatprep.subr.bf16.mxu0 0
        %1677 = vmatpush1.bf16.msra.mxu0 0
        %1678 = vmatprep.subr.bf16.mxu0 0
        %1679 = vmatpush1.bf16.msra.mxu0 0
        %1680 = vmatprep.subr.bf16.mxu0 0
        %1681 = vmatpush1.bf16.msra.mxu0 0
        %1682 = vmatprep.subr.bf16.mxu0 0
        %1683 = vmatpush1.bf16.msra.mxu0 0
        %1684 = vmatprep.subr.bf16.mxu0 0
        %1685 = vmatpush1.bf16.msra.mxu0 0
        %1686 = vmatprep.subr.bf16.mxu0 0
        %1687 = vmatpush1.bf16.msra.mxu0 0
        %1688 = vmatprep.subr.bf16.mxu0 0
        %1689 = vmatpush1.bf16.msra.mxu0 0
        %1690 = vmatprep.subr.bf16.mxu0 0
        %1691 = vmatpush1.bf16.msra.mxu0 0
        %1692 = vmatprep.subr.bf16.mxu0 0
        %1693 = vmatpush1.bf16.msra.mxu0 0
        %1694 = vmatprep.subr.bf16.mxu0 0
        %1695 = vmatpush1.bf16.msra.mxu0 0
        %1696 = vmatprep.subr.bf16.mxu0 0
        %1697 = vmatpush1.bf16.msra.mxu0 0
        %1698 = vmatprep.mubr.bf16.mxu0 0
        %1699 = vmatmul.mubr.bf16.gmra.mrb[0].mxu0 %v1655
        %v1700 = vpop.f32.mrb[0].mxu0
        %v1701 = vadd.f32 0.0, %v1700
        %v1702 = vpop.f32.mrb[0].mxu0
        %v1703 = vpop.f32.mrb[0].mxu0
        %v1704 = vadd.f32 0.0, %v1703
        %v1705 = vpop.f32.mrb[0].mxu0
        %1706 = vmatprep.mubr.bf16.mxu0 0
        %1707 = vmatmul.mubr.bf16.gmra.mrb[0].mxu0 %v1658
        %v1708 = vpop.f32.mrb[0].mxu0
        %v1709 = vadd.f32 0.0, %v1708
        %v1710 = vpop.f32.mrb[0].mxu0
        %v1711 = vpop.f32.mrb[0].mxu0
        %v1712 = vadd.f32 0.0, %v1711
        %v1713 = vpop.f32.mrb[0].mxu0
        %1714 = vmatprep.mubr.bf16.mxu0 0
        %1715 = vmatmul.mubr.bf16.gmra.mrb[0].mxu0 %v1661
        %v1716 = vpop.f32.mrb[0].mxu0
        %v1717 = vadd.f32 0.0, %v1716
        %v1718 = vpop.f32.mrb[0].mxu0
        %v1719 = vpop.f32.mrb[0].mxu0
        %v1720 = vadd.f32 0.0, %v1719
        %v1721 = vpop.f32.mrb[0].mxu0
        %1722 = vmatprep.mubr.bf16.mxu0 0
        %1723 = vmatmul.mubr.bf16.gmra.mrb[0].mxu0 %v1664
        %v1724 = vpop.f32.mrb[0].mxu0
        %v1725 = vadd.f32 0.0, %v1724
        %v1726 = vpop.f32.mrb[0].mxu0
        %v1727 = vpop.f32.mrb[0].mxu0
        %v1728 = vadd.f32 0.0, %v1727
        %v1729 = vpop.f32.mrb[0].mxu0
        %1730 = vdwg.mxu0
        %v1739 = vunpack.c.l.b16 %v627
        %v1740 = vunpack.c.l.b16 %v628
        %v1741 = vunpack.c.l.b16 %v629
        %v1742 = vunpack.c.l.b16 %v630
        %v1743 = vunpack.c.l.b16 %v631
        %v1744 = vunpack.c.l.b16 %v632
        %v1745 = vunpack.c.l.b16 %v633
        %v1746 = vunpack.c.l.b16 %v634
        %v1747 = vpack.c.b16 %v1740, %v1739
        %v1748 = vpack.c.b16 %v1742, %v1741
        %v1749 = vpack.c.b16 %v1744, %v1743
        %v1750 = vpack.c.b16 %v1746, %v1745
        %v1756 = vsel %vm1160, %v1521, 0
        %v1759 = vsel %vm1160, %v1522, 0
        %v1762 = vsel %vm1160, %v1523, 0
        %v1765 = vsel %vm1160, %v1524, 0
        %1767 = vmatprep.subr.bf16.mxu0 0
        %1768 = vmatpush1.bf16.msra.mxu0 %v1747
        %1769 = vmatprep.subr.bf16.mxu0 0
        %1770 = vmatpush1.bf16.msra.mxu0 %v1748
        %1771 = vmatprep.subr.bf16.mxu0 0
        %1772 = vmatpush1.bf16.msra.mxu0 %v1749
        %1773 = vmatprep.subr.bf16.mxu0 0
        %1774 = vmatpush1.bf16.msra.mxu0 %v1750
        %1775 = vmatprep.subr.bf16.mxu0 0
        %1776 = vmatpush1.bf16.msra.mxu0 0
        %1777 = vmatprep.subr.bf16.mxu0 0
        %1778 = vmatpush1.bf16.msra.mxu0 0
        %1779 = vmatprep.subr.bf16.mxu0 0
        %1780 = vmatpush1.bf16.msra.mxu0 0
        %1781 = vmatprep.subr.bf16.mxu0 0
        %1782 = vmatpush1.bf16.msra.mxu0 0
        %1783 = vmatprep.subr.bf16.mxu0 0
        %1784 = vmatpush1.bf16.msra.mxu0 0
        %1785 = vmatprep.subr.bf16.mxu0 0
        %1786 = vmatpush1.bf16.msra.mxu0 0
        %1787 = vmatprep.subr.bf16.mxu0 0
        %1788 = vmatpush1.bf16.msra.mxu0 0
        %1789 = vmatprep.subr.bf16.mxu0 0
        %1790 = vmatpush1.bf16.msra.mxu0 0
        %1791 = vmatprep.subr.bf16.mxu0 0
        %1792 = vmatpush1.bf16.msra.mxu0 0
        %1793 = vmatprep.subr.bf16.mxu0 0
        %1794 = vmatpush1.bf16.msra.mxu0 0
        %1795 = vmatprep.subr.bf16.mxu0 0
        %1796 = vmatpush1.bf16.msra.mxu0 0
        %1797 = vmatprep.subr.bf16.mxu0 0
        %1798 = vmatpush1.bf16.msra.mxu0 0
        %1799 = vmatprep.mubr.bf16.mxu0 0
        %1800 = vmatmul.mubr.bf16.gmra.mrb[0].mxu0 %v1756
        %v1801 = vpop.f32.mrb[0].mxu0
        %v1802 = vadd.f32 0.0, %v1801
        %v1803 = vpop.f32.mrb[0].mxu0
        %v1804 = vpop.f32.mrb[0].mxu0
        %v1805 = vadd.f32 0.0, %v1804
        %v1806 = vpop.f32.mrb[0].mxu0
        %1807 = vmatprep.mubr.bf16.mxu0 0
        %1808 = vmatmul.mubr.bf16.gmra.mrb[0].mxu0 %v1759
        %v1809 = vpop.f32.mrb[0].mxu0
        %v1810 = vadd.f32 0.0, %v1809
        %v1811 = vpop.f32.mrb[0].mxu0
        %v1812 = vpop.f32.mrb[0].mxu0
        %v1813 = vadd.f32 0.0, %v1812
        %v1814 = vpop.f32.mrb[0].mxu0
        %1815 = vmatprep.mubr.bf16.mxu0 0
        %1816 = vmatmul.mubr.bf16.gmra.mrb[0].mxu0 %v1762
        %v1817 = vpop.f32.mrb[0].mxu0
        %v1818 = vadd.f32 0.0, %v1817
        %v1819 = vpop.f32.mrb[0].mxu0
        %v1820 = vpop.f32.mrb[0].mxu0
        %v1821 = vadd.f32 0.0, %v1820
        %v1822 = vpop.f32.mrb[0].mxu0
        %1823 = vmatprep.mubr.bf16.mxu0 0
        %1824 = vmatmul.mubr.bf16.gmra.mrb[0].mxu0 %v1765
        %v1825 = vpop.f32.mrb[0].mxu0
        %v1826 = vadd.f32 0.0, %v1825
        %v1827 = vpop.f32.mrb[0].mxu0
        %v1828 = vpop.f32.mrb[0].mxu0
        %v1829 = vadd.f32 0.0, %v1828
        %v1830 = vpop.f32.mrb[0].mxu0
        %1831 = vdwg.mxu0
        %v1840 = vunpack.c.l.b16 %v635
        %v1841 = vunpack.c.l.b16 %v636
        %v1842 = vunpack.c.l.b16 %v637
        %v1843 = vunpack.c.l.b16 %v638
        %v1844 = vunpack.c.l.b16 %v639
        %v1845 = vunpack.c.l.b16 %v640
        %v1846 = vunpack.c.l.b16 %v641
        %v1847 = vunpack.c.l.b16 %v642
        %v1848 = vpack.c.b16 %v1841, %v1840
        %v1849 = vpack.c.b16 %v1843, %v1842
        %v1850 = vpack.c.b16 %v1845, %v1844
        %v1851 = vpack.c.b16 %v1847, %v1846
        %v1857 = vsel %vm1160, %v1525, 0
        %v1860 = vsel %vm1160, %v1526, 0
        %v1863 = vsel %vm1160, %v1527, 0
        %v1866 = vsel %vm1160, %v1528, 0
        %1868 = vmatprep.subr.bf16.mxu0 0
        %1869 = vmatpush1.bf16.msra.mxu0 %v1848
        %1870 = vmatprep.subr.bf16.mxu0 0
        %1871 = vmatpush1.bf16.msra.mxu0 %v1849
        %1872 = vmatprep.subr.bf16.mxu0 0
        %1873 = vmatpush1.bf16.msra.mxu0 %v1850
        %1874 = vmatprep.subr.bf16.mxu0 0
        %1875 = vmatpush1.bf16.msra.mxu0 %v1851
        %1876 = vmatprep.subr.bf16.mxu0 0
        %1877 = vmatpush1.bf16.msra.mxu0 0
        %1878 = vmatprep.subr.bf16.mxu0 0
        %1879 = vmatpush1.bf16.msra.mxu0 0
        %1880 = vmatprep.subr.bf16.mxu0 0
        %1881 = vmatpush1.bf16.msra.mxu0 0
        %1882 = vmatprep.subr.bf16.mxu0 0
        %1883 = vmatpush1.bf16.msra.mxu0 0
        %1884 = vmatprep.subr.bf16.mxu0 0
        %1885 = vmatpush1.bf16.msra.mxu0 0
        %1886 = vmatprep.subr.bf16.mxu0 0
        %1887 = vmatpush1.bf16.msra.mxu0 0
        %1888 = vmatprep.subr.bf16.mxu0 0
        %1889 = vmatpush1.bf16.msra.mxu0 0
        %1890 = vmatprep.subr.bf16.mxu0 0
        %1891 = vmatpush1.bf16.msra.mxu0 0
        %1892 = vmatprep.subr.bf16.mxu0 0
        %1893 = vmatpush1.bf16.msra.mxu0 0
        %1894 = vmatprep.subr.bf16.mxu0 0
        %1895 = vmatpush1.bf16.msra.mxu0 0
        %1896 = vmatprep.subr.bf16.mxu0 0
        %1897 = vmatpush1.bf16.msra.mxu0 0
        %1898 = vmatprep.subr.bf16.mxu0 0
        %1899 = vmatpush1.bf16.msra.mxu0 0
        %1900 = vmatprep.mubr.bf16.mxu0 0
        %1901 = vmatmul.mubr.bf16.gmra.mrb[0].mxu0 %v1857
        %v1902 = vpop.f32.mrb[0].mxu0
        %v1903 = vadd.f32 0.0, %v1902
        %v1904 = vpop.f32.mrb[0].mxu0
        %v1905 = vpop.f32.mrb[0].mxu0
        %v1906 = vadd.f32 0.0, %v1905
        %v1907 = vpop.f32.mrb[0].mxu0
        %1908 = vmatprep.mubr.bf16.mxu0 0
        %1909 = vmatmul.mubr.bf16.gmra.mrb[0].mxu0 %v1860
        %v1910 = vpop.f32.mrb[0].mxu0
        %v1911 = vadd.f32 0.0, %v1910
        %v1912 = vpop.f32.mrb[0].mxu0
        %v1913 = vpop.f32.mrb[0].mxu0
        %v1914 = vadd.f32 0.0, %v1913
        %v1915 = vpop.f32.mrb[0].mxu0
        %1916 = vmatprep.mubr.bf16.mxu0 0
        %1917 = vmatmul.mubr.bf16.gmra.mrb[0].mxu0 %v1863
        %v1918 = vpop.f32.mrb[0].mxu0
        %v1919 = vadd.f32 0.0, %v1918
        %v1920 = vpop.f32.mrb[0].mxu0
        %v1921 = vpop.f32.mrb[0].mxu0
        %v1922 = vadd.f32 0.0, %v1921
        %v1923 = vpop.f32.mrb[0].mxu0
        %1924 = vmatprep.mubr.bf16.mxu0 0
        %1925 = vmatmul.mubr.bf16.gmra.mrb[0].mxu0 %v1866
        %v1926 = vpop.f32.mrb[0].mxu0
        %v1927 = vadd.f32 0.0, %v1926
        %v1928 = vpop.f32.mrb[0].mxu0
        %v1929 = vpop.f32.mrb[0].mxu0
        %v1930 = vadd.f32 0.0, %v1929
        %v1931 = vpop.f32.mrb[0].mxu0
        %1932 = vdwg.mxu0
        %v1933 = vpack.c.bf16 %v1603, %v1600
        %v1934 = vpack.c.bf16 %v1611, %v1608
        %v1935 = vpack.c.bf16 %v1619, %v1616
        %v1936 = vpack.c.bf16 %v1627, %v1624
        %v1937 = vpack.c.bf16 %v1704, %v1701
        %v1938 = vpack.c.bf16 %v1712, %v1709
        %v1939 = vpack.c.bf16 %v1720, %v1717
        %v1940 = vpack.c.bf16 %v1728, %v1725
        %v1941 = vpack.c.bf16 %v1805, %v1802
        %v1942 = vpack.c.bf16 %v1813, %v1810
        %v1943 = vpack.c.bf16 %v1821, %v1818
        %v1944 = vpack.c.bf16 %v1829, %v1826
        %v1945 = vpack.c.bf16 %v1906, %v1903
        %v1946 = vpack.c.bf16 %v1914, %v1911
        %v1947 = vpack.c.bf16 %v1922, %v1919
        %v1948 = vpack.c.bf16 %v1930, %v1927
        %v1965 = vunpack.c.l.b16 %v1933
        %v1966 = vunpack.c.h.b16 %v1933
        %v1967 = vunpack.c.l.b16 %v1934
        %v1968 = vunpack.c.h.b16 %v1934
        %v1969 = vunpack.c.l.b16 %v1935
        %v1970 = vunpack.c.h.b16 %v1935
        %v1971 = vunpack.c.l.b16 %v1936
        %v1972 = vunpack.c.h.b16 %v1936
        %v1973 = vunpack.c.l.b16 %v1937
        %v1974 = vunpack.c.h.b16 %v1937
        %v1975 = vunpack.c.l.b16 %v1938
        %v1976 = vunpack.c.h.b16 %v1938
        %v1977 = vunpack.c.l.b16 %v1939
        %v1978 = vunpack.c.h.b16 %v1939
        %v1979 = vunpack.c.l.b16 %v1940
        %v1980 = vunpack.c.h.b16 %v1940
        %v1981 = vunpack.c.l.b16 %v1941
        %v1982 = vunpack.c.h.b16 %v1941
        %v1983 = vunpack.c.l.b16 %v1942
        %v1984 = vunpack.c.h.b16 %v1942
        %v1985 = vunpack.c.l.b16 %v1943
        %v1986 = vunpack.c.h.b16 %v1943
        %v1987 = vunpack.c.l.b16 %v1944
        %v1988 = vunpack.c.h.b16 %v1944
        %v1989 = vunpack.c.l.b16 %v1945
        %v1990 = vunpack.c.h.b16 %v1945
        %v1991 = vunpack.c.l.b16 %v1946
        %v1992 = vunpack.c.h.b16 %v1946
        %v1993 = vunpack.c.l.b16 %v1947
        %v1994 = vunpack.c.h.b16 %v1947
        %v1995 = vunpack.c.l.b16 %v1948
        %v1996 = vunpack.c.h.b16 %v1948
        %v1997 = vpack.c.b16 %v1965, %v1965
        %v1998 = vpack.c.b16 %v1966, %v1966
        %v1999 = vpack.c.b16 %v1967, %v1967
        %v2000 = vpack.c.b16 %v1968, %v1968
        %v2001 = vpack.c.b16 %v1969, %v1969
        %v2002 = vpack.c.b16 %v1970, %v1970
        %v2003 = vpack.c.b16 %v1971, %v1971
        %v2004 = vpack.c.b16 %v1972, %v1972
        %v2005 = vpack.c.b16 %v1973, %v1973
        %v2006 = vpack.c.b16 %v1974, %v1974
        %v2007 = vpack.c.b16 %v1975, %v1975
        %v2008 = vpack.c.b16 %v1976, %v1976
        %v2009 = vpack.c.b16 %v1977, %v1977
        %v2010 = vpack.c.b16 %v1978, %v1978
        %v2011 = vpack.c.b16 %v1979, %v1979
        %v2012 = vpack.c.b16 %v1980, %v1980
        %v2013 = vpack.c.b16 %v1981, %v1981
        %v2014 = vpack.c.b16 %v1982, %v1982
        %v2015 = vpack.c.b16 %v1983, %v1983
        %v2016 = vpack.c.b16 %v1984, %v1984
        %v2017 = vpack.c.b16 %v1985, %v1985
        %v2018 = vpack.c.b16 %v1986, %v1986
        %v2019 = vpack.c.b16 %v1987, %v1987
        %v2020 = vpack.c.b16 %v1988, %v1988
        %v2021 = vpack.c.b16 %v1989, %v1989
        %v2022 = vpack.c.b16 %v1990, %v1990
        %v2023 = vpack.c.b16 %v1991, %v1991
        %v2024 = vpack.c.b16 %v1992, %v1992
        %v2025 = vpack.c.b16 %v1993, %v1993
        %v2026 = vpack.c.b16 %v1994, %v1994
        %v2027 = vpack.c.b16 %v1995, %v1995
        %v2028 = vpack.c.b16 %v1996, %v1996
        %vm2061 = vcmask 125952
        %2062 = vst.msk [vmem:[%s542] sm:$0xf] %vm2061, %v1997
        %2063 = vst.msk [vmem:[%s542 + $0x4] sm:$0xf] %vm2061, %v1998
        %2064 = vst.msk [vmem:[%s542 + $0x8] sm:$0xf] %vm2061, %v1999
        %2065 = vst.msk [vmem:[%s542 + $0xc] sm:$0xf] %vm2061, %v2000
        %2066 = vst.msk [vmem:[%s542 + $0x10] sm:$0xf] %vm2061, %v2001
        %2067 = vst.msk [vmem:[%s542 + $0x14] sm:$0xf] %vm2061, %v2002
        %2068 = vst.msk [vmem:[%s542 + $0x18] sm:$0xf] %vm2061, %v2003
        %2069 = vst.msk [vmem:[%s542 + $0x1c] sm:$0xf] %vm2061, %v2004
        %2070 = vst.msk [vmem:[%s542 + $0x20] sm:$0xf] %vm2061, %v2005
        %2071 = vst.msk [vmem:[%s542 + $0x24] sm:$0xf] %vm2061, %v2006
        %2072 = vst.msk [vmem:[%s542 + $0x28] sm:$0xf] %vm2061, %v2007
        %2073 = vst.msk [vmem:[%s542 + $0x2c] sm:$0xf] %vm2061, %v2008
        %2074 = vst.msk [vmem:[%s542 + $0x30] sm:$0xf] %vm2061, %v2009
        %2075 = vst.msk [vmem:[%s542 + $0x34] sm:$0xf] %vm2061, %v2010
        %2076 = vst.msk [vmem:[%s542 + $0x38] sm:$0xf] %vm2061, %v2011
        %2077 = vst.msk [vmem:[%s542 + $0x3c] sm:$0xf] %vm2061, %v2012
        %2078 = vst.msk [vmem:[%s542 + $0x40] sm:$0xf] %vm2061, %v2013
        %2079 = vst.msk [vmem:[%s542 + $0x44] sm:$0xf] %vm2061, %v2014
        %2080 = vst.msk [vmem:[%s542 + $0x48] sm:$0xf] %vm2061, %v2015
        %2081 = vst.msk [vmem:[%s542 + $0x4c] sm:$0xf] %vm2061, %v2016
        %2082 = vst.msk [vmem:[%s542 + $0x50] sm:$0xf] %vm2061, %v2017
        %2083 = vst.msk [vmem:[%s542 + $0x54] sm:$0xf] %vm2061, %v2018
        %2084 = vst.msk [vmem:[%s542 + $0x58] sm:$0xf] %vm2061, %v2019
        %2085 = vst.msk [vmem:[%s542 + $0x5c] sm:$0xf] %vm2061, %v2020
        %2086 = vst.msk [vmem:[%s542 + $0x60] sm:$0xf] %vm2061, %v2021
        %2087 = vst.msk [vmem:[%s542 + $0x64] sm:$0xf] %vm2061, %v2022
        %2088 = vst.msk [vmem:[%s542 + $0x68] sm:$0xf] %vm2061, %v2023
        %2089 = vst.msk [vmem:[%s542 + $0x6c] sm:$0xf] %vm2061, %v2024
        %2090 = vst.msk [vmem:[%s542 + $0x70] sm:$0xf] %vm2061, %v2025
        %2091 = vst.msk [vmem:[%s542 + $0x74] sm:$0xf] %vm2061, %v2026
        %2092 = vst.msk [vmem:[%s542 + $0x78] sm:$0xf] %vm2061, %v2027
        %2093 = vst.msk [vmem:[%s542 + $0x7c] sm:$0xf] %vm2061, %v2028
        %s2094 = smul.u32 4, %s12
        %p2095 = scmp.lt.s32.totalorder %s2094, 7
        %s2096 = scalar_select %p2095, %s2094, 7
        %s2097 = smul.addr %s2096, 8
        %s2098 = smul.addr %s2097, 4
        %s2099 = scalar_lea.vmem %s1, %s2098
        // Predicated region
        $region66: #{body_forward.7} parent=60 // pred_check
          %p2100 = pneg %p56
        $region67: #{body_forward.7} parent=60 // pred_check_branch
          %2102 = sbr.rel (%p2100) target = $region69
        $region68: #{body_forward.7} parent=60 // pred_region
          %s2103 = smul.u32 4, %s12
        $region69: #{body_forward.7} parent=60 // pred_fallthru
          _
      $region61: #{body_forward.7} parent=5 // pred_fallthru
        _
      %p2104 = scmp.le.s32.totalorder 2, %s7
      // Predicated region
      $region70: #{body_forward.7} parent=5 // pred_check
        %p2105 = pneg %p2104
      $region71: #{body_forward.7} parent=5 // pred_check_branch
        %2107 = sbr.rel (%p2105) target = $region73
      $region72: #{body_forward.7} parent=5 // pred_region
        %s2108 = ssub.s32 %s7, 2
        // Predicated region
        $region74: #{body_forward.7} parent=72 // pred_check
          %p2109 = pneg %p62
        $region75: #{body_forward.7} parent=72 // pred_check_branch
          %2111 = sbr.rel (%p2109) target = $region77
        $region76: #{body_forward.7} parent=72 // pred_region
          %s2112 = smul.u32 4, %s13
          %p2113 = scmp.lt.s32.totalorder %s2112, 7
          %s2114 = scalar_select %p2113, %s2112, 7
          %s2115 = smul.addr %s2114, 8
          %s2116 = smul.addr %s2115, 4
          %s2117 = scalar_lea.vmem %s1, %s2116
        $region77: #{body_forward.7} parent=72 // pred_fallthru
          _
      $region73: #{body_forward.7} parent=5 // pred_fallthru
        _
    $region6: #{body_forward.7} parent=1 // loop_footer
      %s11 = sadd.s32 1, %s7
    $region7: #{body_forward.7} parent=1 // loop_footer_branch
      %6 = sbr.rel target = $region3
    $region8: #{body_forward.7} parent=1 // loop_exit
      _

</llo_original>
